<compile_context>
chip_gen: v7x
topology: tpu7x:2x2x1
jax: 0.10.0
libtpu: 0.0.40
codegen_flags: <defaults>
</compile_context>

<pallas_src>
from functools import partial

import jax
import jax.numpy as jnp
from jax import lax
from jax.experimental import pallas as pl
from jax.experimental.pallas import tpu as pltpu

LANE = 128               # padded channel width (lane-dense stores / matmul N)
BT_MAX = 32              # max batch rows per grid step (VMEM-safe on v5e..v7x)
FC_HIDDEN = 512
_M_MAX = 256             # max accumulator rows per matmul chunk (~32 f32 vregs)
_VMEM_LIMIT = 48 * 1024 * 1024


def _round_up(v, m):
    return -(-v // m) * m


def _row_chunks(n_rows, rows_per_out_row):
    """Chunk `n_rows` conv output rows so M = chunk*rows_per_out_row <= _M_MAX."""
    rc = max(1, min(n_rows, _M_MAX // max(1, rows_per_out_row)))
    return [(r0, min(rc, n_rows - r0)) for r0 in range(0, n_rows, rc)]


# ----------------------------------------------------------------------------
# Fused forward kernel: conv1 -> conv2 -> conv3 -> fc1 -> fc2
# ----------------------------------------------------------------------------
def _dqn_kernel(x_ref, w1_ref, b1_ref, w2_ref, b2_ref, w3_ref, b3_ref,
                wf1_ref, bf1_ref, wf2_ref, bf2_ref, out_ref,
                y1_ref, y2_ref, y3_ref, *, oh1, oh2, oh3):
    bt = out_ref.shape[0]
    f1p = x_ref.shape[-1]          # padded space-to-depth feature width
    p1 = oh1 // 2                  # conv1-output per-parity spatial extent
    f32, bf16 = jnp.float32, jnp.bfloat16

    # ---- conv1: 8x8 stride-4 conv on the space-to-depth(4) input ----------
    # Evaluated per output-parity phase (ph, pw) as 4 accumulating taps; the
    # column-parity result pw is stored into lanes [pw*128, (pw+1)*128) of the
    # 256-lane y1 scratch so conv2 below can contract K=256 per tap.  Row
    # chunking keeps each f32 accumulator <= ~32 vregs.
    for ph in range(2):
        for pw in range(2):
            for r0, rc in _row_chunks(p1, p1 * bt):
                acc = None
                for di in range(2):
                    for dj in range(2):
                        sh, sw = ph + di, pw + dj
                        a = x_ref[sh % 2, sw % 2,
                                  sh // 2 + r0:sh // 2 + r0 + rc,
                                  sw // 2:sw // 2 + p1, :, :]
                        d = jnp.dot(a.reshape(rc * p1 * bt, f1p),
                                    w1_ref[di, dj, :, :],
                                    preferred_element_type=f32)
                        acc = d if acc is None else acc + d
                y1 = jnp.maximum(acc + b1_ref[...], 0.0).astype(bf16)
                y1_ref[ph, r0:r0 + rc, :, :, pw * LANE:(pw + 1) * LANE] = (
                    y1.reshape(rc, p1, bt, LANE))

    # ---- conv2: 4x4 stride-2 conv, col-parity-merged -> 8 taps of K=256 ----
    for r0, rc in _row_chunks(oh2, oh2 * bt):
        acc = None
        for kh in range(4):
            for j in range(2):          # kw = 2*j + col_parity, merged in K
                a = y1_ref[kh % 2,
                           kh // 2 + r0:kh // 2 + r0 + rc,
                           j:j + oh2, :, :]
                d = jnp.dot(a.reshape(rc * oh2 * bt, 2 * LANE),
                            w2_ref[kh, j, :, :],
                            preferred_element_type=f32)
                acc = d if acc is None else acc + d
        y2 = jnp.maximum(acc + b2_ref[...], 0.0).astype(bf16)
        y2_ref[r0:r0 + rc, :, :, :] = y2.reshape(rc, oh2, bt, LANE)

    # ---- conv3: 3x3 stride-1 conv as 9 accumulating taps --------------------
    # Results are written batch-major into y3_ref (bt, s3*128), one 128-lane
    # block per spatial position, so fc1 below is a single big-K matmul.
    for r0, rc in _row_chunks(oh3, oh3 * bt):
        acc = None
        for kh in range(3):
            for kw in range(3):
                a = y2_ref[kh + r0:kh + r0 + rc, kw:kw + oh3, :, :]
                d = jnp.dot(a.reshape(rc * oh3 * bt, LANE),
                            w3_ref[kh, kw, :, :],
                            preferred_element_type=f32)
                acc = d if acc is None else acc + d
        y3 = jnp.maximum(acc + b3_ref[...], 0.0).astype(bf16)
        y3 = y3.reshape(rc, oh3, bt, LANE)
        for rr in range(rc):
            for cc in range(oh3):
                pidx = (r0 + rr) * oh3 + cc
                y3_ref[:, pidx * LANE:(pidx + 1) * LANE] = y3[rr, cc]

    # ---- fc1: ONE matmul with K = s3*128 (PyTorch's channel-major flatten is
    #      folded into the wf1 row regrouping in prepare_params), then fc2 ----
    h1 = jnp.dot(y3_ref[...], wf1_ref[...], preferred_element_type=f32)
    h1 = jnp.maximum(h1 + bf1_ref[...], 0.0).astype(bf16)
    out_ref[...] = (jnp.dot(h1, wf2_ref[...], preferred_element_type=f32)
                    + bf2_ref[...])


# ----------------------------------------------------------------------------
# Wrapper-side layout preparation (pure layout plumbing, no compute)
# ----------------------------------------------------------------------------
def _conv_dims(h):
    oh1 = (h - 8) // 4 + 1
    oh2 = (oh1 - 4) // 2 + 1
    oh3 = (oh2 - 3) // 1 + 1
    return oh1, oh2, oh3


def _space_to_depth_phases(x, n_pad, bt, f1p):
    """NCHW -> (batch-block, row-par, col-par, rI, cI, BT, 16*C pad) bf16."""
    n, c, h, _ = x.shape
    br = h // 4                      # 4x4 block-grid extent
    pp = (br + 1) // 2               # per-parity (padded) extent
    f1 = 16 * c
    xb = x.transpose(0, 2, 3, 1)                                    # NHWC
    xb = xb.reshape(n, br, 4, br, 4, c).transpose(0, 1, 3, 2, 4, 5)
    xb = xb.reshape(n, br, br, f1)            # feat = hr*4C + wr*C + ch
    xb = jnp.pad(xb, ((0, n_pad - n), (0, 2 * pp - br),
                      (0, 2 * pp - br), (0, f1p - f1)))
    xb = xb.reshape(n_pad // bt, bt, pp, 2, pp, 2, f1p)  # block row = 2*rI+par
    xb = xb.transpose(0, 3, 5, 2, 4, 1, 6)    # (nb, rp, cp, rI, cI, bt, feat)
    return xb.astype(jnp.bfloat16)


def prepare_params(p, input_shape):
    """Pad / regroup the PyTorch-layout parameters once for the fused kernel."""
    c, h, _ = input_shape
    _, _, oh3 = _conv_dims(h)
    s3 = oh3 * oh3
    f1 = 16 * c
    f1p = _round_up(f1, LANE)
    bf16, f32 = jnp.bfloat16, jnp.float32

    def pad_last(a, n):
        return jnp.pad(a, [(0, 0)] * (a.ndim - 1) + [(0, n - a.shape[-1])])

    # conv1 (32, C, 8, 8) -> (di, dj, hr*4C + wr*C + c [padded to f1p], oc_pad)
    w1 = p["w1"].reshape(32, c, 2, 4, 2, 4).transpose(2, 4, 3, 5, 1, 0)
    w1 = w1.reshape(2, 2, f1, 32)
    w1 = jnp.pad(w1, ((0, 0), (0, 0), (0, f1p - f1),
                      (0, LANE - 32))).astype(bf16)
    b1 = pad_last(p["b1"], LANE).reshape(1, LANE).astype(f32)

    # conv2 (64, 32, 4, 4) -> (kh, kw//2, colpar*128 + c1_pad, oc_pad):
    # column-parity taps merged so the kernel contracts K=256 per tap.
    w2 = p["w2"].transpose(2, 3, 1, 0)                     # (kh, kw, ic, oc)
    w2 = jnp.pad(w2, ((0, 0), (0, 0), (0, LANE - w2.shape[2]),
                      (0, LANE - w2.shape[3])))
    w2 = w2.reshape(4, 2, 2 * LANE, LANE).astype(bf16)     # row = cp*128 + ic
    b2 = pad_last(p["b2"], LANE).reshape(1, LANE).astype(f32)

    # conv3 (64, 64, 3, 3) -> (kh, kw, c2_pad, oc_pad)
    w3 = p["w3"].transpose(2, 3, 1, 0)
    w3 = jnp.pad(w3, ((0, 0), (0, 0), (0, LANE - w3.shape[2]),
                      (0, LANE - w3.shape[3]))).astype(bf16)
    b3 = pad_last(p["b3"], LANE).reshape(1, LANE).astype(f32)

    # fc1 (64*s3, 512): regroup PyTorch's channel-major flatten so that row
    # index = spatial_pos*128 + channel (matching the kernel's batch-major y3
    # slab) and flatten to one (s3*128, 512) matrix (single big-K fc1 matmul).
    wf1 = p["wf1"].reshape(64, s3, FC_HIDDEN).transpose(1, 0, 2)
    wf1 = jnp.pad(wf1, ((0, 0), (0, LANE - 64), (0, 0)))
    wf1 = wf1.reshape(s3 * LANE, FC_HIDDEN).astype(bf16)
    bf1 = p["bf1"].reshape(1, FC_HIDDEN).astype(f32)

    # fc2 (512, A) -> (512, 128)
    wf2 = pad_last(p["wf2"], LANE).astype(bf16)
    bf2 = pad_last(p["bf2"], LANE).reshape(1, LANE).astype(f32)

    return dict(w1=w1, b1=b1, w2=w2, b2=b2, w3=w3, b3=b3,
                wf1=wf1, bf1=bf1, wf2=wf2, bf2=bf2)


# ----------------------------------------------------------------------------
# pl.Buffered(1) support probe (single-buffered constant weight operands)
# ----------------------------------------------------------------------------
_BUFFERED1_OK = None


def _buffered1_supported():
    global _BUFFERED1_OK
    if _BUFFERED1_OK is None:
        try:
            def _probe(x_ref, o_ref):
                o_ref[...] = x_ref[...] + 1.0

            f = pl.pallas_call(
                _probe,
                out_shape=jax.ShapeDtypeStruct((8, LANE), jnp.float32),
                grid=(2,),
                in_specs=[pl.BlockSpec((8, LANE), lambda i: (0, 0),
                                       pipeline_mode=pl.Buffered(1))],
                out_specs=pl.BlockSpec((8, LANE), lambda i: (0, 0)))
            jax.block_until_ready(f(jnp.zeros((8, LANE), jnp.float32)))
            _BUFFERED1_OK = True
        except Exception:
            _BUFFERED1_OK = False
    return _BUFFERED1_OK


# ----------------------------------------------------------------------------
# Forward wrapper
# ----------------------------------------------------------------------------
def dqn_forward_pallas(x, prep, *, n_actions, bt_max=BT_MAX):
    n, c, h, w = x.shape
    # Structural requirements of this kernel's layout tricks.
    # TODO(synk): rectangular inputs / odd conv1 output extents would need an
    # extra row/col of phase padding; 36x36 and Atari 84x84 satisfy these.
    assert h == w and h % 4 == 0, "square input with H % 4 == 0 required"
    oh1, oh2, oh3 = _conv_dims(h)
    assert oh1 >= 4 and oh1 % 2 == 0 and oh2 >= 3 and oh3 >= 1

    p1 = oh1 // 2
    pp = p1 + 1
    f1p = _round_up(16 * c, LANE)
    s3 = oh3 * oh3
    # Batch tile: up to bt_max rows per grid step (>= 8 for sublane alignment).
    # bt_max=32 keeps VMEM bounded on v7x (64 MiB) and leaves >= 2 grid steps
    # (two-TensorCore "parallel" split) for batches >= 2*bt_max.
    bt = min(bt_max, _round_up(n, 8))
    n_pad = _round_up(n, bt)

    xb = _space_to_depth_phases(x, n_pad, bt, f1p)

    use_buffered = _buffered1_supported()

    def fixed(arr):
        zeros = (0,) * arr.ndim

        def idx(i):
            return zeros

        if use_buffered:
            # Constant operands: DMA'd once, single-buffered (saves ~7 MiB of
            # duplicated weight buffers at Atari scale).
            return pl.BlockSpec(arr.shape, idx, pipeline_mode=pl.Buffered(1))
        return pl.BlockSpec(arr.shape, idx)

    grid_spec = pltpu.PrefetchScalarGridSpec(
        num_scalar_prefetch=0,
        grid=(n_pad // bt,),
        in_specs=[
            # Batch is pre-blocked into the leading dim -> each grid step's
            # input DMA is one contiguous HBM slab.
            pl.BlockSpec((None, 2, 2, pp, pp, bt, f1p),
                         lambda i: (i, 0, 0, 0, 0, 0, 0)),
            fixed(prep["w1"]), fixed(prep["b1"]),
            fixed(prep["w2"]), fixed(prep["b2"]),
            fixed(prep["w3"]), fixed(prep["b3"]),
            fixed(prep["wf1"]), fixed(prep["bf1"]),
            fixed(prep["wf2"]), fixed(prep["bf2"]),
        ],
        out_specs=pl.BlockSpec((bt, LANE), lambda i: (i, 0)),
        scratch_shapes=[
            pltpu.VMEM((2, p1, p1, bt, 2 * LANE), jnp.bfloat16),  # y1 (256 ln)
            pltpu.VMEM((oh2, oh2, bt, LANE), jnp.bfloat16),       # y2
            pltpu.VMEM((bt, s3 * LANE), jnp.bfloat16),            # y3 b-major
        ],
    )
    out = pl.pallas_call(
        partial(_dqn_kernel, oh1=oh1, oh2=oh2, oh3=oh3),
        out_shape=jax.ShapeDtypeStruct((n_pad, LANE), jnp.float32),
        grid_spec=grid_spec,
        compiler_params=pltpu.CompilerParams(
            dimension_semantics=("parallel",),
            vmem_limit_bytes=_VMEM_LIMIT),
    )(xb, prep["w1"], prep["b1"], prep["w2"], prep["b2"],
      prep["w3"], prep["b3"], prep["wf1"], prep["bf1"],
      prep["wf2"], prep["bf2"])
    return out[:n, :n_actions]


# ----------------------------------------------------------------------------
# DQN parameters (PyTorch-style init) and pure-JAX reference
# ----------------------------------------------------------------------------
def init_dqn_params(key, input_shape, n_actions):
    c, h, w = input_shape
    ks = jax.random.split(key, 10)

    def unif(k, shape, fan_in):
        bound = 1.0 / jnp.sqrt(fan_in)
        return jax.random.uniform(k, shape, jnp.float32, -bound, bound)

    p = {}
    p["w1"] = unif(ks[0], (32, c, 8, 8), c * 8 * 8)
    p["b1"] = unif(ks[1], (32,), c * 8 * 8)
    p["w2"] = unif(ks[2], (64, 32, 4, 4), 32 * 4 * 4)
    p["b2"] = unif(ks[3], (64,), 32 * 4 * 4)
    p["w3"] = unif(ks[4], (64, 64, 3, 3), 64 * 3 * 3)
    p["b3"] = unif(ks[5], (64,), 64 * 3 * 3)

    oh1, oh2, oh3 = _conv_dims(h)
    conv_out = 64 * oh3 * oh3

    p["wf1"] = unif(ks[6], (conv_out, FC_HIDDEN), conv_out)
    p["bf1"] = unif(ks[7], (FC_HIDDEN,), conv_out)
    p["wf2"] = unif(ks[8], (FC_HIDDEN, n_actions), FC_HIDDEN)
    p["bf2"] = unif(ks[9], (n_actions,), FC_HIDDEN)
    return p


def dqn_forward_ref(x, p):
    y = x
    for w, b, s in ((p["w1"], p["b1"], 4), (p["w2"], p["b2"], 2),
                    (p["w3"], p["b3"], 1)):
        y = lax.conv_general_dilated(
            y, w, (s, s), "VALID",
            dimension_numbers=("NCHW", "OIHW", "NCHW"))
        y = jnp.maximum(y + b[None, :, None, None], 0.0)
    y = y.reshape(x.shape[0], -1)
    y = jnp.maximum(y @ p["wf1"] + p["bf1"], 0.0)
    return y @ p["wf2"] + p["bf2"]


if __name__ == "__main__":
    _buffered1_supported()   # run the (cached) pipeline-mode probe eagerly

    def run_case(batch, channels, spatial, n_actions, case_idx):
        input_shape = (channels, spatial, spatial)
        key = jax.random.fold_in(jax.random.PRNGKey(0), case_idx)
        k_param, k_x = jax.random.split(key)
        params = init_dqn_params(k_param, input_shape, n_actions)
        x = jax.random.normal(k_x, (batch, channels, spatial, spatial),
                              jnp.float32)
        prep = prepare_params(params, input_shape)
        fwd = jax.jit(partial(dqn_forward_pallas, n_actions=n_actions))
        out = jax.block_until_ready(fwd(x, prep))
        ref = jax.block_until_ready(dqn_forward_ref(x, params))
        assert out.shape == (batch, n_actions), out.shape
        # bf16 matmul operands (f32 MXU accumulation) => loosened tolerance.
        assert jnp.allclose(out, ref, atol=5e-2, rtol=5e-2), (
            "mismatch vs reference at "
            f"{(batch, channels, spatial, n_actions)}: "
            f"max|err|={float(jnp.max(jnp.abs(out - ref)))}")

    # Smallest spatial size the DQN conv stack supports: 36 -> 8 -> 3 -> 1.
    run_case(batch=2, channels=4, spatial=36, n_actions=6, case_idx=0)
    # Larger batch: exercises the BT=32 tile, batch padding and a 2-step grid.
    run_case(batch=40, channels=4, spatial=36, n_actions=6, case_idx=1)
    # Atari-sized input (84x84): exercises the pp = p1+1 parity padding and
    # the row-chunked accumulators at full spatial extent.
    run_case(batch=2, channels=4, spatial=84, n_actions=6, case_idx=2)
    print("KERNEL_OK")
</pallas_src>

<mosaic_0001>
module attributes {stable_mosaic.version = 11 : i64} {
  func.func @_probe(%arg0: i32, %arg1: memref<8x128xf32, #tpu.memory_space<vmem>>, %arg2: memref<8x128xf32, #tpu.memory_space<vmem>>) attributes {dimension_semantics = [#tpu.dimension_semantics<arbitrary>], iteration_bounds = array<i64: 2>, scalar_prefetch = 0 : i64, scratch_operands = 0 : i64, tpu.core_type = #tpu.core_type<tc>, window_params = [{pipeline_mode = #tpu.pipeline_mode<synchronous>, transform_indices = @transform_0, window_bounds = array<i64: 8, 128>}, {pipeline_mode = #tpu.pipeline_mode<synchronous>, transform_indices = @transform_1, window_bounds = array<i64: 8, 128>}]} {
    %c0 = arith.constant 0 : index
    %c0_0 = arith.constant 0 : index
    %0 = vector.load %arg1[%c0, %c0_0] : memref<8x128xf32, #tpu.memory_space<vmem>>, vector<8x128xf32>
    %cst = arith.constant 1.000000e+00 : f32
    %1 = vector.broadcast %cst : f32 to vector<8x128xf32>
    %2 = arith.addf %0, %1 : vector<8x128xf32>
    %c0_1 = arith.constant 0 : index
    %c0_2 = arith.constant 0 : index
    %3 = vector.load %arg2[%c0_1, %c0_2] : memref<8x128xf32, #tpu.memory_space<vmem>>, vector<8x128xf32>
    tpu.vector_store %arg2[%c0_1, %c0_2], %2 {strides = array<i32>} : memref<8x128xf32, #tpu.memory_space<vmem>>, vector<8x128xf32>,
    return
  }
  func.func @transform_0(%arg0: i32) -> (i32, i32) {
    %c0_i32 = arith.constant 0 : i32
    %c0_i32_0 = arith.constant 0 : i32
    %c0_i32_1 = arith.constant 0 : i32
    return %c0_i32, %c0_i32_0 : i32, i32
  }
  func.func @transform_1(%arg0: i32) -> (i32, i32) {
    %c0_i32 = arith.constant 0 : i32
    %c0_i32_0 = arith.constant 0 : i32
    %c0_i32_1 = arith.constant 0 : i32
    return %c0_i32, %c0_i32_0 : i32, i32
  }
}

module attributes {stable_mosaic.version = 11 : i64} {
  func.func @_dqn_kernel(%arg0: i32, %arg1: memref<1x2x2x5x5x8x128xbf16, #tpu.memory_space<vmem>>, %arg2: memref<2x2x128x128xbf16, #tpu.memory_space<vmem>>, %arg3: memref<1x128xf32, #tpu.memory_space<vmem>>, %arg4: memref<4x2x256x128xbf16, #tpu.memory_space<vmem>>, %arg5: memref<1x128xf32, #tpu.memory_space<vmem>>, %arg6: memref<3x3x128x128xbf16, #tpu.memory_space<vmem>>, %arg7: memref<1x128xf32, #tpu.memory_space<vmem>>, %arg8: memref<128x512xbf16, #tpu.memory_space<vmem>>, %arg9: memref<1x512xf32, #tpu.memory_space<vmem>>, %arg10: memref<512x128xbf16, #tpu.memory_space<vmem>>, %arg11: memref<1x128xf32, #tpu.memory_space<vmem>>, %arg12: memref<8x128xf32, #tpu.memory_space<vmem>>, %arg13: memref<2x4x4x8x256xbf16, #tpu.memory_space<vmem>>, %arg14: memref<3x3x8x128xbf16, #tpu.memory_space<vmem>>, %arg15: memref<8x128xbf16, #tpu.memory_space<vmem>>) attributes {dimension_semantics = [#tpu.dimension_semantics<parallel>], iteration_bounds = array<i64: 1>, scalar_prefetch = 0 : i64, scratch_operands = 3 : i64, tpu.core_type = #tpu.core_type<tc>, window_params = [{transform_indices = @transform_0, window_bounds = array<i64: 1, 2, 2, 5, 5, 8, 128>}, {pipeline_mode = #tpu.pipeline_mode<synchronous>, transform_indices = @transform_1, window_bounds = array<i64: 2, 2, 128, 128>}, {pipeline_mode = #tpu.pipeline_mode<synchronous>, transform_indices = @transform_2, window_bounds = array<i64: 1, 128>}, {pipeline_mode = #tpu.pipeline_mode<synchronous>, transform_indices = @transform_3, window_bounds = array<i64: 4, 2, 256, 128>}, {pipeline_mode = #tpu.pipeline_mode<synchronous>, transform_indices = @transform_4, window_bounds = array<i64: 1, 128>}, {pipeline_mode = #tpu.pipeline_mode<synchronous>, transform_indices = @transform_5, window_bounds = array<i64: 3, 3, 128, 128>}, {pipeline_mode = #tpu.pipeline_mode<synchronous>, transform_indices = @transform_6, window_bounds = array<i64: 1, 128>}, {pipeline_mode = #tpu.pipeline_mode<synchronous>, transform_indices = @transform_7, window_bounds = array<i64: 128, 512>}, {pipeline_mode = #tpu.pipeline_mode<synchronous>, transform_indices = @transform_8, window_bounds = array<i64: 1, 512>}, {pipeline_mode = #tpu.pipeline_mode<synchronous>, transform_indices = @transform_9, window_bounds = array<i64: 512, 128>}, {pipeline_mode = #tpu.pipeline_mode<synchronous>, transform_indices = @transform_10, window_bounds = array<i64: 1, 128>}, {transform_indices = @transform_11, window_bounds = array<i64: 8, 128>}]} {
    %c0 = arith.constant 0 : index
    %c0_0 = arith.constant 0 : index
    %c0_1 = arith.constant 0 : index
    %c0_2 = arith.constant 0 : index
    %c0_3 = arith.constant 0 : index
    %c0_4 = arith.constant 0 : index
    %c0_5 = arith.constant 0 : index
    %0 = vector.load %arg1[%c0, %c0_0, %c0_1, %c0_2, %c0_3, %c0_4, %c0_5] : memref<1x2x2x5x5x8x128xbf16, #tpu.memory_space<vmem>>, vector<1x1x1x4x4x8x128xbf16>
    %1 = vector.shape_cast %0 : vector<1x1x1x4x4x8x128xbf16> to vector<4x4x8x128xbf16>
    %2 = vector.shape_cast %1 : vector<4x4x8x128xbf16> to vector<128x128xbf16>
    %c0_6 = arith.constant 0 : index
    %c0_7 = arith.constant 0 : index
    %c0_8 = arith.constant 0 : index
    %c0_9 = arith.constant 0 : index
    %3 = vector.load %arg2[%c0_6, %c0_7, %c0_8, %c0_9] : memref<2x2x128x128xbf16, #tpu.memory_space<vmem>>, vector<1x1x128x128xbf16>
    %4 = vector.shape_cast %3 : vector<1x1x128x128xbf16> to vector<128x128xbf16>
    %cst = arith.constant dense<0.000000e+00> : vector<128x128xf32>
    %5 = tpu.matmul %2, %4, %cst {dimension_numbers = #tpu.dot_dimension_numbers<[1], [0], [0], [1], [0, 0, 1, 1], [], []>} : vector<128x128xbf16>, vector<128x128xbf16>, vector<128x128xf32> -> vector<128x128xf32>
    %c0_10 = arith.constant 0 : index
    %c0_11 = arith.constant 0 : index
    %c1 = arith.constant 1 : index
    %c0_12 = arith.constant 0 : index
    %c0_13 = arith.constant 0 : index
    %c0_14 = arith.constant 0 : index
    %c0_15 = arith.constant 0 : index
    %6 = vector.load %arg1[%c0_10, %c0_11, %c1, %c0_12, %c0_13, %c0_14, %c0_15] : memref<1x2x2x5x5x8x128xbf16, #tpu.memory_space<vmem>>, vector<1x1x1x4x4x8x128xbf16>
    %7 = vector.shape_cast %6 : vector<1x1x1x4x4x8x128xbf16> to vector<4x4x8x128xbf16>
    %8 = vector.shape_cast %7 : vector<4x4x8x128xbf16> to vector<128x128xbf16>
    %c0_16 = arith.constant 0 : index
    %c1_17 = arith.constant 1 : index
    %c0_18 = arith.constant 0 : index
    %c0_19 = arith.constant 0 : index
    %9 = vector.load %arg2[%c0_16, %c1_17, %c0_18, %c0_19] : memref<2x2x128x128xbf16, #tpu.memory_space<vmem>>, vector<1x1x128x128xbf16>
    %10 = vector.shape_cast %9 : vector<1x1x128x128xbf16> to vector<128x128xbf16>
    %cst_20 = arith.constant dense<0.000000e+00> : vector<128x128xf32>
    %11 = tpu.matmul %8, %10, %cst_20 {dimension_numbers = #tpu.dot_dimension_numbers<[1], [0], [0], [1], [0, 0, 1, 1], [], []>} : vector<128x128xbf16>, vector<128x128xbf16>, vector<128x128xf32> -> vector<128x128xf32>
    %12 = arith.addf %5, %11 : vector<128x128xf32>
    %c0_21 = arith.constant 0 : index
    %c1_22 = arith.constant 1 : index
    %c0_23 = arith.constant 0 : index
    %c0_24 = arith.constant 0 : index
    %c0_25 = arith.constant 0 : index
    %c0_26 = arith.constant 0 : index
    %c0_27 = arith.constant 0 : index
    %13 = vector.load %arg1[%c0_21, %c1_22, %c0_23, %c0_24, %c0_25, %c0_26, %c0_27] : memref<1x2x2x5x5x8x128xbf16, #tpu.memory_space<vmem>>, vector<1x1x1x4x4x8x128xbf16>
    %14 = vector.shape_cast %13 : vector<1x1x1x4x4x8x128xbf16> to vector<4x4x8x128xbf16>
    %15 = vector.shape_cast %14 : vector<4x4x8x128xbf16> to vector<128x128xbf16>
    %c1_28 = arith.constant 1 : index
    %c0_29 = arith.constant 0 : index
    %c0_30 = arith.constant 0 : index
    %c0_31 = arith.constant 0 : index
    %16 = vector.load %arg2[%c1_28, %c0_29, %c0_30, %c0_31] : memref<2x2x128x128xbf16, #tpu.memory_space<vmem>>, vector<1x1x128x128xbf16>
    %17 = vector.shape_cast %16 : vector<1x1x128x128xbf16> to vector<128x128xbf16>
    %cst_32 = arith.constant dense<0.000000e+00> : vector<128x128xf32>
    %18 = tpu.matmul %15, %17, %cst_32 {dimension_numbers = #tpu.dot_dimension_numbers<[1], [0], [0], [1], [0, 0, 1, 1], [], []>} : vector<128x128xbf16>, vector<128x128xbf16>, vector<128x128xf32> -> vector<128x128xf32>
    %19 = arith.addf %12, %18 : vector<128x128xf32>
    %c0_33 = arith.constant 0 : index
    %c1_34 = arith.constant 1 : index
    %c1_35 = arith.constant 1 : index
    %c0_36 = arith.constant 0 : index
    %c0_37 = arith.constant 0 : index
    %c0_38 = arith.constant 0 : index
    %c0_39 = arith.constant 0 : index
    %20 = vector.load %arg1[%c0_33, %c1_34, %c1_35, %c0_36, %c0_37, %c0_38, %c0_39] : memref<1x2x2x5x5x8x128xbf16, #tpu.memory_space<vmem>>, vector<1x1x1x4x4x8x128xbf16>
    %21 = vector.shape_cast %20 : vector<1x1x1x4x4x8x128xbf16> to vector<4x4x8x128xbf16>
    %22 = vector.shape_cast %21 : vector<4x4x8x128xbf16> to vector<128x128xbf16>
    %c1_40 = arith.constant 1 : index
    %c1_41 = arith.constant 1 : index
    %c0_42 = arith.constant 0 : index
    %c0_43 = arith.constant 0 : index
    %23 = vector.load %arg2[%c1_40, %c1_41, %c0_42, %c0_43] : memref<2x2x128x128xbf16, #tpu.memory_space<vmem>>, vector<1x1x128x128xbf16>
    %24 = vector.shape_cast %23 : vector<1x1x128x128xbf16> to vector<128x128xbf16>
    %cst_44 = arith.constant dense<0.000000e+00> : vector<128x128xf32>
    %25 = tpu.matmul %22, %24, %cst_44 {dimension_numbers = #tpu.dot_dimension_numbers<[1], [0], [0], [1], [0, 0, 1, 1], [], []>} : vector<128x128xbf16>, vector<128x128xbf16>, vector<128x128xf32> -> vector<128x128xf32>
    %26 = arith.addf %19, %25 : vector<128x128xf32>
    %c0_45 = arith.constant 0 : index
    %c0_46 = arith.constant 0 : index
    %27 = vector.load %arg3[%c0_45, %c0_46] : memref<1x128xf32, #tpu.memory_space<vmem>>, vector<1x128xf32>
    %28 = vector.broadcast %27 : vector<1x128xf32> to vector<128x128xf32>
    %29 = arith.addf %26, %28 : vector<128x128xf32>
    %cst_47 = arith.constant 0.000000e+00 : f32
    %30 = vector.broadcast %cst_47 : f32 to vector<128x128xf32>
    %31 = arith.maximumf %29, %30 : vector<128x128xf32>
    %32 = arith.truncf %31 : vector<128x128xf32> to vector<128x128xbf16>
    %33 = vector.shape_cast %32 : vector<128x128xbf16> to vector<4x4x8x128xbf16>
    %c0_48 = arith.constant 0 : index
    %c0_49 = arith.constant 0 : index
    %c0_50 = arith.constant 0 : index
    %c0_51 = arith.constant 0 : index
    %c0_52 = arith.constant 0 : index
    %34 = vector.load %arg13[%c0_48, %c0_49, %c0_50, %c0_51, %c0_52] : memref<2x4x4x8x256xbf16, #tpu.memory_space<vmem>>, vector<1x4x4x8x128xbf16>
    %35 = vector.shape_cast %34 : vector<1x4x4x8x128xbf16> to vector<4x4x8x128xbf16>
    %36 = vector.shape_cast %33 : vector<4x4x8x128xbf16> to vector<1x4x4x8x128xbf16>
    tpu.vector_store %arg13[%c0_48, %c0_49, %c0_50, %c0_51, %c0_52], %36 {strides = array<i32>} : memref<2x4x4x8x256xbf16, #tpu.memory_space<vmem>>, vector<1x4x4x8x128xbf16>,
    %c0_53 = arith.constant 0 : index
    %c0_54 = arith.constant 0 : index
    %c1_55 = arith.constant 1 : index
    %c0_56 = arith.constant 0 : index
    %c0_57 = arith.constant 0 : index
    %c0_58 = arith.constant 0 : index
    %c0_59 = arith.constant 0 : index
    %37 = vector.load %arg1[%c0_53, %c0_54, %c1_55, %c0_56, %c0_57, %c0_58, %c0_59] : memref<1x2x2x5x5x8x128xbf16, #tpu.memory_space<vmem>>, vector<1x1x1x4x4x8x128xbf16>
    %38 = vector.shape_cast %37 : vector<1x1x1x4x4x8x128xbf16> to vector<4x4x8x128xbf16>
    %39 = vector.shape_cast %38 : vector<4x4x8x128xbf16> to vector<128x128xbf16>
    %c0_60 = arith.constant 0 : index
    %c0_61 = arith.constant 0 : index
    %c0_62 = arith.constant 0 : index
    %c0_63 = arith.constant 0 : index
    %40 = vector.load %arg2[%c0_60, %c0_61, %c0_62, %c0_63] : memref<2x2x128x128xbf16, #tpu.memory_space<vmem>>, vector<1x1x128x128xbf16>
    %41 = vector.shape_cast %40 : vector<1x1x128x128xbf16> to vector<128x128xbf16>
    %cst_64 = arith.constant dense<0.000000e+00> : vector<128x128xf32>
    %42 = tpu.matmul %39, %41, %cst_64 {dimension_numbers = #tpu.dot_dimension_numbers<[1], [0], [0], [1], [0, 0, 1, 1], [], []>} : vector<128x128xbf16>, vector<128x128xbf16>, vector<128x128xf32> -> vector<128x128xf32>
    %c0_65 = arith.constant 0 : index
    %c0_66 = arith.constant 0 : index
    %c0_67 = arith.constant 0 : index
    %c0_68 = arith.constant 0 : index
    %c1_69 = arith.constant 1 : index
    %c0_70 = arith.constant 0 : index
    %c0_71 = arith.constant 0 : index
    %43 = vector.load %arg1[%c0_65, %c0_66, %c0_67, %c0_68, %c1_69, %c0_70, %c0_71] : memref<1x2x2x5x5x8x128xbf16, #tpu.memory_space<vmem>>, vector<1x1x1x4x4x8x128xbf16>
    %44 = vector.shape_cast %43 : vector<1x1x1x4x4x8x128xbf16> to vector<4x4x8x128xbf16>
    %45 = vector.shape_cast %44 : vector<4x4x8x128xbf16> to vector<128x128xbf16>
    %c0_72 = arith.constant 0 : index
    %c1_73 = arith.constant 1 : index
    %c0_74 = arith.constant 0 : index
    %c0_75 = arith.constant 0 : index
    %46 = vector.load %arg2[%c0_72, %c1_73, %c0_74, %c0_75] : memref<2x2x128x128xbf16, #tpu.memory_space<vmem>>, vector<1x1x128x128xbf16>
    %47 = vector.shape_cast %46 : vector<1x1x128x128xbf16> to vector<128x128xbf16>
    %cst_76 = arith.constant dense<0.000000e+00> : vector<128x128xf32>
    %48 = tpu.matmul %45, %47, %cst_76 {dimension_numbers = #tpu.dot_dimension_numbers<[1], [0], [0], [1], [0, 0, 1, 1], [], []>} : vector<128x128xbf16>, vector<128x128xbf16>, vector<128x128xf32> -> vector<128x128xf32>
    %49 = arith.addf %42, %48 : vector<128x128xf32>
    %c0_77 = arith.constant 0 : index
    %c1_78 = arith.constant 1 : index
    %c1_79 = arith.constant 1 : index
    %c0_80 = arith.constant 0 : index
    %c0_81 = arith.constant 0 : index
    %c0_82 = arith.constant 0 : index
    %c0_83 = arith.constant 0 : index
    %50 = vector.load %arg1[%c0_77, %c1_78, %c1_79, %c0_80, %c0_81, %c0_82, %c0_83] : memref<1x2x2x5x5x8x128xbf16, #tpu.memory_space<vmem>>, vector<1x1x1x4x4x8x128xbf16>
    %51 = vector.shape_cast %50 : vector<1x1x1x4x4x8x128xbf16> to vector<4x4x8x128xbf16>
    %52 = vector.shape_cast %51 : vector<4x4x8x128xbf16> to vector<128x128xbf16>
    %c1_84 = arith.constant 1 : index
    %c0_85 = arith.constant 0 : index
    %c0_86 = arith.constant 0 : index
    %c0_87 = arith.constant 0 : index
    %53 = vector.load %arg2[%c1_84, %c0_85, %c0_86, %c0_87] : memref<2x2x128x128xbf16, #tpu.memory_space<vmem>>, vector<1x1x128x128xbf16>
    %54 = vector.shape_cast %53 : vector<1x1x128x128xbf16> to vector<128x128xbf16>
    %cst_88 = arith.constant dense<0.000000e+00> : vector<128x128xf32>
    %55 = tpu.matmul %52, %54, %cst_88 {dimension_numbers = #tpu.dot_dimension_numbers<[1], [0], [0], [1], [0, 0, 1, 1], [], []>} : vector<128x128xbf16>, vector<128x128xbf16>, vector<128x128xf32> -> vector<128x128xf32>
    %56 = arith.addf %49, %55 : vector<128x128xf32>
    %c0_89 = arith.constant 0 : index
    %c1_90 = arith.constant 1 : index
    %c0_91 = arith.constant 0 : index
    %c0_92 = arith.constant 0 : index
    %c1_93 = arith.constant 1 : index
    %c0_94 = arith.constant 0 : index
    %c0_95 = arith.constant 0 : index
    %57 = vector.load %arg1[%c0_89, %c1_90, %c0_91, %c0_92, %c1_93, %c0_94, %c0_95] : memref<1x2x2x5x5x8x128xbf16, #tpu.memory_space<vmem>>, vector<1x1x1x4x4x8x128xbf16>
    %58 = vector.shape_cast %57 : vector<1x1x1x4x4x8x128xbf16> to vector<4x4x8x128xbf16>
    %59 = vector.shape_cast %58 : vector<4x4x8x128xbf16> to vector<128x128xbf16>
    %c1_96 = arith.constant 1 : index
    %c1_97 = arith.constant 1 : index
    %c0_98 = arith.constant 0 : index
    %c0_99 = arith.constant 0 : index
    %60 = vector.load %arg2[%c1_96, %c1_97, %c0_98, %c0_99] : memref<2x2x128x128xbf16, #tpu.memory_space<vmem>>, vector<1x1x128x128xbf16>
    %61 = vector.shape_cast %60 : vector<1x1x128x128xbf16> to vector<128x128xbf16>
    %cst_100 = arith.constant dense<0.000000e+00> : vector<128x128xf32>
    %62 = tpu.matmul %59, %61, %cst_100 {dimension_numbers = #tpu.dot_dimension_numbers<[1], [0], [0], [1], [0, 0, 1, 1], [], []>} : vector<128x128xbf16>, vector<128x128xbf16>, vector<128x128xf32> -> vector<128x128xf32>
    %63 = arith.addf %56, %62 : vector<128x128xf32>
    %c0_101 = arith.constant 0 : index
    %c0_102 = arith.constant 0 : index
    %64 = vector.load %arg3[%c0_101, %c0_102] : memref<1x128xf32, #tpu.memory_space<vmem>>, vector<1x128xf32>
    %65 = vector.broadcast %64 : vector<1x128xf32> to vector<128x128xf32>
    %66 = arith.addf %63, %65 : vector<128x128xf32>
    %cst_103 = arith.constant 0.000000e+00 : f32
    %67 = vector.broadcast %cst_103 : f32 to vector<128x128xf32>
    %68 = arith.maximumf %66, %67 : vector<128x128xf32>
    %69 = arith.truncf %68 : vector<128x128xf32> to vector<128x128xbf16>
    %70 = vector.shape_cast %69 : vector<128x128xbf16> to vector<4x4x8x128xbf16>
    %c0_104 = arith.constant 0 : index
    %c0_105 = arith.constant 0 : index
    %c0_106 = arith.constant 0 : index
    %c0_107 = arith.constant 0 : index
    %c128 = arith.constant 128 : index
    %71 = vector.load %arg13[%c0_104, %c0_105, %c0_106, %c0_107, %c128] : memref<2x4x4x8x256xbf16, #tpu.memory_space<vmem>>, vector<1x4x4x8x128xbf16>
    %72 = vector.shape_cast %71 : vector<1x4x4x8x128xbf16> to vector<4x4x8x128xbf16>
    %73 = vector.shape_cast %70 : vector<4x4x8x128xbf16> to vector<1x4x4x8x128xbf16>
    tpu.vector_store %arg13[%c0_104, %c0_105, %c0_106, %c0_107, %c128], %73 {strides = array<i32>} : memref<2x4x4x8x256xbf16, #tpu.memory_space<vmem>>, vector<1x4x4x8x128xbf16>,
    %c0_108 = arith.constant 0 : index
    %c1_109 = arith.constant 1 : index
    %c0_110 = arith.constant 0 : index
    %c0_111 = arith.constant 0 : index
    %c0_112 = arith.constant 0 : index
    %c0_113 = arith.constant 0 : index
    %c0_114 = arith.constant 0 : index
    %74 = vector.load %arg1[%c0_108, %c1_109, %c0_110, %c0_111, %c0_112, %c0_113, %c0_114] : memref<1x2x2x5x5x8x128xbf16, #tpu.memory_space<vmem>>, vector<1x1x1x4x4x8x128xbf16>
    %75 = vector.shape_cast %74 : vector<1x1x1x4x4x8x128xbf16> to vector<4x4x8x128xbf16>
    %76 = vector.shape_cast %75 : vector<4x4x8x128xbf16> to vector<128x128xbf16>
    %c0_115 = arith.constant 0 : index
    %c0_116 = arith.constant 0 : index
    %c0_117 = arith.constant 0 : index
    %c0_118 = arith.constant 0 : index
    %77 = vector.load %arg2[%c0_115, %c0_116, %c0_117, %c0_118] : memref<2x2x128x128xbf16, #tpu.memory_space<vmem>>, vector<1x1x128x128xbf16>
    %78 = vector.shape_cast %77 : vector<1x1x128x128xbf16> to vector<128x128xbf16>
    %cst_119 = arith.constant dense<0.000000e+00> : vector<128x128xf32>
    %79 = tpu.matmul %76, %78, %cst_119 {dimension_numbers = #tpu.dot_dimension_numbers<[1], [0], [0], [1], [0, 0, 1, 1], [], []>} : vector<128x128xbf16>, vector<128x128xbf16>, vector<128x128xf32> -> vector<128x128xf32>
    %c0_120 = arith.constant 0 : index
    %c1_121 = arith.constant 1 : index
    %c1_122 = arith.constant 1 : index
    %c0_123 = arith.constant 0 : index
    %c0_124 = arith.constant 0 : index
    %c0_125 = arith.constant 0 : index
    %c0_126 = arith.constant 0 : index
    %80 = vector.load %arg1[%c0_120, %c1_121, %c1_122, %c0_123, %c0_124, %c0_125, %c0_126] : memref<1x2x2x5x5x8x128xbf16, #tpu.memory_space<vmem>>, vector<1x1x1x4x4x8x128xbf16>
    %81 = vector.shape_cast %80 : vector<1x1x1x4x4x8x128xbf16> to vector<4x4x8x128xbf16>
    %82 = vector.shape_cast %81 : vector<4x4x8x128xbf16> to vector<128x128xbf16>
    %c0_127 = arith.constant 0 : index
    %c1_128 = arith.constant 1 : index
    %c0_129 = arith.constant 0 : index
    %c0_130 = arith.constant 0 : index
    %83 = vector.load %arg2[%c0_127, %c1_128, %c0_129, %c0_130] : memref<2x2x128x128xbf16, #tpu.memory_space<vmem>>, vector<1x1x128x128xbf16>
    %84 = vector.shape_cast %83 : vector<1x1x128x128xbf16> to vector<128x128xbf16>
    %cst_131 = arith.constant dense<0.000000e+00> : vector<128x128xf32>
    %85 = tpu.matmul %82, %84, %cst_131 {dimension_numbers = #tpu.dot_dimension_numbers<[1], [0], [0], [1], [0, 0, 1, 1], [], []>} : vector<128x128xbf16>, vector<128x128xbf16>, vector<128x128xf32> -> vector<128x128xf32>
    %86 = arith.addf %79, %85 : vector<128x128xf32>
    %c0_132 = arith.constant 0 : index
    %c0_133 = arith.constant 0 : index
    %c0_134 = arith.constant 0 : index
    %c1_135 = arith.constant 1 : index
    %c0_136 = arith.constant 0 : index
    %c0_137 = arith.constant 0 : index
    %c0_138 = arith.constant 0 : index
    %87 = vector.load %arg1[%c0_132, %c0_133, %c0_134, %c1_135, %c0_136, %c0_137, %c0_138] : memref<1x2x2x5x5x8x128xbf16, #tpu.memory_space<vmem>>, vector<1x1x1x4x4x8x128xbf16>
    %88 = vector.shape_cast %87 : vector<1x1x1x4x4x8x128xbf16> to vector<4x4x8x128xbf16>
    %89 = vector.shape_cast %88 : vector<4x4x8x128xbf16> to vector<128x128xbf16>
    %c1_139 = arith.constant 1 : index
    %c0_140 = arith.constant 0 : index
    %c0_141 = arith.constant 0 : index
    %c0_142 = arith.constant 0 : index
    %90 = vector.load %arg2[%c1_139, %c0_140, %c0_141, %c0_142] : memref<2x2x128x128xbf16, #tpu.memory_space<vmem>>, vector<1x1x128x128xbf16>
    %91 = vector.shape_cast %90 : vector<1x1x128x128xbf16> to vector<128x128xbf16>
    %cst_143 = arith.constant dense<0.000000e+00> : vector<128x128xf32>
    %92 = tpu.matmul %89, %91, %cst_143 {dimension_numbers = #tpu.dot_dimension_numbers<[1], [0], [0], [1], [0, 0, 1, 1], [], []>} : vector<128x128xbf16>, vector<128x128xbf16>, vector<128x128xf32> -> vector<128x128xf32>
    %93 = arith.addf %86, %92 : vector<128x128xf32>
    %c0_144 = arith.constant 0 : index
    %c0_145 = arith.constant 0 : index
    %c1_146 = arith.constant 1 : index
    %c1_147 = arith.constant 1 : index
    %c0_148 = arith.constant 0 : index
    %c0_149 = arith.constant 0 : index
    %c0_150 = arith.constant 0 : index
    %94 = vector.load %arg1[%c0_144, %c0_145, %c1_146, %c1_147, %c0_148, %c0_149, %c0_150] : memref<1x2x2x5x5x8x128xbf16, #tpu.memory_space<vmem>>, vector<1x1x1x4x4x8x128xbf16>
    %95 = vector.shape_cast %94 : vector<1x1x1x4x4x8x128xbf16> to vector<4x4x8x128xbf16>
    %96 = vector.shape_cast %95 : vector<4x4x8x128xbf16> to vector<128x128xbf16>
    %c1_151 = arith.constant 1 : index
    %c1_152 = arith.constant 1 : index
    %c0_153 = arith.constant 0 : index
    %c0_154 = arith.constant 0 : index
    %97 = vector.load %arg2[%c1_151, %c1_152, %c0_153, %c0_154] : memref<2x2x128x128xbf16, #tpu.memory_space<vmem>>, vector<1x1x128x128xbf16>
    %98 = vector.shape_cast %97 : vector<1x1x128x128xbf16> to vector<128x128xbf16>
    %cst_155 = arith.constant dense<0.000000e+00> : vector<128x128xf32>
    %99 = tpu.matmul %96, %98, %cst_155 {dimension_numbers = #tpu.dot_dimension_numbers<[1], [0], [0], [1], [0, 0, 1, 1], [], []>} : vector<128x128xbf16>, vector<128x128xbf16>, vector<128x128xf32> -> vector<128x128xf32>
    %100 = arith.addf %93, %99 : vector<128x128xf32>
    %c0_156 = arith.constant 0 : index
    %c0_157 = arith.constant 0 : index
    %101 = vector.load %arg3[%c0_156, %c0_157] : memref<1x128xf32, #tpu.memory_space<vmem>>, vector<1x128xf32>
    %102 = vector.broadcast %101 : vector<1x128xf32> to vector<128x128xf32>
    %103 = arith.addf %100, %102 : vector<128x128xf32>
    %cst_158 = arith.constant 0.000000e+00 : f32
    %104 = vector.broadcast %cst_158 : f32 to vector<128x128xf32>
    %105 = arith.maximumf %103, %104 : vector<128x128xf32>
    %106 = arith.truncf %105 : vector<128x128xf32> to vector<128x128xbf16>
    %107 = vector.shape_cast %106 : vector<128x128xbf16> to vector<4x4x8x128xbf16>
    %c1_159 = arith.constant 1 : index
    %c0_160 = arith.constant 0 : index
    %c0_161 = arith.constant 0 : index
    %c0_162 = arith.constant 0 : index
    %c0_163 = arith.constant 0 : index
    %108 = vector.load %arg13[%c1_159, %c0_160, %c0_161, %c0_162, %c0_163] : memref<2x4x4x8x256xbf16, #tpu.memory_space<vmem>>, vector<1x4x4x8x128xbf16>
    %109 = vector.shape_cast %108 : vector<1x4x4x8x128xbf16> to vector<4x4x8x128xbf16>
    %110 = vector.shape_cast %107 : vector<4x4x8x128xbf16> to vector<1x4x4x8x128xbf16>
    tpu.vector_store %arg13[%c1_159, %c0_160, %c0_161, %c0_162, %c0_163], %110 {strides = array<i32>} : memref<2x4x4x8x256xbf16, #tpu.memory_space<vmem>>, vector<1x4x4x8x128xbf16>,
    %c0_164 = arith.constant 0 : index
    %c1_165 = arith.constant 1 : index
    %c1_166 = arith.constant 1 : index
    %c0_167 = arith.constant 0 : index
    %c0_168 = arith.constant 0 : index
    %c0_169 = arith.constant 0 : index
    %c0_170 = arith.constant 0 : index
    %111 = vector.load %arg1[%c0_164, %c1_165, %c1_166, %c0_167, %c0_168, %c0_169, %c0_170] : memref<1x2x2x5x5x8x128xbf16, #tpu.memory_space<vmem>>, vector<1x1x1x4x4x8x128xbf16>
    %112 = vector.shape_cast %111 : vector<1x1x1x4x4x8x128xbf16> to vector<4x4x8x128xbf16>
    %113 = vector.shape_cast %112 : vector<4x4x8x128xbf16> to vector<128x128xbf16>
    %c0_171 = arith.constant 0 : index
    %c0_172 = arith.constant 0 : index
    %c0_173 = arith.constant 0 : index
    %c0_174 = arith.constant 0 : index
    %114 = vector.load %arg2[%c0_171, %c0_172, %c0_173, %c0_174] : memref<2x2x128x128xbf16, #tpu.memory_space<vmem>>, vector<1x1x128x128xbf16>
    %115 = vector.shape_cast %114 : vector<1x1x128x128xbf16> to vector<128x128xbf16>
    %cst_175 = arith.constant dense<0.000000e+00> : vector<128x128xf32>
    %116 = tpu.matmul %113, %115, %cst_175 {dimension_numbers = #tpu.dot_dimension_numbers<[1], [0], [0], [1], [0, 0, 1, 1], [], []>} : vector<128x128xbf16>, vector<128x128xbf16>, vector<128x128xf32> -> vector<128x128xf32>
    %c0_176 = arith.constant 0 : index
    %c1_177 = arith.constant 1 : index
    %c0_178 = arith.constant 0 : index
    %c0_179 = arith.constant 0 : index
    %c1_180 = arith.constant 1 : index
    %c0_181 = arith.constant 0 : index
    %c0_182 = arith.constant 0 : index
    %117 = vector.load %arg1[%c0_176, %c1_177, %c0_178, %c0_179, %c1_180, %c0_181, %c0_182] : memref<1x2x2x5x5x8x128xbf16, #tpu.memory_space<vmem>>, vector<1x1x1x4x4x8x128xbf16>
    %118 = vector.shape_cast %117 : vector<1x1x1x4x4x8x128xbf16> to vector<4x4x8x128xbf16>
    %119 = vector.shape_cast %118 : vector<4x4x8x128xbf16> to vector<128x128xbf16>
    %c0_183 = arith.constant 0 : index
    %c1_184 = arith.constant 1 : index
    %c0_185 = arith.constant 0 : index
    %c0_186 = arith.constant 0 : index
    %120 = vector.load %arg2[%c0_183, %c1_184, %c0_185, %c0_186] : memref<2x2x128x128xbf16, #tpu.memory_space<vmem>>, vector<1x1x128x128xbf16>
    %121 = vector.shape_cast %120 : vector<1x1x128x128xbf16> to vector<128x128xbf16>
    %cst_187 = arith.constant dense<0.000000e+00> : vector<128x128xf32>
    %122 = tpu.matmul %119, %121, %cst_187 {dimension_numbers = #tpu.dot_dimension_numbers<[1], [0], [0], [1], [0, 0, 1, 1], [], []>} : vector<128x128xbf16>, vector<128x128xbf16>, vector<128x128xf32> -> vector<128x128xf32>
    %123 = arith.addf %116, %122 : vector<128x128xf32>
    %c0_188 = arith.constant 0 : index
    %c0_189 = arith.constant 0 : index
    %c1_190 = arith.constant 1 : index
    %c1_191 = arith.constant 1 : index
    %c0_192 = arith.constant 0 : index
    %c0_193 = arith.constant 0 : index
    %c0_194 = arith.constant 0 : index
    %124 = vector.load %arg1[%c0_188, %c0_189, %c1_190, %c1_191, %c0_192, %c0_193, %c0_194] : memref<1x2x2x5x5x8x128xbf16, #tpu.memory_space<vmem>>, vector<1x1x1x4x4x8x128xbf16>
    %125 = vector.shape_cast %124 : vector<1x1x1x4x4x8x128xbf16> to vector<4x4x8x128xbf16>
    %126 = vector.shape_cast %125 : vector<4x4x8x128xbf16> to vector<128x128xbf16>
    %c1_195 = arith.constant 1 : index
    %c0_196 = arith.constant 0 : index
    %c0_197 = arith.constant 0 : index
    %c0_198 = arith.constant 0 : index
    %127 = vector.load %arg2[%c1_195, %c0_196, %c0_197, %c0_198] : memref<2x2x128x128xbf16, #tpu.memory_space<vmem>>, vector<1x1x128x128xbf16>
    %128 = vector.shape_cast %127 : vector<1x1x128x128xbf16> to vector<128x128xbf16>
    %cst_199 = arith.constant dense<0.000000e+00> : vector<128x128xf32>
    %129 = tpu.matmul %126, %128, %cst_199 {dimension_numbers = #tpu.dot_dimension_numbers<[1], [0], [0], [1], [0, 0, 1, 1], [], []>} : vector<128x128xbf16>, vector<128x128xbf16>, vector<128x128xf32> -> vector<128x128xf32>
    %130 = arith.addf %123, %129 : vector<128x128xf32>
    %c0_200 = arith.constant 0 : index
    %c0_201 = arith.constant 0 : index
    %c0_202 = arith.constant 0 : index
    %c1_203 = arith.constant 1 : index
    %c1_204 = arith.constant 1 : index
    %c0_205 = arith.constant 0 : index
    %c0_206 = arith.constant 0 : index
    %131 = vector.load %arg1[%c0_200, %c0_201, %c0_202, %c1_203, %c1_204, %c0_205, %c0_206] : memref<1x2x2x5x5x8x128xbf16, #tpu.memory_space<vmem>>, vector<1x1x1x4x4x8x128xbf16>
    %132 = vector.shape_cast %131 : vector<1x1x1x4x4x8x128xbf16> to vector<4x4x8x128xbf16>
    %133 = vector.shape_cast %132 : vector<4x4x8x128xbf16> to vector<128x128xbf16>
    %c1_207 = arith.constant 1 : index
    %c1_208 = arith.constant 1 : index
    %c0_209 = arith.constant 0 : index
    %c0_210 = arith.constant 0 : index
    %134 = vector.load %arg2[%c1_207, %c1_208, %c0_209, %c0_210] : memref<2x2x128x128xbf16, #tpu.memory_space<vmem>>, vector<1x1x128x128xbf16>
    %135 = vector.shape_cast %134 : vector<1x1x128x128xbf16> to vector<128x128xbf16>
    %cst_211 = arith.constant dense<0.000000e+00> : vector<128x128xf32>
    %136 = tpu.matmul %133, %135, %cst_211 {dimension_numbers = #tpu.dot_dimension_numbers<[1], [0], [0], [1], [0, 0, 1, 1], [], []>} : vector<128x128xbf16>, vector<128x128xbf16>, vector<128x128xf32> -> vector<128x128xf32>
    %137 = arith.addf %130, %136 : vector<128x128xf32>
    %c0_212 = arith.constant 0 : index
    %c0_213 = arith.constant 0 : index
    %138 = vector.load %arg3[%c0_212, %c0_213] : memref<1x128xf32, #tpu.memory_space<vmem>>, vector<1x128xf32>
    %139 = vector.broadcast %138 : vector<1x128xf32> to vector<128x128xf32>
    %140 = arith.addf %137, %139 : vector<128x128xf32>
    %cst_214 = arith.constant 0.000000e+00 : f32
    %141 = vector.broadcast %cst_214 : f32 to vector<128x128xf32>
    %142 = arith.maximumf %140, %141 : vector<128x128xf32>
    %143 = arith.truncf %142 : vector<128x128xf32> to vector<128x128xbf16>
    %144 = vector.shape_cast %143 : vector<128x128xbf16> to vector<4x4x8x128xbf16>
    %c1_215 = arith.constant 1 : index
    %c0_216 = arith.constant 0 : index
    %c0_217 = arith.constant 0 : index
    %c0_218 = arith.constant 0 : index
    %c128_219 = arith.constant 128 : index
    %145 = vector.load %arg13[%c1_215, %c0_216, %c0_217, %c0_218, %c128_219] : memref<2x4x4x8x256xbf16, #tpu.memory_space<vmem>>, vector<1x4x4x8x128xbf16>
    %146 = vector.shape_cast %145 : vector<1x4x4x8x128xbf16> to vector<4x4x8x128xbf16>
    %147 = vector.shape_cast %144 : vector<4x4x8x128xbf16> to vector<1x4x4x8x128xbf16>
    tpu.vector_store %arg13[%c1_215, %c0_216, %c0_217, %c0_218, %c128_219], %147 {strides = array<i32>} : memref<2x4x4x8x256xbf16, #tpu.memory_space<vmem>>, vector<1x4x4x8x128xbf16>,
    %c0_220 = arith.constant 0 : index
    %c0_221 = arith.constant 0 : index
    %c0_222 = arith.constant 0 : index
    %c0_223 = arith.constant 0 : index
    %c0_224 = arith.constant 0 : index
    %148 = vector.load %arg13[%c0_220, %c0_221, %c0_222, %c0_223, %c0_224] : memref<2x4x4x8x256xbf16, #tpu.memory_space<vmem>>, vector<1x3x3x8x256xbf16>
    %149 = vector.shape_cast %148 : vector<1x3x3x8x256xbf16> to vector<3x3x8x256xbf16>
    %150 = vector.shape_cast %149 : vector<3x3x8x256xbf16> to vector<72x256xbf16>
    %c0_225 = arith.constant 0 : index
    %c0_226 = arith.constant 0 : index
    %c0_227 = arith.constant 0 : index
    %c0_228 = arith.constant 0 : index
    %151 = vector.load %arg4[%c0_225, %c0_226, %c0_227, %c0_228] : memref<4x2x256x128xbf16, #tpu.memory_space<vmem>>, vector<1x1x256x128xbf16>
    %152 = vector.shape_cast %151 : vector<1x1x256x128xbf16> to vector<256x128xbf16>
    %cst_229 = arith.constant dense<0.000000e+00> : vector<72x128xf32>
    %153 = tpu.matmul %150, %152, %cst_229 {dimension_numbers = #tpu.dot_dimension_numbers<[1], [0], [0], [1], [0, 0, 1, 1], [], []>} : vector<72x256xbf16>, vector<256x128xbf16>, vector<72x128xf32> -> vector<72x128xf32>
    %c0_230 = arith.constant 0 : index
    %c0_231 = arith.constant 0 : index
    %c1_232 = arith.constant 1 : index
    %c0_233 = arith.constant 0 : index
    %c0_234 = arith.constant 0 : index
    %154 = vector.load %arg13[%c0_230, %c0_231, %c1_232, %c0_233, %c0_234] : memref<2x4x4x8x256xbf16, #tpu.memory_space<vmem>>, vector<1x3x3x8x256xbf16>
    %155 = vector.shape_cast %154 : vector<1x3x3x8x256xbf16> to vector<3x3x8x256xbf16>
    %156 = vector.shape_cast %155 : vector<3x3x8x256xbf16> to vector<72x256xbf16>
    %c0_235 = arith.constant 0 : index
    %c1_236 = arith.constant 1 : index
    %c0_237 = arith.constant 0 : index
    %c0_238 = arith.constant 0 : index
    %157 = vector.load %arg4[%c0_235, %c1_236, %c0_237, %c0_238] : memref<4x2x256x128xbf16, #tpu.memory_space<vmem>>, vector<1x1x256x128xbf16>
    %158 = vector.shape_cast %157 : vector<1x1x256x128xbf16> to vector<256x128xbf16>
    %cst_239 = arith.constant dense<0.000000e+00> : vector<72x128xf32>
    %159 = tpu.matmul %156, %158, %cst_239 {dimension_numbers = #tpu.dot_dimension_numbers<[1], [0], [0], [1], [0, 0, 1, 1], [], []>} : vector<72x256xbf16>, vector<256x128xbf16>, vector<72x128xf32> -> vector<72x128xf32>
    %160 = arith.addf %153, %159 : vector<72x128xf32>
    %c1_240 = arith.constant 1 : index
    %c0_241 = arith.constant 0 : index
    %c0_242 = arith.constant 0 : index
    %c0_243 = arith.constant 0 : index
    %c0_244 = arith.constant 0 : index
    %161 = vector.load %arg13[%c1_240, %c0_241, %c0_242, %c0_243, %c0_244] : memref<2x4x4x8x256xbf16, #tpu.memory_space<vmem>>, vector<1x3x3x8x256xbf16>
    %162 = vector.shape_cast %161 : vector<1x3x3x8x256xbf16> to vector<3x3x8x256xbf16>
    %163 = vector.shape_cast %162 : vector<3x3x8x256xbf16> to vector<72x256xbf16>
    %c1_245 = arith.constant 1 : index
    %c0_246 = arith.constant 0 : index
    %c0_247 = arith.constant 0 : index
    %c0_248 = arith.constant 0 : index
    %164 = vector.load %arg4[%c1_245, %c0_246, %c0_247, %c0_248] : memref<4x2x256x128xbf16, #tpu.memory_space<vmem>>, vector<1x1x256x128xbf16>
    %165 = vector.shape_cast %164 : vector<1x1x256x128xbf16> to vector<256x128xbf16>
    %cst_249 = arith.constant dense<0.000000e+00> : vector<72x128xf32>
    %166 = tpu.matmul %163, %165, %cst_249 {dimension_numbers = #tpu.dot_dimension_numbers<[1], [0], [0], [1], [0, 0, 1, 1], [], []>} : vector<72x256xbf16>, vector<256x128xbf16>, vector<72x128xf32> -> vector<72x128xf32>
    %167 = arith.addf %160, %166 : vector<72x128xf32>
    %c1_250 = arith.constant 1 : index
    %c0_251 = arith.constant 0 : index
    %c1_252 = arith.constant 1 : index
    %c0_253 = arith.constant 0 : index
    %c0_254 = arith.constant 0 : index
    %168 = vector.load %arg13[%c1_250, %c0_251, %c1_252, %c0_253, %c0_254] : memref<2x4x4x8x256xbf16, #tpu.memory_space<vmem>>, vector<1x3x3x8x256xbf16>
    %169 = vector.shape_cast %168 : vector<1x3x3x8x256xbf16> to vector<3x3x8x256xbf16>
    %170 = vector.shape_cast %169 : vector<3x3x8x256xbf16> to vector<72x256xbf16>
    %c1_255 = arith.constant 1 : index
    %c1_256 = arith.constant 1 : index
    %c0_257 = arith.constant 0 : index
    %c0_258 = arith.constant 0 : index
    %171 = vector.load %arg4[%c1_255, %c1_256, %c0_257, %c0_258] : memref<4x2x256x128xbf16, #tpu.memory_space<vmem>>, vector<1x1x256x128xbf16>
    %172 = vector.shape_cast %171 : vector<1x1x256x128xbf16> to vector<256x128xbf16>
    %cst_259 = arith.constant dense<0.000000e+00> : vector<72x128xf32>
    %173 = tpu.matmul %170, %172, %cst_259 {dimension_numbers = #tpu.dot_dimension_numbers<[1], [0], [0], [1], [0, 0, 1, 1], [], []>} : vector<72x256xbf16>, vector<256x128xbf16>, vector<72x128xf32> -> vector<72x128xf32>
    %174 = arith.addf %167, %173 : vector<72x128xf32>
    %c0_260 = arith.constant 0 : index
    %c1_261 = arith.constant 1 : index
    %c0_262 = arith.constant 0 : index
    %c0_263 = arith.constant 0 : index
    %c0_264 = arith.constant 0 : index
    %175 = vector.load %arg13[%c0_260, %c1_261, %c0_262, %c0_263, %c0_264] : memref<2x4x4x8x256xbf16, #tpu.memory_space<vmem>>, vector<1x3x3x8x256xbf16>
    %176 = vector.shape_cast %175 : vector<1x3x3x8x256xbf16> to vector<3x3x8x256xbf16>
    %177 = vector.shape_cast %176 : vector<3x3x8x256xbf16> to vector<72x256xbf16>
    %c2 = arith.constant 2 : index
    %c0_265 = arith.constant 0 : index
    %c0_266 = arith.constant 0 : index
    %c0_267 = arith.constant 0 : index
    %178 = vector.load %arg4[%c2, %c0_265, %c0_266, %c0_267] : memref<4x2x256x128xbf16, #tpu.memory_space<vmem>>, vector<1x1x256x128xbf16>
    %179 = vector.shape_cast %178 : vector<1x1x256x128xbf16> to vector<256x128xbf16>
    %cst_268 = arith.constant dense<0.000000e+00> : vector<72x128xf32>
    %180 = tpu.matmul %177, %179, %cst_268 {dimension_numbers = #tpu.dot_dimension_numbers<[1], [0], [0], [1], [0, 0, 1, 1], [], []>} : vector<72x256xbf16>, vector<256x128xbf16>, vector<72x128xf32> -> vector<72x128xf32>
    %181 = arith.addf %174, %180 : vector<72x128xf32>
    %c0_269 = arith.constant 0 : index
    %c1_270 = arith.constant 1 : index
    %c1_271 = arith.constant 1 : index
    %c0_272 = arith.constant 0 : index
    %c0_273 = arith.constant 0 : index
    %182 = vector.load %arg13[%c0_269, %c1_270, %c1_271, %c0_272, %c0_273] : memref<2x4x4x8x256xbf16, #tpu.memory_space<vmem>>, vector<1x3x3x8x256xbf16>
    %183 = vector.shape_cast %182 : vector<1x3x3x8x256xbf16> to vector<3x3x8x256xbf16>
    %184 = vector.shape_cast %183 : vector<3x3x8x256xbf16> to vector<72x256xbf16>
    %c2_274 = arith.constant 2 : index
    %c1_275 = arith.constant 1 : index
    %c0_276 = arith.constant 0 : index
    %c0_277 = arith.constant 0 : index
    %185 = vector.load %arg4[%c2_274, %c1_275, %c0_276, %c0_277] : memref<4x2x256x128xbf16, #tpu.memory_space<vmem>>, vector<1x1x256x128xbf16>
    %186 = vector.shape_cast %185 : vector<1x1x256x128xbf16> to vector<256x128xbf16>
    %cst_278 = arith.constant dense<0.000000e+00> : vector<72x128xf32>
    %187 = tpu.matmul %184, %186, %cst_278 {dimension_numbers = #tpu.dot_dimension_numbers<[1], [0], [0], [1], [0, 0, 1, 1], [], []>} : vector<72x256xbf16>, vector<256x128xbf16>, vector<72x128xf32> -> vector<72x128xf32>
    %188 = arith.addf %181, %187 : vector<72x128xf32>
    %c1_279 = arith.constant 1 : index
    %c1_280 = arith.constant 1 : index
    %c0_281 = arith.constant 0 : index
    %c0_282 = arith.constant 0 : index
    %c0_283 = arith.constant 0 : index
    %189 = vector.load %arg13[%c1_279, %c1_280, %c0_281, %c0_282, %c0_283] : memref<2x4x4x8x256xbf16, #tpu.memory_space<vmem>>, vector<1x3x3x8x256xbf16>
    %190 = vector.shape_cast %189 : vector<1x3x3x8x256xbf16> to vector<3x3x8x256xbf16>
    %191 = vector.shape_cast %190 : vector<3x3x8x256xbf16> to vector<72x256xbf16>
    %c3 = arith.constant 3 : index
    %c0_284 = arith.constant 0 : index
    %c0_285 = arith.constant 0 : index
    %c0_286 = arith.constant 0 : index
    %192 = vector.load %arg4[%c3, %c0_284, %c0_285, %c0_286] : memref<4x2x256x128xbf16, #tpu.memory_space<vmem>>, vector<1x1x256x128xbf16>
    %193 = vector.shape_cast %192 : vector<1x1x256x128xbf16> to vector<256x128xbf16>
    %cst_287 = arith.constant dense<0.000000e+00> : vector<72x128xf32>
    %194 = tpu.matmul %191, %193, %cst_287 {dimension_numbers = #tpu.dot_dimension_numbers<[1], [0], [0], [1], [0, 0, 1, 1], [], []>} : vector<72x256xbf16>, vector<256x128xbf16>, vector<72x128xf32> -> vector<72x128xf32>
    %195 = arith.addf %188, %194 : vector<72x128xf32>
    %c1_288 = arith.constant 1 : index
    %c1_289 = arith.constant 1 : index
    %c1_290 = arith.constant 1 : index
    %c0_291 = arith.constant 0 : index
    %c0_292 = arith.constant 0 : index
    %196 = vector.load %arg13[%c1_288, %c1_289, %c1_290, %c0_291, %c0_292] : memref<2x4x4x8x256xbf16, #tpu.memory_space<vmem>>, vector<1x3x3x8x256xbf16>
    %197 = vector.shape_cast %196 : vector<1x3x3x8x256xbf16> to vector<3x3x8x256xbf16>
    %198 = vector.shape_cast %197 : vector<3x3x8x256xbf16> to vector<72x256xbf16>
    %c3_293 = arith.constant 3 : index
    %c1_294 = arith.constant 1 : index
    %c0_295 = arith.constant 0 : index
    %c0_296 = arith.constant 0 : index
    %199 = vector.load %arg4[%c3_293, %c1_294, %c0_295, %c0_296] : memref<4x2x256x128xbf16, #tpu.memory_space<vmem>>, vector<1x1x256x128xbf16>
    %200 = vector.shape_cast %199 : vector<1x1x256x128xbf16> to vector<256x128xbf16>
    %cst_297 = arith.constant dense<0.000000e+00> : vector<72x128xf32>
    %201 = tpu.matmul %198, %200, %cst_297 {dimension_numbers = #tpu.dot_dimension_numbers<[1], [0], [0], [1], [0, 0, 1, 1], [], []>} : vector<72x256xbf16>, vector<256x128xbf16>, vector<72x128xf32> -> vector<72x128xf32>
    %202 = arith.addf %195, %201 : vector<72x128xf32>
    %c0_298 = arith.constant 0 : index
    %c0_299 = arith.constant 0 : index
    %203 = vector.load %arg5[%c0_298, %c0_299] : memref<1x128xf32, #tpu.memory_space<vmem>>, vector<1x128xf32>
    %204 = vector.broadcast %203 : vector<1x128xf32> to vector<72x128xf32>
    %205 = arith.addf %202, %204 : vector<72x128xf32>
    %cst_300 = arith.constant 0.000000e+00 : f32
    %206 = vector.broadcast %cst_300 : f32 to vector<72x128xf32>
    %207 = arith.maximumf %205, %206 : vector<72x128xf32>
    %208 = arith.truncf %207 : vector<72x128xf32> to vector<72x128xbf16>
    %209 = vector.shape_cast %208 : vector<72x128xbf16> to vector<3x3x8x128xbf16>
    %c0_301 = arith.constant 0 : index
    %c0_302 = arith.constant 0 : index
    %c0_303 = arith.constant 0 : index
    %c0_304 = arith.constant 0 : index
    %210 = vector.load %arg14[%c0_301, %c0_302, %c0_303, %c0_304] : memref<3x3x8x128xbf16, #tpu.memory_space<vmem>>, vector<3x3x8x128xbf16>
    tpu.vector_store %arg14[%c0_301, %c0_302, %c0_303, %c0_304], %209 {strides = array<i32>} : memref<3x3x8x128xbf16, #tpu.memory_space<vmem>>, vector<3x3x8x128xbf16>,
    %c0_305 = arith.constant 0 : index
    %c0_306 = arith.constant 0 : index
    %c0_307 = arith.constant 0 : index
    %c0_308 = arith.constant 0 : index
    %211 = vector.load %arg14[%c0_305, %c0_306, %c0_307, %c0_308] : memref<3x3x8x128xbf16, #tpu.memory_space<vmem>>, vector<1x1x8x128xbf16>
    %212 = vector.shape_cast %211 : vector<1x1x8x128xbf16> to vector<8x128xbf16>
    %c0_309 = arith.constant 0 : index
    %c0_310 = arith.constant 0 : index
    %c0_311 = arith.constant 0 : index
    %c0_312 = arith.constant 0 : index
    %213 = vector.load %arg6[%c0_309, %c0_310, %c0_311, %c0_312] : memref<3x3x128x128xbf16, #tpu.memory_space<vmem>>, vector<1x1x128x128xbf16>
    %214 = vector.shape_cast %213 : vector<1x1x128x128xbf16> to vector<128x128xbf16>
    %cst_313 = arith.constant dense<0.000000e+00> : vector<8x128xf32>
    %215 = tpu.matmul %212, %214, %cst_313 {dimension_numbers = #tpu.dot_dimension_numbers<[1], [0], [0], [1], [0, 0, 1, 1], [], []>} : vector<8x128xbf16>, vector<128x128xbf16>, vector<8x128xf32> -> vector<8x128xf32>
    %c0_314 = arith.constant 0 : index
    %c1_315 = arith.constant 1 : index
    %c0_316 = arith.constant 0 : index
    %c0_317 = arith.constant 0 : index
    %216 = vector.load %arg14[%c0_314, %c1_315, %c0_316, %c0_317] : memref<3x3x8x128xbf16, #tpu.memory_space<vmem>>, vector<1x1x8x128xbf16>
    %217 = vector.shape_cast %216 : vector<1x1x8x128xbf16> to vector<8x128xbf16>
    %c0_318 = arith.constant 0 : index
    %c1_319 = arith.constant 1 : index
    %c0_320 = arith.constant 0 : index
    %c0_321 = arith.constant 0 : index
    %218 = vector.load %arg6[%c0_318, %c1_319, %c0_320, %c0_321] : memref<3x3x128x128xbf16, #tpu.memory_space<vmem>>, vector<1x1x128x128xbf16>
    %219 = vector.shape_cast %218 : vector<1x1x128x128xbf16> to vector<128x128xbf16>
    %cst_322 = arith.constant dense<0.000000e+00> : vector<8x128xf32>
    %220 = tpu.matmul %217, %219, %cst_322 {dimension_numbers = #tpu.dot_dimension_numbers<[1], [0], [0], [1], [0, 0, 1, 1], [], []>} : vector<8x128xbf16>, vector<128x128xbf16>, vector<8x128xf32> -> vector<8x128xf32>
    %221 = arith.addf %215, %220 : vector<8x128xf32>
    %c0_323 = arith.constant 0 : index
    %c2_324 = arith.constant 2 : index
    %c0_325 = arith.constant 0 : index
    %c0_326 = arith.constant 0 : index
    %222 = vector.load %arg14[%c0_323, %c2_324, %c0_325, %c0_326] : memref<3x3x8x128xbf16, #tpu.memory_space<vmem>>, vector<1x1x8x128xbf16>
    %223 = vector.shape_cast %222 : vector<1x1x8x128xbf16> to vector<8x128xbf16>
    %c0_327 = arith.constant 0 : index
    %c2_328 = arith.constant 2 : index
    %c0_329 = arith.constant 0 : index
    %c0_330 = arith.constant 0 : index
    %224 = vector.load %arg6[%c0_327, %c2_328, %c0_329, %c0_330] : memref<3x3x128x128xbf16, #tpu.memory_space<vmem>>, vector<1x1x128x128xbf16>
    %225 = vector.shape_cast %224 : vector<1x1x128x128xbf16> to vector<128x128xbf16>
    %cst_331 = arith.constant dense<0.000000e+00> : vector<8x128xf32>
    %226 = tpu.matmul %223, %225, %cst_331 {dimension_numbers = #tpu.dot_dimension_numbers<[1], [0], [0], [1], [0, 0, 1, 1], [], []>} : vector<8x128xbf16>, vector<128x128xbf16>, vector<8x128xf32> -> vector<8x128xf32>
    %227 = arith.addf %221, %226 : vector<8x128xf32>
    %c1_332 = arith.constant 1 : index
    %c0_333 = arith.constant 0 : index
    %c0_334 = arith.constant 0 : index
    %c0_335 = arith.constant 0 : index
    %228 = vector.load %arg14[%c1_332, %c0_333, %c0_334, %c0_335] : memref<3x3x8x128xbf16, #tpu.memory_space<vmem>>, vector<1x1x8x128xbf16>
    %229 = vector.shape_cast %228 : vector<1x1x8x128xbf16> to vector<8x128xbf16>
    %c1_336 = arith.constant 1 : index
    %c0_337 = arith.constant 0 : index
    %c0_338 = arith.constant 0 : index
    %c0_339 = arith.constant 0 : index
    %230 = vector.load %arg6[%c1_336, %c0_337, %c0_338, %c0_339] : memref<3x3x128x128xbf16, #tpu.memory_space<vmem>>, vector<1x1x128x128xbf16>
    %231 = vector.shape_cast %230 : vector<1x1x128x128xbf16> to vector<128x128xbf16>
    %cst_340 = arith.constant dense<0.000000e+00> : vector<8x128xf32>
    %232 = tpu.matmul %229, %231, %cst_340 {dimension_numbers = #tpu.dot_dimension_numbers<[1], [0], [0], [1], [0, 0, 1, 1], [], []>} : vector<8x128xbf16>, vector<128x128xbf16>, vector<8x128xf32> -> vector<8x128xf32>
    %233 = arith.addf %227, %232 : vector<8x128xf32>
    %c1_341 = arith.constant 1 : index
    %c1_342 = arith.constant 1 : index
    %c0_343 = arith.constant 0 : index
    %c0_344 = arith.constant 0 : index
    %234 = vector.load %arg14[%c1_341, %c1_342, %c0_343, %c0_344] : memref<3x3x8x128xbf16, #tpu.memory_space<vmem>>, vector<1x1x8x128xbf16>
    %235 = vector.shape_cast %234 : vector<1x1x8x128xbf16> to vector<8x128xbf16>
    %c1_345 = arith.constant 1 : index
    %c1_346 = arith.constant 1 : index
    %c0_347 = arith.constant 0 : index
    %c0_348 = arith.constant 0 : index
    %236 = vector.load %arg6[%c1_345, %c1_346, %c0_347, %c0_348] : memref<3x3x128x128xbf16, #tpu.memory_space<vmem>>, vector<1x1x128x128xbf16>
    %237 = vector.shape_cast %236 : vector<1x1x128x128xbf16> to vector<128x128xbf16>
    %cst_349 = arith.constant dense<0.000000e+00> : vector<8x128xf32>
    %238 = tpu.matmul %235, %237, %cst_349 {dimension_numbers = #tpu.dot_dimension_numbers<[1], [0], [0], [1], [0, 0, 1, 1], [], []>} : vector<8x128xbf16>, vector<128x128xbf16>, vector<8x128xf32> -> vector<8x128xf32>
    %239 = arith.addf %233, %238 : vector<8x128xf32>
    %c1_350 = arith.constant 1 : index
    %c2_351 = arith.constant 2 : index
    %c0_352 = arith.constant 0 : index
    %c0_353 = arith.constant 0 : index
    %240 = vector.load %arg14[%c1_350, %c2_351, %c0_352, %c0_353] : memref<3x3x8x128xbf16, #tpu.memory_space<vmem>>, vector<1x1x8x128xbf16>
    %241 = vector.shape_cast %240 : vector<1x1x8x128xbf16> to vector<8x128xbf16>
    %c1_354 = arith.constant 1 : index
    %c2_355 = arith.constant 2 : index
    %c0_356 = arith.constant 0 : index
    %c0_357 = arith.constant 0 : index
    %242 = vector.load %arg6[%c1_354, %c2_355, %c0_356, %c0_357] : memref<3x3x128x128xbf16, #tpu.memory_space<vmem>>, vector<1x1x128x128xbf16>
    %243 = vector.shape_cast %242 : vector<1x1x128x128xbf16> to vector<128x128xbf16>
    %cst_358 = arith.constant dense<0.000000e+00> : vector<8x128xf32>
    %244 = tpu.matmul %241, %243, %cst_358 {dimension_numbers = #tpu.dot_dimension_numbers<[1], [0], [0], [1], [0, 0, 1, 1], [], []>} : vector<8x128xbf16>, vector<128x128xbf16>, vector<8x128xf32> -> vector<8x128xf32>
    %245 = arith.addf %239, %244 : vector<8x128xf32>
    %c2_359 = arith.constant 2 : index
    %c0_360 = arith.constant 0 : index
    %c0_361 = arith.constant 0 : index
    %c0_362 = arith.constant 0 : index
    %246 = vector.load %arg14[%c2_359, %c0_360, %c0_361, %c0_362] : memref<3x3x8x128xbf16, #tpu.memory_space<vmem>>, vector<1x1x8x128xbf16>
    %247 = vector.shape_cast %246 : vector<1x1x8x128xbf16> to vector<8x128xbf16>
    %c2_363 = arith.constant 2 : index
    %c0_364 = arith.constant 0 : index
    %c0_365 = arith.constant 0 : index
    %c0_366 = arith.constant 0 : index
    %248 = vector.load %arg6[%c2_363, %c0_364, %c0_365, %c0_366] : memref<3x3x128x128xbf16, #tpu.memory_space<vmem>>, vector<1x1x128x128xbf16>
    %249 = vector.shape_cast %248 : vector<1x1x128x128xbf16> to vector<128x128xbf16>
    %cst_367 = arith.constant dense<0.000000e+00> : vector<8x128xf32>
    %250 = tpu.matmul %247, %249, %cst_367 {dimension_numbers = #tpu.dot_dimension_numbers<[1], [0], [0], [1], [0, 0, 1, 1], [], []>} : vector<8x128xbf16>, vector<128x128xbf16>, vector<8x128xf32> -> vector<8x128xf32>
    %251 = arith.addf %245, %250 : vector<8x128xf32>
    %c2_368 = arith.constant 2 : index
    %c1_369 = arith.constant 1 : index
    %c0_370 = arith.constant 0 : index
    %c0_371 = arith.constant 0 : index
    %252 = vector.load %arg14[%c2_368, %c1_369, %c0_370, %c0_371] : memref<3x3x8x128xbf16, #tpu.memory_space<vmem>>, vector<1x1x8x128xbf16>
    %253 = vector.shape_cast %252 : vector<1x1x8x128xbf16> to vector<8x128xbf16>
    %c2_372 = arith.constant 2 : index
    %c1_373 = arith.constant 1 : index
    %c0_374 = arith.constant 0 : index
    %c0_375 = arith.constant 0 : index
    %254 = vector.load %arg6[%c2_372, %c1_373, %c0_374, %c0_375] : memref<3x3x128x128xbf16, #tpu.memory_space<vmem>>, vector<1x1x128x128xbf16>
    %255 = vector.shape_cast %254 : vector<1x1x128x128xbf16> to vector<128x128xbf16>
    %cst_376 = arith.constant dense<0.000000e+00> : vector<8x128xf32>
    %256 = tpu.matmul %253, %255, %cst_376 {dimension_numbers = #tpu.dot_dimension_numbers<[1], [0], [0], [1], [0, 0, 1, 1], [], []>} : vector<8x128xbf16>, vector<128x128xbf16>, vector<8x128xf32> -> vector<8x128xf32>
    %257 = arith.addf %251, %256 : vector<8x128xf32>
    %c2_377 = arith.constant 2 : index
    %c2_378 = arith.constant 2 : index
    %c0_379 = arith.constant 0 : index
    %c0_380 = arith.constant 0 : index
    %258 = vector.load %arg14[%c2_377, %c2_378, %c0_379, %c0_380] : memref<3x3x8x128xbf16, #tpu.memory_space<vmem>>, vector<1x1x8x128xbf16>
    %259 = vector.shape_cast %258 : vector<1x1x8x128xbf16> to vector<8x128xbf16>
    %c2_381 = arith.constant 2 : index
    %c2_382 = arith.constant 2 : index
    %c0_383 = arith.constant 0 : index
    %c0_384 = arith.constant 0 : index
    %260 = vector.load %arg6[%c2_381, %c2_382, %c0_383, %c0_384] : memref<3x3x128x128xbf16, #tpu.memory_space<vmem>>, vector<1x1x128x128xbf16>
    %261 = vector.shape_cast %260 : vector<1x1x128x128xbf16> to vector<128x128xbf16>
    %cst_385 = arith.constant dense<0.000000e+00> : vector<8x128xf32>
    %262 = tpu.matmul %259, %261, %cst_385 {dimension_numbers = #tpu.dot_dimension_numbers<[1], [0], [0], [1], [0, 0, 1, 1], [], []>} : vector<8x128xbf16>, vector<128x128xbf16>, vector<8x128xf32> -> vector<8x128xf32>
    %263 = arith.addf %257, %262 : vector<8x128xf32>
    %c0_386 = arith.constant 0 : index
    %c0_387 = arith.constant 0 : index
    %264 = vector.load %arg7[%c0_386, %c0_387] : memref<1x128xf32, #tpu.memory_space<vmem>>, vector<1x128xf32>
    %265 = vector.broadcast %264 : vector<1x128xf32> to vector<8x128xf32>
    %266 = arith.addf %263, %265 : vector<8x128xf32>
    %cst_388 = arith.constant 0.000000e+00 : f32
    %267 = vector.broadcast %cst_388 : f32 to vector<8x128xf32>
    %268 = arith.maximumf %266, %267 : vector<8x128xf32>
    %269 = arith.truncf %268 : vector<8x128xf32> to vector<8x128xbf16>
    %270 = vector.shape_cast %269 : vector<8x128xbf16> to vector<1x1x8x128xbf16>
    %271 = vector.shape_cast %270 : vector<1x1x8x128xbf16> to vector<8x128xbf16>
    %c0_389 = arith.constant 0 : index
    %c0_390 = arith.constant 0 : index
    %272 = vector.load %arg15[%c0_389, %c0_390] : memref<8x128xbf16, #tpu.memory_space<vmem>>, vector<8x128xbf16>
    tpu.vector_store %arg15[%c0_389, %c0_390], %271 {strides = array<i32>} : memref<8x128xbf16, #tpu.memory_space<vmem>>, vector<8x128xbf16>,
    %c0_391 = arith.constant 0 : index
    %c0_392 = arith.constant 0 : index
    %273 = vector.load %arg15[%c0_391, %c0_392] : memref<8x128xbf16, #tpu.memory_space<vmem>>, vector<8x128xbf16>
    %c0_393 = arith.constant 0 : index
    %c0_394 = arith.constant 0 : index
    %274 = vector.load %arg8[%c0_393, %c0_394] : memref<128x512xbf16, #tpu.memory_space<vmem>>, vector<128x512xbf16>
    %cst_395 = arith.constant dense<0.000000e+00> : vector<8x512xf32>
    %275 = tpu.matmul %273, %274, %cst_395 {dimension_numbers = #tpu.dot_dimension_numbers<[1], [0], [0], [1], [0, 0, 1, 1], [], []>} : vector<8x128xbf16>, vector<128x512xbf16>, vector<8x512xf32> -> vector<8x512xf32>
    %c0_396 = arith.constant 0 : index
    %c0_397 = arith.constant 0 : index
    %276 = vector.load %arg9[%c0_396, %c0_397] : memref<1x512xf32, #tpu.memory_space<vmem>>, vector<1x512xf32>
    %277 = vector.broadcast %276 : vector<1x512xf32> to vector<8x512xf32>
    %278 = arith.addf %275, %277 : vector<8x512xf32>
    %cst_398 = arith.constant 0.000000e+00 : f32
    %279 = vector.broadcast %cst_398 : f32 to vector<8x512xf32>
    %280 = arith.maximumf %278, %279 : vector<8x512xf32>
    %281 = arith.truncf %280 : vector<8x512xf32> to vector<8x512xbf16>
    %c0_399 = arith.constant 0 : index
    %c0_400 = arith.constant 0 : index
    %282 = vector.load %arg10[%c0_399, %c0_400] : memref<512x128xbf16, #tpu.memory_space<vmem>>, vector<512x128xbf16>
    %cst_401 = arith.constant dense<0.000000e+00> : vector<8x128xf32>
    %283 = tpu.matmul %281, %282, %cst_401 {dimension_numbers = #tpu.dot_dimension_numbers<[1], [0], [0], [1], [0, 0, 1, 1], [], []>} : vector<8x512xbf16>, vector<512x128xbf16>, vector<8x128xf32> -> vector<8x128xf32>
    %c0_402 = arith.constant 0 : index
    %c0_403 = arith.constant 0 : index
    %284 = vector.load %arg11[%c0_402, %c0_403] : memref<1x128xf32, #tpu.memory_space<vmem>>, vector<1x128xf32>
    %285 = vector.broadcast %284 : vector<1x128xf32> to vector<8x128xf32>
    %286 = arith.addf %283, %285 : vector<8x128xf32>
    %c0_404 = arith.constant 0 : index
    %c0_405 = arith.constant 0 : index
    %287 = vector.load %arg12[%c0_404, %c0_405] : memref<8x128xf32, #tpu.memory_space<vmem>>, vector<8x128xf32>
    tpu.vector_store %arg12[%c0_404, %c0_405], %286 {strides = array<i32>} : memref<8x128xf32, #tpu.memory_space<vmem>>, vector<8x128xf32>,
    return
  }
  func.func @transform_0(%arg0: i32) -> (i32, i32, i32, i32, i32, i32, i32) {
    %c0_i32 = arith.constant 0 : i32
    %c0_i32_0 = arith.constant 0 : i32
    %c0_i32_1 = arith.constant 0 : i32
    %c0_i32_2 = arith.constant 0 : i32
    %c0_i32_3 = arith.constant 0 : i32
    %c0_i32_4 = arith.constant 0 : i32
    %c0_i32_5 = arith.constant 0 : i32
    return %arg0, %c0_i32, %c0_i32_0, %c0_i32_1, %c0_i32_2, %c0_i32_3, %c0_i32_4 : i32, i32, i32, i32, i32, i32, i32
  }
  func.func @transform_1(%arg0: i32) -> (i32, i32, i32, i32) {
    %c0_i32 = arith.constant 0 : i32
    %c0_i32_0 = arith.constant 0 : i32
    %c0_i32_1 = arith.constant 0 : i32
    %c0_i32_2 = arith.constant 0 : i32
    %c0_i32_3 = arith.constant 0 : i32
    return %c0_i32, %c0_i32_0, %c0_i32_1, %c0_i32_2 : i32, i32, i32, i32
  }
  func.func @transform_2(%arg0: i32) -> (i32, i32) {
    %c0_i32 = arith.constant 0 : i32
    %c0_i32_0 = arith.constant 0 : i32
    %c0_i32_1 = arith.constant 0 : i32
    return %c0_i32, %c0_i32_0 : i32, i32
  }
  func.func @transform_3(%arg0: i32) -> (i32, i32, i32, i32) {
    %c0_i32 = arith.constant 0 : i32
    %c0_i32_0 = arith.constant 0 : i32
    %c0_i32_1 = arith.constant 0 : i32
    %c0_i32_2 = arith.constant 0 : i32
    %c0_i32_3 = arith.constant 0 : i32
    return %c0_i32, %c0_i32_0, %c0_i32_1, %c0_i32_2 : i32, i32, i32, i32
  }
  func.func @transform_4(%arg0: i32) -> (i32, i32) {
    %c0_i32 = arith.constant 0 : i32
    %c0_i32_0 = arith.constant 0 : i32
    %c0_i32_1 = arith.constant 0 : i32
    return %c0_i32, %c0_i32_0 : i32, i32
  }
  func.func @transform_5(%arg0: i32) -> (i32, i32, i32, i32) {
    %c0_i32 = arith.constant 0 : i32
    %c0_i32_0 = arith.constant 0 : i32
    %c0_i32_1 = arith.constant 0 : i32
    %c0_i32_2 = arith.constant 0 : i32
    %c0_i32_3 = arith.constant 0 : i32
    return %c0_i32, %c0_i32_0, %c0_i32_1, %c0_i32_2 : i32, i32, i32, i32
  }
  func.func @transform_6(%arg0: i32) -> (i32, i32) {
    %c0_i32 = arith.constant 0 : i32
    %c0_i32_0 = arith.constant 0 : i32
    %c0_i32_1 = arith.constant 0 : i32
    return %c0_i32, %c0_i32_0 : i32, i32
  }
  func.func @transform_7(%arg0: i32) -> (i32, i32) {
    %c0_i32 = arith.constant 0 : i32
    %c0_i32_0 = arith.constant 0 : i32
    %c0_i32_1 = arith.constant 0 : i32
    return %c0_i32, %c0_i32_0 : i32, i32
  }
  func.func @transform_8(%arg0: i32) -> (i32, i32) {
    %c0_i32 = arith.constant 0 : i32
    %c0_i32_0 = arith.constant 0 : i32
    %c0_i32_1 = arith.constant 0 : i32
    return %c0_i32, %c0_i32_0 : i32, i32
  }
  func.func @transform_9(%arg0: i32) -> (i32, i32) {
    %c0_i32 = arith.constant 0 : i32
    %c0_i32_0 = arith.constant 0 : i32
    %c0_i32_1 = arith.constant 0 : i32
    return %c0_i32, %c0_i32_0 : i32, i32
  }
  func.func @transform_10(%arg0: i32) -> (i32, i32) {
    %c0_i32 = arith.constant 0 : i32
    %c0_i32_0 = arith.constant 0 : i32
    %c0_i32_1 = arith.constant 0 : i32
    return %c0_i32, %c0_i32_0 : i32, i32
  }
  func.func @transform_11(%arg0: i32) -> (i32, i32) {
    %c0_i32 = arith.constant 0 : i32
    %c0_i32_0 = arith.constant 0 : i32
    return %arg0, %c0_i32 : i32, i32
  }
}

</mosaic_0001>

<llo_original>
// kernel: tpu_custom_call.1
$region0: #{tpu_custom_call.1}
  #allocation0 [shape = 'u32[]', space=smem, size = 0x4, offset = 0x4, fixed_abs, tag = 'smem constant byte address 0x4 - core index']
  #allocation1 [shape = 'u32[144,128]{1,0:T(1,128)}', space=vmem, size = 0x12000, scoped, tag = 'internal scratch']
  %s0 = inlined_call_operand.hbm [shape: f32[8,128], index: 0, kind: input, shape index: {}]
  %s1 = inlined_call_operand.hbm [shape: f32[8,128], index: 1, kind: output, shape index: {}]
  %s2 = sld [smem:[#allocation0]]
  $region41: #{tpu_custom_call.1} parent=0
    _
  %s4 = ssub.s32 1, %s2
  %s5 = scalar_select 0, %s4, %s2
  $region1: #{tpu_custom_call.1} parent=0
    #allocation2 [shape = 'u8[4096]{0}', space=vmem, size = 0x1000, scoped, tag = 'input window, operand 0, single buffered']
    #allocation3 [shape = 's32[2]{0}', space=sflag, size = 0x8, scoped, tag = 'scoped memory for tpu_custom_call.1']
    #allocation4 [shape = 's32[2]{0}', space=sflag, size = 0x8, scoped, tag = 'scoped memory for tpu_custom_call.1']
    #allocation5 [shape = 'u8[4096]{0}', space=vmem, size = 0x1000, scoped, tag = 'output window, operand 0, single buffered']
    %6 = vsyncpa [#allocation3], 0
    %7 = vsyncpa [#allocation4], 0
    loop: start=0, step=1, limit=4
    $region2: #{tpu_custom_call.1} parent=1 // loop_pre_header
      _
    $region3: #{tpu_custom_call.1} parent=1 // loop_header
      %s9 = sphi 0, %s13
      %p10 = scmp.ge.s32.totalorder %s9, 4
      %s17 = sphi 0, %s17
      %s19 = sphi 0, %s17
      %s20 = sphi 0, %s19
      %s34 = sphi 0, %s20
      %s38 = sphi 0, %s38
      %s40 = sphi 0, %s38
      %s41 = sphi 0, %s40
      %s55 = sphi 0, %s41
    $region4: #{tpu_custom_call.1} parent=1 // loop_header_branch
      %12 = sbr.rel (%p10) target = $region8
    $region5: #{tpu_custom_call.1} parent=1 // loop_body
      %s14 = ssub.s32 %s9, 1
      %s15 = ssub.s32 %s9, 2
      %s16 = sadd.s32 %s9, 1
      %s18 = sadd.s32 %s17, 1
      %p21 = scmp.eq.s32.totalorder %s9, 1
      %p22 = scmp.ne.s32.totalorder %s17, %s19
      %p23 = scmp.eq.s32.totalorder %s9, 0
      %p24 = por %p22, %p23
      %p25 = scmp.ne.s32.totalorder %s17, %s19
      %p26 = scmp.eq.s32.totalorder %s14, 1
      %p27 = por %p25, %p26
      %p28 = scmp.ne.s32.totalorder %s19, %s20
      %p29 = scmp.eq.s32.totalorder %s14, 0
      %p30 = por %p28, %p29
      %p31 = scmp.ne.s32.totalorder %s19, %s20
      %p32 = scmp.eq.s32.totalorder %s15, 1
      %p33 = por %p31, %p32
      %p35 = scmp.ne.s32.totalorder %s20, %s34
      %p36 = scmp.eq.s32.totalorder %s15, 0
      %p37 = por %p35, %p36
      %s39 = sadd.s32 %s38, 1
      %p42 = scmp.eq.s32.totalorder %s9, 1
      %p43 = scmp.ne.s32.totalorder %s38, %s40
      %p44 = scmp.eq.s32.totalorder %s9, 0
      %p45 = por %p43, %p44
      %p46 = scmp.ne.s32.totalorder %s38, %s40
      %p47 = scmp.eq.s32.totalorder %s14, 1
      %p48 = por %p46, %p47
      %p49 = scmp.ne.s32.totalorder %s40, %s41
      %p50 = scmp.eq.s32.totalorder %s14, 0
      %p51 = por %p49, %p50
      %p52 = scmp.ne.s32.totalorder %s40, %s41
      %p53 = scmp.eq.s32.totalorder %s15, 1
      %p54 = por %p52, %p53
      %p56 = scmp.ne.s32.totalorder %s41, %s55
      %p57 = scmp.eq.s32.totalorder %s15, 0
      %p58 = por %p56, %p57
      %p59 = scmp.le.s32.totalorder 1, %s9
      %p60 = scmp.lt.s32.totalorder %s9, 3
      %p61 = pnand %p59, %p60
      %p62 = pneg %p61
      // Predicated region
      $region9: #{tpu_custom_call.1} parent=5 // pred_check
        _
      $region10: #{tpu_custom_call.1} parent=5 // pred_check_branch
        %64 = sbr.rel (%p61) target = $region12
      $region11: #{tpu_custom_call.1} parent=5 // pred_region
        %s65 = ssub.s32 %s9, 1
        // Predicated region
        $region13: #{tpu_custom_call.1} parent=11 // pred_check
          %p66 = pneg %p30
        $region14: #{tpu_custom_call.1} parent=11 // pred_check_branch
          %68 = sbr.rel (%p66) target = $region16
        $region15: #{tpu_custom_call.1} parent=11 // pred_region
          %s70 = ssub.s32 128, 128
          %71 = vsyncadd [#allocation3], %s70
          %s73 = sshll.u32 [#allocation2], 4
          %s74 = int_to_ptr.vmem [resolvable:$true] %s73
          %76 = dma.hbm_to_vmem [thread:$0]  %s0, 128, %s74, [#allocation3]
        $region16: #{tpu_custom_call.1} parent=11 // pred_fallthru
          _
      $region12: #{tpu_custom_call.1} parent=5 // pred_fallthru
        _
      %p77 = scmp.lt.s32.totalorder %s9, 2
      // Predicated region
      $region17: #{tpu_custom_call.1} parent=5 // pred_check
        %p78 = pneg %p77
      $region18: #{tpu_custom_call.1} parent=5 // pred_check_branch
        %80 = sbr.rel (%p78) target = $region20
      $region19: #{tpu_custom_call.1} parent=5 // pred_region
        _
      $region20: #{tpu_custom_call.1} parent=5 // pred_fallthru
        _
      %p81 = scmp.le.s32.totalorder 1, %s9
      %p82 = scmp.lt.s32.totalorder %s9, 3
      %p83 = pnand %p81, %p82
      %p84 = pneg %p83
      // Predicated region
      $region21: #{tpu_custom_call.1} parent=5 // pred_check
        _
      $region22: #{tpu_custom_call.1} parent=5 // pred_check_branch
        %86 = sbr.rel (%p83) target = $region24
      $region23: #{tpu_custom_call.1} parent=5 // pred_region
        %s87 = ssub.s32 %s9, 1
        // Predicated region
        $region25: #{tpu_custom_call.1} parent=23 // pred_check
          %p88 = pneg %p30
        $region26: #{tpu_custom_call.1} parent=23 // pred_check_branch
          %90 = sbr.rel (%p88) target = $region28
        $region27: #{tpu_custom_call.1} parent=23 // pred_region
          %91 = dma.done [#allocation3], 128
        $region28: #{tpu_custom_call.1} parent=23 // pred_fallthru
          _
        %p92 = pneg %p30
        %p93 = pneg %p27
        %p94 = pneg %p51
        %p95 = pneg %p48
        %v96 = vld [vmem:[#allocation2] sm:$0xff]
        %v97 = vadd.f32 %v96, 1.0
        %98 = vst [vmem:[#allocation5] sm:$0xff] %v97
        // Predicated region
        $region29: #{tpu_custom_call.1} parent=23 // pred_check
          %p99 = pneg %p48
        $region30: #{tpu_custom_call.1} parent=23 // pred_check_branch
          %101 = sbr.rel (%p99) target = $region32
        $region31: #{tpu_custom_call.1} parent=23 // pred_region
          %s103 = ssub.s32 128, 128
          %104 = vsyncadd [#allocation4], %s103
          %s106 = sshll.u32 [#allocation5], 4
          %s107 = int_to_ptr.vmem [resolvable:$true] %s106
          %109 = dma.vmem_to_hbm [thread:$0]  %s107, 128, %s1, [#allocation4]
        $region32: #{tpu_custom_call.1} parent=23 // pred_fallthru
          _
        // Predicated region
        $region33: #{tpu_custom_call.1} parent=23 // pred_check
          %p110 = pneg %p48
        $region34: #{tpu_custom_call.1} parent=23 // pred_check_branch
          %112 = sbr.rel (%p110) target = $region36
        $region35: #{tpu_custom_call.1} parent=23 // pred_region
          %113 = dma.done [#allocation4], 128
        $region36: #{tpu_custom_call.1} parent=23 // pred_fallthru
          _
      $region24: #{tpu_custom_call.1} parent=5 // pred_fallthru
        _
      %p114 = scmp.le.s32.totalorder 2, %s9
      // Predicated region
      $region37: #{tpu_custom_call.1} parent=5 // pred_check
        %p115 = pneg %p114
      $region38: #{tpu_custom_call.1} parent=5 // pred_check_branch
        %117 = sbr.rel (%p115) target = $region40
      $region39: #{tpu_custom_call.1} parent=5 // pred_region
        %s118 = ssub.s32 %s9, 2
      $region40: #{tpu_custom_call.1} parent=5 // pred_fallthru
        _
    $region6: #{tpu_custom_call.1} parent=1 // loop_footer
      %s13 = sadd.s32 1, %s9
    $region7: #{tpu_custom_call.1} parent=1 // loop_footer_branch
      %8 = sbr.rel target = $region3
    $region8: #{tpu_custom_call.1} parent=1 // loop_exit
      _
    %119 = vsyncpa [#allocation3], 1
    %s120 = scalar_lea.sflag [#allocation3], 1
    %121 = vsyncpa %s120, 1
    %122 = vsyncpa [#allocation4], 1
    %s123 = scalar_lea.sflag [#allocation4], 1
    %124 = vsyncpa %s123, 1

// kernel: dqn_forward_pallas.1
$region0: #{dqn_forward_pallas.1}
  #allocation0 [shape = 'u32[]', space=smem, size = 0x4, offset = 0x4, fixed_abs, tag = 'smem constant byte address 0x4 - core index']
  #allocation1 [shape = 'u32[144,128]{1,0:T(1,128)}', space=vmem, size = 0x12000, scoped, tag = 'internal scratch']
  #allocation2 [shape = 'bf16[2,4,4,8,256]{4,3,2,1,0:T(8,128)(2,1)}', space=vmem, size = 0x20000, scoped, tag = 'scratch operand']
  #allocation3 [shape = 'bf16[3,3,8,128]{3,2,1,0:T(8,128)(2,1)}', space=vmem, size = 0x4800, scoped, tag = 'scratch operand']
  #allocation4 [shape = 'bf16[8,128]{1,0:T(8,128)(2,1)}', space=vmem, size = 0x800, scoped, tag = 'scratch operand']
  %s0 = inlined_call_operand.vmem [shape: bf16[1,2,2,5,5,8,128], index: 0, kind: input, shape index: {}]
  %s1 = inlined_call_operand.vmem [shape: bf16[2,2,128,128], index: 1, kind: input, shape index: {}]
  %s2 = inlined_call_operand.vmem [shape: f32[1,128], index: 2, kind: input, shape index: {}]
  %s3 = inlined_call_operand.vmem [shape: bf16[4,2,256,128], index: 3, kind: input, shape index: {}]
  %s4 = inlined_call_operand.vmem [shape: f32[1,128], index: 4, kind: input, shape index: {}]
  %s5 = inlined_call_operand.vmem [shape: bf16[3,3,128,128], index: 5, kind: input, shape index: {}]
  %s6 = inlined_call_operand.vmem [shape: f32[1,128], index: 6, kind: input, shape index: {}]
  %s7 = inlined_call_operand.vmem [shape: bf16[128,512], index: 7, kind: input, shape index: {}]
  %s8 = inlined_call_operand.vmem [shape: f32[1,512], index: 8, kind: input, shape index: {}]
  %s9 = inlined_call_operand.vmem [shape: bf16[512,128], index: 9, kind: input, shape index: {}]
  %s10 = inlined_call_operand.vmem [shape: f32[1,128], index: 10, kind: input, shape index: {}]
  %s11 = inlined_call_operand.vmem [shape: f32[8,128], index: 11, kind: output, shape index: {}]
  %s12 = sld [smem:[#allocation0]]
  $region54: #{dqn_forward_pallas.1} parent=0
    _
  %s14 = ssub.s32 1, %s12
  %s15 = scalar_select 0, %s14, %s12
  // Predicated region
  $region2: #{dqn_forward_pallas.1} parent=0 // pred_check
    _
  $region3: #{dqn_forward_pallas.1} parent=0 // pred_check_branch
    %17 = sbr.rel (0) target = $region5
  $region4: #{dqn_forward_pallas.1} parent=0 // pred_region
    _
  $region5: #{dqn_forward_pallas.1} parent=0 // pred_fallthru
    _
  // Predicated region
  $region6: #{dqn_forward_pallas.1} parent=0 // pred_check
    _
  $region7: #{dqn_forward_pallas.1} parent=0 // pred_check_branch
    %19 = sbr.rel (0) target = $region9
  $region8: #{dqn_forward_pallas.1} parent=0 // pred_region
    _
  $region9: #{dqn_forward_pallas.1} parent=0 // pred_fallthru
    _
  // Predicated region
  $region10: #{dqn_forward_pallas.1} parent=0 // pred_check
    _
  $region11: #{dqn_forward_pallas.1} parent=0 // pred_check_branch
    %21 = sbr.rel (0) target = $region13
  $region12: #{dqn_forward_pallas.1} parent=0 // pred_region
    _
  $region13: #{dqn_forward_pallas.1} parent=0 // pred_fallthru
    _
  // Predicated region
  $region14: #{dqn_forward_pallas.1} parent=0 // pred_check
    _
  $region15: #{dqn_forward_pallas.1} parent=0 // pred_check_branch
    %23 = sbr.rel (0) target = $region17
  $region16: #{dqn_forward_pallas.1} parent=0 // pred_region
    _
  $region17: #{dqn_forward_pallas.1} parent=0 // pred_fallthru
    _
  // Predicated region
  $region18: #{dqn_forward_pallas.1} parent=0 // pred_check
    _
  $region19: #{dqn_forward_pallas.1} parent=0 // pred_check_branch
    %25 = sbr.rel (0) target = $region21
  $region20: #{dqn_forward_pallas.1} parent=0 // pred_region
    _
  $region21: #{dqn_forward_pallas.1} parent=0 // pred_fallthru
    _
  // Predicated region
  $region22: #{dqn_forward_pallas.1} parent=0 // pred_check
    _
  $region23: #{dqn_forward_pallas.1} parent=0 // pred_check_branch
    %27 = sbr.rel (0) target = $region25
  $region24: #{dqn_forward_pallas.1} parent=0 // pred_region
    _
  $region25: #{dqn_forward_pallas.1} parent=0 // pred_fallthru
    _
  // Predicated region
  $region26: #{dqn_forward_pallas.1} parent=0 // pred_check
    _
  $region27: #{dqn_forward_pallas.1} parent=0 // pred_check_branch
    %29 = sbr.rel (0) target = $region29
  $region28: #{dqn_forward_pallas.1} parent=0 // pred_region
    _
  $region29: #{dqn_forward_pallas.1} parent=0 // pred_fallthru
    _
  // Predicated region
  $region30: #{dqn_forward_pallas.1} parent=0 // pred_check
    _
  $region31: #{dqn_forward_pallas.1} parent=0 // pred_check_branch
    %31 = sbr.rel (0) target = $region33
  $region32: #{dqn_forward_pallas.1} parent=0 // pred_region
    _
  $region33: #{dqn_forward_pallas.1} parent=0 // pred_fallthru
    _
  // Predicated region
  $region34: #{dqn_forward_pallas.1} parent=0 // pred_check
    _
  $region35: #{dqn_forward_pallas.1} parent=0 // pred_check_branch
    %33 = sbr.rel (0) target = $region37
  $region36: #{dqn_forward_pallas.1} parent=0 // pred_region
    _
  $region37: #{dqn_forward_pallas.1} parent=0 // pred_fallthru
    _
  // Predicated region
  $region38: #{dqn_forward_pallas.1} parent=0 // pred_check
    _
  $region39: #{dqn_forward_pallas.1} parent=0 // pred_check_branch
    %35 = sbr.rel (0) target = $region41
  $region40: #{dqn_forward_pallas.1} parent=0 // pred_region
    _
  $region41: #{dqn_forward_pallas.1} parent=0 // pred_fallthru
    _
  // Predicated region
  $region42: #{dqn_forward_pallas.1} parent=0 // pred_check
    _
  $region43: #{dqn_forward_pallas.1} parent=0 // pred_check_branch
    %37 = sbr.rel (0) target = $region45
  $region44: #{dqn_forward_pallas.1} parent=0 // pred_region
    _
  $region45: #{dqn_forward_pallas.1} parent=0 // pred_fallthru
    _
  %v39 = vld [vmem:[%s0] sm:$0xf]
  %v40 = vld [vmem:[%s0 + $0x4] sm:$0xf]
  %v41 = vld [vmem:[%s0 + $0x8] sm:$0xf]
  %v42 = vld [vmem:[%s0 + $0xc] sm:$0xf]
  %v43 = vld [vmem:[%s0 + $0x14] sm:$0xf]
  %v44 = vld [vmem:[%s0 + $0x18] sm:$0xf]
  %v45 = vld [vmem:[%s0 + $0x1c] sm:$0xf]
  %v46 = vld [vmem:[%s0 + $0x20] sm:$0xf]
  %v47 = vld [vmem:[%s0 + $0x28] sm:$0xf]
  %v48 = vld [vmem:[%s0 + $0x2c] sm:$0xf]
  %v49 = vld [vmem:[%s0 + $0x30] sm:$0xf]
  %v50 = vld [vmem:[%s0 + $0x34] sm:$0xf]
  %v51 = vld [vmem:[%s0 + $0x3c] sm:$0xf]
  %v52 = vld [vmem:[%s0 + $0x40] sm:$0xf]
  %v53 = vld [vmem:[%s0 + $0x44] sm:$0xf]
  %v54 = vld [vmem:[%s0 + $0x48] sm:$0xf]
  %v55 = vld [vmem:[%s1] sm:$0xf]
  %v56 = vld [vmem:[%s1 + $0x4] sm:$0xf]
  %v57 = vld [vmem:[%s1 + $0x8] sm:$0xf]
  %v58 = vld [vmem:[%s1 + $0xc] sm:$0xf]
  %v59 = vld [vmem:[%s1 + $0x10] sm:$0xf]
  %v60 = vld [vmem:[%s1 + $0x14] sm:$0xf]
  %v61 = vld [vmem:[%s1 + $0x18] sm:$0xf]
  %v62 = vld [vmem:[%s1 + $0x1c] sm:$0xf]
  %v63 = vld [vmem:[%s1 + $0x20] sm:$0xf]
  %v64 = vld [vmem:[%s1 + $0x24] sm:$0xf]
  %v65 = vld [vmem:[%s1 + $0x28] sm:$0xf]
  %v66 = vld [vmem:[%s1 + $0x2c] sm:$0xf]
  %v67 = vld [vmem:[%s1 + $0x30] sm:$0xf]
  %v68 = vld [vmem:[%s1 + $0x34] sm:$0xf]
  %v69 = vld [vmem:[%s1 + $0x38] sm:$0xf]
  %v70 = vld [vmem:[%s1 + $0x3c] sm:$0xf]
  %s71 = scalar_lea.vmem %s0, 100
  %v72 = vld [vmem:[%s71] sm:$0xf]
  %v73 = vld [vmem:[%s71 + $0x4] sm:$0xf]
  %v74 = vld [vmem:[%s71 + $0x8] sm:$0xf]
  %v75 = vld [vmem:[%s71 + $0xc] sm:$0xf]
  %v76 = vld [vmem:[%s71 + $0x14] sm:$0xf]
  %v77 = vld [vmem:[%s71 + $0x18] sm:$0xf]
  %v78 = vld [vmem:[%s71 + $0x1c] sm:$0xf]
  %v79 = vld [vmem:[%s71 + $0x20] sm:$0xf]
  %v80 = vld [vmem:[%s71 + $0x28] sm:$0xf]
  %v81 = vld [vmem:[%s71 + $0x2c] sm:$0xf]
  %v82 = vld [vmem:[%s71 + $0x30] sm:$0xf]
  %v83 = vld [vmem:[%s71 + $0x34] sm:$0xf]
  %v84 = vld [vmem:[%s71 + $0x3c] sm:$0xf]
  %v85 = vld [vmem:[%s71 + $0x40] sm:$0xf]
  %v86 = vld [vmem:[%s71 + $0x44] sm:$0xf]
  %v87 = vld [vmem:[%s71 + $0x48] sm:$0xf]
  %s88 = scalar_lea.vmem %s1, 64
  %v89 = vld [vmem:[%s88] sm:$0xf]
  %v90 = vld [vmem:[%s88 + $0x4] sm:$0xf]
  %v91 = vld [vmem:[%s88 + $0x8] sm:$0xf]
  %v92 = vld [vmem:[%s88 + $0xc] sm:$0xf]
  %v93 = vld [vmem:[%s88 + $0x10] sm:$0xf]
  %v94 = vld [vmem:[%s88 + $0x14] sm:$0xf]
  %v95 = vld [vmem:[%s88 + $0x18] sm:$0xf]
  %v96 = vld [vmem:[%s88 + $0x1c] sm:$0xf]
  %v97 = vld [vmem:[%s88 + $0x20] sm:$0xf]
  %v98 = vld [vmem:[%s88 + $0x24] sm:$0xf]
  %v99 = vld [vmem:[%s88 + $0x28] sm:$0xf]
  %v100 = vld [vmem:[%s88 + $0x2c] sm:$0xf]
  %v101 = vld [vmem:[%s88 + $0x30] sm:$0xf]
  %v102 = vld [vmem:[%s88 + $0x34] sm:$0xf]
  %v103 = vld [vmem:[%s88 + $0x38] sm:$0xf]
  %v104 = vld [vmem:[%s88 + $0x3c] sm:$0xf]
  %v121 = vunpack.c.l.b16 %v72
  %v122 = vunpack.c.l.b16 %v73
  %v123 = vunpack.c.l.b16 %v74
  %v124 = vunpack.c.l.b16 %v75
  %v125 = vunpack.c.l.b16 %v76
  %v126 = vunpack.c.l.b16 %v77
  %v127 = vunpack.c.l.b16 %v78
  %v128 = vunpack.c.l.b16 %v79
  %v129 = vunpack.c.l.b16 %v80
  %v130 = vunpack.c.l.b16 %v81
  %v131 = vunpack.c.l.b16 %v82
  %v132 = vunpack.c.l.b16 %v83
  %v133 = vunpack.c.l.b16 %v84
  %v134 = vunpack.c.l.b16 %v85
  %v135 = vunpack.c.l.b16 %v86
  %v136 = vunpack.c.l.b16 %v87
  %v137 = vpack.c.b16 %v122, %v121
  %v138 = vpack.c.b16 %v124, %v123
  %v139 = vpack.c.b16 %v126, %v125
  %v140 = vpack.c.b16 %v128, %v127
  %v141 = vpack.c.b16 %v130, %v129
  %v142 = vpack.c.b16 %v132, %v131
  %v143 = vpack.c.b16 %v134, %v133
  %v144 = vpack.c.b16 %v136, %v135
  %v169 = vunpack.c.l.b16 %v89
  %v170 = vunpack.c.l.b16 %v90
  %v171 = vunpack.c.l.b16 %v91
  %v172 = vunpack.c.l.b16 %v92
  %v173 = vunpack.c.l.b16 %v93
  %v174 = vunpack.c.l.b16 %v94
  %v175 = vunpack.c.l.b16 %v95
  %v176 = vunpack.c.l.b16 %v96
  %v177 = vunpack.c.l.b16 %v97
  %v178 = vunpack.c.l.b16 %v98
  %v179 = vunpack.c.l.b16 %v99
  %v180 = vunpack.c.l.b16 %v100
  %v181 = vunpack.c.l.b16 %v101
  %v182 = vunpack.c.l.b16 %v102
  %v183 = vunpack.c.l.b16 %v103
  %v184 = vunpack.c.l.b16 %v104
  %v185 = vpack.c.b16 %v170, %v169
  %v186 = vpack.c.b16 %v172, %v171
  %v187 = vpack.c.b16 %v174, %v173
  %v188 = vpack.c.b16 %v176, %v175
  %v189 = vpack.c.b16 %v178, %v177
  %v190 = vpack.c.b16 %v180, %v179
  %v191 = vpack.c.b16 %v182, %v181
  %v192 = vpack.c.b16 %v184, %v183
  %201 = vmatprep.subr.bf16.mxu0 0
  %202 = vmatpush1.bf16.msra.mxu0 %v185
  %203 = vmatprep.subr.bf16.mxu0 0
  %204 = vmatpush1.bf16.msra.mxu0 %v186
  %205 = vmatprep.subr.bf16.mxu0 0
  %206 = vmatpush1.bf16.msra.mxu0 %v187
  %207 = vmatprep.subr.bf16.mxu0 0
  %208 = vmatpush1.bf16.msra.mxu0 %v188
  %209 = vmatprep.subr.bf16.mxu0 0
  %210 = vmatpush1.bf16.msra.mxu0 %v189
  %211 = vmatprep.subr.bf16.mxu0 0
  %212 = vmatpush1.bf16.msra.mxu0 %v190
  %213 = vmatprep.subr.bf16.mxu0 0
  %214 = vmatpush1.bf16.msra.mxu0 %v191
  %215 = vmatprep.subr.bf16.mxu0 0
  %216 = vmatpush1.bf16.msra.mxu0 %v192
  %217 = vmatprep.subr.bf16.mxu0 0
  %218 = vmatpush1.bf16.msra.mxu0 0
  %219 = vmatprep.subr.bf16.mxu0 0
  %220 = vmatpush1.bf16.msra.mxu0 0
  %221 = vmatprep.subr.bf16.mxu0 0
  %222 = vmatpush1.bf16.msra.mxu0 0
  %223 = vmatprep.subr.bf16.mxu0 0
  %224 = vmatpush1.bf16.msra.mxu0 0
  %225 = vmatprep.subr.bf16.mxu0 0
  %226 = vmatpush1.bf16.msra.mxu0 0
  %227 = vmatprep.subr.bf16.mxu0 0
  %228 = vmatpush1.bf16.msra.mxu0 0
  %229 = vmatprep.subr.bf16.mxu0 0
  %230 = vmatpush1.bf16.msra.mxu0 0
  %231 = vmatprep.subr.bf16.mxu0 0
  %232 = vmatpush1.bf16.msra.mxu0 0
  %233 = vmatprep.mubr.bf16.mxu0 0
  %234 = vmatmul.mubr.bf16.gmra.mrb[0].mxu0 %v137
  %v235 = vpop.f32.mrb[0].mxu0
  %v236 = vadd.f32 0.0, %v235
  %v237 = vpop.f32.mrb[0].mxu0
  %v238 = vpop.f32.mrb[0].mxu0
  %v239 = vadd.f32 0.0, %v238
  %v240 = vpop.f32.mrb[0].mxu0
  %241 = vmatprep.mubr.bf16.mxu0 0
  %242 = vmatmul.mubr.bf16.gmra.mrb[0].mxu0 %v138
  %v243 = vpop.f32.mrb[0].mxu0
  %v244 = vadd.f32 0.0, %v243
  %v245 = vpop.f32.mrb[0].mxu0
  %v246 = vpop.f32.mrb[0].mxu0
  %v247 = vadd.f32 0.0, %v246
  %v248 = vpop.f32.mrb[0].mxu0
  %249 = vmatprep.mubr.bf16.mxu0 0
  %250 = vmatmul.mubr.bf16.gmra.mrb[0].mxu0 %v139
  %v251 = vpop.f32.mrb[0].mxu0
  %v252 = vadd.f32 0.0, %v251
  %v253 = vpop.f32.mrb[0].mxu0
  %v254 = vpop.f32.mrb[0].mxu0
  %v255 = vadd.f32 0.0, %v254
  %v256 = vpop.f32.mrb[0].mxu0
  %257 = vmatprep.mubr.bf16.mxu0 0
  %258 = vmatmul.mubr.bf16.gmra.mrb[0].mxu0 %v140
  %v259 = vpop.f32.mrb[0].mxu0
  %v260 = vadd.f32 0.0, %v259
  %v261 = vpop.f32.mrb[0].mxu0
  %v262 = vpop.f32.mrb[0].mxu0
  %v263 = vadd.f32 0.0, %v262
  %v264 = vpop.f32.mrb[0].mxu0
  %265 = vmatprep.mubr.bf16.mxu0 0
  %266 = vmatmul.mubr.bf16.gmra.mrb[0].mxu0 %v141
  %v267 = vpop.f32.mrb[0].mxu0
  %v268 = vadd.f32 0.0, %v267
  %v269 = vpop.f32.mrb[0].mxu0
  %v270 = vpop.f32.mrb[0].mxu0
  %v271 = vadd.f32 0.0, %v270
  %v272 = vpop.f32.mrb[0].mxu0
  %273 = vmatprep.mubr.bf16.mxu0 0
  %274 = vmatmul.mubr.bf16.gmra.mrb[0].mxu0 %v142
  %v275 = vpop.f32.mrb[0].mxu0
  %v276 = vadd.f32 0.0, %v275
  %v277 = vpop.f32.mrb[0].mxu0
  %v278 = vpop.f32.mrb[0].mxu0
  %v279 = vadd.f32 0.0, %v278
  %v280 = vpop.f32.mrb[0].mxu0
  %281 = vmatprep.mubr.bf16.mxu0 0
  %282 = vmatmul.mubr.bf16.gmra.mrb[0].mxu0 %v143
  %v283 = vpop.f32.mrb[0].mxu0
  %v284 = vadd.f32 0.0, %v283
  %v285 = vpop.f32.mrb[0].mxu0
  %v286 = vpop.f32.mrb[0].mxu0
  %v287 = vadd.f32 0.0, %v286
  %v288 = vpop.f32.mrb[0].mxu0
  %289 = vmatprep.mubr.bf16.mxu0 0
  %290 = vmatmul.mubr.bf16.gmra.mrb[0].mxu0 %v144
  %v291 = vpop.f32.mrb[0].mxu0
  %v292 = vadd.f32 0.0, %v291
  %v293 = vpop.f32.mrb[0].mxu0
  %v294 = vpop.f32.mrb[0].mxu0
  %v295 = vadd.f32 0.0, %v294
  %v296 = vpop.f32.mrb[0].mxu0
  %297 = vdwg.mxu0
  %v314 = vunpack.c.l.b16 %v39
  %v315 = vunpack.c.l.b16 %v40
  %v316 = vunpack.c.l.b16 %v41
  %v317 = vunpack.c.l.b16 %v42
  %v318 = vunpack.c.l.b16 %v43
  %v319 = vunpack.c.l.b16 %v44
  %v320 = vunpack.c.l.b16 %v45
  %v321 = vunpack.c.l.b16 %v46
  %v322 = vunpack.c.l.b16 %v47
  %v323 = vunpack.c.l.b16 %v48
  %v324 = vunpack.c.l.b16 %v49
  %v325 = vunpack.c.l.b16 %v50
  %v326 = vunpack.c.l.b16 %v51
  %v327 = vunpack.c.l.b16 %v52
  %v328 = vunpack.c.l.b16 %v53
  %v329 = vunpack.c.l.b16 %v54
  %v330 = vpack.c.b16 %v315, %v314
  %v331 = vpack.c.b16 %v317, %v316
  %v332 = vpack.c.b16 %v319, %v318
  %v333 = vpack.c.b16 %v321, %v320
  %v334 = vpack.c.b16 %v323, %v322
  %v335 = vpack.c.b16 %v325, %v324
  %v336 = vpack.c.b16 %v327, %v326
  %v337 = vpack.c.b16 %v329, %v328
  %v362 = vunpack.c.l.b16 %v55
  %v363 = vunpack.c.l.b16 %v56
  %v364 = vunpack.c.l.b16 %v57
  %v365 = vunpack.c.l.b16 %v58
  %v366 = vunpack.c.l.b16 %v59
  %v367 = vunpack.c.l.b16 %v60
  %v368 = vunpack.c.l.b16 %v61
  %v369 = vunpack.c.l.b16 %v62
  %v370 = vunpack.c.l.b16 %v63
  %v371 = vunpack.c.l.b16 %v64
  %v372 = vunpack.c.l.b16 %v65
  %v373 = vunpack.c.l.b16 %v66
  %v374 = vunpack.c.l.b16 %v67
  %v375 = vunpack.c.l.b16 %v68
  %v376 = vunpack.c.l.b16 %v69
  %v377 = vunpack.c.l.b16 %v70
  %v378 = vpack.c.b16 %v363, %v362
  %v379 = vpack.c.b16 %v365, %v364
  %v380 = vpack.c.b16 %v367, %v366
  %v381 = vpack.c.b16 %v369, %v368
  %v382 = vpack.c.b16 %v371, %v370
  %v383 = vpack.c.b16 %v373, %v372
  %v384 = vpack.c.b16 %v375, %v374
  %v385 = vpack.c.b16 %v377, %v376
  %394 = vmatprep.subr.bf16.mxu0 0
  %395 = vmatpush1.bf16.msra.mxu0 %v378
  %396 = vmatprep.subr.bf16.mxu0 0
  %397 = vmatpush1.bf16.msra.mxu0 %v379
  %398 = vmatprep.subr.bf16.mxu0 0
  %399 = vmatpush1.bf16.msra.mxu0 %v380
  %400 = vmatprep.subr.bf16.mxu0 0
  %401 = vmatpush1.bf16.msra.mxu0 %v381
  %402 = vmatprep.subr.bf16.mxu0 0
  %403 = vmatpush1.bf16.msra.mxu0 %v382
  %404 = vmatprep.subr.bf16.mxu0 0
  %405 = vmatpush1.bf16.msra.mxu0 %v383
  %406 = vmatprep.subr.bf16.mxu0 0
  %407 = vmatpush1.bf16.msra.mxu0 %v384
  %408 = vmatprep.subr.bf16.mxu0 0
  %409 = vmatpush1.bf16.msra.mxu0 %v385
  %410 = vmatprep.subr.bf16.mxu0 0
  %411 = vmatpush1.bf16.msra.mxu0 0
  %412 = vmatprep.subr.bf16.mxu0 0
  %413 = vmatpush1.bf16.msra.mxu0 0
  %414 = vmatprep.subr.bf16.mxu0 0
  %415 = vmatpush1.bf16.msra.mxu0 0
  %416 = vmatprep.subr.bf16.mxu0 0
  %417 = vmatpush1.bf16.msra.mxu0 0
  %418 = vmatprep.subr.bf16.mxu0 0
  %419 = vmatpush1.bf16.msra.mxu0 0
  %420 = vmatprep.subr.bf16.mxu0 0
  %421 = vmatpush1.bf16.msra.mxu0 0
  %422 = vmatprep.subr.bf16.mxu0 0
  %423 = vmatpush1.bf16.msra.mxu0 0
  %424 = vmatprep.subr.bf16.mxu0 0
  %425 = vmatpush1.bf16.msra.mxu0 0
  %426 = vmatprep.mubr.bf16.mxu0 0
  %427 = vmatmul.mubr.bf16.gmra.mrb[0].mxu0 %v330
  %v428 = vpop.f32.mrb[0].mxu0
  %v429 = vadd.f32 %v236, %v428
  %v430 = vpop.f32.mrb[0].mxu0
  %v431 = vpop.f32.mrb[0].mxu0
  %v432 = vadd.f32 %v239, %v431
  %v433 = vpop.f32.mrb[0].mxu0
  %434 = vmatprep.mubr.bf16.mxu0 0
  %435 = vmatmul.mubr.bf16.gmra.mrb[0].mxu0 %v331
  %v436 = vpop.f32.mrb[0].mxu0
  %v437 = vadd.f32 %v244, %v436
  %v438 = vpop.f32.mrb[0].mxu0
  %v439 = vpop.f32.mrb[0].mxu0
  %v440 = vadd.f32 %v247, %v439
  %v441 = vpop.f32.mrb[0].mxu0
  %442 = vmatprep.mubr.bf16.mxu0 0
  %443 = vmatmul.mubr.bf16.gmra.mrb[0].mxu0 %v332
  %v444 = vpop.f32.mrb[0].mxu0
  %v445 = vadd.f32 %v252, %v444
  %v446 = vpop.f32.mrb[0].mxu0
  %v447 = vpop.f32.mrb[0].mxu0
  %v448 = vadd.f32 %v255, %v447
  %v449 = vpop.f32.mrb[0].mxu0
  %450 = vmatprep.mubr.bf16.mxu0 0
  %451 = vmatmul.mubr.bf16.gmra.mrb[0].mxu0 %v333
  %v452 = vpop.f32.mrb[0].mxu0
  %v453 = vadd.f32 %v260, %v452
  %v454 = vpop.f32.mrb[0].mxu0
  %v455 = vpop.f32.mrb[0].mxu0
  %v456 = vadd.f32 %v263, %v455
  %v457 = vpop.f32.mrb[0].mxu0
  %458 = vmatprep.mubr.bf16.mxu0 0
  %459 = vmatmul.mubr.bf16.gmra.mrb[0].mxu0 %v334
  %v460 = vpop.f32.mrb[0].mxu0
  %v461 = vadd.f32 %v268, %v460
  %v462 = vpop.f32.mrb[0].mxu0
  %v463 = vpop.f32.mrb[0].mxu0
  %v464 = vadd.f32 %v271, %v463
  %v465 = vpop.f32.mrb[0].mxu0
  %466 = vmatprep.mubr.bf16.mxu0 0
  %467 = vmatmul.mubr.bf16.gmra.mrb[0].mxu0 %v335
  %v468 = vpop.f32.mrb[0].mxu0
  %v469 = vadd.f32 %v276, %v468
  %v470 = vpop.f32.mrb[0].mxu0
  %v471 = vpop.f32.mrb[0].mxu0
  %v472 = vadd.f32 %v279, %v471
  %v473 = vpop.f32.mrb[0].mxu0
  %474 = vmatprep.mubr.bf16.mxu0 0
  %475 = vmatmul.mubr.bf16.gmra.mrb[0].mxu0 %v336
  %v476 = vpop.f32.mrb[0].mxu0
  %v477 = vadd.f32 %v284, %v476
  %v478 = vpop.f32.mrb[0].mxu0
  %v479 = vpop.f32.mrb[0].mxu0
  %v480 = vadd.f32 %v287, %v479
  %v481 = vpop.f32.mrb[0].mxu0
  %482 = vmatprep.mubr.bf16.mxu0 0
  %483 = vmatmul.mubr.bf16.gmra.mrb[0].mxu0 %v337
  %v484 = vpop.f32.mrb[0].mxu0
  %v485 = vadd.f32 %v292, %v484
  %v486 = vpop.f32.mrb[0].mxu0
  %v487 = vpop.f32.mrb[0].mxu0
  %v488 = vadd.f32 %v295, %v487
  %v489 = vpop.f32.mrb[0].mxu0
  %490 = vdwg.mxu0
  %s491 = scalar_lea.vmem %s0, 200
  %v492 = vld [vmem:[%s491] sm:$0xf]
  %v493 = vld [vmem:[%s491 + $0x4] sm:$0xf]
  %v494 = vld [vmem:[%s491 + $0x8] sm:$0xf]
  %v495 = vld [vmem:[%s491 + $0xc] sm:$0xf]
  %v496 = vld [vmem:[%s491 + $0x14] sm:$0xf]
  %v497 = vld [vmem:[%s491 + $0x18] sm:$0xf]
  %v498 = vld [vmem:[%s491 + $0x1c] sm:$0xf]
  %v499 = vld [vmem:[%s491 + $0x20] sm:$0xf]
  %v500 = vld [vmem:[%s491 + $0x28] sm:$0xf]
  %v501 = vld [vmem:[%s491 + $0x2c] sm:$0xf]
  %v502 = vld [vmem:[%s491 + $0x30] sm:$0xf]
  %v503 = vld [vmem:[%s491 + $0x34] sm:$0xf]
  %v504 = vld [vmem:[%s491 + $0x3c] sm:$0xf]
  %v505 = vld [vmem:[%s491 + $0x40] sm:$0xf]
  %v506 = vld [vmem:[%s491 + $0x44] sm:$0xf]
  %v507 = vld [vmem:[%s491 + $0x48] sm:$0xf]
  %s508 = scalar_lea.vmem %s1, 128
  %v509 = vld [vmem:[%s508] sm:$0xf]
  %v510 = vld [vmem:[%s508 + $0x4] sm:$0xf]
  %v511 = vld [vmem:[%s508 + $0x8] sm:$0xf]
  %v512 = vld [vmem:[%s508 + $0xc] sm:$0xf]
  %v513 = vld [vmem:[%s508 + $0x10] sm:$0xf]
  %v514 = vld [vmem:[%s508 + $0x14] sm:$0xf]
  %v515 = vld [vmem:[%s508 + $0x18] sm:$0xf]
  %v516 = vld [vmem:[%s508 + $0x1c] sm:$0xf]
  %v517 = vld [vmem:[%s508 + $0x20] sm:$0xf]
  %v518 = vld [vmem:[%s508 + $0x24] sm:$0xf]
  %v519 = vld [vmem:[%s508 + $0x28] sm:$0xf]
  %v520 = vld [vmem:[%s508 + $0x2c] sm:$0xf]
  %v521 = vld [vmem:[%s508 + $0x30] sm:$0xf]
  %v522 = vld [vmem:[%s508 + $0x34] sm:$0xf]
  %v523 = vld [vmem:[%s508 + $0x38] sm:$0xf]
  %v524 = vld [vmem:[%s508 + $0x3c] sm:$0xf]
  %v541 = vunpack.c.l.b16 %v492
  %v542 = vunpack.c.l.b16 %v493
  %v543 = vunpack.c.l.b16 %v494
  %v544 = vunpack.c.l.b16 %v495
  %v545 = vunpack.c.l.b16 %v496
  %v546 = vunpack.c.l.b16 %v497
  %v547 = vunpack.c.l.b16 %v498
  %v548 = vunpack.c.l.b16 %v499
  %v549 = vunpack.c.l.b16 %v500
  %v550 = vunpack.c.l.b16 %v501
  %v551 = vunpack.c.l.b16 %v502
  %v552 = vunpack.c.l.b16 %v503
  %v553 = vunpack.c.l.b16 %v504
  %v554 = vunpack.c.l.b16 %v505
  %v555 = vunpack.c.l.b16 %v506
  %v556 = vunpack.c.l.b16 %v507
  %v557 = vpack.c.b16 %v542, %v541
  %v558 = vpack.c.b16 %v544, %v543
  %v559 = vpack.c.b16 %v546, %v545
  %v560 = vpack.c.b16 %v548, %v547
  %v561 = vpack.c.b16 %v550, %v549
  %v562 = vpack.c.b16 %v552, %v551
  %v563 = vpack.c.b16 %v554, %v553
  %v564 = vpack.c.b16 %v556, %v555
  %v589 = vunpack.c.l.b16 %v509
  %v590 = vunpack.c.l.b16 %v510
  %v591 = vunpack.c.l.b16 %v511
  %v592 = vunpack.c.l.b16 %v512
  %v593 = vunpack.c.l.b16 %v513
  %v594 = vunpack.c.l.b16 %v514
  %v595 = vunpack.c.l.b16 %v515
  %v596 = vunpack.c.l.b16 %v516
  %v597 = vunpack.c.l.b16 %v517
  %v598 = vunpack.c.l.b16 %v518
  %v599 = vunpack.c.l.b16 %v519
  %v600 = vunpack.c.l.b16 %v520
  %v601 = vunpack.c.l.b16 %v521
  %v602 = vunpack.c.l.b16 %v522
  %v603 = vunpack.c.l.b16 %v523
  %v604 = vunpack.c.l.b16 %v524
  %v605 = vpack.c.b16 %v590, %v589
  %v606 = vpack.c.b16 %v592, %v591
  %v607 = vpack.c.b16 %v594, %v593
  %v608 = vpack.c.b16 %v596, %v595
  %v609 = vpack.c.b16 %v598, %v597
  %v610 = vpack.c.b16 %v600, %v599
  %v611 = vpack.c.b16 %v602, %v601
  %v612 = vpack.c.b16 %v604, %v603
  %621 = vmatprep.subr.bf16.mxu0 0
  %622 = vmatpush1.bf16.msra.mxu0 %v605
  %623 = vmatprep.subr.bf16.mxu0 0
  %624 = vmatpush1.bf16.msra.mxu0 %v606
  %625 = vmatprep.subr.bf16.mxu0 0
  %626 = vmatpush1.bf16.msra.mxu0 %v607
  %627 = vmatprep.subr.bf16.mxu0 0
  %628 = vmatpush1.bf16.msra.mxu0 %v608
  %629 = vmatprep.subr.bf16.mxu0 0
  %630 = vmatpush1.bf16.msra.mxu0 %v609
  %631 = vmatprep.subr.bf16.mxu0 0
  %632 = vmatpush1.bf16.msra.mxu0 %v610
  %633 = vmatprep.subr.bf16.mxu0 0
  %634 = vmatpush1.bf16.msra.mxu0 %v611
  %635 = vmatprep.subr.bf16.mxu0 0
  %636 = vmatpush1.bf16.msra.mxu0 %v612
  %637 = vmatprep.subr.bf16.mxu0 0
  %638 = vmatpush1.bf16.msra.mxu0 0
  %639 = vmatprep.subr.bf16.mxu0 0
  %640 = vmatpush1.bf16.msra.mxu0 0
  %641 = vmatprep.subr.bf16.mxu0 0
  %642 = vmatpush1.bf16.msra.mxu0 0
  %643 = vmatprep.subr.bf16.mxu0 0
  %644 = vmatpush1.bf16.msra.mxu0 0
  %645 = vmatprep.subr.bf16.mxu0 0
  %646 = vmatpush1.bf16.msra.mxu0 0
  %647 = vmatprep.subr.bf16.mxu0 0
  %648 = vmatpush1.bf16.msra.mxu0 0
  %649 = vmatprep.subr.bf16.mxu0 0
  %650 = vmatpush1.bf16.msra.mxu0 0
  %651 = vmatprep.subr.bf16.mxu0 0
  %652 = vmatpush1.bf16.msra.mxu0 0
  %653 = vmatprep.mubr.bf16.mxu0 0
  %654 = vmatmul.mubr.bf16.gmra.mrb[0].mxu0 %v557
  %v655 = vpop.f32.mrb[0].mxu0
  %v656 = vadd.f32 0.0, %v655
  %v657 = vpop.f32.mrb[0].mxu0
  %v658 = vpop.f32.mrb[0].mxu0
  %v659 = vadd.f32 0.0, %v658
  %v660 = vpop.f32.mrb[0].mxu0
  %661 = vmatprep.mubr.bf16.mxu0 0
  %662 = vmatmul.mubr.bf16.gmra.mrb[0].mxu0 %v558
  %v663 = vpop.f32.mrb[0].mxu0
  %v664 = vadd.f32 0.0, %v663
  %v665 = vpop.f32.mrb[0].mxu0
  %v666 = vpop.f32.mrb[0].mxu0
  %v667 = vadd.f32 0.0, %v666
  %v668 = vpop.f32.mrb[0].mxu0
  %669 = vmatprep.mubr.bf16.mxu0 0
  %670 = vmatmul.mubr.bf16.gmra.mrb[0].mxu0 %v559
  %v671 = vpop.f32.mrb[0].mxu0
  %v672 = vadd.f32 0.0, %v671
  %v673 = vpop.f32.mrb[0].mxu0
  %v674 = vpop.f32.mrb[0].mxu0
  %v675 = vadd.f32 0.0, %v674
  %v676 = vpop.f32.mrb[0].mxu0
  %677 = vmatprep.mubr.bf16.mxu0 0
  %678 = vmatmul.mubr.bf16.gmra.mrb[0].mxu0 %v560
  %v679 = vpop.f32.mrb[0].mxu0
  %v680 = vadd.f32 0.0, %v679
  %v681 = vpop.f32.mrb[0].mxu0
  %v682 = vpop.f32.mrb[0].mxu0
  %v683 = vadd.f32 0.0, %v682
  %v684 = vpop.f32.mrb[0].mxu0
  %685 = vmatprep.mubr.bf16.mxu0 0
  %686 = vmatmul.mubr.bf16.gmra.mrb[0].mxu0 %v561
  %v687 = vpop.f32.mrb[0].mxu0
  %v688 = vadd.f32 0.0, %v687
  %v689 = vpop.f32.mrb[0].mxu0
  %v690 = vpop.f32.mrb[0].mxu0
  %v691 = vadd.f32 0.0, %v690
  %v692 = vpop.f32.mrb[0].mxu0
  %693 = vmatprep.mubr.bf16.mxu0 0
  %694 = vmatmul.mubr.bf16.gmra.mrb[0].mxu0 %v562
  %v695 = vpop.f32.mrb[0].mxu0
  %v696 = vadd.f32 0.0, %v695
  %v697 = vpop.f32.mrb[0].mxu0
  %v698 = vpop.f32.mrb[0].mxu0
  %v699 = vadd.f32 0.0, %v698
  %v700 = vpop.f32.mrb[0].mxu0
  %701 = vmatprep.mubr.bf16.mxu0 0
  %702 = vmatmul.mubr.bf16.gmra.mrb[0].mxu0 %v563
  %v703 = vpop.f32.mrb[0].mxu0
  %v704 = vadd.f32 0.0, %v703
  %v705 = vpop.f32.mrb[0].mxu0
  %v706 = vpop.f32.mrb[0].mxu0
  %v707 = vadd.f32 0.0, %v706
  %v708 = vpop.f32.mrb[0].mxu0
  %709 = vmatprep.mubr.bf16.mxu0 0
  %710 = vmatmul.mubr.bf16.gmra.mrb[0].mxu0 %v564
  %v711 = vpop.f32.mrb[0].mxu0
  %v712 = vadd.f32 0.0, %v711
  %v713 = vpop.f32.mrb[0].mxu0
  %v714 = vpop.f32.mrb[0].mxu0
  %v715 = vadd.f32 0.0, %v714
  %v716 = vpop.f32.mrb[0].mxu0
  %717 = vdwg.mxu0
  %v718 = vadd.f32 %v429, %v656
  %v719 = vadd.f32 %v432, %v659
  %v720 = vadd.f32 %v437, %v664
  %v721 = vadd.f32 %v440, %v667
  %v722 = vadd.f32 %v445, %v672
  %v723 = vadd.f32 %v448, %v675
  %v724 = vadd.f32 %v453, %v680
  %v725 = vadd.f32 %v456, %v683
  %v726 = vadd.f32 %v461, %v688
  %v727 = vadd.f32 %v464, %v691
  %v728 = vadd.f32 %v469, %v696
  %v729 = vadd.f32 %v472, %v699
  %v730 = vadd.f32 %v477, %v704
  %v731 = vadd.f32 %v480, %v707
  %v732 = vadd.f32 %v485, %v712
  %v733 = vadd.f32 %v488, %v715
  %s734 = scalar_lea.vmem %s0, 300
  %v735 = vld [vmem:[%s734] sm:$0xf]
  %v736 = vld [vmem:[%s734 + $0x4] sm:$0xf]
  %v737 = vld [vmem:[%s734 + $0x8] sm:$0xf]
  %v738 = vld [vmem:[%s734 + $0xc] sm:$0xf]
  %v739 = vld [vmem:[%s734 + $0x14] sm:$0xf]
  %v740 = vld [vmem:[%s734 + $0x18] sm:$0xf]
  %v741 = vld [vmem:[%s734 + $0x1c] sm:$0xf]
  %v742 = vld [vmem:[%s734 + $0x20] sm:$0xf]
  %v743 = vld [vmem:[%s734 + $0x28] sm:$0xf]
  %v744 = vld [vmem:[%s734 + $0x2c] sm:$0xf]
  %v745 = vld [vmem:[%s734 + $0x30] sm:$0xf]
  %v746 = vld [vmem:[%s734 + $0x34] sm:$0xf]
  %v747 = vld [vmem:[%s734 + $0x3c] sm:$0xf]
  %v748 = vld [vmem:[%s734 + $0x40] sm:$0xf]
  %v749 = vld [vmem:[%s734 + $0x44] sm:$0xf]
  %v750 = vld [vmem:[%s734 + $0x48] sm:$0xf]
  %s751 = scalar_lea.vmem %s1, 192
  %v752 = vld [vmem:[%s751] sm:$0xf]
  %v753 = vld [vmem:[%s751 + $0x4] sm:$0xf]
  %v754 = vld [vmem:[%s751 + $0x8] sm:$0xf]
  %v755 = vld [vmem:[%s751 + $0xc] sm:$0xf]
  %v756 = vld [vmem:[%s751 + $0x10] sm:$0xf]
  %v757 = vld [vmem:[%s751 + $0x14] sm:$0xf]
  %v758 = vld [vmem:[%s751 + $0x18] sm:$0xf]
  %v759 = vld [vmem:[%s751 + $0x1c] sm:$0xf]
  %v760 = vld [vmem:[%s751 + $0x20] sm:$0xf]
  %v761 = vld [vmem:[%s751 + $0x24] sm:$0xf]
  %v762 = vld [vmem:[%s751 + $0x28] sm:$0xf]
  %v763 = vld [vmem:[%s751 + $0x2c] sm:$0xf]
  %v764 = vld [vmem:[%s751 + $0x30] sm:$0xf]
  %v765 = vld [vmem:[%s751 + $0x34] sm:$0xf]
  %v766 = vld [vmem:[%s751 + $0x38] sm:$0xf]
  %v767 = vld [vmem:[%s751 + $0x3c] sm:$0xf]
  %v784 = vunpack.c.l.b16 %v735
  %v785 = vunpack.c.l.b16 %v736
  %v786 = vunpack.c.l.b16 %v737
  %v787 = vunpack.c.l.b16 %v738
  %v788 = vunpack.c.l.b16 %v739
  %v789 = vunpack.c.l.b16 %v740
  %v790 = vunpack.c.l.b16 %v741
  %v791 = vunpack.c.l.b16 %v742
  %v792 = vunpack.c.l.b16 %v743
  %v793 = vunpack.c.l.b16 %v744
  %v794 = vunpack.c.l.b16 %v745
  %v795 = vunpack.c.l.b16 %v746
  %v796 = vunpack.c.l.b16 %v747
  %v797 = vunpack.c.l.b16 %v748
  %v798 = vunpack.c.l.b16 %v749
  %v799 = vunpack.c.l.b16 %v750
  %v800 = vpack.c.b16 %v785, %v784
  %v801 = vpack.c.b16 %v787, %v786
  %v802 = vpack.c.b16 %v789, %v788
  %v803 = vpack.c.b16 %v791, %v790
  %v804 = vpack.c.b16 %v793, %v792
  %v805 = vpack.c.b16 %v795, %v794
  %v806 = vpack.c.b16 %v797, %v796
  %v807 = vpack.c.b16 %v799, %v798
  %v832 = vunpack.c.l.b16 %v752
  %v833 = vunpack.c.l.b16 %v753
  %v834 = vunpack.c.l.b16 %v754
  %v835 = vunpack.c.l.b16 %v755
  %v836 = vunpack.c.l.b16 %v756
  %v837 = vunpack.c.l.b16 %v757
  %v838 = vunpack.c.l.b16 %v758
  %v839 = vunpack.c.l.b16 %v759
  %v840 = vunpack.c.l.b16 %v760
  %v841 = vunpack.c.l.b16 %v761
  %v842 = vunpack.c.l.b16 %v762
  %v843 = vunpack.c.l.b16 %v763
  %v844 = vunpack.c.l.b16 %v764
  %v845 = vunpack.c.l.b16 %v765
  %v846 = vunpack.c.l.b16 %v766
  %v847 = vunpack.c.l.b16 %v767
  %v848 = vpack.c.b16 %v833, %v832
  %v849 = vpack.c.b16 %v835, %v834
  %v850 = vpack.c.b16 %v837, %v836
  %v851 = vpack.c.b16 %v839, %v838
  %v852 = vpack.c.b16 %v841, %v840
  %v853 = vpack.c.b16 %v843, %v842
  %v854 = vpack.c.b16 %v845, %v844
  %v855 = vpack.c.b16 %v847, %v846
  %864 = vmatprep.subr.bf16.mxu0 0
  %865 = vmatpush1.bf16.msra.mxu0 %v848
  %866 = vmatprep.subr.bf16.mxu0 0
  %867 = vmatpush1.bf16.msra.mxu0 %v849
  %868 = vmatprep.subr.bf16.mxu0 0
  %869 = vmatpush1.bf16.msra.mxu0 %v850
  %870 = vmatprep.subr.bf16.mxu0 0
  %871 = vmatpush1.bf16.msra.mxu0 %v851
  %872 = vmatprep.subr.bf16.mxu0 0
  %873 = vmatpush1.bf16.msra.mxu0 %v852
  %874 = vmatprep.subr.bf16.mxu0 0
  %875 = vmatpush1.bf16.msra.mxu0 %v853
  %876 = vmatprep.subr.bf16.mxu0 0
  %877 = vmatpush1.bf16.msra.mxu0 %v854
  %878 = vmatprep.subr.bf16.mxu0 0
  %879 = vmatpush1.bf16.msra.mxu0 %v855
  %880 = vmatprep.subr.bf16.mxu0 0
  %881 = vmatpush1.bf16.msra.mxu0 0
  %882 = vmatprep.subr.bf16.mxu0 0
  %883 = vmatpush1.bf16.msra.mxu0 0
  %884 = vmatprep.subr.bf16.mxu0 0
  %885 = vmatpush1.bf16.msra.mxu0 0
  %886 = vmatprep.subr.bf16.mxu0 0
  %887 = vmatpush1.bf16.msra.mxu0 0
  %888 = vmatprep.subr.bf16.mxu0 0
  %889 = vmatpush1.bf16.msra.mxu0 0
  %890 = vmatprep.subr.bf16.mxu0 0
  %891 = vmatpush1.bf16.msra.mxu0 0
  %892 = vmatprep.subr.bf16.mxu0 0
  %893 = vmatpush1.bf16.msra.mxu0 0
  %894 = vmatprep.subr.bf16.mxu0 0
  %895 = vmatpush1.bf16.msra.mxu0 0
  %896 = vmatprep.mubr.bf16.mxu0 0
  %897 = vmatmul.mubr.bf16.gmra.mrb[0].mxu0 %v800
  %v898 = vpop.f32.mrb[0].mxu0
  %v899 = vadd.f32 0.0, %v898
  %v900 = vpop.f32.mrb[0].mxu0
  %v901 = vpop.f32.mrb[0].mxu0
  %v902 = vadd.f32 0.0, %v901
  %v903 = vpop.f32.mrb[0].mxu0
  %904 = vmatprep.mubr.bf16.mxu0 0
  %905 = vmatmul.mubr.bf16.gmra.mrb[0].mxu0 %v801
  %v906 = vpop.f32.mrb[0].mxu0
  %v907 = vadd.f32 0.0, %v906
  %v908 = vpop.f32.mrb[0].mxu0
  %v909 = vpop.f32.mrb[0].mxu0
  %v910 = vadd.f32 0.0, %v909
  %v911 = vpop.f32.mrb[0].mxu0
  %912 = vmatprep.mubr.bf16.mxu0 0
  %913 = vmatmul.mubr.bf16.gmra.mrb[0].mxu0 %v802
  %v914 = vpop.f32.mrb[0].mxu0
  %v915 = vadd.f32 0.0, %v914
  %v916 = vpop.f32.mrb[0].mxu0
  %v917 = vpop.f32.mrb[0].mxu0
  %v918 = vadd.f32 0.0, %v917
  %v919 = vpop.f32.mrb[0].mxu0
  %920 = vmatprep.mubr.bf16.mxu0 0
  %921 = vmatmul.mubr.bf16.gmra.mrb[0].mxu0 %v803
  %v922 = vpop.f32.mrb[0].mxu0
  %v923 = vadd.f32 0.0, %v922
  %v924 = vpop.f32.mrb[0].mxu0
  %v925 = vpop.f32.mrb[0].mxu0
  %v926 = vadd.f32 0.0, %v925
  %v927 = vpop.f32.mrb[0].mxu0
  %928 = vmatprep.mubr.bf16.mxu0 0
  %929 = vmatmul.mubr.bf16.gmra.mrb[0].mxu0 %v804
  %v930 = vpop.f32.mrb[0].mxu0
  %v931 = vadd.f32 0.0, %v930
  %v932 = vpop.f32.mrb[0].mxu0
  %v933 = vpop.f32.mrb[0].mxu0
  %v934 = vadd.f32 0.0, %v933
  %v935 = vpop.f32.mrb[0].mxu0
  %936 = vmatprep.mubr.bf16.mxu0 0
  %937 = vmatmul.mubr.bf16.gmra.mrb[0].mxu0 %v805
  %v938 = vpop.f32.mrb[0].mxu0
  %v939 = vadd.f32 0.0, %v938
  %v940 = vpop.f32.mrb[0].mxu0
  %v941 = vpop.f32.mrb[0].mxu0
  %v942 = vadd.f32 0.0, %v941
  %v943 = vpop.f32.mrb[0].mxu0
  %944 = vmatprep.mubr.bf16.mxu0 0
  %945 = vmatmul.mubr.bf16.gmra.mrb[0].mxu0 %v806
  %v946 = vpop.f32.mrb[0].mxu0
  %v947 = vadd.f32 0.0, %v946
  %v948 = vpop.f32.mrb[0].mxu0
  %v949 = vpop.f32.mrb[0].mxu0
  %v950 = vadd.f32 0.0, %v949
  %v951 = vpop.f32.mrb[0].mxu0
  %952 = vmatprep.mubr.bf16.mxu0 0
  %953 = vmatmul.mubr.bf16.gmra.mrb[0].mxu0 %v807
  %v954 = vpop.f32.mrb[0].mxu0
  %v955 = vadd.f32 0.0, %v954
  %v956 = vpop.f32.mrb[0].mxu0
  %v957 = vpop.f32.mrb[0].mxu0
  %v958 = vadd.f32 0.0, %v957
  %v959 = vpop.f32.mrb[0].mxu0
  %960 = vdwg.mxu0
  %v961 = vadd.f32 %v718, %v899
  %v962 = vadd.f32 %v719, %v902
  %v963 = vadd.f32 %v720, %v907
  %v964 = vadd.f32 %v721, %v910
  %v965 = vadd.f32 %v722, %v915
  %v966 = vadd.f32 %v723, %v918
  %v967 = vadd.f32 %v724, %v923
  %v968 = vadd.f32 %v725, %v926
  %v969 = vadd.f32 %v726, %v931
  %v970 = vadd.f32 %v727, %v934
  %v971 = vadd.f32 %v728, %v939
  %v972 = vadd.f32 %v729, %v942
  %v973 = vadd.f32 %v730, %v947
  %v974 = vadd.f32 %v731, %v950
  %v975 = vadd.f32 %v732, %v955
  %v976 = vadd.f32 %v733, %v958
  %v977 = vld [vmem:[%s2] sm:$0x1]
  %v979 = vlaneseq
  %v980 = vshrl.u32 %v979, 7
  %v981 = vsub.s32 0, %v980
  %v982 = vrot.slane %v977, %v981
  %v984 = vadd.f32 %v961, %v982
  %v985 = vadd.f32 %v962, %v982
  %v986 = vadd.f32 %v963, %v982
  %v987 = vadd.f32 %v964, %v982
  %v988 = vadd.f32 %v965, %v982
  %v989 = vadd.f32 %v966, %v982
  %v990 = vadd.f32 %v967, %v982
  %v991 = vadd.f32 %v968, %v982
  %v992 = vadd.f32 %v969, %v982
  %v993 = vadd.f32 %v970, %v982
  %v994 = vadd.f32 %v971, %v982
  %v995 = vadd.f32 %v972, %v982
  %v996 = vadd.f32 %v973, %v982
  %v997 = vadd.f32 %v974, %v982
  %v998 = vadd.f32 %v975, %v982
  %v999 = vadd.f32 %v976, %v982
  %v1000 = vmax.f32 %v984, 0.0
  %v1001 = vmax.f32 %v985, 0.0
  %v1002 = vmax.f32 %v986, 0.0
  %v1003 = vmax.f32 %v987, 0.0
  %v1004 = vmax.f32 %v988, 0.0
  %v1005 = vmax.f32 %v989, 0.0
  %v1006 = vmax.f32 %v990, 0.0
  %v1007 = vmax.f32 %v991, 0.0
  %v1008 = vmax.f32 %v992, 0.0
  %v1009 = vmax.f32 %v993, 0.0
  %v1010 = vmax.f32 %v994, 0.0
  %v1011 = vmax.f32 %v995, 0.0
  %v1012 = vmax.f32 %v996, 0.0
  %v1013 = vmax.f32 %v997, 0.0
  %v1014 = vmax.f32 %v998, 0.0
  %v1015 = vmax.f32 %v999, 0.0
  %v1016 = vpack.c.bf16 %v1001, %v1000
  %v1017 = vpack.c.bf16 %v1003, %v1002
  %v1018 = vpack.c.bf16 %v1005, %v1004
  %v1019 = vpack.c.bf16 %v1007, %v1006
  %v1020 = vpack.c.bf16 %v1009, %v1008
  %v1021 = vpack.c.bf16 %v1011, %v1010
  %v1022 = vpack.c.bf16 %v1013, %v1012
  %v1023 = vpack.c.bf16 %v1015, %v1014
  %v1032 = vunpack.c.l.b16 %v1016
  %v1033 = vunpack.c.h.b16 %v1016
  %v1034 = vunpack.c.l.b16 %v1017
  %v1035 = vunpack.c.h.b16 %v1017
  %v1036 = vunpack.c.l.b16 %v1018
  %v1037 = vunpack.c.h.b16 %v1018
  %v1038 = vunpack.c.l.b16 %v1019
  %v1039 = vunpack.c.h.b16 %v1019
  %v1040 = vunpack.c.l.b16 %v1020
  %v1041 = vunpack.c.h.b16 %v1020
  %v1042 = vunpack.c.l.b16 %v1021
  %v1043 = vunpack.c.h.b16 %v1021
  %v1044 = vunpack.c.l.b16 %v1022
  %v1045 = vunpack.c.h.b16 %v1022
  %v1046 = vunpack.c.l.b16 %v1023
  %v1047 = vunpack.c.h.b16 %v1023
  %v1048 = vpack.c.b16 %v1032, %v1032
  %v1049 = vpack.c.b16 %v1033, %v1033
  %v1050 = vpack.c.b16 %v1034, %v1034
  %v1051 = vpack.c.b16 %v1035, %v1035
  %v1052 = vpack.c.b16 %v1036, %v1036
  %v1053 = vpack.c.b16 %v1037, %v1037
  %v1054 = vpack.c.b16 %v1038, %v1038
  %v1055 = vpack.c.b16 %v1039, %v1039
  %v1056 = vpack.c.b16 %v1040, %v1040
  %v1057 = vpack.c.b16 %v1041, %v1041
  %v1058 = vpack.c.b16 %v1042, %v1042
  %v1059 = vpack.c.b16 %v1043, %v1043
  %v1060 = vpack.c.b16 %v1044, %v1044
  %v1061 = vpack.c.b16 %v1045, %v1045
  %v1062 = vpack.c.b16 %v1046, %v1046
  %v1063 = vpack.c.b16 %v1047, %v1047
  %1080 = vst [vmem:[#allocation2] sm:$0xf] %v1048
  %1081 = vst [vmem:[#allocation2 + $0x8] sm:$0xf] %v1049
  %1082 = vst [vmem:[#allocation2 + $0x10] sm:$0xf] %v1050
  %1083 = vst [vmem:[#allocation2 + $0x18] sm:$0xf] %v1051
  %1084 = vst [vmem:[#allocation2 + $0x20] sm:$0xf] %v1052
  %1085 = vst [vmem:[#allocation2 + $0x28] sm:$0xf] %v1053
  %1086 = vst [vmem:[#allocation2 + $0x30] sm:$0xf] %v1054
  %1087 = vst [vmem:[#allocation2 + $0x38] sm:$0xf] %v1055
  %1088 = vst [vmem:[#allocation2 + $0x40] sm:$0xf] %v1056
  %1089 = vst [vmem:[#allocation2 + $0x48] sm:$0xf] %v1057
  %1090 = vst [vmem:[#allocation2 + $0x50] sm:$0xf] %v1058
  %1091 = vst [vmem:[#allocation2 + $0x58] sm:$0xf] %v1059
  %1092 = vst [vmem:[#allocation2 + $0x60] sm:$0xf] %v1060
  %1093 = vst [vmem:[#allocation2 + $0x68] sm:$0xf] %v1061
  %1094 = vst [vmem:[#allocation2 + $0x70] sm:$0xf] %v1062
  %1095 = vst [vmem:[#allocation2 + $0x78] sm:$0xf] %v1063
  %v1096 = vld [vmem:[%s71] sm:$0xf]
  %v1097 = vld [vmem:[%s71 + $0x4] sm:$0xf]
  %v1098 = vld [vmem:[%s71 + $0x8] sm:$0xf]
  %v1099 = vld [vmem:[%s71 + $0xc] sm:$0xf]
  %v1100 = vld [vmem:[%s71 + $0x14] sm:$0xf]
  %v1101 = vld [vmem:[%s71 + $0x18] sm:$0xf]
  %v1102 = vld [vmem:[%s71 + $0x1c] sm:$0xf]
  %v1103 = vld [vmem:[%s71 + $0x20] sm:$0xf]
  %v1104 = vld [vmem:[%s71 + $0x28] sm:$0xf]
  %v1105 = vld [vmem:[%s71 + $0x2c] sm:$0xf]
  %v1106 = vld [vmem:[%s71 + $0x30] sm:$0xf]
  %v1107 = vld [vmem:[%s71 + $0x34] sm:$0xf]
  %v1108 = vld [vmem:[%s71 + $0x3c] sm:$0xf]
  %v1109 = vld [vmem:[%s71 + $0x40] sm:$0xf]
  %v1110 = vld [vmem:[%s71 + $0x44] sm:$0xf]
  %v1111 = vld [vmem:[%s71 + $0x48] sm:$0xf]
  %v1112 = vld [vmem:[%s1] sm:$0xf]
  %v1113 = vld [vmem:[%s1 + $0x4] sm:$0xf]
  %v1114 = vld [vmem:[%s1 + $0x8] sm:$0xf]
  %v1115 = vld [vmem:[%s1 + $0xc] sm:$0xf]
  %v1116 = vld [vmem:[%s1 + $0x10] sm:$0xf]
  %v1117 = vld [vmem:[%s1 + $0x14] sm:$0xf]
  %v1118 = vld [vmem:[%s1 + $0x18] sm:$0xf]
  %v1119 = vld [vmem:[%s1 + $0x1c] sm:$0xf]
  %v1120 = vld [vmem:[%s1 + $0x20] sm:$0xf]
  %v1121 = vld [vmem:[%s1 + $0x24] sm:$0xf]
  %v1122 = vld [vmem:[%s1 + $0x28] sm:$0xf]
  %v1123 = vld [vmem:[%s1 + $0x2c] sm:$0xf]
  %v1124 = vld [vmem:[%s1 + $0x30] sm:$0xf]
  %v1125 = vld [vmem:[%s1 + $0x34] sm:$0xf]
  %v1126 = vld [vmem:[%s1 + $0x38] sm:$0xf]
  %v1127 = vld [vmem:[%s1 + $0x3c] sm:$0xf]
  %s1128 = scalar_lea.vmem %s0, 4
  %v1129 = vld [vmem:[%s1128] sm:$0xf]
  %v1130 = vld [vmem:[%s1128 + $0x4] sm:$0xf]
  %v1131 = vld [vmem:[%s1128 + $0x8] sm:$0xf]
  %v1132 = vld [vmem:[%s1128 + $0xc] sm:$0xf]
  %v1133 = vld [vmem:[%s1128 + $0x14] sm:$0xf]
  %v1134 = vld [vmem:[%s1128 + $0x18] sm:$0xf]
  %v1135 = vld [vmem:[%s1128 + $0x1c] sm:$0xf]
  %v1136 = vld [vmem:[%s1128 + $0x20] sm:$0xf]
  %v1137 = vld [vmem:[%s1128 + $0x28] sm:$0xf]
  %v1138 = vld [vmem:[%s1128 + $0x2c] sm:$0xf]
  %v1139 = vld [vmem:[%s1128 + $0x30] sm:$0xf]
  %v1140 = vld [vmem:[%s1128 + $0x34] sm:$0xf]
  %v1141 = vld [vmem:[%s1128 + $0x3c] sm:$0xf]
  %v1142 = vld [vmem:[%s1128 + $0x40] sm:$0xf]
  %v1143 = vld [vmem:[%s1128 + $0x44] sm:$0xf]
  %v1144 = vld [vmem:[%s1128 + $0x48] sm:$0xf]
  %v1145 = vld [vmem:[%s88] sm:$0xf]
  %v1146 = vld [vmem:[%s88 + $0x4] sm:$0xf]
  %v1147 = vld [vmem:[%s88 + $0x8] sm:$0xf]
  %v1148 = vld [vmem:[%s88 + $0xc] sm:$0xf]
  %v1149 = vld [vmem:[%s88 + $0x10] sm:$0xf]
  %v1150 = vld [vmem:[%s88 + $0x14] sm:$0xf]
  %v1151 = vld [vmem:[%s88 + $0x18] sm:$0xf]
  %v1152 = vld [vmem:[%s88 + $0x1c] sm:$0xf]
  %v1153 = vld [vmem:[%s88 + $0x20] sm:$0xf]
  %v1154 = vld [vmem:[%s88 + $0x24] sm:$0xf]
  %v1155 = vld [vmem:[%s88 + $0x28] sm:$0xf]
  %v1156 = vld [vmem:[%s88 + $0x2c] sm:$0xf]
  %v1157 = vld [vmem:[%s88 + $0x30] sm:$0xf]
  %v1158 = vld [vmem:[%s88 + $0x34] sm:$0xf]
  %v1159 = vld [vmem:[%s88 + $0x38] sm:$0xf]
  %v1160 = vld [vmem:[%s88 + $0x3c] sm:$0xf]
  %v1177 = vunpack.c.l.b16 %v1129
  %v1178 = vunpack.c.l.b16 %v1130
  %v1179 = vunpack.c.l.b16 %v1131
  %v1180 = vunpack.c.l.b16 %v1132
  %v1181 = vunpack.c.l.b16 %v1133
  %v1182 = vunpack.c.l.b16 %v1134
  %v1183 = vunpack.c.l.b16 %v1135
  %v1184 = vunpack.c.l.b16 %v1136
  %v1185 = vunpack.c.l.b16 %v1137
  %v1186 = vunpack.c.l.b16 %v1138
  %v1187 = vunpack.c.l.b16 %v1139
  %v1188 = vunpack.c.l.b16 %v1140
  %v1189 = vunpack.c.l.b16 %v1141
  %v1190 = vunpack.c.l.b16 %v1142
  %v1191 = vunpack.c.l.b16 %v1143
  %v1192 = vunpack.c.l.b16 %v1144
  %v1193 = vpack.c.b16 %v1178, %v1177
  %v1194 = vpack.c.b16 %v1180, %v1179
  %v1195 = vpack.c.b16 %v1182, %v1181
  %v1196 = vpack.c.b16 %v1184, %v1183
  %v1197 = vpack.c.b16 %v1186, %v1185
  %v1198 = vpack.c.b16 %v1188, %v1187
  %v1199 = vpack.c.b16 %v1190, %v1189
  %v1200 = vpack.c.b16 %v1192, %v1191
  %v1225 = vunpack.c.l.b16 %v1145
  %v1226 = vunpack.c.l.b16 %v1146
  %v1227 = vunpack.c.l.b16 %v1147
  %v1228 = vunpack.c.l.b16 %v1148
  %v1229 = vunpack.c.l.b16 %v1149
  %v1230 = vunpack.c.l.b16 %v1150
  %v1231 = vunpack.c.l.b16 %v1151
  %v1232 = vunpack.c.l.b16 %v1152
  %v1233 = vunpack.c.l.b16 %v1153
  %v1234 = vunpack.c.l.b16 %v1154
  %v1235 = vunpack.c.l.b16 %v1155
  %v1236 = vunpack.c.l.b16 %v1156
  %v1237 = vunpack.c.l.b16 %v1157
  %v1238 = vunpack.c.l.b16 %v1158
  %v1239 = vunpack.c.l.b16 %v1159
  %v1240 = vunpack.c.l.b16 %v1160
  %v1241 = vpack.c.b16 %v1226, %v1225
  %v1242 = vpack.c.b16 %v1228, %v1227
  %v1243 = vpack.c.b16 %v1230, %v1229
  %v1244 = vpack.c.b16 %v1232, %v1231
  %v1245 = vpack.c.b16 %v1234, %v1233
  %v1246 = vpack.c.b16 %v1236, %v1235
  %v1247 = vpack.c.b16 %v1238, %v1237
  %v1248 = vpack.c.b16 %v1240, %v1239
  %1257 = vmatprep.subr.bf16.mxu0 0
  %1258 = vmatpush1.bf16.msra.mxu0 %v1241
  %1259 = vmatprep.subr.bf16.mxu0 0
  %1260 = vmatpush1.bf16.msra.mxu0 %v1242
  %1261 = vmatprep.subr.bf16.mxu0 0
  %1262 = vmatpush1.bf16.msra.mxu0 %v1243
  %1263 = vmatprep.subr.bf16.mxu0 0
  %1264 = vmatpush1.bf16.msra.mxu0 %v1244
  %1265 = vmatprep.subr.bf16.mxu0 0
  %1266 = vmatpush1.bf16.msra.mxu0 %v1245
  %1267 = vmatprep.subr.bf16.mxu0 0
  %1268 = vmatpush1.bf16.msra.mxu0 %v1246
  %1269 = vmatprep.subr.bf16.mxu0 0
  %1270 = vmatpush1.bf16.msra.mxu0 %v1247
  %1271 = vmatprep.subr.bf16.mxu0 0
  %1272 = vmatpush1.bf16.msra.mxu0 %v1248
  %1273 = vmatprep.subr.bf16.mxu0 0
  %1274 = vmatpush1.bf16.msra.mxu0 0
  %1275 = vmatprep.subr.bf16.mxu0 0
  %1276 = vmatpush1.bf16.msra.mxu0 0
  %1277 = vmatprep.subr.bf16.mxu0 0
  %1278 = vmatpush1.bf16.msra.mxu0 0
  %1279 = vmatprep.subr.bf16.mxu0 0
  %1280 = vmatpush1.bf16.msra.mxu0 0
  %1281 = vmatprep.subr.bf16.mxu0 0
  %1282 = vmatpush1.bf16.msra.mxu0 0
  %1283 = vmatprep.subr.bf16.mxu0 0
  %1284 = vmatpush1.bf16.msra.mxu0 0
  %1285 = vmatprep.subr.bf16.mxu0 0
  %1286 = vmatpush1.bf16.msra.mxu0 0
  %1287 = vmatprep.subr.bf16.mxu0 0
  %1288 = vmatpush1.bf16.msra.mxu0 0
  %1289 = vmatprep.mubr.bf16.mxu0 0
  %1290 = vmatmul.mubr.bf16.gmra.mrb[0].mxu0 %v1193
  %v1291 = vpop.f32.mrb[0].mxu0
  %v1292 = vadd.f32 0.0, %v1291
  %v1293 = vpop.f32.mrb[0].mxu0
  %v1294 = vpop.f32.mrb[0].mxu0
  %v1295 = vadd.f32 0.0, %v1294
  %v1296 = vpop.f32.mrb[0].mxu0
  %1297 = vmatprep.mubr.bf16.mxu0 0
  %1298 = vmatmul.mubr.bf16.gmra.mrb[0].mxu0 %v1194
  %v1299 = vpop.f32.mrb[0].mxu0
  %v1300 = vadd.f32 0.0, %v1299
  %v1301 = vpop.f32.mrb[0].mxu0
  %v1302 = vpop.f32.mrb[0].mxu0
  %v1303 = vadd.f32 0.0, %v1302
  %v1304 = vpop.f32.mrb[0].mxu0
  %1305 = vmatprep.mubr.bf16.mxu0 0
  %1306 = vmatmul.mubr.bf16.gmra.mrb[0].mxu0 %v1195
  %v1307 = vpop.f32.mrb[0].mxu0
  %v1308 = vadd.f32 0.0, %v1307
  %v1309 = vpop.f32.mrb[0].mxu0
  %v1310 = vpop.f32.mrb[0].mxu0
  %v1311 = vadd.f32 0.0, %v1310
  %v1312 = vpop.f32.mrb[0].mxu0
  %1313 = vmatprep.mubr.bf16.mxu0 0
  %1314 = vmatmul.mubr.bf16.gmra.mrb[0].mxu0 %v1196
  %v1315 = vpop.f32.mrb[0].mxu0
  %v1316 = vadd.f32 0.0, %v1315
  %v1317 = vpop.f32.mrb[0].mxu0
  %v1318 = vpop.f32.mrb[0].mxu0
  %v1319 = vadd.f32 0.0, %v1318
  %v1320 = vpop.f32.mrb[0].mxu0
  %1321 = vmatprep.mubr.bf16.mxu0 0
  %1322 = vmatmul.mubr.bf16.gmra.mrb[0].mxu0 %v1197
  %v1323 = vpop.f32.mrb[0].mxu0
  %v1324 = vadd.f32 0.0, %v1323
  %v1325 = vpop.f32.mrb[0].mxu0
  %v1326 = vpop.f32.mrb[0].mxu0
  %v1327 = vadd.f32 0.0, %v1326
  %v1328 = vpop.f32.mrb[0].mxu0
  %1329 = vmatprep.mubr.bf16.mxu0 0
  %1330 = vmatmul.mubr.bf16.gmra.mrb[0].mxu0 %v1198
  %v1331 = vpop.f32.mrb[0].mxu0
  %v1332 = vadd.f32 0.0, %v1331
  %v1333 = vpop.f32.mrb[0].mxu0
  %v1334 = vpop.f32.mrb[0].mxu0
  %v1335 = vadd.f32 0.0, %v1334
  %v1336 = vpop.f32.mrb[0].mxu0
  %1337 = vmatprep.mubr.bf16.mxu0 0
  %1338 = vmatmul.mubr.bf16.gmra.mrb[0].mxu0 %v1199
  %v1339 = vpop.f32.mrb[0].mxu0
  %v1340 = vadd.f32 0.0, %v1339
  %v1341 = vpop.f32.mrb[0].mxu0
  %v1342 = vpop.f32.mrb[0].mxu0
  %v1343 = vadd.f32 0.0, %v1342
  %v1344 = vpop.f32.mrb[0].mxu0
  %1345 = vmatprep.mubr.bf16.mxu0 0
  %1346 = vmatmul.mubr.bf16.gmra.mrb[0].mxu0 %v1200
  %v1347 = vpop.f32.mrb[0].mxu0
  %v1348 = vadd.f32 0.0, %v1347
  %v1349 = vpop.f32.mrb[0].mxu0
  %v1350 = vpop.f32.mrb[0].mxu0
  %v1351 = vadd.f32 0.0, %v1350
  %v1352 = vpop.f32.mrb[0].mxu0
  %1353 = vdwg.mxu0
  %v1370 = vunpack.c.l.b16 %v1096
  %v1371 = vunpack.c.l.b16 %v1097
  %v1372 = vunpack.c.l.b16 %v1098
  %v1373 = vunpack.c.l.b16 %v1099
  %v1374 = vunpack.c.l.b16 %v1100
  %v1375 = vunpack.c.l.b16 %v1101
  %v1376 = vunpack.c.l.b16 %v1102
  %v1377 = vunpack.c.l.b16 %v1103
  %v1378 = vunpack.c.l.b16 %v1104
  %v1379 = vunpack.c.l.b16 %v1105
  %v1380 = vunpack.c.l.b16 %v1106
  %v1381 = vunpack.c.l.b16 %v1107
  %v1382 = vunpack.c.l.b16 %v1108
  %v1383 = vunpack.c.l.b16 %v1109
  %v1384 = vunpack.c.l.b16 %v1110
  %v1385 = vunpack.c.l.b16 %v1111
  %v1386 = vpack.c.b16 %v1371, %v1370
  %v1387 = vpack.c.b16 %v1373, %v1372
  %v1388 = vpack.c.b16 %v1375, %v1374
  %v1389 = vpack.c.b16 %v1377, %v1376
  %v1390 = vpack.c.b16 %v1379, %v1378
  %v1391 = vpack.c.b16 %v1381, %v1380
  %v1392 = vpack.c.b16 %v1383, %v1382
  %v1393 = vpack.c.b16 %v1385, %v1384
  %v1418 = vunpack.c.l.b16 %v1112
  %v1419 = vunpack.c.l.b16 %v1113
  %v1420 = vunpack.c.l.b16 %v1114
  %v1421 = vunpack.c.l.b16 %v1115
  %v1422 = vunpack.c.l.b16 %v1116
  %v1423 = vunpack.c.l.b16 %v1117
  %v1424 = vunpack.c.l.b16 %v1118
  %v1425 = vunpack.c.l.b16 %v1119
  %v1426 = vunpack.c.l.b16 %v1120
  %v1427 = vunpack.c.l.b16 %v1121
  %v1428 = vunpack.c.l.b16 %v1122
  %v1429 = vunpack.c.l.b16 %v1123
  %v1430 = vunpack.c.l.b16 %v1124
  %v1431 = vunpack.c.l.b16 %v1125
  %v1432 = vunpack.c.l.b16 %v1126
  %v1433 = vunpack.c.l.b16 %v1127
  %v1434 = vpack.c.b16 %v1419, %v1418
  %v1435 = vpack.c.b16 %v1421, %v1420
  %v1436 = vpack.c.b16 %v1423, %v1422
  %v1437 = vpack.c.b16 %v1425, %v1424
  %v1438 = vpack.c.b16 %v1427, %v1426
  %v1439 = vpack.c.b16 %v1429, %v1428
  %v1440 = vpack.c.b16 %v1431, %v1430
  %v1441 = vpack.c.b16 %v1433, %v1432
  %1450 = vmatprep.subr.bf16.mxu0 0
  %1451 = vmatpush1.bf16.msra.mxu0 %v1434
  %1452 = vmatprep.subr.bf16.mxu0 0
  %1453 = vmatpush1.bf16.msra.mxu0 %v1435
  %1454 = vmatprep.subr.bf16.mxu0 0
  %1455 = vmatpush1.bf16.msra.mxu0 %v1436
  %1456 = vmatprep.subr.bf16.mxu0 0
  %1457 = vmatpush1.bf16.msra.mxu0 %v1437
  %1458 = vmatprep.subr.bf16.mxu0 0
  %1459 = vmatpush1.bf16.msra.mxu0 %v1438
  %1460 = vmatprep.subr.bf16.mxu0 0
  %1461 = vmatpush1.bf16.msra.mxu0 %v1439
  %1462 = vmatprep.subr.bf16.mxu0 0
  %1463 = vmatpush1.bf16.msra.mxu0 %v1440
  %1464 = vmatprep.subr.bf16.mxu0 0
  %1465 = vmatpush1.bf16.msra.mxu0 %v1441
  %1466 = vmatprep.subr.bf16.mxu0 0
  %1467 = vmatpush1.bf16.msra.mxu0 0
  %1468 = vmatprep.subr.bf16.mxu0 0
  %1469 = vmatpush1.bf16.msra.mxu0 0
  %1470 = vmatprep.subr.bf16.mxu0 0
  %1471 = vmatpush1.bf16.msra.mxu0 0
  %1472 = vmatprep.subr.bf16.mxu0 0
  %1473 = vmatpush1.bf16.msra.mxu0 0
  %1474 = vmatprep.subr.bf16.mxu0 0
  %1475 = vmatpush1.bf16.msra.mxu0 0
  %1476 = vmatprep.subr.bf16.mxu0 0
  %1477 = vmatpush1.bf16.msra.mxu0 0
  %1478 = vmatprep.subr.bf16.mxu0 0
  %1479 = vmatpush1.bf16.msra.mxu0 0
  %1480 = vmatprep.subr.bf16.mxu0 0
  %1481 = vmatpush1.bf16.msra.mxu0 0
  %1482 = vmatprep.mubr.bf16.mxu0 0
  %1483 = vmatmul.mubr.bf16.gmra.mrb[0].mxu0 %v1386
  %v1484 = vpop.f32.mrb[0].mxu0
  %v1485 = vadd.f32 %v1292, %v1484
  %v1486 = vpop.f32.mrb[0].mxu0
  %v1487 = vpop.f32.mrb[0].mxu0
  %v1488 = vadd.f32 %v1295, %v1487
  %v1489 = vpop.f32.mrb[0].mxu0
  %1490 = vmatprep.mubr.bf16.mxu0 0
  %1491 = vmatmul.mubr.bf16.gmra.mrb[0].mxu0 %v1387
  %v1492 = vpop.f32.mrb[0].mxu0
  %v1493 = vadd.f32 %v1300, %v1492
  %v1494 = vpop.f32.mrb[0].mxu0
  %v1495 = vpop.f32.mrb[0].mxu0
  %v1496 = vadd.f32 %v1303, %v1495
  %v1497 = vpop.f32.mrb[0].mxu0
  %1498 = vmatprep.mubr.bf16.mxu0 0
  %1499 = vmatmul.mubr.bf16.gmra.mrb[0].mxu0 %v1388
  %v1500 = vpop.f32.mrb[0].mxu0
  %v1501 = vadd.f32 %v1308, %v1500
  %v1502 = vpop.f32.mrb[0].mxu0
  %v1503 = vpop.f32.mrb[0].mxu0
  %v1504 = vadd.f32 %v1311, %v1503
  %v1505 = vpop.f32.mrb[0].mxu0
  %1506 = vmatprep.mubr.bf16.mxu0 0
  %1507 = vmatmul.mubr.bf16.gmra.mrb[0].mxu0 %v1389
  %v1508 = vpop.f32.mrb[0].mxu0
  %v1509 = vadd.f32 %v1316, %v1508
  %v1510 = vpop.f32.mrb[0].mxu0
  %v1511 = vpop.f32.mrb[0].mxu0
  %v1512 = vadd.f32 %v1319, %v1511
  %v1513 = vpop.f32.mrb[0].mxu0
  %1514 = vmatprep.mubr.bf16.mxu0 0
  %1515 = vmatmul.mubr.bf16.gmra.mrb[0].mxu0 %v1390
  %v1516 = vpop.f32.mrb[0].mxu0
  %v1517 = vadd.f32 %v1324, %v1516
  %v1518 = vpop.f32.mrb[0].mxu0
  %v1519 = vpop.f32.mrb[0].mxu0
  %v1520 = vadd.f32 %v1327, %v1519
  %v1521 = vpop.f32.mrb[0].mxu0
  %1522 = vmatprep.mubr.bf16.mxu0 0
  %1523 = vmatmul.mubr.bf16.gmra.mrb[0].mxu0 %v1391
  %v1524 = vpop.f32.mrb[0].mxu0
  %v1525 = vadd.f32 %v1332, %v1524
  %v1526 = vpop.f32.mrb[0].mxu0
  %v1527 = vpop.f32.mrb[0].mxu0
  %v1528 = vadd.f32 %v1335, %v1527
  %v1529 = vpop.f32.mrb[0].mxu0
  %1530 = vmatprep.mubr.bf16.mxu0 0
  %1531 = vmatmul.mubr.bf16.gmra.mrb[0].mxu0 %v1392
  %v1532 = vpop.f32.mrb[0].mxu0
  %v1533 = vadd.f32 %v1340, %v1532
  %v1534 = vpop.f32.mrb[0].mxu0
  %v1535 = vpop.f32.mrb[0].mxu0
  %v1536 = vadd.f32 %v1343, %v1535
  %v1537 = vpop.f32.mrb[0].mxu0
  %1538 = vmatprep.mubr.bf16.mxu0 0
  %1539 = vmatmul.mubr.bf16.gmra.mrb[0].mxu0 %v1393
  %v1540 = vpop.f32.mrb[0].mxu0
  %v1541 = vadd.f32 %v1348, %v1540
  %v1542 = vpop.f32.mrb[0].mxu0
  %v1543 = vpop.f32.mrb[0].mxu0
  %v1544 = vadd.f32 %v1351, %v1543
  %v1545 = vpop.f32.mrb[0].mxu0
  %1546 = vdwg.mxu0
  %v1547 = vld [vmem:[%s734] sm:$0xf]
  %v1548 = vld [vmem:[%s734 + $0x4] sm:$0xf]
  %v1549 = vld [vmem:[%s734 + $0x8] sm:$0xf]
  %v1550 = vld [vmem:[%s734 + $0xc] sm:$0xf]
  %v1551 = vld [vmem:[%s734 + $0x14] sm:$0xf]
  %v1552 = vld [vmem:[%s734 + $0x18] sm:$0xf]
  %v1553 = vld [vmem:[%s734 + $0x1c] sm:$0xf]
  %v1554 = vld [vmem:[%s734 + $0x20] sm:$0xf]
  %v1555 = vld [vmem:[%s734 + $0x28] sm:$0xf]
  %v1556 = vld [vmem:[%s734 + $0x2c] sm:$0xf]
  %v1557 = vld [vmem:[%s734 + $0x30] sm:$0xf]
  %v1558 = vld [vmem:[%s734 + $0x34] sm:$0xf]
  %v1559 = vld [vmem:[%s734 + $0x3c] sm:$0xf]
  %v1560 = vld [vmem:[%s734 + $0x40] sm:$0xf]
  %v1561 = vld [vmem:[%s734 + $0x44] sm:$0xf]
  %v1562 = vld [vmem:[%s734 + $0x48] sm:$0xf]
  %v1563 = vld [vmem:[%s508] sm:$0xf]
  %v1564 = vld [vmem:[%s508 + $0x4] sm:$0xf]
  %v1565 = vld [vmem:[%s508 + $0x8] sm:$0xf]
  %v1566 = vld [vmem:[%s508 + $0xc] sm:$0xf]
  %v1567 = vld [vmem:[%s508 + $0x10] sm:$0xf]
  %v1568 = vld [vmem:[%s508 + $0x14] sm:$0xf]
  %v1569 = vld [vmem:[%s508 + $0x18] sm:$0xf]
  %v1570 = vld [vmem:[%s508 + $0x1c] sm:$0xf]
  %v1571 = vld [vmem:[%s508 + $0x20] sm:$0xf]
  %v1572 = vld [vmem:[%s508 + $0x24] sm:$0xf]
  %v1573 = vld [vmem:[%s508 + $0x28] sm:$0xf]
  %v1574 = vld [vmem:[%s508 + $0x2c] sm:$0xf]
  %v1575 = vld [vmem:[%s508 + $0x30] sm:$0xf]
  %v1576 = vld [vmem:[%s508 + $0x34] sm:$0xf]
  %v1577 = vld [vmem:[%s508 + $0x38] sm:$0xf]
  %v1578 = vld [vmem:[%s508 + $0x3c] sm:$0xf]
  %v1595 = vunpack.c.l.b16 %v1547
  %v1596 = vunpack.c.l.b16 %v1548
  %v1597 = vunpack.c.l.b16 %v1549
  %v1598 = vunpack.c.l.b16 %v1550
  %v1599 = vunpack.c.l.b16 %v1551
  %v1600 = vunpack.c.l.b16 %v1552
  %v1601 = vunpack.c.l.b16 %v1553
  %v1602 = vunpack.c.l.b16 %v1554
  %v1603 = vunpack.c.l.b16 %v1555
  %v1604 = vunpack.c.l.b16 %v1556
  %v1605 = vunpack.c.l.b16 %v1557
  %v1606 = vunpack.c.l.b16 %v1558
  %v1607 = vunpack.c.l.b16 %v1559
  %v1608 = vunpack.c.l.b16 %v1560
  %v1609 = vunpack.c.l.b16 %v1561
  %v1610 = vunpack.c.l.b16 %v1562
  %v1611 = vpack.c.b16 %v1596, %v1595
  %v1612 = vpack.c.b16 %v1598, %v1597
  %v1613 = vpack.c.b16 %v1600, %v1599
  %v1614 = vpack.c.b16 %v1602, %v1601
  %v1615 = vpack.c.b16 %v1604, %v1603
  %v1616 = vpack.c.b16 %v1606, %v1605
  %v1617 = vpack.c.b16 %v1608, %v1607
  %v1618 = vpack.c.b16 %v1610, %v1609
  %v1643 = vunpack.c.l.b16 %v1563
  %v1644 = vunpack.c.l.b16 %v1564
  %v1645 = vunpack.c.l.b16 %v1565
  %v1646 = vunpack.c.l.b16 %v1566
  %v1647 = vunpack.c.l.b16 %v1567
  %v1648 = vunpack.c.l.b16 %v1568
  %v1649 = vunpack.c.l.b16 %v1569
  %v1650 = vunpack.c.l.b16 %v1570
  %v1651 = vunpack.c.l.b16 %v1571
  %v1652 = vunpack.c.l.b16 %v1572
  %v1653 = vunpack.c.l.b16 %v1573
  %v1654 = vunpack.c.l.b16 %v1574
  %v1655 = vunpack.c.l.b16 %v1575
  %v1656 = vunpack.c.l.b16 %v1576
  %v1657 = vunpack.c.l.b16 %v1577
  %v1658 = vunpack.c.l.b16 %v1578
  %v1659 = vpack.c.b16 %v1644, %v1643
  %v1660 = vpack.c.b16 %v1646, %v1645
  %v1661 = vpack.c.b16 %v1648, %v1647
  %v1662 = vpack.c.b16 %v1650, %v1649
  %v1663 = vpack.c.b16 %v1652, %v1651
  %v1664 = vpack.c.b16 %v1654, %v1653
  %v1665 = vpack.c.b16 %v1656, %v1655
  %v1666 = vpack.c.b16 %v1658, %v1657
  %1675 = vmatprep.subr.bf16.mxu0 0
  %1676 = vmatpush1.bf16.msra.mxu0 %v1659
  %1677 = vmatprep.subr.bf16.mxu0 0
  %1678 = vmatpush1.bf16.msra.mxu0 %v1660
  %1679 = vmatprep.subr.bf16.mxu0 0
  %1680 = vmatpush1.bf16.msra.mxu0 %v1661
  %1681 = vmatprep.subr.bf16.mxu0 0
  %1682 = vmatpush1.bf16.msra.mxu0 %v1662
  %1683 = vmatprep.subr.bf16.mxu0 0
  %1684 = vmatpush1.bf16.msra.mxu0 %v1663
  %1685 = vmatprep.subr.bf16.mxu0 0
  %1686 = vmatpush1.bf16.msra.mxu0 %v1664
  %1687 = vmatprep.subr.bf16.mxu0 0
  %1688 = vmatpush1.bf16.msra.mxu0 %v1665
  %1689 = vmatprep.subr.bf16.mxu0 0
  %1690 = vmatpush1.bf16.msra.mxu0 %v1666
  %1691 = vmatprep.subr.bf16.mxu0 0
  %1692 = vmatpush1.bf16.msra.mxu0 0
  %1693 = vmatprep.subr.bf16.mxu0 0
  %1694 = vmatpush1.bf16.msra.mxu0 0
  %1695 = vmatprep.subr.bf16.mxu0 0
  %1696 = vmatpush1.bf16.msra.mxu0 0
  %1697 = vmatprep.subr.bf16.mxu0 0
  %1698 = vmatpush1.bf16.msra.mxu0 0
  %1699 = vmatprep.subr.bf16.mxu0 0
  %1700 = vmatpush1.bf16.msra.mxu0 0
  %1701 = vmatprep.subr.bf16.mxu0 0
  %1702 = vmatpush1.bf16.msra.mxu0 0
  %1703 = vmatprep.subr.bf16.mxu0 0
  %1704 = vmatpush1.bf16.msra.mxu0 0
  %1705 = vmatprep.subr.bf16.mxu0 0
  %1706 = vmatpush1.bf16.msra.mxu0 0
  %1707 = vmatprep.mubr.bf16.mxu0 0
  %1708 = vmatmul.mubr.bf16.gmra.mrb[0].mxu0 %v1611
  %v1709 = vpop.f32.mrb[0].mxu0
  %v1710 = vadd.f32 0.0, %v1709
  %v1711 = vpop.f32.mrb[0].mxu0
  %v1712 = vpop.f32.mrb[0].mxu0
  %v1713 = vadd.f32 0.0, %v1712
  %v1714 = vpop.f32.mrb[0].mxu0
  %1715 = vmatprep.mubr.bf16.mxu0 0
  %1716 = vmatmul.mubr.bf16.gmra.mrb[0].mxu0 %v1612
  %v1717 = vpop.f32.mrb[0].mxu0
  %v1718 = vadd.f32 0.0, %v1717
  %v1719 = vpop.f32.mrb[0].mxu0
  %v1720 = vpop.f32.mrb[0].mxu0
  %v1721 = vadd.f32 0.0, %v1720
  %v1722 = vpop.f32.mrb[0].mxu0
  %1723 = vmatprep.mubr.bf16.mxu0 0
  %1724 = vmatmul.mubr.bf16.gmra.mrb[0].mxu0 %v1613
  %v1725 = vpop.f32.mrb[0].mxu0
  %v1726 = vadd.f32 0.0, %v1725
  %v1727 = vpop.f32.mrb[0].mxu0
  %v1728 = vpop.f32.mrb[0].mxu0
  %v1729 = vadd.f32 0.0, %v1728
  %v1730 = vpop.f32.mrb[0].mxu0
  %1731 = vmatprep.mubr.bf16.mxu0 0
  %1732 = vmatmul.mubr.bf16.gmra.mrb[0].mxu0 %v1614
  %v1733 = vpop.f32.mrb[0].mxu0
  %v1734 = vadd.f32 0.0, %v1733
  %v1735 = vpop.f32.mrb[0].mxu0
  %v1736 = vpop.f32.mrb[0].mxu0
  %v1737 = vadd.f32 0.0, %v1736
  %v1738 = vpop.f32.mrb[0].mxu0
  %1739 = vmatprep.mubr.bf16.mxu0 0
  %1740 = vmatmul.mubr.bf16.gmra.mrb[0].mxu0 %v1615
  %v1741 = vpop.f32.mrb[0].mxu0
  %v1742 = vadd.f32 0.0, %v1741
  %v1743 = vpop.f32.mrb[0].mxu0
  %v1744 = vpop.f32.mrb[0].mxu0
  %v1745 = vadd.f32 0.0, %v1744
  %v1746 = vpop.f32.mrb[0].mxu0
  %1747 = vmatprep.mubr.bf16.mxu0 0
  %1748 = vmatmul.mubr.bf16.gmra.mrb[0].mxu0 %v1616
  %v1749 = vpop.f32.mrb[0].mxu0
  %v1750 = vadd.f32 0.0, %v1749
  %v1751 = vpop.f32.mrb[0].mxu0
  %v1752 = vpop.f32.mrb[0].mxu0
  %v1753 = vadd.f32 0.0, %v1752
  %v1754 = vpop.f32.mrb[0].mxu0
  %1755 = vmatprep.mubr.bf16.mxu0 0
  %1756 = vmatmul.mubr.bf16.gmra.mrb[0].mxu0 %v1617
  %v1757 = vpop.f32.mrb[0].mxu0
  %v1758 = vadd.f32 0.0, %v1757
  %v1759 = vpop.f32.mrb[0].mxu0
  %v1760 = vpop.f32.mrb[0].mxu0
  %v1761 = vadd.f32 0.0, %v1760
  %v1762 = vpop.f32.mrb[0].mxu0
  %1763 = vmatprep.mubr.bf16.mxu0 0
  %1764 = vmatmul.mubr.bf16.gmra.mrb[0].mxu0 %v1618
  %v1765 = vpop.f32.mrb[0].mxu0
  %v1766 = vadd.f32 0.0, %v1765
  %v1767 = vpop.f32.mrb[0].mxu0
  %v1768 = vpop.f32.mrb[0].mxu0
  %v1769 = vadd.f32 0.0, %v1768
  %v1770 = vpop.f32.mrb[0].mxu0
  %1771 = vdwg.mxu0
  %v1772 = vadd.f32 %v1485, %v1710
  %v1773 = vadd.f32 %v1488, %v1713
  %v1774 = vadd.f32 %v1493, %v1718
  %v1775 = vadd.f32 %v1496, %v1721
  %v1776 = vadd.f32 %v1501, %v1726
  %v1777 = vadd.f32 %v1504, %v1729
  %v1778 = vadd.f32 %v1509, %v1734
  %v1779 = vadd.f32 %v1512, %v1737
  %v1780 = vadd.f32 %v1517, %v1742
  %v1781 = vadd.f32 %v1520, %v1745
  %v1782 = vadd.f32 %v1525, %v1750
  %v1783 = vadd.f32 %v1528, %v1753
  %v1784 = vadd.f32 %v1533, %v1758
  %v1785 = vadd.f32 %v1536, %v1761
  %v1786 = vadd.f32 %v1541, %v1766
  %v1787 = vadd.f32 %v1544, %v1769
  %s1788 = scalar_lea.vmem %s0, 204
  %v1789 = vld [vmem:[%s1788] sm:$0xf]
  %v1790 = vld [vmem:[%s1788 + $0x4] sm:$0xf]
  %v1791 = vld [vmem:[%s1788 + $0x8] sm:$0xf]
  %v1792 = vld [vmem:[%s1788 + $0xc] sm:$0xf]
  %v1793 = vld [vmem:[%s1788 + $0x14] sm:$0xf]
  %v1794 = vld [vmem:[%s1788 + $0x18] sm:$0xf]
  %v1795 = vld [vmem:[%s1788 + $0x1c] sm:$0xf]
  %v1796 = vld [vmem:[%s1788 + $0x20] sm:$0xf]
  %v1797 = vld [vmem:[%s1788 + $0x28] sm:$0xf]
  %v1798 = vld [vmem:[%s1788 + $0x2c] sm:$0xf]
  %v1799 = vld [vmem:[%s1788 + $0x30] sm:$0xf]
  %v1800 = vld [vmem:[%s1788 + $0x34] sm:$0xf]
  %v1801 = vld [vmem:[%s1788 + $0x3c] sm:$0xf]
  %v1802 = vld [vmem:[%s1788 + $0x40] sm:$0xf]
  %v1803 = vld [vmem:[%s1788 + $0x44] sm:$0xf]
  %v1804 = vld [vmem:[%s1788 + $0x48] sm:$0xf]
  %v1805 = vld [vmem:[%s751] sm:$0xf]
  %v1806 = vld [vmem:[%s751 + $0x4] sm:$0xf]
  %v1807 = vld [vmem:[%s751 + $0x8] sm:$0xf]
  %v1808 = vld [vmem:[%s751 + $0xc] sm:$0xf]
  %v1809 = vld [vmem:[%s751 + $0x10] sm:$0xf]
  %v1810 = vld [vmem:[%s751 + $0x14] sm:$0xf]
  %v1811 = vld [vmem:[%s751 + $0x18] sm:$0xf]
  %v1812 = vld [vmem:[%s751 + $0x1c] sm:$0xf]
  %v1813 = vld [vmem:[%s751 + $0x20] sm:$0xf]
  %v1814 = vld [vmem:[%s751 + $0x24] sm:$0xf]
  %v1815 = vld [vmem:[%s751 + $0x28] sm:$0xf]
  %v1816 = vld [vmem:[%s751 + $0x2c] sm:$0xf]
  %v1817 = vld [vmem:[%s751 + $0x30] sm:$0xf]
  %v1818 = vld [vmem:[%s751 + $0x34] sm:$0xf]
  %v1819 = vld [vmem:[%s751 + $0x38] sm:$0xf]
  %v1820 = vld [vmem:[%s751 + $0x3c] sm:$0xf]
  %v1837 = vunpack.c.l.b16 %v1789
  %v1838 = vunpack.c.l.b16 %v1790
  %v1839 = vunpack.c.l.b16 %v1791
  %v1840 = vunpack.c.l.b16 %v1792
  %v1841 = vunpack.c.l.b16 %v1793
  %v1842 = vunpack.c.l.b16 %v1794
  %v1843 = vunpack.c.l.b16 %v1795
  %v1844 = vunpack.c.l.b16 %v1796
  %v1845 = vunpack.c.l.b16 %v1797
  %v1846 = vunpack.c.l.b16 %v1798
  %v1847 = vunpack.c.l.b16 %v1799
  %v1848 = vunpack.c.l.b16 %v1800
  %v1849 = vunpack.c.l.b16 %v1801
  %v1850 = vunpack.c.l.b16 %v1802
  %v1851 = vunpack.c.l.b16 %v1803
  %v1852 = vunpack.c.l.b16 %v1804
  %v1853 = vpack.c.b16 %v1838, %v1837
  %v1854 = vpack.c.b16 %v1840, %v1839
  %v1855 = vpack.c.b16 %v1842, %v1841
  %v1856 = vpack.c.b16 %v1844, %v1843
  %v1857 = vpack.c.b16 %v1846, %v1845
  %v1858 = vpack.c.b16 %v1848, %v1847
  %v1859 = vpack.c.b16 %v1850, %v1849
  %v1860 = vpack.c.b16 %v1852, %v1851
  %v1885 = vunpack.c.l.b16 %v1805
  %v1886 = vunpack.c.l.b16 %v1806
  %v1887 = vunpack.c.l.b16 %v1807
  %v1888 = vunpack.c.l.b16 %v1808
  %v1889 = vunpack.c.l.b16 %v1809
  %v1890 = vunpack.c.l.b16 %v1810
  %v1891 = vunpack.c.l.b16 %v1811
  %v1892 = vunpack.c.l.b16 %v1812
  %v1893 = vunpack.c.l.b16 %v1813
  %v1894 = vunpack.c.l.b16 %v1814
  %v1895 = vunpack.c.l.b16 %v1815
  %v1896 = vunpack.c.l.b16 %v1816
  %v1897 = vunpack.c.l.b16 %v1817
  %v1898 = vunpack.c.l.b16 %v1818
  %v1899 = vunpack.c.l.b16 %v1819
  %v1900 = vunpack.c.l.b16 %v1820
  %v1901 = vpack.c.b16 %v1886, %v1885
  %v1902 = vpack.c.b16 %v1888, %v1887
  %v1903 = vpack.c.b16 %v1890, %v1889
  %v1904 = vpack.c.b16 %v1892, %v1891
  %v1905 = vpack.c.b16 %v1894, %v1893
  %v1906 = vpack.c.b16 %v1896, %v1895
  %v1907 = vpack.c.b16 %v1898, %v1897
  %v1908 = vpack.c.b16 %v1900, %v1899
  %1917 = vmatprep.subr.bf16.mxu0 0
  %1918 = vmatpush1.bf16.msra.mxu0 %v1901
  %1919 = vmatprep.subr.bf16.mxu0 0
  %1920 = vmatpush1.bf16.msra.mxu0 %v1902
  %1921 = vmatprep.subr.bf16.mxu0 0
  %1922 = vmatpush1.bf16.msra.mxu0 %v1903
  %1923 = vmatprep.subr.bf16.mxu0 0
  %1924 = vmatpush1.bf16.msra.mxu0 %v1904
  %1925 = vmatprep.subr.bf16.mxu0 0
  %1926 = vmatpush1.bf16.msra.mxu0 %v1905
  %1927 = vmatprep.subr.bf16.mxu0 0
  %1928 = vmatpush1.bf16.msra.mxu0 %v1906
  %1929 = vmatprep.subr.bf16.mxu0 0
  %1930 = vmatpush1.bf16.msra.mxu0 %v1907
  %1931 = vmatprep.subr.bf16.mxu0 0
  %1932 = vmatpush1.bf16.msra.mxu0 %v1908
  %1933 = vmatprep.subr.bf16.mxu0 0
  %1934 = vmatpush1.bf16.msra.mxu0 0
  %1935 = vmatprep.subr.bf16.mxu0 0
  %1936 = vmatpush1.bf16.msra.mxu0 0
  %1937 = vmatprep.subr.bf16.mxu0 0
  %1938 = vmatpush1.bf16.msra.mxu0 0
  %1939 = vmatprep.subr.bf16.mxu0 0
  %1940 = vmatpush1.bf16.msra.mxu0 0
  %1941 = vmatprep.subr.bf16.mxu0 0
  %1942 = vmatpush1.bf16.msra.mxu0 0
  %1943 = vmatprep.subr.bf16.mxu0 0
  %1944 = vmatpush1.bf16.msra.mxu0 0
  %1945 = vmatprep.subr.bf16.mxu0 0
  %1946 = vmatpush1.bf16.msra.mxu0 0
  %1947 = vmatprep.subr.bf16.mxu0 0
  %1948 = vmatpush1.bf16.msra.mxu0 0
  %1949 = vmatprep.mubr.bf16.mxu0 0
  %1950 = vmatmul.mubr.bf16.gmra.mrb[0].mxu0 %v1853
  %v1951 = vpop.f32.mrb[0].mxu0
  %v1952 = vadd.f32 0.0, %v1951
  %v1953 = vpop.f32.mrb[0].mxu0
  %v1954 = vpop.f32.mrb[0].mxu0
  %v1955 = vadd.f32 0.0, %v1954
  %v1956 = vpop.f32.mrb[0].mxu0
  %1957 = vmatprep.mubr.bf16.mxu0 0
  %1958 = vmatmul.mubr.bf16.gmra.mrb[0].mxu0 %v1854
  %v1959 = vpop.f32.mrb[0].mxu0
  %v1960 = vadd.f32 0.0, %v1959
  %v1961 = vpop.f32.mrb[0].mxu0
  %v1962 = vpop.f32.mrb[0].mxu0
  %v1963 = vadd.f32 0.0, %v1962
  %v1964 = vpop.f32.mrb[0].mxu0
  %1965 = vmatprep.mubr.bf16.mxu0 0
  %1966 = vmatmul.mubr.bf16.gmra.mrb[0].mxu0 %v1855
  %v1967 = vpop.f32.mrb[0].mxu0
  %v1968 = vadd.f32 0.0, %v1967
  %v1969 = vpop.f32.mrb[0].mxu0
  %v1970 = vpop.f32.mrb[0].mxu0
  %v1971 = vadd.f32 0.0, %v1970
  %v1972 = vpop.f32.mrb[0].mxu0
  %1973 = vmatprep.mubr.bf16.mxu0 0
  %1974 = vmatmul.mubr.bf16.gmra.mrb[0].mxu0 %v1856
  %v1975 = vpop.f32.mrb[0].mxu0
  %v1976 = vadd.f32 0.0, %v1975
  %v1977 = vpop.f32.mrb[0].mxu0
  %v1978 = vpop.f32.mrb[0].mxu0
  %v1979 = vadd.f32 0.0, %v1978
  %v1980 = vpop.f32.mrb[0].mxu0
  %1981 = vmatprep.mubr.bf16.mxu0 0
  %1982 = vmatmul.mubr.bf16.gmra.mrb[0].mxu0 %v1857
  %v1983 = vpop.f32.mrb[0].mxu0
  %v1984 = vadd.f32 0.0, %v1983
  %v1985 = vpop.f32.mrb[0].mxu0
  %v1986 = vpop.f32.mrb[0].mxu0
  %v1987 = vadd.f32 0.0, %v1986
  %v1988 = vpop.f32.mrb[0].mxu0
  %1989 = vmatprep.mubr.bf16.mxu0 0
  %1990 = vmatmul.mubr.bf16.gmra.mrb[0].mxu0 %v1858
  %v1991 = vpop.f32.mrb[0].mxu0
  %v1992 = vadd.f32 0.0, %v1991
  %v1993 = vpop.f32.mrb[0].mxu0
  %v1994 = vpop.f32.mrb[0].mxu0
  %v1995 = vadd.f32 0.0, %v1994
  %v1996 = vpop.f32.mrb[0].mxu0
  %1997 = vmatprep.mubr.bf16.mxu0 0
  %1998 = vmatmul.mubr.bf16.gmra.mrb[0].mxu0 %v1859
  %v1999 = vpop.f32.mrb[0].mxu0
  %v2000 = vadd.f32 0.0, %v1999
  %v2001 = vpop.f32.mrb[0].mxu0
  %v2002 = vpop.f32.mrb[0].mxu0
  %v2003 = vadd.f32 0.0, %v2002
  %v2004 = vpop.f32.mrb[0].mxu0
  %2005 = vmatprep.mubr.bf16.mxu0 0
  %2006 = vmatmul.mubr.bf16.gmra.mrb[0].mxu0 %v1860
  %v2007 = vpop.f32.mrb[0].mxu0
  %v2008 = vadd.f32 0.0, %v2007
  %v2009 = vpop.f32.mrb[0].mxu0
  %v2010 = vpop.f32.mrb[0].mxu0
  %v2011 = vadd.f32 0.0, %v2010
  %v2012 = vpop.f32.mrb[0].mxu0
  %2013 = vdwg.mxu0
  %v2014 = vadd.f32 %v1772, %v1952
  %v2015 = vadd.f32 %v1773, %v1955
  %v2016 = vadd.f32 %v1774, %v1960
  %v2017 = vadd.f32 %v1775, %v1963
  %v2018 = vadd.f32 %v1776, %v1968
  %v2019 = vadd.f32 %v1777, %v1971
  %v2020 = vadd.f32 %v1778, %v1976
  %v2021 = vadd.f32 %v1779, %v1979
  %v2022 = vadd.f32 %v1780, %v1984
  %v2023 = vadd.f32 %v1781, %v1987
  %v2024 = vadd.f32 %v1782, %v1992
  %v2025 = vadd.f32 %v1783, %v1995
  %v2026 = vadd.f32 %v1784, %v2000
  %v2027 = vadd.f32 %v1785, %v2003
  %v2028 = vadd.f32 %v1786, %v2008
  %v2029 = vadd.f32 %v1787, %v2011
  %v2030 = vld [vmem:[%s2] sm:$0x1]
  %v2032 = vlaneseq
  %v2033 = vshrl.u32 %v2032, 7
  %v2034 = vsub.s32 0, %v2033
  %v2035 = vrot.slane %v2030, %v2034
  %v2037 = vadd.f32 %v2014, %v2035
  %v2038 = vadd.f32 %v2015, %v2035
  %v2039 = vadd.f32 %v2016, %v2035
  %v2040 = vadd.f32 %v2017, %v2035
  %v2041 = vadd.f32 %v2018, %v2035
  %v2042 = vadd.f32 %v2019, %v2035
  %v2043 = vadd.f32 %v2020, %v2035
  %v2044 = vadd.f32 %v2021, %v2035
  %v2045 = vadd.f32 %v2022, %v2035
  %v2046 = vadd.f32 %v2023, %v2035
  %v2047 = vadd.f32 %v2024, %v2035
  %v2048 = vadd.f32 %v2025, %v2035
  %v2049 = vadd.f32 %v2026, %v2035
  %v2050 = vadd.f32 %v2027, %v2035
  %v2051 = vadd.f32 %v2028, %v2035
  %v2052 = vadd.f32 %v2029, %v2035
  %v2053 = vmax.f32 %v2037, 0.0
  %v2054 = vmax.f32 %v2038, 0.0
  %v2055 = vmax.f32 %v2039, 0.0
  %v2056 = vmax.f32 %v2040, 0.0
  %v2057 = vmax.f32 %v2041, 0.0
  %v2058 = vmax.f32 %v2042, 0.0
  %v2059 = vmax.f32 %v2043, 0.0
  %v2060 = vmax.f32 %v2044, 0.0
  %v2061 = vmax.f32 %v2045, 0.0
  %v2062 = vmax.f32 %v2046, 0.0
  %v2063 = vmax.f32 %v2047, 0.0
  %v2064 = vmax.f32 %v2048, 0.0
  %v2065 = vmax.f32 %v2049, 0.0
  %v2066 = vmax.f32 %v2050, 0.0
  %v2067 = vmax.f32 %v2051, 0.0
  %v2068 = vmax.f32 %v2052, 0.0
  %v2069 = vpack.c.bf16 %v2054, %v2053
  %v2070 = vpack.c.bf16 %v2056, %v2055
  %v2071 = vpack.c.bf16 %v2058, %v2057
  %v2072 = vpack.c.bf16 %v2060, %v2059
  %v2073 = vpack.c.bf16 %v2062, %v2061
  %v2074 = vpack.c.bf16 %v2064, %v2063
  %v2075 = vpack.c.bf16 %v2066, %v2065
  %v2076 = vpack.c.bf16 %v2068, %v2067
  %v2085 = vunpack.c.l.b16 %v2069
  %v2086 = vunpack.c.h.b16 %v2069
  %v2087 = vunpack.c.l.b16 %v2070
  %v2088 = vunpack.c.h.b16 %v2070
  %v2089 = vunpack.c.l.b16 %v2071
  %v2090 = vunpack.c.h.b16 %v2071
  %v2091 = vunpack.c.l.b16 %v2072
  %v2092 = vunpack.c.h.b16 %v2072
  %v2093 = vunpack.c.l.b16 %v2073
  %v2094 = vunpack.c.h.b16 %v2073
  %v2095 = vunpack.c.l.b16 %v2074
  %v2096 = vunpack.c.h.b16 %v2074
  %v2097 = vunpack.c.l.b16 %v2075
  %v2098 = vunpack.c.h.b16 %v2075
  %v2099 = vunpack.c.l.b16 %v2076
  %v2100 = vunpack.c.h.b16 %v2076
  %v2101 = vpack.c.b16 %v2085, %v2085
  %v2102 = vpack.c.b16 %v2086, %v2086
  %v2103 = vpack.c.b16 %v2087, %v2087
  %v2104 = vpack.c.b16 %v2088, %v2088
  %v2105 = vpack.c.b16 %v2089, %v2089
  %v2106 = vpack.c.b16 %v2090, %v2090
  %v2107 = vpack.c.b16 %v2091, %v2091
  %v2108 = vpack.c.b16 %v2092, %v2092
  %v2109 = vpack.c.b16 %v2093, %v2093
  %v2110 = vpack.c.b16 %v2094, %v2094
  %v2111 = vpack.c.b16 %v2095, %v2095
  %v2112 = vpack.c.b16 %v2096, %v2096
  %v2113 = vpack.c.b16 %v2097, %v2097
  %v2114 = vpack.c.b16 %v2098, %v2098
  %v2115 = vpack.c.b16 %v2099, %v2099
  %v2116 = vpack.c.b16 %v2100, %v2100
  %2133 = vst [vmem:[#allocation2 + $0x4] sm:$0xf] %v2101
  %2134 = vst [vmem:[#allocation2 + $0xc] sm:$0xf] %v2102
  %2135 = vst [vmem:[#allocation2 + $0x14] sm:$0xf] %v2103
  %2136 = vst [vmem:[#allocation2 + $0x1c] sm:$0xf] %v2104
  %2137 = vst [vmem:[#allocation2 + $0x24] sm:$0xf] %v2105
  %2138 = vst [vmem:[#allocation2 + $0x2c] sm:$0xf] %v2106
  %2139 = vst [vmem:[#allocation2 + $0x34] sm:$0xf] %v2107
  %2140 = vst [vmem:[#allocation2 + $0x3c] sm:$0xf] %v2108
  %2141 = vst [vmem:[#allocation2 + $0x44] sm:$0xf] %v2109
  %2142 = vst [vmem:[#allocation2 + $0x4c] sm:$0xf] %v2110
  %2143 = vst [vmem:[#allocation2 + $0x54] sm:$0xf] %v2111
  %2144 = vst [vmem:[#allocation2 + $0x5c] sm:$0xf] %v2112
  %2145 = vst [vmem:[#allocation2 + $0x64] sm:$0xf] %v2113
  %2146 = vst [vmem:[#allocation2 + $0x6c] sm:$0xf] %v2114
  %2147 = vst [vmem:[#allocation2 + $0x74] sm:$0xf] %v2115
  %2148 = vst [vmem:[#allocation2 + $0x7c] sm:$0xf] %v2116
  %v2149 = vld [vmem:[%s491] sm:$0xf]
  %v2150 = vld [vmem:[%s491 + $0x4] sm:$0xf]
  %v2151 = vld [vmem:[%s491 + $0x8] sm:$0xf]
  %v2152 = vld [vmem:[%s491 + $0xc] sm:$0xf]
  %v2153 = vld [vmem:[%s491 + $0x14] sm:$0xf]
  %v2154 = vld [vmem:[%s491 + $0x18] sm:$0xf]
  %v2155 = vld [vmem:[%s491 + $0x1c] sm:$0xf]
  %v2156 = vld [vmem:[%s491 + $0x20] sm:$0xf]
  %v2157 = vld [vmem:[%s491 + $0x28] sm:$0xf]
  %v2158 = vld [vmem:[%s491 + $0x2c] sm:$0xf]
  %v2159 = vld [vmem:[%s491 + $0x30] sm:$0xf]
  %v2160 = vld [vmem:[%s491 + $0x34] sm:$0xf]
  %v2161 = vld [vmem:[%s491 + $0x3c] sm:$0xf]
  %v2162 = vld [vmem:[%s491 + $0x40] sm:$0xf]
  %v2163 = vld [vmem:[%s491 + $0x44] sm:$0xf]
  %v2164 = vld [vmem:[%s491 + $0x48] sm:$0xf]
  %v2165 = vld [vmem:[%s1] sm:$0xf]
  %v2166 = vld [vmem:[%s1 + $0x4] sm:$0xf]
  %v2167 = vld [vmem:[%s1 + $0x8] sm:$0xf]
  %v2168 = vld [vmem:[%s1 + $0xc] sm:$0xf]
  %v2169 = vld [vmem:[%s1 + $0x10] sm:$0xf]
  %v2170 = vld [vmem:[%s1 + $0x14] sm:$0xf]
  %v2171 = vld [vmem:[%s1 + $0x18] sm:$0xf]
  %v2172 = vld [vmem:[%s1 + $0x1c] sm:$0xf]
  %v2173 = vld [vmem:[%s1 + $0x20] sm:$0xf]
  %v2174 = vld [vmem:[%s1 + $0x24] sm:$0xf]
  %v2175 = vld [vmem:[%s1 + $0x28] sm:$0xf]
  %v2176 = vld [vmem:[%s1 + $0x2c] sm:$0xf]
  %v2177 = vld [vmem:[%s1 + $0x30] sm:$0xf]
  %v2178 = vld [vmem:[%s1 + $0x34] sm:$0xf]
  %v2179 = vld [vmem:[%s1 + $0x38] sm:$0xf]
  %v2180 = vld [vmem:[%s1 + $0x3c] sm:$0xf]
  %v2181 = vld [vmem:[%s734] sm:$0xf]
  %v2182 = vld [vmem:[%s734 + $0x4] sm:$0xf]
  %v2183 = vld [vmem:[%s734 + $0x8] sm:$0xf]
  %v2184 = vld [vmem:[%s734 + $0xc] sm:$0xf]
  %v2185 = vld [vmem:[%s734 + $0x14] sm:$0xf]
  %v2186 = vld [vmem:[%s734 + $0x18] sm:$0xf]
  %v2187 = vld [vmem:[%s734 + $0x1c] sm:$0xf]
  %v2188 = vld [vmem:[%s734 + $0x20] sm:$0xf]
  %v2189 = vld [vmem:[%s734 + $0x28] sm:$0xf]
  %v2190 = vld [vmem:[%s734 + $0x2c] sm:$0xf]
  %v2191 = vld [vmem:[%s734 + $0x30] sm:$0xf]
  %v2192 = vld [vmem:[%s734 + $0x34] sm:$0xf]
  %v2193 = vld [vmem:[%s734 + $0x3c] sm:$0xf]
  %v2194 = vld [vmem:[%s734 + $0x40] sm:$0xf]
  %v2195 = vld [vmem:[%s734 + $0x44] sm:$0xf]
  %v2196 = vld [vmem:[%s734 + $0x48] sm:$0xf]
  %v2197 = vld [vmem:[%s88] sm:$0xf]
  %v2198 = vld [vmem:[%s88 + $0x4] sm:$0xf]
  %v2199 = vld [vmem:[%s88 + $0x8] sm:$0xf]
  %v2200 = vld [vmem:[%s88 + $0xc] sm:$0xf]
  %v2201 = vld [vmem:[%s88 + $0x10] sm:$0xf]
  %v2202 = vld [vmem:[%s88 + $0x14] sm:$0xf]
  %v2203 = vld [vmem:[%s88 + $0x18] sm:$0xf]
  %v2204 = vld [vmem:[%s88 + $0x1c] sm:$0xf]
  %v2205 = vld [vmem:[%s88 + $0x20] sm:$0xf]
  %v2206 = vld [vmem:[%s88 + $0x24] sm:$0xf]
  %v2207 = vld [vmem:[%s88 + $0x28] sm:$0xf]
  %v2208 = vld [vmem:[%s88 + $0x2c] sm:$0xf]
  %v2209 = vld [vmem:[%s88 + $0x30] sm:$0xf]
  %v2210 = vld [vmem:[%s88 + $0x34] sm:$0xf]
  %v2211 = vld [vmem:[%s88 + $0x38] sm:$0xf]
  %v2212 = vld [vmem:[%s88 + $0x3c] sm:$0xf]
  %v2229 = vunpack.c.l.b16 %v2181
  %v2230 = vunpack.c.l.b16 %v2182
  %v2231 = vunpack.c.l.b16 %v2183
  %v2232 = vunpack.c.l.b16 %v2184
  %v2233 = vunpack.c.l.b16 %v2185
  %v2234 = vunpack.c.l.b16 %v2186
  %v2235 = vunpack.c.l.b16 %v2187
  %v2236 = vunpack.c.l.b16 %v2188
  %v2237 = vunpack.c.l.b16 %v2189
  %v2238 = vunpack.c.l.b16 %v2190
  %v2239 = vunpack.c.l.b16 %v2191
  %v2240 = vunpack.c.l.b16 %v2192
  %v2241 = vunpack.c.l.b16 %v2193
  %v2242 = vunpack.c.l.b16 %v2194
  %v2243 = vunpack.c.l.b16 %v2195
  %v2244 = vunpack.c.l.b16 %v2196
  %v2245 = vpack.c.b16 %v2230, %v2229
  %v2246 = vpack.c.b16 %v2232, %v2231
  %v2247 = vpack.c.b16 %v2234, %v2233
  %v2248 = vpack.c.b16 %v2236, %v2235
  %v2249 = vpack.c.b16 %v2238, %v2237
  %v2250 = vpack.c.b16 %v2240, %v2239
  %v2251 = vpack.c.b16 %v2242, %v2241
  %v2252 = vpack.c.b16 %v2244, %v2243
  %v2277 = vunpack.c.l.b16 %v2197
  %v2278 = vunpack.c.l.b16 %v2198
  %v2279 = vunpack.c.l.b16 %v2199
  %v2280 = vunpack.c.l.b16 %v2200
  %v2281 = vunpack.c.l.b16 %v2201
  %v2282 = vunpack.c.l.b16 %v2202
  %v2283 = vunpack.c.l.b16 %v2203
  %v2284 = vunpack.c.l.b16 %v2204
  %v2285 = vunpack.c.l.b16 %v2205
  %v2286 = vunpack.c.l.b16 %v2206
  %v2287 = vunpack.c.l.b16 %v2207
  %v2288 = vunpack.c.l.b16 %v2208
  %v2289 = vunpack.c.l.b16 %v2209
  %v2290 = vunpack.c.l.b16 %v2210
  %v2291 = vunpack.c.l.b16 %v2211
  %v2292 = vunpack.c.l.b16 %v2212
  %v2293 = vpack.c.b16 %v2278, %v2277
  %v2294 = vpack.c.b16 %v2280, %v2279
  %v2295 = vpack.c.b16 %v2282, %v2281
  %v2296 = vpack.c.b16 %v2284, %v2283
  %v2297 = vpack.c.b16 %v2286, %v2285
  %v2298 = vpack.c.b16 %v2288, %v2287
  %v2299 = vpack.c.b16 %v2290, %v2289
  %v2300 = vpack.c.b16 %v2292, %v2291
  %2309 = vmatprep.subr.bf16.mxu0 0
  %2310 = vmatpush1.bf16.msra.mxu0 %v2293
  %2311 = vmatprep.subr.bf16.mxu0 0
  %2312 = vmatpush1.bf16.msra.mxu0 %v2294
  %2313 = vmatprep.subr.bf16.mxu0 0
  %2314 = vmatpush1.bf16.msra.mxu0 %v2295
  %2315 = vmatprep.subr.bf16.mxu0 0
  %2316 = vmatpush1.bf16.msra.mxu0 %v2296
  %2317 = vmatprep.subr.bf16.mxu0 0
  %2318 = vmatpush1.bf16.msra.mxu0 %v2297
  %2319 = vmatprep.subr.bf16.mxu0 0
  %2320 = vmatpush1.bf16.msra.mxu0 %v2298
  %2321 = vmatprep.subr.bf16.mxu0 0
  %2322 = vmatpush1.bf16.msra.mxu0 %v2299
  %2323 = vmatprep.subr.bf16.mxu0 0
  %2324 = vmatpush1.bf16.msra.mxu0 %v2300
  %2325 = vmatprep.subr.bf16.mxu0 0
  %2326 = vmatpush1.bf16.msra.mxu0 0
  %2327 = vmatprep.subr.bf16.mxu0 0
  %2328 = vmatpush1.bf16.msra.mxu0 0
  %2329 = vmatprep.subr.bf16.mxu0 0
  %2330 = vmatpush1.bf16.msra.mxu0 0
  %2331 = vmatprep.subr.bf16.mxu0 0
  %2332 = vmatpush1.bf16.msra.mxu0 0
  %2333 = vmatprep.subr.bf16.mxu0 0
  %2334 = vmatpush1.bf16.msra.mxu0 0
  %2335 = vmatprep.subr.bf16.mxu0 0
  %2336 = vmatpush1.bf16.msra.mxu0 0
  %2337 = vmatprep.subr.bf16.mxu0 0
  %2338 = vmatpush1.bf16.msra.mxu0 0
  %2339 = vmatprep.subr.bf16.mxu0 0
  %2340 = vmatpush1.bf16.msra.mxu0 0
  %2341 = vmatprep.mubr.bf16.mxu0 0
  %2342 = vmatmul.mubr.bf16.gmra.mrb[0].mxu0 %v2245
  %v2343 = vpop.f32.mrb[0].mxu0
  %v2344 = vadd.f32 0.0, %v2343
  %v2345 = vpop.f32.mrb[0].mxu0
  %v2346 = vpop.f32.mrb[0].mxu0
  %v2347 = vadd.f32 0.0, %v2346
  %v2348 = vpop.f32.mrb[0].mxu0
  %2349 = vmatprep.mubr.bf16.mxu0 0
  %2350 = vmatmul.mubr.bf16.gmra.mrb[0].mxu0 %v2246
  %v2351 = vpop.f32.mrb[0].mxu0
  %v2352 = vadd.f32 0.0, %v2351
  %v2353 = vpop.f32.mrb[0].mxu0
  %v2354 = vpop.f32.mrb[0].mxu0
  %v2355 = vadd.f32 0.0, %v2354
  %v2356 = vpop.f32.mrb[0].mxu0
  %2357 = vmatprep.mubr.bf16.mxu0 0
  %2358 = vmatmul.mubr.bf16.gmra.mrb[0].mxu0 %v2247
  %v2359 = vpop.f32.mrb[0].mxu0
  %v2360 = vadd.f32 0.0, %v2359
  %v2361 = vpop.f32.mrb[0].mxu0
  %v2362 = vpop.f32.mrb[0].mxu0
  %v2363 = vadd.f32 0.0, %v2362
  %v2364 = vpop.f32.mrb[0].mxu0
  %2365 = vmatprep.mubr.bf16.mxu0 0
  %2366 = vmatmul.mubr.bf16.gmra.mrb[0].mxu0 %v2248
  %v2367 = vpop.f32.mrb[0].mxu0
  %v2368 = vadd.f32 0.0, %v2367
  %v2369 = vpop.f32.mrb[0].mxu0
  %v2370 = vpop.f32.mrb[0].mxu0
  %v2371 = vadd.f32 0.0, %v2370
  %v2372 = vpop.f32.mrb[0].mxu0
  %2373 = vmatprep.mubr.bf16.mxu0 0
  %2374 = vmatmul.mubr.bf16.gmra.mrb[0].mxu0 %v2249
  %v2375 = vpop.f32.mrb[0].mxu0
  %v2376 = vadd.f32 0.0, %v2375
  %v2377 = vpop.f32.mrb[0].mxu0
  %v2378 = vpop.f32.mrb[0].mxu0
  %v2379 = vadd.f32 0.0, %v2378
  %v2380 = vpop.f32.mrb[0].mxu0
  %2381 = vmatprep.mubr.bf16.mxu0 0
  %2382 = vmatmul.mubr.bf16.gmra.mrb[0].mxu0 %v2250
  %v2383 = vpop.f32.mrb[0].mxu0
  %v2384 = vadd.f32 0.0, %v2383
  %v2385 = vpop.f32.mrb[0].mxu0
  %v2386 = vpop.f32.mrb[0].mxu0
  %v2387 = vadd.f32 0.0, %v2386
  %v2388 = vpop.f32.mrb[0].mxu0
  %2389 = vmatprep.mubr.bf16.mxu0 0
  %2390 = vmatmul.mubr.bf16.gmra.mrb[0].mxu0 %v2251
  %v2391 = vpop.f32.mrb[0].mxu0
  %v2392 = vadd.f32 0.0, %v2391
  %v2393 = vpop.f32.mrb[0].mxu0
  %v2394 = vpop.f32.mrb[0].mxu0
  %v2395 = vadd.f32 0.0, %v2394
  %v2396 = vpop.f32.mrb[0].mxu0
  %2397 = vmatprep.mubr.bf16.mxu0 0
  %2398 = vmatmul.mubr.bf16.gmra.mrb[0].mxu0 %v2252
  %v2399 = vpop.f32.mrb[0].mxu0
  %v2400 = vadd.f32 0.0, %v2399
  %v2401 = vpop.f32.mrb[0].mxu0
  %v2402 = vpop.f32.mrb[0].mxu0
  %v2403 = vadd.f32 0.0, %v2402
  %v2404 = vpop.f32.mrb[0].mxu0
  %2405 = vdwg.mxu0
  %v2422 = vunpack.c.l.b16 %v2149
  %v2423 = vunpack.c.l.b16 %v2150
  %v2424 = vunpack.c.l.b16 %v2151
  %v2425 = vunpack.c.l.b16 %v2152
  %v2426 = vunpack.c.l.b16 %v2153
  %v2427 = vunpack.c.l.b16 %v2154
  %v2428 = vunpack.c.l.b16 %v2155
  %v2429 = vunpack.c.l.b16 %v2156
  %v2430 = vunpack.c.l.b16 %v2157
  %v2431 = vunpack.c.l.b16 %v2158
  %v2432 = vunpack.c.l.b16 %v2159
  %v2433 = vunpack.c.l.b16 %v2160
  %v2434 = vunpack.c.l.b16 %v2161
  %v2435 = vunpack.c.l.b16 %v2162
  %v2436 = vunpack.c.l.b16 %v2163
  %v2437 = vunpack.c.l.b16 %v2164
  %v2438 = vpack.c.b16 %v2423, %v2422
  %v2439 = vpack.c.b16 %v2425, %v2424
  %v2440 = vpack.c.b16 %v2427, %v2426
  %v2441 = vpack.c.b16 %v2429, %v2428
  %v2442 = vpack.c.b16 %v2431, %v2430
  %v2443 = vpack.c.b16 %v2433, %v2432
  %v2444 = vpack.c.b16 %v2435, %v2434
  %v2445 = vpack.c.b16 %v2437, %v2436
  %v2470 = vunpack.c.l.b16 %v2165
  %v2471 = vunpack.c.l.b16 %v2166
  %v2472 = vunpack.c.l.b16 %v2167
  %v2473 = vunpack.c.l.b16 %v2168
  %v2474 = vunpack.c.l.b16 %v2169
  %v2475 = vunpack.c.l.b16 %v2170
  %v2476 = vunpack.c.l.b16 %v2171
  %v2477 = vunpack.c.l.b16 %v2172
  %v2478 = vunpack.c.l.b16 %v2173
  %v2479 = vunpack.c.l.b16 %v2174
  %v2480 = vunpack.c.l.b16 %v2175
  %v2481 = vunpack.c.l.b16 %v2176
  %v2482 = vunpack.c.l.b16 %v2177
  %v2483 = vunpack.c.l.b16 %v2178
  %v2484 = vunpack.c.l.b16 %v2179
  %v2485 = vunpack.c.l.b16 %v2180
  %v2486 = vpack.c.b16 %v2471, %v2470
  %v2487 = vpack.c.b16 %v2473, %v2472
  %v2488 = vpack.c.b16 %v2475, %v2474
  %v2489 = vpack.c.b16 %v2477, %v2476
  %v2490 = vpack.c.b16 %v2479, %v2478
  %v2491 = vpack.c.b16 %v2481, %v2480
  %v2492 = vpack.c.b16 %v2483, %v2482
  %v2493 = vpack.c.b16 %v2485, %v2484
  %2502 = vmatprep.subr.bf16.mxu0 0
  %2503 = vmatpush1.bf16.msra.mxu0 %v2486
  %2504 = vmatprep.subr.bf16.mxu0 0
  %2505 = vmatpush1.bf16.msra.mxu0 %v2487
  %2506 = vmatprep.subr.bf16.mxu0 0
  %2507 = vmatpush1.bf16.msra.mxu0 %v2488
  %2508 = vmatprep.subr.bf16.mxu0 0
  %2509 = vmatpush1.bf16.msra.mxu0 %v2489
  %2510 = vmatprep.subr.bf16.mxu0 0
  %2511 = vmatpush1.bf16.msra.mxu0 %v2490
  %2512 = vmatprep.subr.bf16.mxu0 0
  %2513 = vmatpush1.bf16.msra.mxu0 %v2491
  %2514 = vmatprep.subr.bf16.mxu0 0
  %2515 = vmatpush1.bf16.msra.mxu0 %v2492
  %2516 = vmatprep.subr.bf16.mxu0 0
  %2517 = vmatpush1.bf16.msra.mxu0 %v2493
  %2518 = vmatprep.subr.bf16.mxu0 0
  %2519 = vmatpush1.bf16.msra.mxu0 0
  %2520 = vmatprep.subr.bf16.mxu0 0
  %2521 = vmatpush1.bf16.msra.mxu0 0
  %2522 = vmatprep.subr.bf16.mxu0 0
  %2523 = vmatpush1.bf16.msra.mxu0 0
  %2524 = vmatprep.subr.bf16.mxu0 0
  %2525 = vmatpush1.bf16.msra.mxu0 0
  %2526 = vmatprep.subr.bf16.mxu0 0
  %2527 = vmatpush1.bf16.msra.mxu0 0
  %2528 = vmatprep.subr.bf16.mxu0 0
  %2529 = vmatpush1.bf16.msra.mxu0 0
  %2530 = vmatprep.subr.bf16.mxu0 0
  %2531 = vmatpush1.bf16.msra.mxu0 0
  %2532 = vmatprep.subr.bf16.mxu0 0
  %2533 = vmatpush1.bf16.msra.mxu0 0
  %2534 = vmatprep.mubr.bf16.mxu0 0
  %2535 = vmatmul.mubr.bf16.gmra.mrb[0].mxu0 %v2438
  %v2536 = vpop.f32.mrb[0].mxu0
  %v2537 = vadd.f32 %v2344, %v2536
  %v2538 = vpop.f32.mrb[0].mxu0
  %v2539 = vpop.f32.mrb[0].mxu0
  %v2540 = vadd.f32 %v2347, %v2539
  %v2541 = vpop.f32.mrb[0].mxu0
  %2542 = vmatprep.mubr.bf16.mxu0 0
  %2543 = vmatmul.mubr.bf16.gmra.mrb[0].mxu0 %v2439
  %v2544 = vpop.f32.mrb[0].mxu0
  %v2545 = vadd.f32 %v2352, %v2544
  %v2546 = vpop.f32.mrb[0].mxu0
  %v2547 = vpop.f32.mrb[0].mxu0
  %v2548 = vadd.f32 %v2355, %v2547
  %v2549 = vpop.f32.mrb[0].mxu0
  %2550 = vmatprep.mubr.bf16.mxu0 0
  %2551 = vmatmul.mubr.bf16.gmra.mrb[0].mxu0 %v2440
  %v2552 = vpop.f32.mrb[0].mxu0
  %v2553 = vadd.f32 %v2360, %v2552
  %v2554 = vpop.f32.mrb[0].mxu0
  %v2555 = vpop.f32.mrb[0].mxu0
  %v2556 = vadd.f32 %v2363, %v2555
  %v2557 = vpop.f32.mrb[0].mxu0
  %2558 = vmatprep.mubr.bf16.mxu0 0
  %2559 = vmatmul.mubr.bf16.gmra.mrb[0].mxu0 %v2441
  %v2560 = vpop.f32.mrb[0].mxu0
  %v2561 = vadd.f32 %v2368, %v2560
  %v2562 = vpop.f32.mrb[0].mxu0
  %v2563 = vpop.f32.mrb[0].mxu0
  %v2564 = vadd.f32 %v2371, %v2563
  %v2565 = vpop.f32.mrb[0].mxu0
  %2566 = vmatprep.mubr.bf16.mxu0 0
  %2567 = vmatmul.mubr.bf16.gmra.mrb[0].mxu0 %v2442
  %v2568 = vpop.f32.mrb[0].mxu0
  %v2569 = vadd.f32 %v2376, %v2568
  %v2570 = vpop.f32.mrb[0].mxu0
  %v2571 = vpop.f32.mrb[0].mxu0
  %v2572 = vadd.f32 %v2379, %v2571
  %v2573 = vpop.f32.mrb[0].mxu0
  %2574 = vmatprep.mubr.bf16.mxu0 0
  %2575 = vmatmul.mubr.bf16.gmra.mrb[0].mxu0 %v2443
  %v2576 = vpop.f32.mrb[0].mxu0
  %v2577 = vadd.f32 %v2384, %v2576
  %v2578 = vpop.f32.mrb[0].mxu0
  %v2579 = vpop.f32.mrb[0].mxu0
  %v2580 = vadd.f32 %v2387, %v2579
  %v2581 = vpop.f32.mrb[0].mxu0
  %2582 = vmatprep.mubr.bf16.mxu0 0
  %2583 = vmatmul.mubr.bf16.gmra.mrb[0].mxu0 %v2444
  %v2584 = vpop.f32.mrb[0].mxu0
  %v2585 = vadd.f32 %v2392, %v2584
  %v2586 = vpop.f32.mrb[0].mxu0
  %v2587 = vpop.f32.mrb[0].mxu0
  %v2588 = vadd.f32 %v2395, %v2587
  %v2589 = vpop.f32.mrb[0].mxu0
  %2590 = vmatprep.mubr.bf16.mxu0 0
  %2591 = vmatmul.mubr.bf16.gmra.mrb[0].mxu0 %v2445
  %v2592 = vpop.f32.mrb[0].mxu0
  %v2593 = vadd.f32 %v2400, %v2592
  %v2594 = vpop.f32.mrb[0].mxu0
  %v2595 = vpop.f32.mrb[0].mxu0
  %v2596 = vadd.f32 %v2403, %v2595
  %v2597 = vpop.f32.mrb[0].mxu0
  %2598 = vdwg.mxu0
  %s2599 = scalar_lea.vmem %s0, 20
  %v2600 = vld [vmem:[%s2599] sm:$0xf]
  %v2601 = vld [vmem:[%s2599 + $0x4] sm:$0xf]
  %v2602 = vld [vmem:[%s2599 + $0x8] sm:$0xf]
  %v2603 = vld [vmem:[%s2599 + $0xc] sm:$0xf]
  %v2604 = vld [vmem:[%s2599 + $0x14] sm:$0xf]
  %v2605 = vld [vmem:[%s2599 + $0x18] sm:$0xf]
  %v2606 = vld [vmem:[%s2599 + $0x1c] sm:$0xf]
  %v2607 = vld [vmem:[%s2599 + $0x20] sm:$0xf]
  %v2608 = vld [vmem:[%s2599 + $0x28] sm:$0xf]
  %v2609 = vld [vmem:[%s2599 + $0x2c] sm:$0xf]
  %v2610 = vld [vmem:[%s2599 + $0x30] sm:$0xf]
  %v2611 = vld [vmem:[%s2599 + $0x34] sm:$0xf]
  %v2612 = vld [vmem:[%s2599 + $0x3c] sm:$0xf]
  %v2613 = vld [vmem:[%s2599 + $0x40] sm:$0xf]
  %v2614 = vld [vmem:[%s2599 + $0x44] sm:$0xf]
  %v2615 = vld [vmem:[%s2599 + $0x48] sm:$0xf]
  %v2616 = vld [vmem:[%s508] sm:$0xf]
  %v2617 = vld [vmem:[%s508 + $0x4] sm:$0xf]
  %v2618 = vld [vmem:[%s508 + $0x8] sm:$0xf]
  %v2619 = vld [vmem:[%s508 + $0xc] sm:$0xf]
  %v2620 = vld [vmem:[%s508 + $0x10] sm:$0xf]
  %v2621 = vld [vmem:[%s508 + $0x14] sm:$0xf]
  %v2622 = vld [vmem:[%s508 + $0x18] sm:$0xf]
  %v2623 = vld [vmem:[%s508 + $0x1c] sm:$0xf]
  %v2624 = vld [vmem:[%s508 + $0x20] sm:$0xf]
  %v2625 = vld [vmem:[%s508 + $0x24] sm:$0xf]
  %v2626 = vld [vmem:[%s508 + $0x28] sm:$0xf]
  %v2627 = vld [vmem:[%s508 + $0x2c] sm:$0xf]
  %v2628 = vld [vmem:[%s508 + $0x30] sm:$0xf]
  %v2629 = vld [vmem:[%s508 + $0x34] sm:$0xf]
  %v2630 = vld [vmem:[%s508 + $0x38] sm:$0xf]
  %v2631 = vld [vmem:[%s508 + $0x3c] sm:$0xf]
  %v2648 = vunpack.c.l.b16 %v2600
  %v2649 = vunpack.c.l.b16 %v2601
  %v2650 = vunpack.c.l.b16 %v2602
  %v2651 = vunpack.c.l.b16 %v2603
  %v2652 = vunpack.c.l.b16 %v2604
  %v2653 = vunpack.c.l.b16 %v2605
  %v2654 = vunpack.c.l.b16 %v2606
  %v2655 = vunpack.c.l.b16 %v2607
  %v2656 = vunpack.c.l.b16 %v2608
  %v2657 = vunpack.c.l.b16 %v2609
  %v2658 = vunpack.c.l.b16 %v2610
  %v2659 = vunpack.c.l.b16 %v2611
  %v2660 = vunpack.c.l.b16 %v2612
  %v2661 = vunpack.c.l.b16 %v2613
  %v2662 = vunpack.c.l.b16 %v2614
  %v2663 = vunpack.c.l.b16 %v2615
  %v2664 = vpack.c.b16 %v2649, %v2648
  %v2665 = vpack.c.b16 %v2651, %v2650
  %v2666 = vpack.c.b16 %v2653, %v2652
  %v2667 = vpack.c.b16 %v2655, %v2654
  %v2668 = vpack.c.b16 %v2657, %v2656
  %v2669 = vpack.c.b16 %v2659, %v2658
  %v2670 = vpack.c.b16 %v2661, %v2660
  %v2671 = vpack.c.b16 %v2663, %v2662
  %v2696 = vunpack.c.l.b16 %v2616
  %v2697 = vunpack.c.l.b16 %v2617
  %v2698 = vunpack.c.l.b16 %v2618
  %v2699 = vunpack.c.l.b16 %v2619
  %v2700 = vunpack.c.l.b16 %v2620
  %v2701 = vunpack.c.l.b16 %v2621
  %v2702 = vunpack.c.l.b16 %v2622
  %v2703 = vunpack.c.l.b16 %v2623
  %v2704 = vunpack.c.l.b16 %v2624
  %v2705 = vunpack.c.l.b16 %v2625
  %v2706 = vunpack.c.l.b16 %v2626
  %v2707 = vunpack.c.l.b16 %v2627
  %v2708 = vunpack.c.l.b16 %v2628
  %v2709 = vunpack.c.l.b16 %v2629
  %v2710 = vunpack.c.l.b16 %v2630
  %v2711 = vunpack.c.l.b16 %v2631
  %v2712 = vpack.c.b16 %v2697, %v2696
  %v2713 = vpack.c.b16 %v2699, %v2698
  %v2714 = vpack.c.b16 %v2701, %v2700
  %v2715 = vpack.c.b16 %v2703, %v2702
  %v2716 = vpack.c.b16 %v2705, %v2704
  %v2717 = vpack.c.b16 %v2707, %v2706
  %v2718 = vpack.c.b16 %v2709, %v2708
  %v2719 = vpack.c.b16 %v2711, %v2710
  %2728 = vmatprep.subr.bf16.mxu0 0
  %2729 = vmatpush1.bf16.msra.mxu0 %v2712
  %2730 = vmatprep.subr.bf16.mxu0 0
  %2731 = vmatpush1.bf16.msra.mxu0 %v2713
  %2732 = vmatprep.subr.bf16.mxu0 0
  %2733 = vmatpush1.bf16.msra.mxu0 %v2714
  %2734 = vmatprep.subr.bf16.mxu0 0
  %2735 = vmatpush1.bf16.msra.mxu0 %v2715
  %2736 = vmatprep.subr.bf16.mxu0 0
  %2737 = vmatpush1.bf16.msra.mxu0 %v2716
  %2738 = vmatprep.subr.bf16.mxu0 0
  %2739 = vmatpush1.bf16.msra.mxu0 %v2717
  %2740 = vmatprep.subr.bf16.mxu0 0
  %2741 = vmatpush1.bf16.msra.mxu0 %v2718
  %2742 = vmatprep.subr.bf16.mxu0 0
  %2743 = vmatpush1.bf16.msra.mxu0 %v2719
  %2744 = vmatprep.subr.bf16.mxu0 0
  %2745 = vmatpush1.bf16.msra.mxu0 0
  %2746 = vmatprep.subr.bf16.mxu0 0
  %2747 = vmatpush1.bf16.msra.mxu0 0
  %2748 = vmatprep.subr.bf16.mxu0 0
  %2749 = vmatpush1.bf16.msra.mxu0 0
  %2750 = vmatprep.subr.bf16.mxu0 0
  %2751 = vmatpush1.bf16.msra.mxu0 0
  %2752 = vmatprep.subr.bf16.mxu0 0
  %2753 = vmatpush1.bf16.msra.mxu0 0
  %2754 = vmatprep.subr.bf16.mxu0 0
  %2755 = vmatpush1.bf16.msra.mxu0 0
  %2756 = vmatprep.subr.bf16.mxu0 0
  %2757 = vmatpush1.bf16.msra.mxu0 0
  %2758 = vmatprep.subr.bf16.mxu0 0
  %2759 = vmatpush1.bf16.msra.mxu0 0
  %2760 = vmatprep.mubr.bf16.mxu0 0
  %2761 = vmatmul.mubr.bf16.gmra.mrb[0].mxu0 %v2664
  %v2762 = vpop.f32.mrb[0].mxu0
  %v2763 = vadd.f32 0.0, %v2762
  %v2764 = vpop.f32.mrb[0].mxu0
  %v2765 = vpop.f32.mrb[0].mxu0
  %v2766 = vadd.f32 0.0, %v2765
  %v2767 = vpop.f32.mrb[0].mxu0
  %2768 = vmatprep.mubr.bf16.mxu0 0
  %2769 = vmatmul.mubr.bf16.gmra.mrb[0].mxu0 %v2665
  %v2770 = vpop.f32.mrb[0].mxu0
  %v2771 = vadd.f32 0.0, %v2770
  %v2772 = vpop.f32.mrb[0].mxu0
  %v2773 = vpop.f32.mrb[0].mxu0
  %v2774 = vadd.f32 0.0, %v2773
  %v2775 = vpop.f32.mrb[0].mxu0
  %2776 = vmatprep.mubr.bf16.mxu0 0
  %2777 = vmatmul.mubr.bf16.gmra.mrb[0].mxu0 %v2666
  %v2778 = vpop.f32.mrb[0].mxu0
  %v2779 = vadd.f32 0.0, %v2778
  %v2780 = vpop.f32.mrb[0].mxu0
  %v2781 = vpop.f32.mrb[0].mxu0
  %v2782 = vadd.f32 0.0, %v2781
  %v2783 = vpop.f32.mrb[0].mxu0
  %2784 = vmatprep.mubr.bf16.mxu0 0
  %2785 = vmatmul.mubr.bf16.gmra.mrb[0].mxu0 %v2667
  %v2786 = vpop.f32.mrb[0].mxu0
  %v2787 = vadd.f32 0.0, %v2786
  %v2788 = vpop.f32.mrb[0].mxu0
  %v2789 = vpop.f32.mrb[0].mxu0
  %v2790 = vadd.f32 0.0, %v2789
  %v2791 = vpop.f32.mrb[0].mxu0
  %2792 = vmatprep.mubr.bf16.mxu0 0
  %2793 = vmatmul.mubr.bf16.gmra.mrb[0].mxu0 %v2668
  %v2794 = vpop.f32.mrb[0].mxu0
  %v2795 = vadd.f32 0.0, %v2794
  %v2796 = vpop.f32.mrb[0].mxu0
  %v2797 = vpop.f32.mrb[0].mxu0
  %v2798 = vadd.f32 0.0, %v2797
  %v2799 = vpop.f32.mrb[0].mxu0
  %2800 = vmatprep.mubr.bf16.mxu0 0
  %2801 = vmatmul.mubr.bf16.gmra.mrb[0].mxu0 %v2669
  %v2802 = vpop.f32.mrb[0].mxu0
  %v2803 = vadd.f32 0.0, %v2802
  %v2804 = vpop.f32.mrb[0].mxu0
  %v2805 = vpop.f32.mrb[0].mxu0
  %v2806 = vadd.f32 0.0, %v2805
  %v2807 = vpop.f32.mrb[0].mxu0
  %2808 = vmatprep.mubr.bf16.mxu0 0
  %2809 = vmatmul.mubr.bf16.gmra.mrb[0].mxu0 %v2670
  %v2810 = vpop.f32.mrb[0].mxu0
  %v2811 = vadd.f32 0.0, %v2810
  %v2812 = vpop.f32.mrb[0].mxu0
  %v2813 = vpop.f32.mrb[0].mxu0
  %v2814 = vadd.f32 0.0, %v2813
  %v2815 = vpop.f32.mrb[0].mxu0
  %2816 = vmatprep.mubr.bf16.mxu0 0
  %2817 = vmatmul.mubr.bf16.gmra.mrb[0].mxu0 %v2671
  %v2818 = vpop.f32.mrb[0].mxu0
  %v2819 = vadd.f32 0.0, %v2818
  %v2820 = vpop.f32.mrb[0].mxu0
  %v2821 = vpop.f32.mrb[0].mxu0
  %v2822 = vadd.f32 0.0, %v2821
  %v2823 = vpop.f32.mrb[0].mxu0
  %2824 = vdwg.mxu0
  %v2825 = vadd.f32 %v2537, %v2763
  %v2826 = vadd.f32 %v2540, %v2766
  %v2827 = vadd.f32 %v2545, %v2771
  %v2828 = vadd.f32 %v2548, %v2774
  %v2829 = vadd.f32 %v2553, %v2779
  %v2830 = vadd.f32 %v2556, %v2782
  %v2831 = vadd.f32 %v2561, %v2787
  %v2832 = vadd.f32 %v2564, %v2790
  %v2833 = vadd.f32 %v2569, %v2795
  %v2834 = vadd.f32 %v2572, %v2798
  %v2835 = vadd.f32 %v2577, %v2803
  %v2836 = vadd.f32 %v2580, %v2806
  %v2837 = vadd.f32 %v2585, %v2811
  %v2838 = vadd.f32 %v2588, %v2814
  %v2839 = vadd.f32 %v2593, %v2819
  %v2840 = vadd.f32 %v2596, %v2822
  %s2841 = scalar_lea.vmem %s0, 120
  %v2842 = vld [vmem:[%s2841] sm:$0xf]
  %v2843 = vld [vmem:[%s2841 + $0x4] sm:$0xf]
  %v2844 = vld [vmem:[%s2841 + $0x8] sm:$0xf]
  %v2845 = vld [vmem:[%s2841 + $0xc] sm:$0xf]
  %v2846 = vld [vmem:[%s2841 + $0x14] sm:$0xf]
  %v2847 = vld [vmem:[%s2841 + $0x18] sm:$0xf]
  %v2848 = vld [vmem:[%s2841 + $0x1c] sm:$0xf]
  %v2849 = vld [vmem:[%s2841 + $0x20] sm:$0xf]
  %v2850 = vld [vmem:[%s2841 + $0x28] sm:$0xf]
  %v2851 = vld [vmem:[%s2841 + $0x2c] sm:$0xf]
  %v2852 = vld [vmem:[%s2841 + $0x30] sm:$0xf]
  %v2853 = vld [vmem:[%s2841 + $0x34] sm:$0xf]
  %v2854 = vld [vmem:[%s2841 + $0x3c] sm:$0xf]
  %v2855 = vld [vmem:[%s2841 + $0x40] sm:$0xf]
  %v2856 = vld [vmem:[%s2841 + $0x44] sm:$0xf]
  %v2857 = vld [vmem:[%s2841 + $0x48] sm:$0xf]
  %v2858 = vld [vmem:[%s751] sm:$0xf]
  %v2859 = vld [vmem:[%s751 + $0x4] sm:$0xf]
  %v2860 = vld [vmem:[%s751 + $0x8] sm:$0xf]
  %v2861 = vld [vmem:[%s751 + $0xc] sm:$0xf]
  %v2862 = vld [vmem:[%s751 + $0x10] sm:$0xf]
  %v2863 = vld [vmem:[%s751 + $0x14] sm:$0xf]
  %v2864 = vld [vmem:[%s751 + $0x18] sm:$0xf]
  %v2865 = vld [vmem:[%s751 + $0x1c] sm:$0xf]
  %v2866 = vld [vmem:[%s751 + $0x20] sm:$0xf]
  %v2867 = vld [vmem:[%s751 + $0x24] sm:$0xf]
  %v2868 = vld [vmem:[%s751 + $0x28] sm:$0xf]
  %v2869 = vld [vmem:[%s751 + $0x2c] sm:$0xf]
  %v2870 = vld [vmem:[%s751 + $0x30] sm:$0xf]
  %v2871 = vld [vmem:[%s751 + $0x34] sm:$0xf]
  %v2872 = vld [vmem:[%s751 + $0x38] sm:$0xf]
  %v2873 = vld [vmem:[%s751 + $0x3c] sm:$0xf]
  %v2890 = vunpack.c.l.b16 %v2842
  %v2891 = vunpack.c.l.b16 %v2843
  %v2892 = vunpack.c.l.b16 %v2844
  %v2893 = vunpack.c.l.b16 %v2845
  %v2894 = vunpack.c.l.b16 %v2846
  %v2895 = vunpack.c.l.b16 %v2847
  %v2896 = vunpack.c.l.b16 %v2848
  %v2897 = vunpack.c.l.b16 %v2849
  %v2898 = vunpack.c.l.b16 %v2850
  %v2899 = vunpack.c.l.b16 %v2851
  %v2900 = vunpack.c.l.b16 %v2852
  %v2901 = vunpack.c.l.b16 %v2853
  %v2902 = vunpack.c.l.b16 %v2854
  %v2903 = vunpack.c.l.b16 %v2855
  %v2904 = vunpack.c.l.b16 %v2856
  %v2905 = vunpack.c.l.b16 %v2857
  %v2906 = vpack.c.b16 %v2891, %v2890
  %v2907 = vpack.c.b16 %v2893, %v2892
  %v2908 = vpack.c.b16 %v2895, %v2894
  %v2909 = vpack.c.b16 %v2897, %v2896
  %v2910 = vpack.c.b16 %v2899, %v2898
  %v2911 = vpack.c.b16 %v2901, %v2900
  %v2912 = vpack.c.b16 %v2903, %v2902
  %v2913 = vpack.c.b16 %v2905, %v2904
  %v2938 = vunpack.c.l.b16 %v2858
  %v2939 = vunpack.c.l.b16 %v2859
  %v2940 = vunpack.c.l.b16 %v2860
  %v2941 = vunpack.c.l.b16 %v2861
  %v2942 = vunpack.c.l.b16 %v2862
  %v2943 = vunpack.c.l.b16 %v2863
  %v2944 = vunpack.c.l.b16 %v2864
  %v2945 = vunpack.c.l.b16 %v2865
  %v2946 = vunpack.c.l.b16 %v2866
  %v2947 = vunpack.c.l.b16 %v2867
  %v2948 = vunpack.c.l.b16 %v2868
  %v2949 = vunpack.c.l.b16 %v2869
  %v2950 = vunpack.c.l.b16 %v2870
  %v2951 = vunpack.c.l.b16 %v2871
  %v2952 = vunpack.c.l.b16 %v2872
  %v2953 = vunpack.c.l.b16 %v2873
  %v2954 = vpack.c.b16 %v2939, %v2938
  %v2955 = vpack.c.b16 %v2941, %v2940
  %v2956 = vpack.c.b16 %v2943, %v2942
  %v2957 = vpack.c.b16 %v2945, %v2944
  %v2958 = vpack.c.b16 %v2947, %v2946
  %v2959 = vpack.c.b16 %v2949, %v2948
  %v2960 = vpack.c.b16 %v2951, %v2950
  %v2961 = vpack.c.b16 %v2953, %v2952
  %2970 = vmatprep.subr.bf16.mxu0 0
  %2971 = vmatpush1.bf16.msra.mxu0 %v2954
  %2972 = vmatprep.subr.bf16.mxu0 0
  %2973 = vmatpush1.bf16.msra.mxu0 %v2955
  %2974 = vmatprep.subr.bf16.mxu0 0
  %2975 = vmatpush1.bf16.msra.mxu0 %v2956
  %2976 = vmatprep.subr.bf16.mxu0 0
  %2977 = vmatpush1.bf16.msra.mxu0 %v2957
  %2978 = vmatprep.subr.bf16.mxu0 0
  %2979 = vmatpush1.bf16.msra.mxu0 %v2958
  %2980 = vmatprep.subr.bf16.mxu0 0
  %2981 = vmatpush1.bf16.msra.mxu0 %v2959
  %2982 = vmatprep.subr.bf16.mxu0 0
  %2983 = vmatpush1.bf16.msra.mxu0 %v2960
  %2984 = vmatprep.subr.bf16.mxu0 0
  %2985 = vmatpush1.bf16.msra.mxu0 %v2961
  %2986 = vmatprep.subr.bf16.mxu0 0
  %2987 = vmatpush1.bf16.msra.mxu0 0
  %2988 = vmatprep.subr.bf16.mxu0 0
  %2989 = vmatpush1.bf16.msra.mxu0 0
  %2990 = vmatprep.subr.bf16.mxu0 0
  %2991 = vmatpush1.bf16.msra.mxu0 0
  %2992 = vmatprep.subr.bf16.mxu0 0
  %2993 = vmatpush1.bf16.msra.mxu0 0
  %2994 = vmatprep.subr.bf16.mxu0 0
  %2995 = vmatpush1.bf16.msra.mxu0 0
  %2996 = vmatprep.subr.bf16.mxu0 0
  %2997 = vmatpush1.bf16.msra.mxu0 0
  %2998 = vmatprep.subr.bf16.mxu0 0
  %2999 = vmatpush1.bf16.msra.mxu0 0
  %3000 = vmatprep.subr.bf16.mxu0 0
  %3001 = vmatpush1.bf16.msra.mxu0 0
  %3002 = vmatprep.mubr.bf16.mxu0 0
  %3003 = vmatmul.mubr.bf16.gmra.mrb[0].mxu0 %v2906
  %v3004 = vpop.f32.mrb[0].mxu0
  %v3005 = vadd.f32 0.0, %v3004
  %v3006 = vpop.f32.mrb[0].mxu0
  %v3007 = vpop.f32.mrb[0].mxu0
  %v3008 = vadd.f32 0.0, %v3007
  %v3009 = vpop.f32.mrb[0].mxu0
  %3010 = vmatprep.mubr.bf16.mxu0 0
  %3011 = vmatmul.mubr.bf16.gmra.mrb[0].mxu0 %v2907
  %v3012 = vpop.f32.mrb[0].mxu0
  %v3013 = vadd.f32 0.0, %v3012
  %v3014 = vpop.f32.mrb[0].mxu0
  %v3015 = vpop.f32.mrb[0].mxu0
  %v3016 = vadd.f32 0.0, %v3015
  %v3017 = vpop.f32.mrb[0].mxu0
  %3018 = vmatprep.mubr.bf16.mxu0 0
  %3019 = vmatmul.mubr.bf16.gmra.mrb[0].mxu0 %v2908
  %v3020 = vpop.f32.mrb[0].mxu0
  %v3021 = vadd.f32 0.0, %v3020
  %v3022 = vpop.f32.mrb[0].mxu0
  %v3023 = vpop.f32.mrb[0].mxu0
  %v3024 = vadd.f32 0.0, %v3023
  %v3025 = vpop.f32.mrb[0].mxu0
  %3026 = vmatprep.mubr.bf16.mxu0 0
  %3027 = vmatmul.mubr.bf16.gmra.mrb[0].mxu0 %v2909
  %v3028 = vpop.f32.mrb[0].mxu0
  %v3029 = vadd.f32 0.0, %v3028
  %v3030 = vpop.f32.mrb[0].mxu0
  %v3031 = vpop.f32.mrb[0].mxu0
  %v3032 = vadd.f32 0.0, %v3031
  %v3033 = vpop.f32.mrb[0].mxu0
  %3034 = vmatprep.mubr.bf16.mxu0 0
  %3035 = vmatmul.mubr.bf16.gmra.mrb[0].mxu0 %v2910
  %v3036 = vpop.f32.mrb[0].mxu0
  %v3037 = vadd.f32 0.0, %v3036
  %v3038 = vpop.f32.mrb[0].mxu0
  %v3039 = vpop.f32.mrb[0].mxu0
  %v3040 = vadd.f32 0.0, %v3039
  %v3041 = vpop.f32.mrb[0].mxu0
  %3042 = vmatprep.mubr.bf16.mxu0 0
  %3043 = vmatmul.mubr.bf16.gmra.mrb[0].mxu0 %v2911
  %v3044 = vpop.f32.mrb[0].mxu0
  %v3045 = vadd.f32 0.0, %v3044
  %v3046 = vpop.f32.mrb[0].mxu0
  %v3047 = vpop.f32.mrb[0].mxu0
  %v3048 = vadd.f32 0.0, %v3047
  %v3049 = vpop.f32.mrb[0].mxu0
  %3050 = vmatprep.mubr.bf16.mxu0 0
  %3051 = vmatmul.mubr.bf16.gmra.mrb[0].mxu0 %v2912
  %v3052 = vpop.f32.mrb[0].mxu0
  %v3053 = vadd.f32 0.0, %v3052
  %v3054 = vpop.f32.mrb[0].mxu0
  %v3055 = vpop.f32.mrb[0].mxu0
  %v3056 = vadd.f32 0.0, %v3055
  %v3057 = vpop.f32.mrb[0].mxu0
  %3058 = vmatprep.mubr.bf16.mxu0 0
  %3059 = vmatmul.mubr.bf16.gmra.mrb[0].mxu0 %v2913
  %v3060 = vpop.f32.mrb[0].mxu0
  %v3061 = vadd.f32 0.0, %v3060
  %v3062 = vpop.f32.mrb[0].mxu0
  %v3063 = vpop.f32.mrb[0].mxu0
  %v3064 = vadd.f32 0.0, %v3063
  %v3065 = vpop.f32.mrb[0].mxu0
  %3066 = vdwg.mxu0
  %v3067 = vadd.f32 %v2825, %v3005
  %v3068 = vadd.f32 %v2826, %v3008
  %v3069 = vadd.f32 %v2827, %v3013
  %v3070 = vadd.f32 %v2828, %v3016
  %v3071 = vadd.f32 %v2829, %v3021
  %v3072 = vadd.f32 %v2830, %v3024
  %v3073 = vadd.f32 %v2831, %v3029
  %v3074 = vadd.f32 %v2832, %v3032
  %v3075 = vadd.f32 %v2833, %v3037
  %v3076 = vadd.f32 %v2834, %v3040
  %v3077 = vadd.f32 %v2835, %v3045
  %v3078 = vadd.f32 %v2836, %v3048
  %v3079 = vadd.f32 %v2837, %v3053
  %v3080 = vadd.f32 %v2838, %v3056
  %v3081 = vadd.f32 %v2839, %v3061
  %v3082 = vadd.f32 %v2840, %v3064
  %v3083 = vld [vmem:[%s2] sm:$0x1]
  %v3085 = vlaneseq
  %v3086 = vshrl.u32 %v3085, 7
  %v3087 = vsub.s32 0, %v3086
  %v3088 = vrot.slane %v3083, %v3087
  %v3090 = vadd.f32 %v3067, %v3088
  %v3091 = vadd.f32 %v3068, %v3088
  %v3092 = vadd.f32 %v3069, %v3088
  %v3093 = vadd.f32 %v3070, %v3088
  %v3094 = vadd.f32 %v3071, %v3088
  %v3095 = vadd.f32 %v3072, %v3088
  %v3096 = vadd.f32 %v3073, %v3088
  %v3097 = vadd.f32 %v3074, %v3088
  %v3098 = vadd.f32 %v3075, %v3088
  %v3099 = vadd.f32 %v3076, %v3088
  %v3100 = vadd.f32 %v3077, %v3088
  %v3101 = vadd.f32 %v3078, %v3088
  %v3102 = vadd.f32 %v3079, %v3088
  %v3103 = vadd.f32 %v3080, %v3088
  %v3104 = vadd.f32 %v3081, %v3088
  %v3105 = vadd.f32 %v3082, %v3088
  %v3106 = vmax.f32 %v3090, 0.0
  %v3107 = vmax.f32 %v3091, 0.0
  %v3108 = vmax.f32 %v3092, 0.0
  %v3109 = vmax.f32 %v3093, 0.0
  %v3110 = vmax.f32 %v3094, 0.0
  %v3111 = vmax.f32 %v3095, 0.0
  %v3112 = vmax.f32 %v3096, 0.0
  %v3113 = vmax.f32 %v3097, 0.0
  %v3114 = vmax.f32 %v3098, 0.0
  %v3115 = vmax.f32 %v3099, 0.0
  %v3116 = vmax.f32 %v3100, 0.0
  %v3117 = vmax.f32 %v3101, 0.0
  %v3118 = vmax.f32 %v3102, 0.0
  %v3119 = vmax.f32 %v3103, 0.0
  %v3120 = vmax.f32 %v3104, 0.0
  %v3121 = vmax.f32 %v3105, 0.0
  %v3122 = vpack.c.bf16 %v3107, %v3106
  %v3123 = vpack.c.bf16 %v3109, %v3108
  %v3124 = vpack.c.bf16 %v3111, %v3110
  %v3125 = vpack.c.bf16 %v3113, %v3112
  %v3126 = vpack.c.bf16 %v3115, %v3114
  %v3127 = vpack.c.bf16 %v3117, %v3116
  %v3128 = vpack.c.bf16 %v3119, %v3118
  %v3129 = vpack.c.bf16 %v3121, %v3120
  %v3138 = vunpack.c.l.b16 %v3122
  %v3139 = vunpack.c.h.b16 %v3122
  %v3140 = vunpack.c.l.b16 %v3123
  %v3141 = vunpack.c.h.b16 %v3123
  %v3142 = vunpack.c.l.b16 %v3124
  %v3143 = vunpack.c.h.b16 %v3124
  %v3144 = vunpack.c.l.b16 %v3125
  %v3145 = vunpack.c.h.b16 %v3125
  %v3146 = vunpack.c.l.b16 %v3126
  %v3147 = vunpack.c.h.b16 %v3126
  %v3148 = vunpack.c.l.b16 %v3127
  %v3149 = vunpack.c.h.b16 %v3127
  %v3150 = vunpack.c.l.b16 %v3128
  %v3151 = vunpack.c.h.b16 %v3128
  %v3152 = vunpack.c.l.b16 %v3129
  %v3153 = vunpack.c.h.b16 %v3129
  %v3154 = vpack.c.b16 %v3138, %v3138
  %v3155 = vpack.c.b16 %v3139, %v3139
  %v3156 = vpack.c.b16 %v3140, %v3140
  %v3157 = vpack.c.b16 %v3141, %v3141
  %v3158 = vpack.c.b16 %v3142, %v3142
  %v3159 = vpack.c.b16 %v3143, %v3143
  %v3160 = vpack.c.b16 %v3144, %v3144
  %v3161 = vpack.c.b16 %v3145, %v3145
  %v3162 = vpack.c.b16 %v3146, %v3146
  %v3163 = vpack.c.b16 %v3147, %v3147
  %v3164 = vpack.c.b16 %v3148, %v3148
  %v3165 = vpack.c.b16 %v3149, %v3149
  %v3166 = vpack.c.b16 %v3150, %v3150
  %v3167 = vpack.c.b16 %v3151, %v3151
  %v3168 = vpack.c.b16 %v3152, %v3152
  %v3169 = vpack.c.b16 %v3153, %v3153
  %s3186 = scalar_lea.vmem [#allocation2], 128
  %3187 = vst [vmem:[%s3186] sm:$0xf] %v3154
  %3188 = vst [vmem:[%s3186 + $0x8] sm:$0xf] %v3155
  %3189 = vst [vmem:[%s3186 + $0x10] sm:$0xf] %v3156
  %3190 = vst [vmem:[%s3186 + $0x18] sm:$0xf] %v3157
  %3191 = vst [vmem:[%s3186 + $0x20] sm:$0xf] %v3158
  %3192 = vst [vmem:[%s3186 + $0x28] sm:$0xf] %v3159
  %3193 = vst [vmem:[%s3186 + $0x30] sm:$0xf] %v3160
  %3194 = vst [vmem:[%s3186 + $0x38] sm:$0xf] %v3161
  %3195 = vst [vmem:[%s3186 + $0x40] sm:$0xf] %v3162
  %3196 = vst [vmem:[%s3186 + $0x48] sm:$0xf] %v3163
  %3197 = vst [vmem:[%s3186 + $0x50] sm:$0xf] %v3164
  %3198 = vst [vmem:[%s3186 + $0x58] sm:$0xf] %v3165
  %3199 = vst [vmem:[%s3186 + $0x60] sm:$0xf] %v3166
  %3200 = vst [vmem:[%s3186 + $0x68] sm:$0xf] %v3167
  %3201 = vst [vmem:[%s3186 + $0x70] sm:$0xf] %v3168
  %3202 = vst [vmem:[%s3186 + $0x78] sm:$0xf] %v3169
  %v3203 = vld [vmem:[%s734] sm:$0xf]
  %v3204 = vld [vmem:[%s734 + $0x4] sm:$0xf]
  %v3205 = vld [vmem:[%s734 + $0x8] sm:$0xf]
  %v3206 = vld [vmem:[%s734 + $0xc] sm:$0xf]
  %v3207 = vld [vmem:[%s734 + $0x14] sm:$0xf]
  %v3208 = vld [vmem:[%s734 + $0x18] sm:$0xf]
  %v3209 = vld [vmem:[%s734 + $0x1c] sm:$0xf]
  %v3210 = vld [vmem:[%s734 + $0x20] sm:$0xf]
  %v3211 = vld [vmem:[%s734 + $0x28] sm:$0xf]
  %v3212 = vld [vmem:[%s734 + $0x2c] sm:$0xf]
  %v3213 = vld [vmem:[%s734 + $0x30] sm:$0xf]
  %v3214 = vld [vmem:[%s734 + $0x34] sm:$0xf]
  %v3215 = vld [vmem:[%s734 + $0x3c] sm:$0xf]
  %v3216 = vld [vmem:[%s734 + $0x40] sm:$0xf]
  %v3217 = vld [vmem:[%s734 + $0x44] sm:$0xf]
  %v3218 = vld [vmem:[%s734 + $0x48] sm:$0xf]
  %v3219 = vld [vmem:[%s1] sm:$0xf]
  %v3220 = vld [vmem:[%s1 + $0x4] sm:$0xf]
  %v3221 = vld [vmem:[%s1 + $0x8] sm:$0xf]
  %v3222 = vld [vmem:[%s1 + $0xc] sm:$0xf]
  %v3223 = vld [vmem:[%s1 + $0x10] sm:$0xf]
  %v3224 = vld [vmem:[%s1 + $0x14] sm:$0xf]
  %v3225 = vld [vmem:[%s1 + $0x18] sm:$0xf]
  %v3226 = vld [vmem:[%s1 + $0x1c] sm:$0xf]
  %v3227 = vld [vmem:[%s1 + $0x20] sm:$0xf]
  %v3228 = vld [vmem:[%s1 + $0x24] sm:$0xf]
  %v3229 = vld [vmem:[%s1 + $0x28] sm:$0xf]
  %v3230 = vld [vmem:[%s1 + $0x2c] sm:$0xf]
  %v3231 = vld [vmem:[%s1 + $0x30] sm:$0xf]
  %v3232 = vld [vmem:[%s1 + $0x34] sm:$0xf]
  %v3233 = vld [vmem:[%s1 + $0x38] sm:$0xf]
  %v3234 = vld [vmem:[%s1 + $0x3c] sm:$0xf]
  %v3235 = vld [vmem:[%s1788] sm:$0xf]
  %v3236 = vld [vmem:[%s1788 + $0x4] sm:$0xf]
  %v3237 = vld [vmem:[%s1788 + $0x8] sm:$0xf]
  %v3238 = vld [vmem:[%s1788 + $0xc] sm:$0xf]
  %v3239 = vld [vmem:[%s1788 + $0x14] sm:$0xf]
  %v3240 = vld [vmem:[%s1788 + $0x18] sm:$0xf]
  %v3241 = vld [vmem:[%s1788 + $0x1c] sm:$0xf]
  %v3242 = vld [vmem:[%s1788 + $0x20] sm:$0xf]
  %v3243 = vld [vmem:[%s1788 + $0x28] sm:$0xf]
  %v3244 = vld [vmem:[%s1788 + $0x2c] sm:$0xf]
  %v3245 = vld [vmem:[%s1788 + $0x30] sm:$0xf]
  %v3246 = vld [vmem:[%s1788 + $0x34] sm:$0xf]
  %v3247 = vld [vmem:[%s1788 + $0x3c] sm:$0xf]
  %v3248 = vld [vmem:[%s1788 + $0x40] sm:$0xf]
  %v3249 = vld [vmem:[%s1788 + $0x44] sm:$0xf]
  %v3250 = vld [vmem:[%s1788 + $0x48] sm:$0xf]
  %v3251 = vld [vmem:[%s88] sm:$0xf]
  %v3252 = vld [vmem:[%s88 + $0x4] sm:$0xf]
  %v3253 = vld [vmem:[%s88 + $0x8] sm:$0xf]
  %v3254 = vld [vmem:[%s88 + $0xc] sm:$0xf]
  %v3255 = vld [vmem:[%s88 + $0x10] sm:$0xf]
  %v3256 = vld [vmem:[%s88 + $0x14] sm:$0xf]
  %v3257 = vld [vmem:[%s88 + $0x18] sm:$0xf]
  %v3258 = vld [vmem:[%s88 + $0x1c] sm:$0xf]
  %v3259 = vld [vmem:[%s88 + $0x20] sm:$0xf]
  %v3260 = vld [vmem:[%s88 + $0x24] sm:$0xf]
  %v3261 = vld [vmem:[%s88 + $0x28] sm:$0xf]
  %v3262 = vld [vmem:[%s88 + $0x2c] sm:$0xf]
  %v3263 = vld [vmem:[%s88 + $0x30] sm:$0xf]
  %v3264 = vld [vmem:[%s88 + $0x34] sm:$0xf]
  %v3265 = vld [vmem:[%s88 + $0x38] sm:$0xf]
  %v3266 = vld [vmem:[%s88 + $0x3c] sm:$0xf]
  %v3283 = vunpack.c.l.b16 %v3235
  %v3284 = vunpack.c.l.b16 %v3236
  %v3285 = vunpack.c.l.b16 %v3237
  %v3286 = vunpack.c.l.b16 %v3238
  %v3287 = vunpack.c.l.b16 %v3239
  %v3288 = vunpack.c.l.b16 %v3240
  %v3289 = vunpack.c.l.b16 %v3241
  %v3290 = vunpack.c.l.b16 %v3242
  %v3291 = vunpack.c.l.b16 %v3243
  %v3292 = vunpack.c.l.b16 %v3244
  %v3293 = vunpack.c.l.b16 %v3245
  %v3294 = vunpack.c.l.b16 %v3246
  %v3295 = vunpack.c.l.b16 %v3247
  %v3296 = vunpack.c.l.b16 %v3248
  %v3297 = vunpack.c.l.b16 %v3249
  %v3298 = vunpack.c.l.b16 %v3250
  %v3299 = vpack.c.b16 %v3284, %v3283
  %v3300 = vpack.c.b16 %v3286, %v3285
  %v3301 = vpack.c.b16 %v3288, %v3287
  %v3302 = vpack.c.b16 %v3290, %v3289
  %v3303 = vpack.c.b16 %v3292, %v3291
  %v3304 = vpack.c.b16 %v3294, %v3293
  %v3305 = vpack.c.b16 %v3296, %v3295
  %v3306 = vpack.c.b16 %v3298, %v3297
  %v3331 = vunpack.c.l.b16 %v3251
  %v3332 = vunpack.c.l.b16 %v3252
  %v3333 = vunpack.c.l.b16 %v3253
  %v3334 = vunpack.c.l.b16 %v3254
  %v3335 = vunpack.c.l.b16 %v3255
  %v3336 = vunpack.c.l.b16 %v3256
  %v3337 = vunpack.c.l.b16 %v3257
  %v3338 = vunpack.c.l.b16 %v3258
  %v3339 = vunpack.c.l.b16 %v3259
  %v3340 = vunpack.c.l.b16 %v3260
  %v3341 = vunpack.c.l.b16 %v3261
  %v3342 = vunpack.c.l.b16 %v3262
  %v3343 = vunpack.c.l.b16 %v3263
  %v3344 = vunpack.c.l.b16 %v3264
  %v3345 = vunpack.c.l.b16 %v3265
  %v3346 = vunpack.c.l.b16 %v3266
  %v3347 = vpack.c.b16 %v3332, %v3331
  %v3348 = vpack.c.b16 %v3334, %v3333
  %v3349 = vpack.c.b16 %v3336, %v3335
  %v3350 = vpack.c.b16 %v3338, %v3337
  %v3351 = vpack.c.b16 %v3340, %v3339
  %v3352 = vpack.c.b16 %v3342, %v3341
  %v3353 = vpack.c.b16 %v3344, %v3343
  %v3354 = vpack.c.b16 %v3346, %v3345
  %3363 = vmatprep.subr.bf16.mxu0 0
  %3364 = vmatpush1.bf16.msra.mxu0 %v3347
  %3365 = vmatprep.subr.bf16.mxu0 0
  %3366 = vmatpush1.bf16.msra.mxu0 %v3348
  %3367 = vmatprep.subr.bf16.mxu0 0
  %3368 = vmatpush1.bf16.msra.mxu0 %v3349
  %3369 = vmatprep.subr.bf16.mxu0 0
  %3370 = vmatpush1.bf16.msra.mxu0 %v3350
  %3371 = vmatprep.subr.bf16.mxu0 0
  %3372 = vmatpush1.bf16.msra.mxu0 %v3351
  %3373 = vmatprep.subr.bf16.mxu0 0
  %3374 = vmatpush1.bf16.msra.mxu0 %v3352
  %3375 = vmatprep.subr.bf16.mxu0 0
  %3376 = vmatpush1.bf16.msra.mxu0 %v3353
  %3377 = vmatprep.subr.bf16.mxu0 0
  %3378 = vmatpush1.bf16.msra.mxu0 %v3354
  %3379 = vmatprep.subr.bf16.mxu0 0
  %3380 = vmatpush1.bf16.msra.mxu0 0
  %3381 = vmatprep.subr.bf16.mxu0 0
  %3382 = vmatpush1.bf16.msra.mxu0 0
  %3383 = vmatprep.subr.bf16.mxu0 0
  %3384 = vmatpush1.bf16.msra.mxu0 0
  %3385 = vmatprep.subr.bf16.mxu0 0
  %3386 = vmatpush1.bf16.msra.mxu0 0
  %3387 = vmatprep.subr.bf16.mxu0 0
  %3388 = vmatpush1.bf16.msra.mxu0 0
  %3389 = vmatprep.subr.bf16.mxu0 0
  %3390 = vmatpush1.bf16.msra.mxu0 0
  %3391 = vmatprep.subr.bf16.mxu0 0
  %3392 = vmatpush1.bf16.msra.mxu0 0
  %3393 = vmatprep.subr.bf16.mxu0 0
  %3394 = vmatpush1.bf16.msra.mxu0 0
  %3395 = vmatprep.mubr.bf16.mxu0 0
  %3396 = vmatmul.mubr.bf16.gmra.mrb[0].mxu0 %v3299
  %v3397 = vpop.f32.mrb[0].mxu0
  %v3398 = vadd.f32 0.0, %v3397
  %v3399 = vpop.f32.mrb[0].mxu0
  %v3400 = vpop.f32.mrb[0].mxu0
  %v3401 = vadd.f32 0.0, %v3400
  %v3402 = vpop.f32.mrb[0].mxu0
  %3403 = vmatprep.mubr.bf16.mxu0 0
  %3404 = vmatmul.mubr.bf16.gmra.mrb[0].mxu0 %v3300
  %v3405 = vpop.f32.mrb[0].mxu0
  %v3406 = vadd.f32 0.0, %v3405
  %v3407 = vpop.f32.mrb[0].mxu0
  %v3408 = vpop.f32.mrb[0].mxu0
  %v3409 = vadd.f32 0.0, %v3408
  %v3410 = vpop.f32.mrb[0].mxu0
  %3411 = vmatprep.mubr.bf16.mxu0 0
  %3412 = vmatmul.mubr.bf16.gmra.mrb[0].mxu0 %v3301
  %v3413 = vpop.f32.mrb[0].mxu0
  %v3414 = vadd.f32 0.0, %v3413
  %v3415 = vpop.f32.mrb[0].mxu0
  %v3416 = vpop.f32.mrb[0].mxu0
  %v3417 = vadd.f32 0.0, %v3416
  %v3418 = vpop.f32.mrb[0].mxu0
  %3419 = vmatprep.mubr.bf16.mxu0 0
  %3420 = vmatmul.mubr.bf16.gmra.mrb[0].mxu0 %v3302
  %v3421 = vpop.f32.mrb[0].mxu0
  %v3422 = vadd.f32 0.0, %v3421
  %v3423 = vpop.f32.mrb[0].mxu0
  %v3424 = vpop.f32.mrb[0].mxu0
  %v3425 = vadd.f32 0.0, %v3424
  %v3426 = vpop.f32.mrb[0].mxu0
  %3427 = vmatprep.mubr.bf16.mxu0 0
  %3428 = vmatmul.mubr.bf16.gmra.mrb[0].mxu0 %v3303
  %v3429 = vpop.f32.mrb[0].mxu0
  %v3430 = vadd.f32 0.0, %v3429
  %v3431 = vpop.f32.mrb[0].mxu0
  %v3432 = vpop.f32.mrb[0].mxu0
  %v3433 = vadd.f32 0.0, %v3432
  %v3434 = vpop.f32.mrb[0].mxu0
  %3435 = vmatprep.mubr.bf16.mxu0 0
  %3436 = vmatmul.mubr.bf16.gmra.mrb[0].mxu0 %v3304
  %v3437 = vpop.f32.mrb[0].mxu0
  %v3438 = vadd.f32 0.0, %v3437
  %v3439 = vpop.f32.mrb[0].mxu0
  %v3440 = vpop.f32.mrb[0].mxu0
  %v3441 = vadd.f32 0.0, %v3440
  %v3442 = vpop.f32.mrb[0].mxu0
  %3443 = vmatprep.mubr.bf16.mxu0 0
  %3444 = vmatmul.mubr.bf16.gmra.mrb[0].mxu0 %v3305
  %v3445 = vpop.f32.mrb[0].mxu0
  %v3446 = vadd.f32 0.0, %v3445
  %v3447 = vpop.f32.mrb[0].mxu0
  %v3448 = vpop.f32.mrb[0].mxu0
  %v3449 = vadd.f32 0.0, %v3448
  %v3450 = vpop.f32.mrb[0].mxu0
  %3451 = vmatprep.mubr.bf16.mxu0 0
  %3452 = vmatmul.mubr.bf16.gmra.mrb[0].mxu0 %v3306
  %v3453 = vpop.f32.mrb[0].mxu0
  %v3454 = vadd.f32 0.0, %v3453
  %v3455 = vpop.f32.mrb[0].mxu0
  %v3456 = vpop.f32.mrb[0].mxu0
  %v3457 = vadd.f32 0.0, %v3456
  %v3458 = vpop.f32.mrb[0].mxu0
  %3459 = vdwg.mxu0
  %v3476 = vunpack.c.l.b16 %v3203
  %v3477 = vunpack.c.l.b16 %v3204
  %v3478 = vunpack.c.l.b16 %v3205
  %v3479 = vunpack.c.l.b16 %v3206
  %v3480 = vunpack.c.l.b16 %v3207
  %v3481 = vunpack.c.l.b16 %v3208
  %v3482 = vunpack.c.l.b16 %v3209
  %v3483 = vunpack.c.l.b16 %v3210
  %v3484 = vunpack.c.l.b16 %v3211
  %v3485 = vunpack.c.l.b16 %v3212
  %v3486 = vunpack.c.l.b16 %v3213
  %v3487 = vunpack.c.l.b16 %v3214
  %v3488 = vunpack.c.l.b16 %v3215
  %v3489 = vunpack.c.l.b16 %v3216
  %v3490 = vunpack.c.l.b16 %v3217
  %v3491 = vunpack.c.l.b16 %v3218
  %v3492 = vpack.c.b16 %v3477, %v3476
  %v3493 = vpack.c.b16 %v3479, %v3478
  %v3494 = vpack.c.b16 %v3481, %v3480
  %v3495 = vpack.c.b16 %v3483, %v3482
  %v3496 = vpack.c.b16 %v3485, %v3484
  %v3497 = vpack.c.b16 %v3487, %v3486
  %v3498 = vpack.c.b16 %v3489, %v3488
  %v3499 = vpack.c.b16 %v3491, %v3490
  %v3524 = vunpack.c.l.b16 %v3219
  %v3525 = vunpack.c.l.b16 %v3220
  %v3526 = vunpack.c.l.b16 %v3221
  %v3527 = vunpack.c.l.b16 %v3222
  %v3528 = vunpack.c.l.b16 %v3223
  %v3529 = vunpack.c.l.b16 %v3224
  %v3530 = vunpack.c.l.b16 %v3225
  %v3531 = vunpack.c.l.b16 %v3226
  %v3532 = vunpack.c.l.b16 %v3227
  %v3533 = vunpack.c.l.b16 %v3228
  %v3534 = vunpack.c.l.b16 %v3229
  %v3535 = vunpack.c.l.b16 %v3230
  %v3536 = vunpack.c.l.b16 %v3231
  %v3537 = vunpack.c.l.b16 %v3232
  %v3538 = vunpack.c.l.b16 %v3233
  %v3539 = vunpack.c.l.b16 %v3234
  %v3540 = vpack.c.b16 %v3525, %v3524
  %v3541 = vpack.c.b16 %v3527, %v3526
  %v3542 = vpack.c.b16 %v3529, %v3528
  %v3543 = vpack.c.b16 %v3531, %v3530
  %v3544 = vpack.c.b16 %v3533, %v3532
  %v3545 = vpack.c.b16 %v3535, %v3534
  %v3546 = vpack.c.b16 %v3537, %v3536
  %v3547 = vpack.c.b16 %v3539, %v3538
  %3556 = vmatprep.subr.bf16.mxu0 0
  %3557 = vmatpush1.bf16.msra.mxu0 %v3540
  %3558 = vmatprep.subr.bf16.mxu0 0
  %3559 = vmatpush1.bf16.msra.mxu0 %v3541
  %3560 = vmatprep.subr.bf16.mxu0 0
  %3561 = vmatpush1.bf16.msra.mxu0 %v3542
  %3562 = vmatprep.subr.bf16.mxu0 0
  %3563 = vmatpush1.bf16.msra.mxu0 %v3543
  %3564 = vmatprep.subr.bf16.mxu0 0
  %3565 = vmatpush1.bf16.msra.mxu0 %v3544
  %3566 = vmatprep.subr.bf16.mxu0 0
  %3567 = vmatpush1.bf16.msra.mxu0 %v3545
  %3568 = vmatprep.subr.bf16.mxu0 0
  %3569 = vmatpush1.bf16.msra.mxu0 %v3546
  %3570 = vmatprep.subr.bf16.mxu0 0
  %3571 = vmatpush1.bf16.msra.mxu0 %v3547
  %3572 = vmatprep.subr.bf16.mxu0 0
  %3573 = vmatpush1.bf16.msra.mxu0 0
  %3574 = vmatprep.subr.bf16.mxu0 0
  %3575 = vmatpush1.bf16.msra.mxu0 0
  %3576 = vmatprep.subr.bf16.mxu0 0
  %3577 = vmatpush1.bf16.msra.mxu0 0
  %3578 = vmatprep.subr.bf16.mxu0 0
  %3579 = vmatpush1.bf16.msra.mxu0 0
  %3580 = vmatprep.subr.bf16.mxu0 0
  %3581 = vmatpush1.bf16.msra.mxu0 0
  %3582 = vmatprep.subr.bf16.mxu0 0
  %3583 = vmatpush1.bf16.msra.mxu0 0
  %3584 = vmatprep.subr.bf16.mxu0 0
  %3585 = vmatpush1.bf16.msra.mxu0 0
  %3586 = vmatprep.subr.bf16.mxu0 0
  %3587 = vmatpush1.bf16.msra.mxu0 0
  %3588 = vmatprep.mubr.bf16.mxu0 0
  %3589 = vmatmul.mubr.bf16.gmra.mrb[0].mxu0 %v3492
  %v3590 = vpop.f32.mrb[0].mxu0
  %v3591 = vadd.f32 %v3398, %v3590
  %v3592 = vpop.f32.mrb[0].mxu0
  %v3593 = vpop.f32.mrb[0].mxu0
  %v3594 = vadd.f32 %v3401, %v3593
  %v3595 = vpop.f32.mrb[0].mxu0
  %3596 = vmatprep.mubr.bf16.mxu0 0
  %3597 = vmatmul.mubr.bf16.gmra.mrb[0].mxu0 %v3493
  %v3598 = vpop.f32.mrb[0].mxu0
  %v3599 = vadd.f32 %v3406, %v3598
  %v3600 = vpop.f32.mrb[0].mxu0
  %v3601 = vpop.f32.mrb[0].mxu0
  %v3602 = vadd.f32 %v3409, %v3601
  %v3603 = vpop.f32.mrb[0].mxu0
  %3604 = vmatprep.mubr.bf16.mxu0 0
  %3605 = vmatmul.mubr.bf16.gmra.mrb[0].mxu0 %v3494
  %v3606 = vpop.f32.mrb[0].mxu0
  %v3607 = vadd.f32 %v3414, %v3606
  %v3608 = vpop.f32.mrb[0].mxu0
  %v3609 = vpop.f32.mrb[0].mxu0
  %v3610 = vadd.f32 %v3417, %v3609
  %v3611 = vpop.f32.mrb[0].mxu0
  %3612 = vmatprep.mubr.bf16.mxu0 0
  %3613 = vmatmul.mubr.bf16.gmra.mrb[0].mxu0 %v3495
  %v3614 = vpop.f32.mrb[0].mxu0
  %v3615 = vadd.f32 %v3422, %v3614
  %v3616 = vpop.f32.mrb[0].mxu0
  %v3617 = vpop.f32.mrb[0].mxu0
  %v3618 = vadd.f32 %v3425, %v3617
  %v3619 = vpop.f32.mrb[0].mxu0
  %3620 = vmatprep.mubr.bf16.mxu0 0
  %3621 = vmatmul.mubr.bf16.gmra.mrb[0].mxu0 %v3496
  %v3622 = vpop.f32.mrb[0].mxu0
  %v3623 = vadd.f32 %v3430, %v3622
  %v3624 = vpop.f32.mrb[0].mxu0
  %v3625 = vpop.f32.mrb[0].mxu0
  %v3626 = vadd.f32 %v3433, %v3625
  %v3627 = vpop.f32.mrb[0].mxu0
  %3628 = vmatprep.mubr.bf16.mxu0 0
  %3629 = vmatmul.mubr.bf16.gmra.mrb[0].mxu0 %v3497
  %v3630 = vpop.f32.mrb[0].mxu0
  %v3631 = vadd.f32 %v3438, %v3630
  %v3632 = vpop.f32.mrb[0].mxu0
  %v3633 = vpop.f32.mrb[0].mxu0
  %v3634 = vadd.f32 %v3441, %v3633
  %v3635 = vpop.f32.mrb[0].mxu0
  %3636 = vmatprep.mubr.bf16.mxu0 0
  %3637 = vmatmul.mubr.bf16.gmra.mrb[0].mxu0 %v3498
  %v3638 = vpop.f32.mrb[0].mxu0
  %v3639 = vadd.f32 %v3446, %v3638
  %v3640 = vpop.f32.mrb[0].mxu0
  %v3641 = vpop.f32.mrb[0].mxu0
  %v3642 = vadd.f32 %v3449, %v3641
  %v3643 = vpop.f32.mrb[0].mxu0
  %3644 = vmatprep.mubr.bf16.mxu0 0
  %3645 = vmatmul.mubr.bf16.gmra.mrb[0].mxu0 %v3499
  %v3646 = vpop.f32.mrb[0].mxu0
  %v3647 = vadd.f32 %v3454, %v3646
  %v3648 = vpop.f32.mrb[0].mxu0
  %v3649 = vpop.f32.mrb[0].mxu0
  %v3650 = vadd.f32 %v3457, %v3649
  %v3651 = vpop.f32.mrb[0].mxu0
  %3652 = vdwg.mxu0
  %v3653 = vld [vmem:[%s2841] sm:$0xf]
  %v3654 = vld [vmem:[%s2841 + $0x4] sm:$0xf]
  %v3655 = vld [vmem:[%s2841 + $0x8] sm:$0xf]
  %v3656 = vld [vmem:[%s2841 + $0xc] sm:$0xf]
  %v3657 = vld [vmem:[%s2841 + $0x14] sm:$0xf]
  %v3658 = vld [vmem:[%s2841 + $0x18] sm:$0xf]
  %v3659 = vld [vmem:[%s2841 + $0x1c] sm:$0xf]
  %v3660 = vld [vmem:[%s2841 + $0x20] sm:$0xf]
  %v3661 = vld [vmem:[%s2841 + $0x28] sm:$0xf]
  %v3662 = vld [vmem:[%s2841 + $0x2c] sm:$0xf]
  %v3663 = vld [vmem:[%s2841 + $0x30] sm:$0xf]
  %v3664 = vld [vmem:[%s2841 + $0x34] sm:$0xf]
  %v3665 = vld [vmem:[%s2841 + $0x3c] sm:$0xf]
  %v3666 = vld [vmem:[%s2841 + $0x40] sm:$0xf]
  %v3667 = vld [vmem:[%s2841 + $0x44] sm:$0xf]
  %v3668 = vld [vmem:[%s2841 + $0x48] sm:$0xf]
  %v3669 = vld [vmem:[%s508] sm:$0xf]
  %v3670 = vld [vmem:[%s508 + $0x4] sm:$0xf]
  %v3671 = vld [vmem:[%s508 + $0x8] sm:$0xf]
  %v3672 = vld [vmem:[%s508 + $0xc] sm:$0xf]
  %v3673 = vld [vmem:[%s508 + $0x10] sm:$0xf]
  %v3674 = vld [vmem:[%s508 + $0x14] sm:$0xf]
  %v3675 = vld [vmem:[%s508 + $0x18] sm:$0xf]
  %v3676 = vld [vmem:[%s508 + $0x1c] sm:$0xf]
  %v3677 = vld [vmem:[%s508 + $0x20] sm:$0xf]
  %v3678 = vld [vmem:[%s508 + $0x24] sm:$0xf]
  %v3679 = vld [vmem:[%s508 + $0x28] sm:$0xf]
  %v3680 = vld [vmem:[%s508 + $0x2c] sm:$0xf]
  %v3681 = vld [vmem:[%s508 + $0x30] sm:$0xf]
  %v3682 = vld [vmem:[%s508 + $0x34] sm:$0xf]
  %v3683 = vld [vmem:[%s508 + $0x38] sm:$0xf]
  %v3684 = vld [vmem:[%s508 + $0x3c] sm:$0xf]
  %v3701 = vunpack.c.l.b16 %v3653
  %v3702 = vunpack.c.l.b16 %v3654
  %v3703 = vunpack.c.l.b16 %v3655
  %v3704 = vunpack.c.l.b16 %v3656
  %v3705 = vunpack.c.l.b16 %v3657
  %v3706 = vunpack.c.l.b16 %v3658
  %v3707 = vunpack.c.l.b16 %v3659
  %v3708 = vunpack.c.l.b16 %v3660
  %v3709 = vunpack.c.l.b16 %v3661
  %v3710 = vunpack.c.l.b16 %v3662
  %v3711 = vunpack.c.l.b16 %v3663
  %v3712 = vunpack.c.l.b16 %v3664
  %v3713 = vunpack.c.l.b16 %v3665
  %v3714 = vunpack.c.l.b16 %v3666
  %v3715 = vunpack.c.l.b16 %v3667
  %v3716 = vunpack.c.l.b16 %v3668
  %v3717 = vpack.c.b16 %v3702, %v3701
  %v3718 = vpack.c.b16 %v3704, %v3703
  %v3719 = vpack.c.b16 %v3706, %v3705
  %v3720 = vpack.c.b16 %v3708, %v3707
  %v3721 = vpack.c.b16 %v3710, %v3709
  %v3722 = vpack.c.b16 %v3712, %v3711
  %v3723 = vpack.c.b16 %v3714, %v3713
  %v3724 = vpack.c.b16 %v3716, %v3715
  %v3749 = vunpack.c.l.b16 %v3669
  %v3750 = vunpack.c.l.b16 %v3670
  %v3751 = vunpack.c.l.b16 %v3671
  %v3752 = vunpack.c.l.b16 %v3672
  %v3753 = vunpack.c.l.b16 %v3673
  %v3754 = vunpack.c.l.b16 %v3674
  %v3755 = vunpack.c.l.b16 %v3675
  %v3756 = vunpack.c.l.b16 %v3676
  %v3757 = vunpack.c.l.b16 %v3677
  %v3758 = vunpack.c.l.b16 %v3678
  %v3759 = vunpack.c.l.b16 %v3679
  %v3760 = vunpack.c.l.b16 %v3680
  %v3761 = vunpack.c.l.b16 %v3681
  %v3762 = vunpack.c.l.b16 %v3682
  %v3763 = vunpack.c.l.b16 %v3683
  %v3764 = vunpack.c.l.b16 %v3684
  %v3765 = vpack.c.b16 %v3750, %v3749
  %v3766 = vpack.c.b16 %v3752, %v3751
  %v3767 = vpack.c.b16 %v3754, %v3753
  %v3768 = vpack.c.b16 %v3756, %v3755
  %v3769 = vpack.c.b16 %v3758, %v3757
  %v3770 = vpack.c.b16 %v3760, %v3759
  %v3771 = vpack.c.b16 %v3762, %v3761
  %v3772 = vpack.c.b16 %v3764, %v3763
  %3781 = vmatprep.subr.bf16.mxu0 0
  %3782 = vmatpush1.bf16.msra.mxu0 %v3765
  %3783 = vmatprep.subr.bf16.mxu0 0
  %3784 = vmatpush1.bf16.msra.mxu0 %v3766
  %3785 = vmatprep.subr.bf16.mxu0 0
  %3786 = vmatpush1.bf16.msra.mxu0 %v3767
  %3787 = vmatprep.subr.bf16.mxu0 0
  %3788 = vmatpush1.bf16.msra.mxu0 %v3768
  %3789 = vmatprep.subr.bf16.mxu0 0
  %3790 = vmatpush1.bf16.msra.mxu0 %v3769
  %3791 = vmatprep.subr.bf16.mxu0 0
  %3792 = vmatpush1.bf16.msra.mxu0 %v3770
  %3793 = vmatprep.subr.bf16.mxu0 0
  %3794 = vmatpush1.bf16.msra.mxu0 %v3771
  %3795 = vmatprep.subr.bf16.mxu0 0
  %3796 = vmatpush1.bf16.msra.mxu0 %v3772
  %3797 = vmatprep.subr.bf16.mxu0 0
  %3798 = vmatpush1.bf16.msra.mxu0 0
  %3799 = vmatprep.subr.bf16.mxu0 0
  %3800 = vmatpush1.bf16.msra.mxu0 0
  %3801 = vmatprep.subr.bf16.mxu0 0
  %3802 = vmatpush1.bf16.msra.mxu0 0
  %3803 = vmatprep.subr.bf16.mxu0 0
  %3804 = vmatpush1.bf16.msra.mxu0 0
  %3805 = vmatprep.subr.bf16.mxu0 0
  %3806 = vmatpush1.bf16.msra.mxu0 0
  %3807 = vmatprep.subr.bf16.mxu0 0
  %3808 = vmatpush1.bf16.msra.mxu0 0
  %3809 = vmatprep.subr.bf16.mxu0 0
  %3810 = vmatpush1.bf16.msra.mxu0 0
  %3811 = vmatprep.subr.bf16.mxu0 0
  %3812 = vmatpush1.bf16.msra.mxu0 0
  %3813 = vmatprep.mubr.bf16.mxu0 0
  %3814 = vmatmul.mubr.bf16.gmra.mrb[0].mxu0 %v3717
  %v3815 = vpop.f32.mrb[0].mxu0
  %v3816 = vadd.f32 0.0, %v3815
  %v3817 = vpop.f32.mrb[0].mxu0
  %v3818 = vpop.f32.mrb[0].mxu0
  %v3819 = vadd.f32 0.0, %v3818
  %v3820 = vpop.f32.mrb[0].mxu0
  %3821 = vmatprep.mubr.bf16.mxu0 0
  %3822 = vmatmul.mubr.bf16.gmra.mrb[0].mxu0 %v3718
  %v3823 = vpop.f32.mrb[0].mxu0
  %v3824 = vadd.f32 0.0, %v3823
  %v3825 = vpop.f32.mrb[0].mxu0
  %v3826 = vpop.f32.mrb[0].mxu0
  %v3827 = vadd.f32 0.0, %v3826
  %v3828 = vpop.f32.mrb[0].mxu0
  %3829 = vmatprep.mubr.bf16.mxu0 0
  %3830 = vmatmul.mubr.bf16.gmra.mrb[0].mxu0 %v3719
  %v3831 = vpop.f32.mrb[0].mxu0
  %v3832 = vadd.f32 0.0, %v3831
  %v3833 = vpop.f32.mrb[0].mxu0
  %v3834 = vpop.f32.mrb[0].mxu0
  %v3835 = vadd.f32 0.0, %v3834
  %v3836 = vpop.f32.mrb[0].mxu0
  %3837 = vmatprep.mubr.bf16.mxu0 0
  %3838 = vmatmul.mubr.bf16.gmra.mrb[0].mxu0 %v3720
  %v3839 = vpop.f32.mrb[0].mxu0
  %v3840 = vadd.f32 0.0, %v3839
  %v3841 = vpop.f32.mrb[0].mxu0
  %v3842 = vpop.f32.mrb[0].mxu0
  %v3843 = vadd.f32 0.0, %v3842
  %v3844 = vpop.f32.mrb[0].mxu0
  %3845 = vmatprep.mubr.bf16.mxu0 0
  %3846 = vmatmul.mubr.bf16.gmra.mrb[0].mxu0 %v3721
  %v3847 = vpop.f32.mrb[0].mxu0
  %v3848 = vadd.f32 0.0, %v3847
  %v3849 = vpop.f32.mrb[0].mxu0
  %v3850 = vpop.f32.mrb[0].mxu0
  %v3851 = vadd.f32 0.0, %v3850
  %v3852 = vpop.f32.mrb[0].mxu0
  %3853 = vmatprep.mubr.bf16.mxu0 0
  %3854 = vmatmul.mubr.bf16.gmra.mrb[0].mxu0 %v3722
  %v3855 = vpop.f32.mrb[0].mxu0
  %v3856 = vadd.f32 0.0, %v3855
  %v3857 = vpop.f32.mrb[0].mxu0
  %v3858 = vpop.f32.mrb[0].mxu0
  %v3859 = vadd.f32 0.0, %v3858
  %v3860 = vpop.f32.mrb[0].mxu0
  %3861 = vmatprep.mubr.bf16.mxu0 0
  %3862 = vmatmul.mubr.bf16.gmra.mrb[0].mxu0 %v3723
  %v3863 = vpop.f32.mrb[0].mxu0
  %v3864 = vadd.f32 0.0, %v3863
  %v3865 = vpop.f32.mrb[0].mxu0
  %v3866 = vpop.f32.mrb[0].mxu0
  %v3867 = vadd.f32 0.0, %v3866
  %v3868 = vpop.f32.mrb[0].mxu0
  %3869 = vmatprep.mubr.bf16.mxu0 0
  %3870 = vmatmul.mubr.bf16.gmra.mrb[0].mxu0 %v3724
  %v3871 = vpop.f32.mrb[0].mxu0
  %v3872 = vadd.f32 0.0, %v3871
  %v3873 = vpop.f32.mrb[0].mxu0
  %v3874 = vpop.f32.mrb[0].mxu0
  %v3875 = vadd.f32 0.0, %v3874
  %v3876 = vpop.f32.mrb[0].mxu0
  %3877 = vdwg.mxu0
  %v3878 = vadd.f32 %v3591, %v3816
  %v3879 = vadd.f32 %v3594, %v3819
  %v3880 = vadd.f32 %v3599, %v3824
  %v3881 = vadd.f32 %v3602, %v3827
  %v3882 = vadd.f32 %v3607, %v3832
  %v3883 = vadd.f32 %v3610, %v3835
  %v3884 = vadd.f32 %v3615, %v3840
  %v3885 = vadd.f32 %v3618, %v3843
  %v3886 = vadd.f32 %v3623, %v3848
  %v3887 = vadd.f32 %v3626, %v3851
  %v3888 = vadd.f32 %v3631, %v3856
  %v3889 = vadd.f32 %v3634, %v3859
  %v3890 = vadd.f32 %v3639, %v3864
  %v3891 = vadd.f32 %v3642, %v3867
  %v3892 = vadd.f32 %v3647, %v3872
  %v3893 = vadd.f32 %v3650, %v3875
  %s3894 = scalar_lea.vmem %s0, 24
  %v3895 = vld [vmem:[%s3894] sm:$0xf]
  %v3896 = vld [vmem:[%s3894 + $0x4] sm:$0xf]
  %v3897 = vld [vmem:[%s3894 + $0x8] sm:$0xf]
  %v3898 = vld [vmem:[%s3894 + $0xc] sm:$0xf]
  %v3899 = vld [vmem:[%s3894 + $0x14] sm:$0xf]
  %v3900 = vld [vmem:[%s3894 + $0x18] sm:$0xf]
  %v3901 = vld [vmem:[%s3894 + $0x1c] sm:$0xf]
  %v3902 = vld [vmem:[%s3894 + $0x20] sm:$0xf]
  %v3903 = vld [vmem:[%s3894 + $0x28] sm:$0xf]
  %v3904 = vld [vmem:[%s3894 + $0x2c] sm:$0xf]
  %v3905 = vld [vmem:[%s3894 + $0x30] sm:$0xf]
  %v3906 = vld [vmem:[%s3894 + $0x34] sm:$0xf]
  %v3907 = vld [vmem:[%s3894 + $0x3c] sm:$0xf]
  %v3908 = vld [vmem:[%s3894 + $0x40] sm:$0xf]
  %v3909 = vld [vmem:[%s3894 + $0x44] sm:$0xf]
  %v3910 = vld [vmem:[%s3894 + $0x48] sm:$0xf]
  %v3911 = vld [vmem:[%s751] sm:$0xf]
  %v3912 = vld [vmem:[%s751 + $0x4] sm:$0xf]
  %v3913 = vld [vmem:[%s751 + $0x8] sm:$0xf]
  %v3914 = vld [vmem:[%s751 + $0xc] sm:$0xf]
  %v3915 = vld [vmem:[%s751 + $0x10] sm:$0xf]
  %v3916 = vld [vmem:[%s751 + $0x14] sm:$0xf]
  %v3917 = vld [vmem:[%s751 + $0x18] sm:$0xf]
  %v3918 = vld [vmem:[%s751 + $0x1c] sm:$0xf]
  %v3919 = vld [vmem:[%s751 + $0x20] sm:$0xf]
  %v3920 = vld [vmem:[%s751 + $0x24] sm:$0xf]
  %v3921 = vld [vmem:[%s751 + $0x28] sm:$0xf]
  %v3922 = vld [vmem:[%s751 + $0x2c] sm:$0xf]
  %v3923 = vld [vmem:[%s751 + $0x30] sm:$0xf]
  %v3924 = vld [vmem:[%s751 + $0x34] sm:$0xf]
  %v3925 = vld [vmem:[%s751 + $0x38] sm:$0xf]
  %v3926 = vld [vmem:[%s751 + $0x3c] sm:$0xf]
  %v3943 = vunpack.c.l.b16 %v3895
  %v3944 = vunpack.c.l.b16 %v3896
  %v3945 = vunpack.c.l.b16 %v3897
  %v3946 = vunpack.c.l.b16 %v3898
  %v3947 = vunpack.c.l.b16 %v3899
  %v3948 = vunpack.c.l.b16 %v3900
  %v3949 = vunpack.c.l.b16 %v3901
  %v3950 = vunpack.c.l.b16 %v3902
  %v3951 = vunpack.c.l.b16 %v3903
  %v3952 = vunpack.c.l.b16 %v3904
  %v3953 = vunpack.c.l.b16 %v3905
  %v3954 = vunpack.c.l.b16 %v3906
  %v3955 = vunpack.c.l.b16 %v3907
  %v3956 = vunpack.c.l.b16 %v3908
  %v3957 = vunpack.c.l.b16 %v3909
  %v3958 = vunpack.c.l.b16 %v3910
  %v3959 = vpack.c.b16 %v3944, %v3943
  %v3960 = vpack.c.b16 %v3946, %v3945
  %v3961 = vpack.c.b16 %v3948, %v3947
  %v3962 = vpack.c.b16 %v3950, %v3949
  %v3963 = vpack.c.b16 %v3952, %v3951
  %v3964 = vpack.c.b16 %v3954, %v3953
  %v3965 = vpack.c.b16 %v3956, %v3955
  %v3966 = vpack.c.b16 %v3958, %v3957
  %v3991 = vunpack.c.l.b16 %v3911
  %v3992 = vunpack.c.l.b16 %v3912
  %v3993 = vunpack.c.l.b16 %v3913
  %v3994 = vunpack.c.l.b16 %v3914
  %v3995 = vunpack.c.l.b16 %v3915
  %v3996 = vunpack.c.l.b16 %v3916
  %v3997 = vunpack.c.l.b16 %v3917
  %v3998 = vunpack.c.l.b16 %v3918
  %v3999 = vunpack.c.l.b16 %v3919
  %v4000 = vunpack.c.l.b16 %v3920
  %v4001 = vunpack.c.l.b16 %v3921
  %v4002 = vunpack.c.l.b16 %v3922
  %v4003 = vunpack.c.l.b16 %v3923
  %v4004 = vunpack.c.l.b16 %v3924
  %v4005 = vunpack.c.l.b16 %v3925
  %v4006 = vunpack.c.l.b16 %v3926
  %v4007 = vpack.c.b16 %v3992, %v3991
  %v4008 = vpack.c.b16 %v3994, %v3993
  %v4009 = vpack.c.b16 %v3996, %v3995
  %v4010 = vpack.c.b16 %v3998, %v3997
  %v4011 = vpack.c.b16 %v4000, %v3999
  %v4012 = vpack.c.b16 %v4002, %v4001
  %v4013 = vpack.c.b16 %v4004, %v4003
  %v4014 = vpack.c.b16 %v4006, %v4005
  %4023 = vmatprep.subr.bf16.mxu0 0
  %4024 = vmatpush1.bf16.msra.mxu0 %v4007
  %4025 = vmatprep.subr.bf16.mxu0 0
  %4026 = vmatpush1.bf16.msra.mxu0 %v4008
  %4027 = vmatprep.subr.bf16.mxu0 0
  %4028 = vmatpush1.bf16.msra.mxu0 %v4009
  %4029 = vmatprep.subr.bf16.mxu0 0
  %4030 = vmatpush1.bf16.msra.mxu0 %v4010
  %4031 = vmatprep.subr.bf16.mxu0 0
  %4032 = vmatpush1.bf16.msra.mxu0 %v4011
  %4033 = vmatprep.subr.bf16.mxu0 0
  %4034 = vmatpush1.bf16.msra.mxu0 %v4012
  %4035 = vmatprep.subr.bf16.mxu0 0
  %4036 = vmatpush1.bf16.msra.mxu0 %v4013
  %4037 = vmatprep.subr.bf16.mxu0 0
  %4038 = vmatpush1.bf16.msra.mxu0 %v4014
  %4039 = vmatprep.subr.bf16.mxu0 0
  %4040 = vmatpush1.bf16.msra.mxu0 0
  %4041 = vmatprep.subr.bf16.mxu0 0
  %4042 = vmatpush1.bf16.msra.mxu0 0
  %4043 = vmatprep.subr.bf16.mxu0 0
  %4044 = vmatpush1.bf16.msra.mxu0 0
  %4045 = vmatprep.subr.bf16.mxu0 0
  %4046 = vmatpush1.bf16.msra.mxu0 0
  %4047 = vmatprep.subr.bf16.mxu0 0
  %4048 = vmatpush1.bf16.msra.mxu0 0
  %4049 = vmatprep.subr.bf16.mxu0 0
  %4050 = vmatpush1.bf16.msra.mxu0 0
  %4051 = vmatprep.subr.bf16.mxu0 0
  %4052 = vmatpush1.bf16.msra.mxu0 0
  %4053 = vmatprep.subr.bf16.mxu0 0
  %4054 = vmatpush1.bf16.msra.mxu0 0
  %4055 = vmatprep.mubr.bf16.mxu0 0
  %4056 = vmatmul.mubr.bf16.gmra.mrb[0].mxu0 %v3959
  %v4057 = vpop.f32.mrb[0].mxu0
  %v4058 = vadd.f32 0.0, %v4057
  %v4059 = vpop.f32.mrb[0].mxu0
  %v4060 = vpop.f32.mrb[0].mxu0
  %v4061 = vadd.f32 0.0, %v4060
  %v4062 = vpop.f32.mrb[0].mxu0
  %4063 = vmatprep.mubr.bf16.mxu0 0
  %4064 = vmatmul.mubr.bf16.gmra.mrb[0].mxu0 %v3960
  %v4065 = vpop.f32.mrb[0].mxu0
  %v4066 = vadd.f32 0.0, %v4065
  %v4067 = vpop.f32.mrb[0].mxu0
  %v4068 = vpop.f32.mrb[0].mxu0
  %v4069 = vadd.f32 0.0, %v4068
  %v4070 = vpop.f32.mrb[0].mxu0
  %4071 = vmatprep.mubr.bf16.mxu0 0
  %4072 = vmatmul.mubr.bf16.gmra.mrb[0].mxu0 %v3961
  %v4073 = vpop.f32.mrb[0].mxu0
  %v4074 = vadd.f32 0.0, %v4073
  %v4075 = vpop.f32.mrb[0].mxu0
  %v4076 = vpop.f32.mrb[0].mxu0
  %v4077 = vadd.f32 0.0, %v4076
  %v4078 = vpop.f32.mrb[0].mxu0
  %4079 = vmatprep.mubr.bf16.mxu0 0
  %4080 = vmatmul.mubr.bf16.gmra.mrb[0].mxu0 %v3962
  %v4081 = vpop.f32.mrb[0].mxu0
  %v4082 = vadd.f32 0.0, %v4081
  %v4083 = vpop.f32.mrb[0].mxu0
  %v4084 = vpop.f32.mrb[0].mxu0
  %v4085 = vadd.f32 0.0, %v4084
  %v4086 = vpop.f32.mrb[0].mxu0
  %4087 = vmatprep.mubr.bf16.mxu0 0
  %4088 = vmatmul.mubr.bf16.gmra.mrb[0].mxu0 %v3963
  %v4089 = vpop.f32.mrb[0].mxu0
  %v4090 = vadd.f32 0.0, %v4089
  %v4091 = vpop.f32.mrb[0].mxu0
  %v4092 = vpop.f32.mrb[0].mxu0
  %v4093 = vadd.f32 0.0, %v4092
  %v4094 = vpop.f32.mrb[0].mxu0
  %4095 = vmatprep.mubr.bf16.mxu0 0
  %4096 = vmatmul.mubr.bf16.gmra.mrb[0].mxu0 %v3964
  %v4097 = vpop.f32.mrb[0].mxu0
  %v4098 = vadd.f32 0.0, %v4097
  %v4099 = vpop.f32.mrb[0].mxu0
  %v4100 = vpop.f32.mrb[0].mxu0
  %v4101 = vadd.f32 0.0, %v4100
  %v4102 = vpop.f32.mrb[0].mxu0
  %4103 = vmatprep.mubr.bf16.mxu0 0
  %4104 = vmatmul.mubr.bf16.gmra.mrb[0].mxu0 %v3965
  %v4105 = vpop.f32.mrb[0].mxu0
  %v4106 = vadd.f32 0.0, %v4105
  %v4107 = vpop.f32.mrb[0].mxu0
  %v4108 = vpop.f32.mrb[0].mxu0
  %v4109 = vadd.f32 0.0, %v4108
  %v4110 = vpop.f32.mrb[0].mxu0
  %4111 = vmatprep.mubr.bf16.mxu0 0
  %4112 = vmatmul.mubr.bf16.gmra.mrb[0].mxu0 %v3966
  %v4113 = vpop.f32.mrb[0].mxu0
  %v4114 = vadd.f32 0.0, %v4113
  %v4115 = vpop.f32.mrb[0].mxu0
  %v4116 = vpop.f32.mrb[0].mxu0
  %v4117 = vadd.f32 0.0, %v4116
  %v4118 = vpop.f32.mrb[0].mxu0
  %4119 = vdwg.mxu0
  %v4120 = vadd.f32 %v3878, %v4058
  %v4121 = vadd.f32 %v3879, %v4061
  %v4122 = vadd.f32 %v3880, %v4066
  %v4123 = vadd.f32 %v3881, %v4069
  %v4124 = vadd.f32 %v3882, %v4074
  %v4125 = vadd.f32 %v3883, %v4077
  %v4126 = vadd.f32 %v3884, %v4082
  %v4127 = vadd.f32 %v3885, %v4085
  %v4128 = vadd.f32 %v3886, %v4090
  %v4129 = vadd.f32 %v3887, %v4093
  %v4130 = vadd.f32 %v3888, %v4098
  %v4131 = vadd.f32 %v3889, %v4101
  %v4132 = vadd.f32 %v3890, %v4106
  %v4133 = vadd.f32 %v3891, %v4109
  %v4134 = vadd.f32 %v3892, %v4114
  %v4135 = vadd.f32 %v3893, %v4117
  %v4136 = vld [vmem:[%s2] sm:$0x1]
  %v4138 = vlaneseq
  %v4139 = vshrl.u32 %v4138, 7
  %v4140 = vsub.s32 0, %v4139
  %v4141 = vrot.slane %v4136, %v4140
  %v4143 = vadd.f32 %v4120, %v4141
  %v4144 = vadd.f32 %v4121, %v4141
  %v4145 = vadd.f32 %v4122, %v4141
  %v4146 = vadd.f32 %v4123, %v4141
  %v4147 = vadd.f32 %v4124, %v4141
  %v4148 = vadd.f32 %v4125, %v4141
  %v4149 = vadd.f32 %v4126, %v4141
  %v4150 = vadd.f32 %v4127, %v4141
  %v4151 = vadd.f32 %v4128, %v4141
  %v4152 = vadd.f32 %v4129, %v4141
  %v4153 = vadd.f32 %v4130, %v4141
  %v4154 = vadd.f32 %v4131, %v4141
  %v4155 = vadd.f32 %v4132, %v4141
  %v4156 = vadd.f32 %v4133, %v4141
  %v4157 = vadd.f32 %v4134, %v4141
  %v4158 = vadd.f32 %v4135, %v4141
  %v4159 = vmax.f32 %v4143, 0.0
  %v4160 = vmax.f32 %v4144, 0.0
  %v4161 = vmax.f32 %v4145, 0.0
  %v4162 = vmax.f32 %v4146, 0.0
  %v4163 = vmax.f32 %v4147, 0.0
  %v4164 = vmax.f32 %v4148, 0.0
  %v4165 = vmax.f32 %v4149, 0.0
  %v4166 = vmax.f32 %v4150, 0.0
  %v4167 = vmax.f32 %v4151, 0.0
  %v4168 = vmax.f32 %v4152, 0.0
  %v4169 = vmax.f32 %v4153, 0.0
  %v4170 = vmax.f32 %v4154, 0.0
  %v4171 = vmax.f32 %v4155, 0.0
  %v4172 = vmax.f32 %v4156, 0.0
  %v4173 = vmax.f32 %v4157, 0.0
  %v4174 = vmax.f32 %v4158, 0.0
  %v4175 = vpack.c.bf16 %v4160, %v4159
  %v4176 = vpack.c.bf16 %v4162, %v4161
  %v4177 = vpack.c.bf16 %v4164, %v4163
  %v4178 = vpack.c.bf16 %v4166, %v4165
  %v4179 = vpack.c.bf16 %v4168, %v4167
  %v4180 = vpack.c.bf16 %v4170, %v4169
  %v4181 = vpack.c.bf16 %v4172, %v4171
  %v4182 = vpack.c.bf16 %v4174, %v4173
  %v4191 = vunpack.c.l.b16 %v4175
  %v4192 = vunpack.c.h.b16 %v4175
  %v4193 = vunpack.c.l.b16 %v4176
  %v4194 = vunpack.c.h.b16 %v4176
  %v4195 = vunpack.c.l.b16 %v4177
  %v4196 = vunpack.c.h.b16 %v4177
  %v4197 = vunpack.c.l.b16 %v4178
  %v4198 = vunpack.c.h.b16 %v4178
  %v4199 = vunpack.c.l.b16 %v4179
  %v4200 = vunpack.c.h.b16 %v4179
  %v4201 = vunpack.c.l.b16 %v4180
  %v4202 = vunpack.c.h.b16 %v4180
  %v4203 = vunpack.c.l.b16 %v4181
  %v4204 = vunpack.c.h.b16 %v4181
  %v4205 = vunpack.c.l.b16 %v4182
  %v4206 = vunpack.c.h.b16 %v4182
  %v4207 = vpack.c.b16 %v4191, %v4191
  %v4208 = vpack.c.b16 %v4192, %v4192
  %v4209 = vpack.c.b16 %v4193, %v4193
  %v4210 = vpack.c.b16 %v4194, %v4194
  %v4211 = vpack.c.b16 %v4195, %v4195
  %v4212 = vpack.c.b16 %v4196, %v4196
  %v4213 = vpack.c.b16 %v4197, %v4197
  %v4214 = vpack.c.b16 %v4198, %v4198
  %v4215 = vpack.c.b16 %v4199, %v4199
  %v4216 = vpack.c.b16 %v4200, %v4200
  %v4217 = vpack.c.b16 %v4201, %v4201
  %v4218 = vpack.c.b16 %v4202, %v4202
  %v4219 = vpack.c.b16 %v4203, %v4203
  %v4220 = vpack.c.b16 %v4204, %v4204
  %v4221 = vpack.c.b16 %v4205, %v4205
  %v4222 = vpack.c.b16 %v4206, %v4206
  %4239 = vst [vmem:[%s3186 + $0x4] sm:$0xf] %v4207
  %4240 = vst [vmem:[%s3186 + $0xc] sm:$0xf] %v4208
  %4241 = vst [vmem:[%s3186 + $0x14] sm:$0xf] %v4209
  %4242 = vst [vmem:[%s3186 + $0x1c] sm:$0xf] %v4210
  %4243 = vst [vmem:[%s3186 + $0x24] sm:$0xf] %v4211
  %4244 = vst [vmem:[%s3186 + $0x2c] sm:$0xf] %v4212
  %4245 = vst [vmem:[%s3186 + $0x34] sm:$0xf] %v4213
  %4246 = vst [vmem:[%s3186 + $0x3c] sm:$0xf] %v4214
  %4247 = vst [vmem:[%s3186 + $0x44] sm:$0xf] %v4215
  %4248 = vst [vmem:[%s3186 + $0x4c] sm:$0xf] %v4216
  %4249 = vst [vmem:[%s3186 + $0x54] sm:$0xf] %v4217
  %4250 = vst [vmem:[%s3186 + $0x5c] sm:$0xf] %v4218
  %4251 = vst [vmem:[%s3186 + $0x64] sm:$0xf] %v4219
  %4252 = vst [vmem:[%s3186 + $0x6c] sm:$0xf] %v4220
  %4253 = vst [vmem:[%s3186 + $0x74] sm:$0xf] %v4221
  %4254 = vst [vmem:[%s3186 + $0x7c] sm:$0xf] %v4222
  %v4255 = vld [vmem:[#allocation2] sm:$0xff]
  %v4256 = vld [vmem:[#allocation2 + $0x8] sm:$0xff]
  %v4257 = vld [vmem:[#allocation2 + $0x10] sm:$0xff]
  %v4258 = vld [vmem:[#allocation2 + $0x20] sm:$0xff]
  %v4259 = vld [vmem:[#allocation2 + $0x28] sm:$0xff]
  %v4260 = vld [vmem:[#allocation2 + $0x30] sm:$0xff]
  %v4261 = vld [vmem:[#allocation2 + $0x40] sm:$0xff]
  %v4262 = vld [vmem:[#allocation2 + $0x48] sm:$0xff]
  %v4263 = vld [vmem:[#allocation2 + $0x50] sm:$0xff]
  %v4264 = vld [vmem:[%s3] sm:$0xf]
  %v4265 = vld [vmem:[%s3 + $0x4] sm:$0xf]
  %v4266 = vld [vmem:[%s3 + $0x8] sm:$0xf]
  %v4267 = vld [vmem:[%s3 + $0xc] sm:$0xf]
  %v4268 = vld [vmem:[%s3 + $0x10] sm:$0xf]
  %v4269 = vld [vmem:[%s3 + $0x14] sm:$0xf]
  %v4270 = vld [vmem:[%s3 + $0x18] sm:$0xf]
  %v4271 = vld [vmem:[%s3 + $0x1c] sm:$0xf]
  %v4272 = vld [vmem:[%s3 + $0x20] sm:$0xf]
  %v4273 = vld [vmem:[%s3 + $0x24] sm:$0xf]
  %v4274 = vld [vmem:[%s3 + $0x28] sm:$0xf]
  %v4275 = vld [vmem:[%s3 + $0x2c] sm:$0xf]
  %v4276 = vld [vmem:[%s3 + $0x30] sm:$0xf]
  %v4277 = vld [vmem:[%s3 + $0x34] sm:$0xf]
  %v4278 = vld [vmem:[%s3 + $0x38] sm:$0xf]
  %v4279 = vld [vmem:[%s3 + $0x3c] sm:$0xf]
  %v4280 = vld [vmem:[%s3 + $0x40] sm:$0xf]
  %v4281 = vld [vmem:[%s3 + $0x44] sm:$0xf]
  %v4282 = vld [vmem:[%s3 + $0x48] sm:$0xf]
  %v4283 = vld [vmem:[%s3 + $0x4c] sm:$0xf]
  %v4284 = vld [vmem:[%s3 + $0x50] sm:$0xf]
  %v4285 = vld [vmem:[%s3 + $0x54] sm:$0xf]
  %v4286 = vld [vmem:[%s3 + $0x58] sm:$0xf]
  %v4287 = vld [vmem:[%s3 + $0x5c] sm:$0xf]
  %v4288 = vld [vmem:[%s3 + $0x60] sm:$0xf]
  %v4289 = vld [vmem:[%s3 + $0x64] sm:$0xf]
  %v4290 = vld [vmem:[%s3 + $0x68] sm:$0xf]
  %v4291 = vld [vmem:[%s3 + $0x6c] sm:$0xf]
  %v4292 = vld [vmem:[%s3 + $0x70] sm:$0xf]
  %v4293 = vld [vmem:[%s3 + $0x74] sm:$0xf]
  %v4294 = vld [vmem:[%s3 + $0x78] sm:$0xf]
  %v4295 = vld [vmem:[%s3 + $0x7c] sm:$0xf]
  %s4296 = scalar_lea.vmem [#allocation2], 8
  %v4297 = vld [vmem:[%s4296] sm:$0xff]
  %v4298 = vld [vmem:[%s4296 + $0x8] sm:$0xff]
  %v4299 = vld [vmem:[%s4296 + $0x10] sm:$0xff]
  %v4300 = vld [vmem:[%s4296 + $0x20] sm:$0xff]
  %v4301 = vld [vmem:[%s4296 + $0x28] sm:$0xff]
  %v4302 = vld [vmem:[%s4296 + $0x30] sm:$0xff]
  %v4303 = vld [vmem:[%s4296 + $0x40] sm:$0xff]
  %v4304 = vld [vmem:[%s4296 + $0x48] sm:$0xff]
  %v4305 = vld [vmem:[%s4296 + $0x50] sm:$0xff]
  %s4306 = scalar_lea.vmem %s3, 128
  %v4307 = vld [vmem:[%s4306] sm:$0xf]
  %v4308 = vld [vmem:[%s4306 + $0x4] sm:$0xf]
  %v4309 = vld [vmem:[%s4306 + $0x8] sm:$0xf]
  %v4310 = vld [vmem:[%s4306 + $0xc] sm:$0xf]
  %v4311 = vld [vmem:[%s4306 + $0x10] sm:$0xf]
  %v4312 = vld [vmem:[%s4306 + $0x14] sm:$0xf]
  %v4313 = vld [vmem:[%s4306 + $0x18] sm:$0xf]
  %v4314 = vld [vmem:[%s4306 + $0x1c] sm:$0xf]
  %v4315 = vld [vmem:[%s4306 + $0x20] sm:$0xf]
  %v4316 = vld [vmem:[%s4306 + $0x24] sm:$0xf]
  %v4317 = vld [vmem:[%s4306 + $0x28] sm:$0xf]
  %v4318 = vld [vmem:[%s4306 + $0x2c] sm:$0xf]
  %v4319 = vld [vmem:[%s4306 + $0x30] sm:$0xf]
  %v4320 = vld [vmem:[%s4306 + $0x34] sm:$0xf]
  %v4321 = vld [vmem:[%s4306 + $0x38] sm:$0xf]
  %v4322 = vld [vmem:[%s4306 + $0x3c] sm:$0xf]
  %v4323 = vld [vmem:[%s4306 + $0x40] sm:$0xf]
  %v4324 = vld [vmem:[%s4306 + $0x44] sm:$0xf]
  %v4325 = vld [vmem:[%s4306 + $0x48] sm:$0xf]
  %v4326 = vld [vmem:[%s4306 + $0x4c] sm:$0xf]
  %v4327 = vld [vmem:[%s4306 + $0x50] sm:$0xf]
  %v4328 = vld [vmem:[%s4306 + $0x54] sm:$0xf]
  %v4329 = vld [vmem:[%s4306 + $0x58] sm:$0xf]
  %v4330 = vld [vmem:[%s4306 + $0x5c] sm:$0xf]
  %v4331 = vld [vmem:[%s4306 + $0x60] sm:$0xf]
  %v4332 = vld [vmem:[%s4306 + $0x64] sm:$0xf]
  %v4333 = vld [vmem:[%s4306 + $0x68] sm:$0xf]
  %v4334 = vld [vmem:[%s4306 + $0x6c] sm:$0xf]
  %v4335 = vld [vmem:[%s4306 + $0x70] sm:$0xf]
  %v4336 = vld [vmem:[%s4306 + $0x74] sm:$0xf]
  %v4337 = vld [vmem:[%s4306 + $0x78] sm:$0xf]
  %v4338 = vld [vmem:[%s4306 + $0x7c] sm:$0xf]
  %v4348 = vunpack.c.l.b16 %v4297
  %v4349 = vunpack.c.h.b16 %v4297
  %v4350 = vunpack.c.l.b16 %v4298
  %v4351 = vunpack.c.h.b16 %v4298
  %v4352 = vunpack.c.l.b16 %v4299
  %v4353 = vunpack.c.h.b16 %v4299
  %v4354 = vunpack.c.l.b16 %v4300
  %v4355 = vunpack.c.h.b16 %v4300
  %v4356 = vunpack.c.l.b16 %v4301
  %v4357 = vunpack.c.h.b16 %v4301
  %v4358 = vunpack.c.l.b16 %v4302
  %v4359 = vunpack.c.h.b16 %v4302
  %v4360 = vunpack.c.l.b16 %v4303
  %v4361 = vunpack.c.h.b16 %v4303
  %v4362 = vunpack.c.l.b16 %v4304
  %v4363 = vunpack.c.h.b16 %v4304
  %v4364 = vunpack.c.l.b16 %v4305
  %v4365 = vunpack.c.h.b16 %v4305
  %v4366 = vpack.c.b16 %v4350, %v4348
  %v4367 = vpack.c.b16 %v4351, %v4349
  %v4368 = vpack.c.b16 %v4354, %v4352
  %v4369 = vpack.c.b16 %v4355, %v4353
  %v4370 = vpack.c.b16 %v4358, %v4356
  %v4371 = vpack.c.b16 %v4359, %v4357
  %v4372 = vpack.c.b16 %v4362, %v4360
  %v4373 = vpack.c.b16 %v4363, %v4361
  %v4374 = vpack.c.b16 %v4364, %v4364
  %v4375 = vpack.c.b16 %v4365, %v4365
  %v4418 = vunpack.c.l.b16 %v4307
  %v4419 = vunpack.c.l.b16 %v4308
  %v4420 = vunpack.c.l.b16 %v4309
  %v4421 = vunpack.c.l.b16 %v4310
  %v4422 = vunpack.c.l.b16 %v4311
  %v4423 = vunpack.c.l.b16 %v4312
  %v4424 = vunpack.c.l.b16 %v4313
  %v4425 = vunpack.c.l.b16 %v4314
  %v4426 = vunpack.c.l.b16 %v4315
  %v4427 = vunpack.c.l.b16 %v4316
  %v4428 = vunpack.c.l.b16 %v4317
  %v4429 = vunpack.c.l.b16 %v4318
  %v4430 = vunpack.c.l.b16 %v4319
  %v4431 = vunpack.c.l.b16 %v4320
  %v4432 = vunpack.c.l.b16 %v4321
  %v4433 = vunpack.c.l.b16 %v4322
  %v4434 = vunpack.c.l.b16 %v4323
  %v4435 = vunpack.c.l.b16 %v4324
  %v4436 = vunpack.c.l.b16 %v4325
  %v4437 = vunpack.c.l.b16 %v4326
  %v4438 = vunpack.c.l.b16 %v4327
  %v4439 = vunpack.c.l.b16 %v4328
  %v4440 = vunpack.c.l.b16 %v4329
  %v4441 = vunpack.c.l.b16 %v4330
  %v4442 = vunpack.c.l.b16 %v4331
  %v4443 = vunpack.c.l.b16 %v4332
  %v4444 = vunpack.c.l.b16 %v4333
  %v4445 = vunpack.c.l.b16 %v4334
  %v4446 = vunpack.c.l.b16 %v4335
  %v4447 = vunpack.c.l.b16 %v4336
  %v4448 = vunpack.c.l.b16 %v4337
  %v4449 = vunpack.c.l.b16 %v4338
  %v4450 = vpack.c.b16 %v4419, %v4418
  %v4451 = vpack.c.b16 %v4421, %v4420
  %v4452 = vpack.c.b16 %v4423, %v4422
  %v4453 = vpack.c.b16 %v4425, %v4424
  %v4454 = vpack.c.b16 %v4427, %v4426
  %v4455 = vpack.c.b16 %v4429, %v4428
  %v4456 = vpack.c.b16 %v4431, %v4430
  %v4457 = vpack.c.b16 %v4433, %v4432
  %v4458 = vpack.c.b16 %v4435, %v4434
  %v4459 = vpack.c.b16 %v4437, %v4436
  %v4460 = vpack.c.b16 %v4439, %v4438
  %v4461 = vpack.c.b16 %v4441, %v4440
  %v4462 = vpack.c.b16 %v4443, %v4442
  %v4463 = vpack.c.b16 %v4445, %v4444
  %v4464 = vpack.c.b16 %v4447, %v4446
  %v4465 = vpack.c.b16 %v4449, %v4448
  %4482 = vmatprep.subr.bf16.mxu0 0
  %4483 = vmatpush1.bf16.msra.mxu0 %v4450
  %4484 = vmatprep.subr.bf16.mxu0 0
  %4485 = vmatpush1.bf16.msra.mxu0 %v4451
  %4486 = vmatprep.subr.bf16.mxu0 0
  %4487 = vmatpush1.bf16.msra.mxu0 %v4452
  %4488 = vmatprep.subr.bf16.mxu0 0
  %4489 = vmatpush1.bf16.msra.mxu0 %v4453
  %4490 = vmatprep.subr.bf16.mxu0 0
  %4491 = vmatpush1.bf16.msra.mxu0 %v4454
  %4492 = vmatprep.subr.bf16.mxu0 0
  %4493 = vmatpush1.bf16.msra.mxu0 %v4455
  %4494 = vmatprep.subr.bf16.mxu0 0
  %4495 = vmatpush1.bf16.msra.mxu0 %v4456
  %4496 = vmatprep.subr.bf16.mxu0 0
  %4497 = vmatpush1.bf16.msra.mxu0 %v4457
  %4498 = vmatprep.subr.bf16.mxu0 0
  %4499 = vmatpush1.bf16.msra.mxu0 %v4458
  %4500 = vmatprep.subr.bf16.mxu0 0
  %4501 = vmatpush1.bf16.msra.mxu0 %v4459
  %4502 = vmatprep.subr.bf16.mxu0 0
  %4503 = vmatpush1.bf16.msra.mxu0 %v4460
  %4504 = vmatprep.subr.bf16.mxu0 0
  %4505 = vmatpush1.bf16.msra.mxu0 %v4461
  %4506 = vmatprep.subr.bf16.mxu0 0
  %4507 = vmatpush1.bf16.msra.mxu0 %v4462
  %4508 = vmatprep.subr.bf16.mxu0 0
  %4509 = vmatpush1.bf16.msra.mxu0 %v4463
  %4510 = vmatprep.subr.bf16.mxu0 0
  %4511 = vmatpush1.bf16.msra.mxu0 %v4464
  %4512 = vmatprep.subr.bf16.mxu0 0
  %4513 = vmatpush1.bf16.msra.mxu0 %v4465
  %4514 = vmatprep.mubr.bf16.mxu0 %v4367
  %4515 = vmatmul.mubr.bf16.gmra.mrb[0].mxu0 %v4366
  %v4516 = vpop.f32.mrb[0].mxu0
  %v4517 = vadd.f32 0.0, %v4516
  %v4518 = vpop.f32.mrb[0].mxu0
  %v4519 = vpop.f32.mrb[0].mxu0
  %v4520 = vadd.f32 0.0, %v4519
  %v4521 = vpop.f32.mrb[0].mxu0
  %4522 = vmatprep.mubr.bf16.mxu0 %v4369
  %4523 = vmatmul.mubr.bf16.gmra.mrb[0].mxu0 %v4368
  %v4524 = vpop.f32.mrb[0].mxu0
  %v4525 = vadd.f32 0.0, %v4524
  %v4526 = vpop.f32.mrb[0].mxu0
  %v4527 = vpop.f32.mrb[0].mxu0
  %v4528 = vadd.f32 0.0, %v4527
  %v4529 = vpop.f32.mrb[0].mxu0
  %4530 = vmatprep.mubr.bf16.mxu0 %v4371
  %4531 = vmatmul.mubr.bf16.gmra.mrb[0].mxu0 %v4370
  %v4532 = vpop.f32.mrb[0].mxu0
  %v4533 = vadd.f32 0.0, %v4532
  %v4534 = vpop.f32.mrb[0].mxu0
  %v4535 = vpop.f32.mrb[0].mxu0
  %v4536 = vadd.f32 0.0, %v4535
  %v4537 = vpop.f32.mrb[0].mxu0
  %4538 = vmatprep.mubr.bf16.mxu0 %v4373
  %4539 = vmatmul.mubr.bf16.gmra.mrb[0].mxu0 %v4372
  %v4540 = vpop.f32.mrb[0].mxu0
  %v4541 = vadd.f32 0.0, %v4540
  %v4542 = vpop.f32.mrb[0].mxu0
  %v4543 = vpop.f32.mrb[0].mxu0
  %v4544 = vadd.f32 0.0, %v4543
  %v4545 = vpop.f32.mrb[0].mxu0
  %4546 = vmatprep.mubr.bf16.mxu0 %v4375
  %4547 = vmatmul.mubr.bf16.gmra.mrb[0].mxu0 %v4374
  %v4548 = vpop.f32.mrb[0].mxu0
  %v4549 = vadd.f32 0.0, %v4548
  %v4550 = vpop.f32.mrb[0].mxu0
  %v4551 = vpop.f32.mrb[0].mxu0
  %v4552 = vpop.f32.mrb[0].mxu0
  %4553 = vdwg.mxu0
  %v4563 = vunpack.c.l.b16 %v4255
  %v4564 = vunpack.c.h.b16 %v4255
  %v4565 = vunpack.c.l.b16 %v4256
  %v4566 = vunpack.c.h.b16 %v4256
  %v4567 = vunpack.c.l.b16 %v4257
  %v4568 = vunpack.c.h.b16 %v4257
  %v4569 = vunpack.c.l.b16 %v4258
  %v4570 = vunpack.c.h.b16 %v4258
  %v4571 = vunpack.c.l.b16 %v4259
  %v4572 = vunpack.c.h.b16 %v4259
  %v4573 = vunpack.c.l.b16 %v4260
  %v4574 = vunpack.c.h.b16 %v4260
  %v4575 = vunpack.c.l.b16 %v4261
  %v4576 = vunpack.c.h.b16 %v4261
  %v4577 = vunpack.c.l.b16 %v4262
  %v4578 = vunpack.c.h.b16 %v4262
  %v4579 = vunpack.c.l.b16 %v4263
  %v4580 = vunpack.c.h.b16 %v4263
  %v4581 = vpack.c.b16 %v4565, %v4563
  %v4582 = vpack.c.b16 %v4566, %v4564
  %v4583 = vpack.c.b16 %v4569, %v4567
  %v4584 = vpack.c.b16 %v4570, %v4568
  %v4585 = vpack.c.b16 %v4573, %v4571
  %v4586 = vpack.c.b16 %v4574, %v4572
  %v4587 = vpack.c.b16 %v4577, %v4575
  %v4588 = vpack.c.b16 %v4578, %v4576
  %v4589 = vpack.c.b16 %v4579, %v4579
  %v4590 = vpack.c.b16 %v4580, %v4580
  %v4633 = vunpack.c.l.b16 %v4264
  %v4634 = vunpack.c.l.b16 %v4265
  %v4635 = vunpack.c.l.b16 %v4266
  %v4636 = vunpack.c.l.b16 %v4267
  %v4637 = vunpack.c.l.b16 %v4268
  %v4638 = vunpack.c.l.b16 %v4269
  %v4639 = vunpack.c.l.b16 %v4270
  %v4640 = vunpack.c.l.b16 %v4271
  %v4641 = vunpack.c.l.b16 %v4272
  %v4642 = vunpack.c.l.b16 %v4273
  %v4643 = vunpack.c.l.b16 %v4274
  %v4644 = vunpack.c.l.b16 %v4275
  %v4645 = vunpack.c.l.b16 %v4276
  %v4646 = vunpack.c.l.b16 %v4277
  %v4647 = vunpack.c.l.b16 %v4278
  %v4648 = vunpack.c.l.b16 %v4279
  %v4649 = vunpack.c.l.b16 %v4280
  %v4650 = vunpack.c.l.b16 %v4281
  %v4651 = vunpack.c.l.b16 %v4282
  %v4652 = vunpack.c.l.b16 %v4283
  %v4653 = vunpack.c.l.b16 %v4284
  %v4654 = vunpack.c.l.b16 %v4285
  %v4655 = vunpack.c.l.b16 %v4286
  %v4656 = vunpack.c.l.b16 %v4287
  %v4657 = vunpack.c.l.b16 %v4288
  %v4658 = vunpack.c.l.b16 %v4289
  %v4659 = vunpack.c.l.b16 %v4290
  %v4660 = vunpack.c.l.b16 %v4291
  %v4661 = vunpack.c.l.b16 %v4292
  %v4662 = vunpack.c.l.b16 %v4293
  %v4663 = vunpack.c.l.b16 %v4294
  %v4664 = vunpack.c.l.b16 %v4295
  %v4665 = vpack.c.b16 %v4634, %v4633
  %v4666 = vpack.c.b16 %v4636, %v4635
  %v4667 = vpack.c.b16 %v4638, %v4637
  %v4668 = vpack.c.b16 %v4640, %v4639
  %v4669 = vpack.c.b16 %v4642, %v4641
  %v4670 = vpack.c.b16 %v4644, %v4643
  %v4671 = vpack.c.b16 %v4646, %v4645
  %v4672 = vpack.c.b16 %v4648, %v4647
  %v4673 = vpack.c.b16 %v4650, %v4649
  %v4674 = vpack.c.b16 %v4652, %v4651
  %v4675 = vpack.c.b16 %v4654, %v4653
  %v4676 = vpack.c.b16 %v4656, %v4655
  %v4677 = vpack.c.b16 %v4658, %v4657
  %v4678 = vpack.c.b16 %v4660, %v4659
  %v4679 = vpack.c.b16 %v4662, %v4661
  %v4680 = vpack.c.b16 %v4664, %v4663
  %4697 = vmatprep.subr.bf16.mxu0 0
  %4698 = vmatpush1.bf16.msra.mxu0 %v4665
  %4699 = vmatprep.subr.bf16.mxu0 0
  %4700 = vmatpush1.bf16.msra.mxu0 %v4666
  %4701 = vmatprep.subr.bf16.mxu0 0
  %4702 = vmatpush1.bf16.msra.mxu0 %v4667
  %4703 = vmatprep.subr.bf16.mxu0 0
  %4704 = vmatpush1.bf16.msra.mxu0 %v4668
  %4705 = vmatprep.subr.bf16.mxu0 0
  %4706 = vmatpush1.bf16.msra.mxu0 %v4669
  %4707 = vmatprep.subr.bf16.mxu0 0
  %4708 = vmatpush1.bf16.msra.mxu0 %v4670
  %4709 = vmatprep.subr.bf16.mxu0 0
  %4710 = vmatpush1.bf16.msra.mxu0 %v4671
  %4711 = vmatprep.subr.bf16.mxu0 0
  %4712 = vmatpush1.bf16.msra.mxu0 %v4672
  %4713 = vmatprep.subr.bf16.mxu0 0
  %4714 = vmatpush1.bf16.msra.mxu0 %v4673
  %4715 = vmatprep.subr.bf16.mxu0 0
  %4716 = vmatpush1.bf16.msra.mxu0 %v4674
  %4717 = vmatprep.subr.bf16.mxu0 0
  %4718 = vmatpush1.bf16.msra.mxu0 %v4675
  %4719 = vmatprep.subr.bf16.mxu0 0
  %4720 = vmatpush1.bf16.msra.mxu0 %v4676
  %4721 = vmatprep.subr.bf16.mxu0 0
  %4722 = vmatpush1.bf16.msra.mxu0 %v4677
  %4723 = vmatprep.subr.bf16.mxu0 0
  %4724 = vmatpush1.bf16.msra.mxu0 %v4678
  %4725 = vmatprep.subr.bf16.mxu0 0
  %4726 = vmatpush1.bf16.msra.mxu0 %v4679
  %4727 = vmatprep.subr.bf16.mxu0 0
  %4728 = vmatpush1.bf16.msra.mxu0 %v4680
  %4729 = vmatprep.mubr.bf16.mxu0 %v4582
  %4730 = vmatmul.mubr.bf16.gmra.mrb[0].mxu0 %v4581
  %v4731 = vpop.f32.mrb[0].mxu0
  %v4732 = vadd.f32 %v4517, %v4731
  %v4733 = vpop.f32.mrb[0].mxu0
  %v4734 = vpop.f32.mrb[0].mxu0
  %v4735 = vadd.f32 %v4520, %v4734
  %v4736 = vpop.f32.mrb[0].mxu0
  %4737 = vmatprep.mubr.bf16.mxu0 %v4584
  %4738 = vmatmul.mubr.bf16.gmra.mrb[0].mxu0 %v4583
  %v4739 = vpop.f32.mrb[0].mxu0
  %v4740 = vadd.f32 %v4525, %v4739
  %v4741 = vpop.f32.mrb[0].mxu0
  %v4742 = vpop.f32.mrb[0].mxu0
  %v4743 = vadd.f32 %v4528, %v4742
  %v4744 = vpop.f32.mrb[0].mxu0
  %4745 = vmatprep.mubr.bf16.mxu0 %v4586
  %4746 = vmatmul.mubr.bf16.gmra.mrb[0].mxu0 %v4585
  %v4747 = vpop.f32.mrb[0].mxu0
  %v4748 = vadd.f32 %v4533, %v4747
  %v4749 = vpop.f32.mrb[0].mxu0
  %v4750 = vpop.f32.mrb[0].mxu0
  %v4751 = vadd.f32 %v4536, %v4750
  %v4752 = vpop.f32.mrb[0].mxu0
  %4753 = vmatprep.mubr.bf16.mxu0 %v4588
  %4754 = vmatmul.mubr.bf16.gmra.mrb[0].mxu0 %v4587
  %v4755 = vpop.f32.mrb[0].mxu0
  %v4756 = vadd.f32 %v4541, %v4755
  %v4757 = vpop.f32.mrb[0].mxu0
  %v4758 = vpop.f32.mrb[0].mxu0
  %v4759 = vadd.f32 %v4544, %v4758
  %v4760 = vpop.f32.mrb[0].mxu0
  %4761 = vmatprep.mubr.bf16.mxu0 %v4590
  %4762 = vmatmul.mubr.bf16.gmra.mrb[0].mxu0 %v4589
  %v4763 = vpop.f32.mrb[0].mxu0
  %v4764 = vadd.f32 %v4549, %v4763
  %v4765 = vpop.f32.mrb[0].mxu0
  %v4766 = vpop.f32.mrb[0].mxu0
  %v4767 = vpop.f32.mrb[0].mxu0
  %4768 = vdwg.mxu0
  %v4769 = vld [vmem:[%s3186] sm:$0xff]
  %v4770 = vld [vmem:[%s3186 + $0x8] sm:$0xff]
  %v4771 = vld [vmem:[%s3186 + $0x10] sm:$0xff]
  %v4772 = vld [vmem:[%s3186 + $0x20] sm:$0xff]
  %v4773 = vld [vmem:[%s3186 + $0x28] sm:$0xff]
  %v4774 = vld [vmem:[%s3186 + $0x30] sm:$0xff]
  %v4775 = vld [vmem:[%s3186 + $0x40] sm:$0xff]
  %v4776 = vld [vmem:[%s3186 + $0x48] sm:$0xff]
  %v4777 = vld [vmem:[%s3186 + $0x50] sm:$0xff]
  %s4778 = scalar_lea.vmem %s3, 256
  %v4779 = vld [vmem:[%s4778] sm:$0xf]
  %v4780 = vld [vmem:[%s4778 + $0x4] sm:$0xf]
  %v4781 = vld [vmem:[%s4778 + $0x8] sm:$0xf]
  %v4782 = vld [vmem:[%s4778 + $0xc] sm:$0xf]
  %v4783 = vld [vmem:[%s4778 + $0x10] sm:$0xf]
  %v4784 = vld [vmem:[%s4778 + $0x14] sm:$0xf]
  %v4785 = vld [vmem:[%s4778 + $0x18] sm:$0xf]
  %v4786 = vld [vmem:[%s4778 + $0x1c] sm:$0xf]
  %v4787 = vld [vmem:[%s4778 + $0x20] sm:$0xf]
  %v4788 = vld [vmem:[%s4778 + $0x24] sm:$0xf]
  %v4789 = vld [vmem:[%s4778 + $0x28] sm:$0xf]
  %v4790 = vld [vmem:[%s4778 + $0x2c] sm:$0xf]
  %v4791 = vld [vmem:[%s4778 + $0x30] sm:$0xf]
  %v4792 = vld [vmem:[%s4778 + $0x34] sm:$0xf]
  %v4793 = vld [vmem:[%s4778 + $0x38] sm:$0xf]
  %v4794 = vld [vmem:[%s4778 + $0x3c] sm:$0xf]
  %v4795 = vld [vmem:[%s4778 + $0x40] sm:$0xf]
  %v4796 = vld [vmem:[%s4778 + $0x44] sm:$0xf]
  %v4797 = vld [vmem:[%s4778 + $0x48] sm:$0xf]
  %v4798 = vld [vmem:[%s4778 + $0x4c] sm:$0xf]
  %v4799 = vld [vmem:[%s4778 + $0x50] sm:$0xf]
  %v4800 = vld [vmem:[%s4778 + $0x54] sm:$0xf]
  %v4801 = vld [vmem:[%s4778 + $0x58] sm:$0xf]
  %v4802 = vld [vmem:[%s4778 + $0x5c] sm:$0xf]
  %v4803 = vld [vmem:[%s4778 + $0x60] sm:$0xf]
  %v4804 = vld [vmem:[%s4778 + $0x64] sm:$0xf]
  %v4805 = vld [vmem:[%s4778 + $0x68] sm:$0xf]
  %v4806 = vld [vmem:[%s4778 + $0x6c] sm:$0xf]
  %v4807 = vld [vmem:[%s4778 + $0x70] sm:$0xf]
  %v4808 = vld [vmem:[%s4778 + $0x74] sm:$0xf]
  %v4809 = vld [vmem:[%s4778 + $0x78] sm:$0xf]
  %v4810 = vld [vmem:[%s4778 + $0x7c] sm:$0xf]
  %v4820 = vunpack.c.l.b16 %v4769
  %v4821 = vunpack.c.h.b16 %v4769
  %v4822 = vunpack.c.l.b16 %v4770
  %v4823 = vunpack.c.h.b16 %v4770
  %v4824 = vunpack.c.l.b16 %v4771
  %v4825 = vunpack.c.h.b16 %v4771
  %v4826 = vunpack.c.l.b16 %v4772
  %v4827 = vunpack.c.h.b16 %v4772
  %v4828 = vunpack.c.l.b16 %v4773
  %v4829 = vunpack.c.h.b16 %v4773
  %v4830 = vunpack.c.l.b16 %v4774
  %v4831 = vunpack.c.h.b16 %v4774
  %v4832 = vunpack.c.l.b16 %v4775
  %v4833 = vunpack.c.h.b16 %v4775
  %v4834 = vunpack.c.l.b16 %v4776
  %v4835 = vunpack.c.h.b16 %v4776
  %v4836 = vunpack.c.l.b16 %v4777
  %v4837 = vunpack.c.h.b16 %v4777
  %v4838 = vpack.c.b16 %v4822, %v4820
  %v4839 = vpack.c.b16 %v4823, %v4821
  %v4840 = vpack.c.b16 %v4826, %v4824
  %v4841 = vpack.c.b16 %v4827, %v4825
  %v4842 = vpack.c.b16 %v4830, %v4828
  %v4843 = vpack.c.b16 %v4831, %v4829
  %v4844 = vpack.c.b16 %v4834, %v4832
  %v4845 = vpack.c.b16 %v4835, %v4833
  %v4846 = vpack.c.b16 %v4836, %v4836
  %v4847 = vpack.c.b16 %v4837, %v4837
  %v4890 = vunpack.c.l.b16 %v4779
  %v4891 = vunpack.c.l.b16 %v4780
  %v4892 = vunpack.c.l.b16 %v4781
  %v4893 = vunpack.c.l.b16 %v4782
  %v4894 = vunpack.c.l.b16 %v4783
  %v4895 = vunpack.c.l.b16 %v4784
  %v4896 = vunpack.c.l.b16 %v4785
  %v4897 = vunpack.c.l.b16 %v4786
  %v4898 = vunpack.c.l.b16 %v4787
  %v4899 = vunpack.c.l.b16 %v4788
  %v4900 = vunpack.c.l.b16 %v4789
  %v4901 = vunpack.c.l.b16 %v4790
  %v4902 = vunpack.c.l.b16 %v4791
  %v4903 = vunpack.c.l.b16 %v4792
  %v4904 = vunpack.c.l.b16 %v4793
  %v4905 = vunpack.c.l.b16 %v4794
  %v4906 = vunpack.c.l.b16 %v4795
  %v4907 = vunpack.c.l.b16 %v4796
  %v4908 = vunpack.c.l.b16 %v4797
  %v4909 = vunpack.c.l.b16 %v4798
  %v4910 = vunpack.c.l.b16 %v4799
  %v4911 = vunpack.c.l.b16 %v4800
  %v4912 = vunpack.c.l.b16 %v4801
  %v4913 = vunpack.c.l.b16 %v4802
  %v4914 = vunpack.c.l.b16 %v4803
  %v4915 = vunpack.c.l.b16 %v4804
  %v4916 = vunpack.c.l.b16 %v4805
  %v4917 = vunpack.c.l.b16 %v4806
  %v4918 = vunpack.c.l.b16 %v4807
  %v4919 = vunpack.c.l.b16 %v4808
  %v4920 = vunpack.c.l.b16 %v4809
  %v4921 = vunpack.c.l.b16 %v4810
  %v4922 = vpack.c.b16 %v4891, %v4890
  %v4923 = vpack.c.b16 %v4893, %v4892
  %v4924 = vpack.c.b16 %v4895, %v4894
  %v4925 = vpack.c.b16 %v4897, %v4896
  %v4926 = vpack.c.b16 %v4899, %v4898
  %v4927 = vpack.c.b16 %v4901, %v4900
  %v4928 = vpack.c.b16 %v4903, %v4902
  %v4929 = vpack.c.b16 %v4905, %v4904
  %v4930 = vpack.c.b16 %v4907, %v4906
  %v4931 = vpack.c.b16 %v4909, %v4908
  %v4932 = vpack.c.b16 %v4911, %v4910
  %v4933 = vpack.c.b16 %v4913, %v4912
  %v4934 = vpack.c.b16 %v4915, %v4914
  %v4935 = vpack.c.b16 %v4917, %v4916
  %v4936 = vpack.c.b16 %v4919, %v4918
  %v4937 = vpack.c.b16 %v4921, %v4920
  %4954 = vmatprep.subr.bf16.mxu0 0
  %4955 = vmatpush1.bf16.msra.mxu0 %v4922
  %4956 = vmatprep.subr.bf16.mxu0 0
  %4957 = vmatpush1.bf16.msra.mxu0 %v4923
  %4958 = vmatprep.subr.bf16.mxu0 0
  %4959 = vmatpush1.bf16.msra.mxu0 %v4924
  %4960 = vmatprep.subr.bf16.mxu0 0
  %4961 = vmatpush1.bf16.msra.mxu0 %v4925
  %4962 = vmatprep.subr.bf16.mxu0 0
  %4963 = vmatpush1.bf16.msra.mxu0 %v4926
  %4964 = vmatprep.subr.bf16.mxu0 0
  %4965 = vmatpush1.bf16.msra.mxu0 %v4927
  %4966 = vmatprep.subr.bf16.mxu0 0
  %4967 = vmatpush1.bf16.msra.mxu0 %v4928
  %4968 = vmatprep.subr.bf16.mxu0 0
  %4969 = vmatpush1.bf16.msra.mxu0 %v4929
  %4970 = vmatprep.subr.bf16.mxu0 0
  %4971 = vmatpush1.bf16.msra.mxu0 %v4930
  %4972 = vmatprep.subr.bf16.mxu0 0
  %4973 = vmatpush1.bf16.msra.mxu0 %v4931
  %4974 = vmatprep.subr.bf16.mxu0 0
  %4975 = vmatpush1.bf16.msra.mxu0 %v4932
  %4976 = vmatprep.subr.bf16.mxu0 0
  %4977 = vmatpush1.bf16.msra.mxu0 %v4933
  %4978 = vmatprep.subr.bf16.mxu0 0
  %4979 = vmatpush1.bf16.msra.mxu0 %v4934
  %4980 = vmatprep.subr.bf16.mxu0 0
  %4981 = vmatpush1.bf16.msra.mxu0 %v4935
  %4982 = vmatprep.subr.bf16.mxu0 0
  %4983 = vmatpush1.bf16.msra.mxu0 %v4936
  %4984 = vmatprep.subr.bf16.mxu0 0
  %4985 = vmatpush1.bf16.msra.mxu0 %v4937
  %4986 = vmatprep.mubr.bf16.mxu0 %v4839
  %4987 = vmatmul.mubr.bf16.gmra.mrb[0].mxu0 %v4838
  %v4988 = vpop.f32.mrb[0].mxu0
  %v4989 = vadd.f32 0.0, %v4988
  %v4990 = vpop.f32.mrb[0].mxu0
  %v4991 = vpop.f32.mrb[0].mxu0
  %v4992 = vadd.f32 0.0, %v4991
  %v4993 = vpop.f32.mrb[0].mxu0
  %4994 = vmatprep.mubr.bf16.mxu0 %v4841
  %4995 = vmatmul.mubr.bf16.gmra.mrb[0].mxu0 %v4840
  %v4996 = vpop.f32.mrb[0].mxu0
  %v4997 = vadd.f32 0.0, %v4996
  %v4998 = vpop.f32.mrb[0].mxu0
  %v4999 = vpop.f32.mrb[0].mxu0
  %v5000 = vadd.f32 0.0, %v4999
  %v5001 = vpop.f32.mrb[0].mxu0
  %5002 = vmatprep.mubr.bf16.mxu0 %v4843
  %5003 = vmatmul.mubr.bf16.gmra.mrb[0].mxu0 %v4842
  %v5004 = vpop.f32.mrb[0].mxu0
  %v5005 = vadd.f32 0.0, %v5004
  %v5006 = vpop.f32.mrb[0].mxu0
  %v5007 = vpop.f32.mrb[0].mxu0
  %v5008 = vadd.f32 0.0, %v5007
  %v5009 = vpop.f32.mrb[0].mxu0
  %5010 = vmatprep.mubr.bf16.mxu0 %v4845
  %5011 = vmatmul.mubr.bf16.gmra.mrb[0].mxu0 %v4844
  %v5012 = vpop.f32.mrb[0].mxu0
  %v5013 = vadd.f32 0.0, %v5012
  %v5014 = vpop.f32.mrb[0].mxu0
  %v5015 = vpop.f32.mrb[0].mxu0
  %v5016 = vadd.f32 0.0, %v5015
  %v5017 = vpop.f32.mrb[0].mxu0
  %5018 = vmatprep.mubr.bf16.mxu0 %v4847
  %5019 = vmatmul.mubr.bf16.gmra.mrb[0].mxu0 %v4846
  %v5020 = vpop.f32.mrb[0].mxu0
  %v5021 = vadd.f32 0.0, %v5020
  %v5022 = vpop.f32.mrb[0].mxu0
  %v5023 = vpop.f32.mrb[0].mxu0
  %v5024 = vpop.f32.mrb[0].mxu0
  %5025 = vdwg.mxu0
  %v5026 = vadd.f32 %v4732, %v4989
  %v5027 = vadd.f32 %v4735, %v4992
  %v5028 = vadd.f32 %v4740, %v4997
  %v5029 = vadd.f32 %v4743, %v5000
  %v5030 = vadd.f32 %v4748, %v5005
  %v5031 = vadd.f32 %v4751, %v5008
  %v5032 = vadd.f32 %v4756, %v5013
  %v5033 = vadd.f32 %v4759, %v5016
  %v5034 = vadd.f32 %v4764, %v5021
  %s5035 = scalar_lea.vmem [#allocation2], 136
  %v5036 = vld [vmem:[%s5035] sm:$0xff]
  %v5037 = vld [vmem:[%s5035 + $0x8] sm:$0xff]
  %v5038 = vld [vmem:[%s5035 + $0x10] sm:$0xff]
  %v5039 = vld [vmem:[%s5035 + $0x20] sm:$0xff]
  %v5040 = vld [vmem:[%s5035 + $0x28] sm:$0xff]
  %v5041 = vld [vmem:[%s5035 + $0x30] sm:$0xff]
  %v5042 = vld [vmem:[%s5035 + $0x40] sm:$0xff]
  %v5043 = vld [vmem:[%s5035 + $0x48] sm:$0xff]
  %v5044 = vld [vmem:[%s5035 + $0x50] sm:$0xff]
  %s5045 = scalar_lea.vmem %s3, 384
  %v5046 = vld [vmem:[%s5045] sm:$0xf]
  %v5047 = vld [vmem:[%s5045 + $0x4] sm:$0xf]
  %v5048 = vld [vmem:[%s5045 + $0x8] sm:$0xf]
  %v5049 = vld [vmem:[%s5045 + $0xc] sm:$0xf]
  %v5050 = vld [vmem:[%s5045 + $0x10] sm:$0xf]
  %v5051 = vld [vmem:[%s5045 + $0x14] sm:$0xf]
  %v5052 = vld [vmem:[%s5045 + $0x18] sm:$0xf]
  %v5053 = vld [vmem:[%s5045 + $0x1c] sm:$0xf]
  %v5054 = vld [vmem:[%s5045 + $0x20] sm:$0xf]
  %v5055 = vld [vmem:[%s5045 + $0x24] sm:$0xf]
  %v5056 = vld [vmem:[%s5045 + $0x28] sm:$0xf]
  %v5057 = vld [vmem:[%s5045 + $0x2c] sm:$0xf]
  %v5058 = vld [vmem:[%s5045 + $0x30] sm:$0xf]
  %v5059 = vld [vmem:[%s5045 + $0x34] sm:$0xf]
  %v5060 = vld [vmem:[%s5045 + $0x38] sm:$0xf]
  %v5061 = vld [vmem:[%s5045 + $0x3c] sm:$0xf]
  %v5062 = vld [vmem:[%s5045 + $0x40] sm:$0xf]
  %v5063 = vld [vmem:[%s5045 + $0x44] sm:$0xf]
  %v5064 = vld [vmem:[%s5045 + $0x48] sm:$0xf]
  %v5065 = vld [vmem:[%s5045 + $0x4c] sm:$0xf]
  %v5066 = vld [vmem:[%s5045 + $0x50] sm:$0xf]
  %v5067 = vld [vmem:[%s5045 + $0x54] sm:$0xf]
  %v5068 = vld [vmem:[%s5045 + $0x58] sm:$0xf]
  %v5069 = vld [vmem:[%s5045 + $0x5c] sm:$0xf]
  %v5070 = vld [vmem:[%s5045 + $0x60] sm:$0xf]
  %v5071 = vld [vmem:[%s5045 + $0x64] sm:$0xf]
  %v5072 = vld [vmem:[%s5045 + $0x68] sm:$0xf]
  %v5073 = vld [vmem:[%s5045 + $0x6c] sm:$0xf]
  %v5074 = vld [vmem:[%s5045 + $0x70] sm:$0xf]
  %v5075 = vld [vmem:[%s5045 + $0x74] sm:$0xf]
  %v5076 = vld [vmem:[%s5045 + $0x78] sm:$0xf]
  %v5077 = vld [vmem:[%s5045 + $0x7c] sm:$0xf]
  %v5087 = vunpack.c.l.b16 %v5036
  %v5088 = vunpack.c.h.b16 %v5036
  %v5089 = vunpack.c.l.b16 %v5037
  %v5090 = vunpack.c.h.b16 %v5037
  %v5091 = vunpack.c.l.b16 %v5038
  %v5092 = vunpack.c.h.b16 %v5038
  %v5093 = vunpack.c.l.b16 %v5039
  %v5094 = vunpack.c.h.b16 %v5039
  %v5095 = vunpack.c.l.b16 %v5040
  %v5096 = vunpack.c.h.b16 %v5040
  %v5097 = vunpack.c.l.b16 %v5041
  %v5098 = vunpack.c.h.b16 %v5041
  %v5099 = vunpack.c.l.b16 %v5042
  %v5100 = vunpack.c.h.b16 %v5042
  %v5101 = vunpack.c.l.b16 %v5043
  %v5102 = vunpack.c.h.b16 %v5043
  %v5103 = vunpack.c.l.b16 %v5044
  %v5104 = vunpack.c.h.b16 %v5044
  %v5105 = vpack.c.b16 %v5089, %v5087
  %v5106 = vpack.c.b16 %v5090, %v5088
  %v5107 = vpack.c.b16 %v5093, %v5091
  %v5108 = vpack.c.b16 %v5094, %v5092
  %v5109 = vpack.c.b16 %v5097, %v5095
  %v5110 = vpack.c.b16 %v5098, %v5096
  %v5111 = vpack.c.b16 %v5101, %v5099
  %v5112 = vpack.c.b16 %v5102, %v5100
  %v5113 = vpack.c.b16 %v5103, %v5103
  %v5114 = vpack.c.b16 %v5104, %v5104
  %v5157 = vunpack.c.l.b16 %v5046
  %v5158 = vunpack.c.l.b16 %v5047
  %v5159 = vunpack.c.l.b16 %v5048
  %v5160 = vunpack.c.l.b16 %v5049
  %v5161 = vunpack.c.l.b16 %v5050
  %v5162 = vunpack.c.l.b16 %v5051
  %v5163 = vunpack.c.l.b16 %v5052
  %v5164 = vunpack.c.l.b16 %v5053
  %v5165 = vunpack.c.l.b16 %v5054
  %v5166 = vunpack.c.l.b16 %v5055
  %v5167 = vunpack.c.l.b16 %v5056
  %v5168 = vunpack.c.l.b16 %v5057
  %v5169 = vunpack.c.l.b16 %v5058
  %v5170 = vunpack.c.l.b16 %v5059
  %v5171 = vunpack.c.l.b16 %v5060
  %v5172 = vunpack.c.l.b16 %v5061
  %v5173 = vunpack.c.l.b16 %v5062
  %v5174 = vunpack.c.l.b16 %v5063
  %v5175 = vunpack.c.l.b16 %v5064
  %v5176 = vunpack.c.l.b16 %v5065
  %v5177 = vunpack.c.l.b16 %v5066
  %v5178 = vunpack.c.l.b16 %v5067
  %v5179 = vunpack.c.l.b16 %v5068
  %v5180 = vunpack.c.l.b16 %v5069
  %v5181 = vunpack.c.l.b16 %v5070
  %v5182 = vunpack.c.l.b16 %v5071
  %v5183 = vunpack.c.l.b16 %v5072
  %v5184 = vunpack.c.l.b16 %v5073
  %v5185 = vunpack.c.l.b16 %v5074
  %v5186 = vunpack.c.l.b16 %v5075
  %v5187 = vunpack.c.l.b16 %v5076
  %v5188 = vunpack.c.l.b16 %v5077
  %v5189 = vpack.c.b16 %v5158, %v5157
  %v5190 = vpack.c.b16 %v5160, %v5159
  %v5191 = vpack.c.b16 %v5162, %v5161
  %v5192 = vpack.c.b16 %v5164, %v5163
  %v5193 = vpack.c.b16 %v5166, %v5165
  %v5194 = vpack.c.b16 %v5168, %v5167
  %v5195 = vpack.c.b16 %v5170, %v5169
  %v5196 = vpack.c.b16 %v5172, %v5171
  %v5197 = vpack.c.b16 %v5174, %v5173
  %v5198 = vpack.c.b16 %v5176, %v5175
  %v5199 = vpack.c.b16 %v5178, %v5177
  %v5200 = vpack.c.b16 %v5180, %v5179
  %v5201 = vpack.c.b16 %v5182, %v5181
  %v5202 = vpack.c.b16 %v5184, %v5183
  %v5203 = vpack.c.b16 %v5186, %v5185
  %v5204 = vpack.c.b16 %v5188, %v5187
  %5221 = vmatprep.subr.bf16.mxu0 0
  %5222 = vmatpush1.bf16.msra.mxu0 %v5189
  %5223 = vmatprep.subr.bf16.mxu0 0
  %5224 = vmatpush1.bf16.msra.mxu0 %v5190
  %5225 = vmatprep.subr.bf16.mxu0 0
  %5226 = vmatpush1.bf16.msra.mxu0 %v5191
  %5227 = vmatprep.subr.bf16.mxu0 0
  %5228 = vmatpush1.bf16.msra.mxu0 %v5192
  %5229 = vmatprep.subr.bf16.mxu0 0
  %5230 = vmatpush1.bf16.msra.mxu0 %v5193
  %5231 = vmatprep.subr.bf16.mxu0 0
  %5232 = vmatpush1.bf16.msra.mxu0 %v5194
  %5233 = vmatprep.subr.bf16.mxu0 0
  %5234 = vmatpush1.bf16.msra.mxu0 %v5195
  %5235 = vmatprep.subr.bf16.mxu0 0
  %5236 = vmatpush1.bf16.msra.mxu0 %v5196
  %5237 = vmatprep.subr.bf16.mxu0 0
  %5238 = vmatpush1.bf16.msra.mxu0 %v5197
  %5239 = vmatprep.subr.bf16.mxu0 0
  %5240 = vmatpush1.bf16.msra.mxu0 %v5198
  %5241 = vmatprep.subr.bf16.mxu0 0
  %5242 = vmatpush1.bf16.msra.mxu0 %v5199
  %5243 = vmatprep.subr.bf16.mxu0 0
  %5244 = vmatpush1.bf16.msra.mxu0 %v5200
  %5245 = vmatprep.subr.bf16.mxu0 0
  %5246 = vmatpush1.bf16.msra.mxu0 %v5201
  %5247 = vmatprep.subr.bf16.mxu0 0
  %5248 = vmatpush1.bf16.msra.mxu0 %v5202
  %5249 = vmatprep.subr.bf16.mxu0 0
  %5250 = vmatpush1.bf16.msra.mxu0 %v5203
  %5251 = vmatprep.subr.bf16.mxu0 0
  %5252 = vmatpush1.bf16.msra.mxu0 %v5204
  %5253 = vmatprep.mubr.bf16.mxu0 %v5106
  %5254 = vmatmul.mubr.bf16.gmra.mrb[0].mxu0 %v5105
  %v5255 = vpop.f32.mrb[0].mxu0
  %v5256 = vadd.f32 0.0, %v5255
  %v5257 = vpop.f32.mrb[0].mxu0
  %v5258 = vpop.f32.mrb[0].mxu0
  %v5259 = vadd.f32 0.0, %v5258
  %v5260 = vpop.f32.mrb[0].mxu0
  %5261 = vmatprep.mubr.bf16.mxu0 %v5108
  %5262 = vmatmul.mubr.bf16.gmra.mrb[0].mxu0 %v5107
  %v5263 = vpop.f32.mrb[0].mxu0
  %v5264 = vadd.f32 0.0, %v5263
  %v5265 = vpop.f32.mrb[0].mxu0
  %v5266 = vpop.f32.mrb[0].mxu0
  %v5267 = vadd.f32 0.0, %v5266
  %v5268 = vpop.f32.mrb[0].mxu0
  %5269 = vmatprep.mubr.bf16.mxu0 %v5110
  %5270 = vmatmul.mubr.bf16.gmra.mrb[0].mxu0 %v5109
  %v5271 = vpop.f32.mrb[0].mxu0
  %v5272 = vadd.f32 0.0, %v5271
  %v5273 = vpop.f32.mrb[0].mxu0
  %v5274 = vpop.f32.mrb[0].mxu0
  %v5275 = vadd.f32 0.0, %v5274
  %v5276 = vpop.f32.mrb[0].mxu0
  %5277 = vmatprep.mubr.bf16.mxu0 %v5112
  %5278 = vmatmul.mubr.bf16.gmra.mrb[0].mxu0 %v5111
  %v5279 = vpop.f32.mrb[0].mxu0
  %v5280 = vadd.f32 0.0, %v5279
  %v5281 = vpop.f32.mrb[0].mxu0
  %v5282 = vpop.f32.mrb[0].mxu0
  %v5283 = vadd.f32 0.0, %v5282
  %v5284 = vpop.f32.mrb[0].mxu0
  %5285 = vmatprep.mubr.bf16.mxu0 %v5114
  %5286 = vmatmul.mubr.bf16.gmra.mrb[0].mxu0 %v5113
  %v5287 = vpop.f32.mrb[0].mxu0
  %v5288 = vadd.f32 0.0, %v5287
  %v5289 = vpop.f32.mrb[0].mxu0
  %v5290 = vpop.f32.mrb[0].mxu0
  %v5291 = vpop.f32.mrb[0].mxu0
  %5292 = vdwg.mxu0
  %v5293 = vadd.f32 %v5026, %v5256
  %v5294 = vadd.f32 %v5027, %v5259
  %v5295 = vadd.f32 %v5028, %v5264
  %v5296 = vadd.f32 %v5029, %v5267
  %v5297 = vadd.f32 %v5030, %v5272
  %v5298 = vadd.f32 %v5031, %v5275
  %v5299 = vadd.f32 %v5032, %v5280
  %v5300 = vadd.f32 %v5033, %v5283
  %v5301 = vadd.f32 %v5034, %v5288
  %s5302 = scalar_lea.vmem [#allocation2], 32
  %v5303 = vld [vmem:[%s5302] sm:$0xff]
  %v5304 = vld [vmem:[%s5302 + $0x8] sm:$0xff]
  %v5305 = vld [vmem:[%s5302 + $0x10] sm:$0xff]
  %v5306 = vld [vmem:[%s5302 + $0x20] sm:$0xff]
  %v5307 = vld [vmem:[%s5302 + $0x28] sm:$0xff]
  %v5308 = vld [vmem:[%s5302 + $0x30] sm:$0xff]
  %v5309 = vld [vmem:[%s5302 + $0x40] sm:$0xff]
  %v5310 = vld [vmem:[%s5302 + $0x48] sm:$0xff]
  %v5311 = vld [vmem:[%s5302 + $0x50] sm:$0xff]
  %s5312 = scalar_lea.vmem %s3, 512
  %v5313 = vld [vmem:[%s5312] sm:$0xf]
  %v5314 = vld [vmem:[%s5312 + $0x4] sm:$0xf]
  %v5315 = vld [vmem:[%s5312 + $0x8] sm:$0xf]
  %v5316 = vld [vmem:[%s5312 + $0xc] sm:$0xf]
  %v5317 = vld [vmem:[%s5312 + $0x10] sm:$0xf]
  %v5318 = vld [vmem:[%s5312 + $0x14] sm:$0xf]
  %v5319 = vld [vmem:[%s5312 + $0x18] sm:$0xf]
  %v5320 = vld [vmem:[%s5312 + $0x1c] sm:$0xf]
  %v5321 = vld [vmem:[%s5312 + $0x20] sm:$0xf]
  %v5322 = vld [vmem:[%s5312 + $0x24] sm:$0xf]
  %v5323 = vld [vmem:[%s5312 + $0x28] sm:$0xf]
  %v5324 = vld [vmem:[%s5312 + $0x2c] sm:$0xf]
  %v5325 = vld [vmem:[%s5312 + $0x30] sm:$0xf]
  %v5326 = vld [vmem:[%s5312 + $0x34] sm:$0xf]
  %v5327 = vld [vmem:[%s5312 + $0x38] sm:$0xf]
  %v5328 = vld [vmem:[%s5312 + $0x3c] sm:$0xf]
  %v5329 = vld [vmem:[%s5312 + $0x40] sm:$0xf]
  %v5330 = vld [vmem:[%s5312 + $0x44] sm:$0xf]
  %v5331 = vld [vmem:[%s5312 + $0x48] sm:$0xf]
  %v5332 = vld [vmem:[%s5312 + $0x4c] sm:$0xf]
  %v5333 = vld [vmem:[%s5312 + $0x50] sm:$0xf]
  %v5334 = vld [vmem:[%s5312 + $0x54] sm:$0xf]
  %v5335 = vld [vmem:[%s5312 + $0x58] sm:$0xf]
  %v5336 = vld [vmem:[%s5312 + $0x5c] sm:$0xf]
  %v5337 = vld [vmem:[%s5312 + $0x60] sm:$0xf]
  %v5338 = vld [vmem:[%s5312 + $0x64] sm:$0xf]
  %v5339 = vld [vmem:[%s5312 + $0x68] sm:$0xf]
  %v5340 = vld [vmem:[%s5312 + $0x6c] sm:$0xf]
  %v5341 = vld [vmem:[%s5312 + $0x70] sm:$0xf]
  %v5342 = vld [vmem:[%s5312 + $0x74] sm:$0xf]
  %v5343 = vld [vmem:[%s5312 + $0x78] sm:$0xf]
  %v5344 = vld [vmem:[%s5312 + $0x7c] sm:$0xf]
  %v5354 = vunpack.c.l.b16 %v5303
  %v5355 = vunpack.c.h.b16 %v5303
  %v5356 = vunpack.c.l.b16 %v5304
  %v5357 = vunpack.c.h.b16 %v5304
  %v5358 = vunpack.c.l.b16 %v5305
  %v5359 = vunpack.c.h.b16 %v5305
  %v5360 = vunpack.c.l.b16 %v5306
  %v5361 = vunpack.c.h.b16 %v5306
  %v5362 = vunpack.c.l.b16 %v5307
  %v5363 = vunpack.c.h.b16 %v5307
  %v5364 = vunpack.c.l.b16 %v5308
  %v5365 = vunpack.c.h.b16 %v5308
  %v5366 = vunpack.c.l.b16 %v5309
  %v5367 = vunpack.c.h.b16 %v5309
  %v5368 = vunpack.c.l.b16 %v5310
  %v5369 = vunpack.c.h.b16 %v5310
  %v5370 = vunpack.c.l.b16 %v5311
  %v5371 = vunpack.c.h.b16 %v5311
  %v5372 = vpack.c.b16 %v5356, %v5354
  %v5373 = vpack.c.b16 %v5357, %v5355
  %v5374 = vpack.c.b16 %v5360, %v5358
  %v5375 = vpack.c.b16 %v5361, %v5359
  %v5376 = vpack.c.b16 %v5364, %v5362
  %v5377 = vpack.c.b16 %v5365, %v5363
  %v5378 = vpack.c.b16 %v5368, %v5366
  %v5379 = vpack.c.b16 %v5369, %v5367
  %v5380 = vpack.c.b16 %v5370, %v5370
  %v5381 = vpack.c.b16 %v5371, %v5371
  %v5424 = vunpack.c.l.b16 %v5313
  %v5425 = vunpack.c.l.b16 %v5314
  %v5426 = vunpack.c.l.b16 %v5315
  %v5427 = vunpack.c.l.b16 %v5316
  %v5428 = vunpack.c.l.b16 %v5317
  %v5429 = vunpack.c.l.b16 %v5318
  %v5430 = vunpack.c.l.b16 %v5319
  %v5431 = vunpack.c.l.b16 %v5320
  %v5432 = vunpack.c.l.b16 %v5321
  %v5433 = vunpack.c.l.b16 %v5322
  %v5434 = vunpack.c.l.b16 %v5323
  %v5435 = vunpack.c.l.b16 %v5324
  %v5436 = vunpack.c.l.b16 %v5325
  %v5437 = vunpack.c.l.b16 %v5326
  %v5438 = vunpack.c.l.b16 %v5327
  %v5439 = vunpack.c.l.b16 %v5328
  %v5440 = vunpack.c.l.b16 %v5329
  %v5441 = vunpack.c.l.b16 %v5330
  %v5442 = vunpack.c.l.b16 %v5331
  %v5443 = vunpack.c.l.b16 %v5332
  %v5444 = vunpack.c.l.b16 %v5333
  %v5445 = vunpack.c.l.b16 %v5334
  %v5446 = vunpack.c.l.b16 %v5335
  %v5447 = vunpack.c.l.b16 %v5336
  %v5448 = vunpack.c.l.b16 %v5337
  %v5449 = vunpack.c.l.b16 %v5338
  %v5450 = vunpack.c.l.b16 %v5339
  %v5451 = vunpack.c.l.b16 %v5340
  %v5452 = vunpack.c.l.b16 %v5341
  %v5453 = vunpack.c.l.b16 %v5342
  %v5454 = vunpack.c.l.b16 %v5343
  %v5455 = vunpack.c.l.b16 %v5344
  %v5456 = vpack.c.b16 %v5425, %v5424
  %v5457 = vpack.c.b16 %v5427, %v5426
  %v5458 = vpack.c.b16 %v5429, %v5428
  %v5459 = vpack.c.b16 %v5431, %v5430
  %v5460 = vpack.c.b16 %v5433, %v5432
  %v5461 = vpack.c.b16 %v5435, %v5434
  %v5462 = vpack.c.b16 %v5437, %v5436
  %v5463 = vpack.c.b16 %v5439, %v5438
  %v5464 = vpack.c.b16 %v5441, %v5440
  %v5465 = vpack.c.b16 %v5443, %v5442
  %v5466 = vpack.c.b16 %v5445, %v5444
  %v5467 = vpack.c.b16 %v5447, %v5446
  %v5468 = vpack.c.b16 %v5449, %v5448
  %v5469 = vpack.c.b16 %v5451, %v5450
  %v5470 = vpack.c.b16 %v5453, %v5452
  %v5471 = vpack.c.b16 %v5455, %v5454
  %5488 = vmatprep.subr.bf16.mxu0 0
  %5489 = vmatpush1.bf16.msra.mxu0 %v5456
  %5490 = vmatprep.subr.bf16.mxu0 0
  %5491 = vmatpush1.bf16.msra.mxu0 %v5457
  %5492 = vmatprep.subr.bf16.mxu0 0
  %5493 = vmatpush1.bf16.msra.mxu0 %v5458
  %5494 = vmatprep.subr.bf16.mxu0 0
  %5495 = vmatpush1.bf16.msra.mxu0 %v5459
  %5496 = vmatprep.subr.bf16.mxu0 0
  %5497 = vmatpush1.bf16.msra.mxu0 %v5460
  %5498 = vmatprep.subr.bf16.mxu0 0
  %5499 = vmatpush1.bf16.msra.mxu0 %v5461
  %5500 = vmatprep.subr.bf16.mxu0 0
  %5501 = vmatpush1.bf16.msra.mxu0 %v5462
  %5502 = vmatprep.subr.bf16.mxu0 0
  %5503 = vmatpush1.bf16.msra.mxu0 %v5463
  %5504 = vmatprep.subr.bf16.mxu0 0
  %5505 = vmatpush1.bf16.msra.mxu0 %v5464
  %5506 = vmatprep.subr.bf16.mxu0 0
  %5507 = vmatpush1.bf16.msra.mxu0 %v5465
  %5508 = vmatprep.subr.bf16.mxu0 0
  %5509 = vmatpush1.bf16.msra.mxu0 %v5466
  %5510 = vmatprep.subr.bf16.mxu0 0
  %5511 = vmatpush1.bf16.msra.mxu0 %v5467
  %5512 = vmatprep.subr.bf16.mxu0 0
  %5513 = vmatpush1.bf16.msra.mxu0 %v5468
  %5514 = vmatprep.subr.bf16.mxu0 0
  %5515 = vmatpush1.bf16.msra.mxu0 %v5469
  %5516 = vmatprep.subr.bf16.mxu0 0
  %5517 = vmatpush1.bf16.msra.mxu0 %v5470
  %5518 = vmatprep.subr.bf16.mxu0 0
  %5519 = vmatpush1.bf16.msra.mxu0 %v5471
  %5520 = vmatprep.mubr.bf16.mxu0 %v5373
  %5521 = vmatmul.mubr.bf16.gmra.mrb[0].mxu0 %v5372
  %v5522 = vpop.f32.mrb[0].mxu0
  %v5523 = vadd.f32 0.0, %v5522
  %v5524 = vpop.f32.mrb[0].mxu0
  %v5525 = vpop.f32.mrb[0].mxu0
  %v5526 = vadd.f32 0.0, %v5525
  %v5527 = vpop.f32.mrb[0].mxu0
  %5528 = vmatprep.mubr.bf16.mxu0 %v5375
  %5529 = vmatmul.mubr.bf16.gmra.mrb[0].mxu0 %v5374
  %v5530 = vpop.f32.mrb[0].mxu0
  %v5531 = vadd.f32 0.0, %v5530
  %v5532 = vpop.f32.mrb[0].mxu0
  %v5533 = vpop.f32.mrb[0].mxu0
  %v5534 = vadd.f32 0.0, %v5533
  %v5535 = vpop.f32.mrb[0].mxu0
  %5536 = vmatprep.mubr.bf16.mxu0 %v5377
  %5537 = vmatmul.mubr.bf16.gmra.mrb[0].mxu0 %v5376
  %v5538 = vpop.f32.mrb[0].mxu0
  %v5539 = vadd.f32 0.0, %v5538
  %v5540 = vpop.f32.mrb[0].mxu0
  %v5541 = vpop.f32.mrb[0].mxu0
  %v5542 = vadd.f32 0.0, %v5541
  %v5543 = vpop.f32.mrb[0].mxu0
  %5544 = vmatprep.mubr.bf16.mxu0 %v5379
  %5545 = vmatmul.mubr.bf16.gmra.mrb[0].mxu0 %v5378
  %v5546 = vpop.f32.mrb[0].mxu0
  %v5547 = vadd.f32 0.0, %v5546
  %v5548 = vpop.f32.mrb[0].mxu0
  %v5549 = vpop.f32.mrb[0].mxu0
  %v5550 = vadd.f32 0.0, %v5549
  %v5551 = vpop.f32.mrb[0].mxu0
  %5552 = vmatprep.mubr.bf16.mxu0 %v5381
  %5553 = vmatmul.mubr.bf16.gmra.mrb[0].mxu0 %v5380
  %v5554 = vpop.f32.mrb[0].mxu0
  %v5555 = vadd.f32 0.0, %v5554
  %v5556 = vpop.f32.mrb[0].mxu0
  %v5557 = vpop.f32.mrb[0].mxu0
  %v5558 = vpop.f32.mrb[0].mxu0
  %5559 = vdwg.mxu0
  %v5560 = vadd.f32 %v5293, %v5523
  %v5561 = vadd.f32 %v5294, %v5526
  %v5562 = vadd.f32 %v5295, %v5531
  %v5563 = vadd.f32 %v5296, %v5534
  %v5564 = vadd.f32 %v5297, %v5539
  %v5565 = vadd.f32 %v5298, %v5542
  %v5566 = vadd.f32 %v5299, %v5547
  %v5567 = vadd.f32 %v5300, %v5550
  %v5568 = vadd.f32 %v5301, %v5555
  %s5569 = scalar_lea.vmem [#allocation2], 40
  %v5570 = vld [vmem:[%s5569] sm:$0xff]
  %v5571 = vld [vmem:[%s5569 + $0x8] sm:$0xff]
  %v5572 = vld [vmem:[%s5569 + $0x10] sm:$0xff]
  %v5573 = vld [vmem:[%s5569 + $0x20] sm:$0xff]
  %v5574 = vld [vmem:[%s5569 + $0x28] sm:$0xff]
  %v5575 = vld [vmem:[%s5569 + $0x30] sm:$0xff]
  %v5576 = vld [vmem:[%s5569 + $0x40] sm:$0xff]
  %v5577 = vld [vmem:[%s5569 + $0x48] sm:$0xff]
  %v5578 = vld [vmem:[%s5569 + $0x50] sm:$0xff]
  %s5579 = scalar_lea.vmem %s3, 640
  %v5580 = vld [vmem:[%s5579] sm:$0xf]
  %v5581 = vld [vmem:[%s5579 + $0x4] sm:$0xf]
  %v5582 = vld [vmem:[%s5579 + $0x8] sm:$0xf]
  %v5583 = vld [vmem:[%s5579 + $0xc] sm:$0xf]
  %v5584 = vld [vmem:[%s5579 + $0x10] sm:$0xf]
  %v5585 = vld [vmem:[%s5579 + $0x14] sm:$0xf]
  %v5586 = vld [vmem:[%s5579 + $0x18] sm:$0xf]
  %v5587 = vld [vmem:[%s5579 + $0x1c] sm:$0xf]
  %v5588 = vld [vmem:[%s5579 + $0x20] sm:$0xf]
  %v5589 = vld [vmem:[%s5579 + $0x24] sm:$0xf]
  %v5590 = vld [vmem:[%s5579 + $0x28] sm:$0xf]
  %v5591 = vld [vmem:[%s5579 + $0x2c] sm:$0xf]
  %v5592 = vld [vmem:[%s5579 + $0x30] sm:$0xf]
  %v5593 = vld [vmem:[%s5579 + $0x34] sm:$0xf]
  %v5594 = vld [vmem:[%s5579 + $0x38] sm:$0xf]
  %v5595 = vld [vmem:[%s5579 + $0x3c] sm:$0xf]
  %v5596 = vld [vmem:[%s5579 + $0x40] sm:$0xf]
  %v5597 = vld [vmem:[%s5579 + $0x44] sm:$0xf]
  %v5598 = vld [vmem:[%s5579 + $0x48] sm:$0xf]
  %v5599 = vld [vmem:[%s5579 + $0x4c] sm:$0xf]
  %v5600 = vld [vmem:[%s5579 + $0x50] sm:$0xf]
  %v5601 = vld [vmem:[%s5579 + $0x54] sm:$0xf]
  %v5602 = vld [vmem:[%s5579 + $0x58] sm:$0xf]
  %v5603 = vld [vmem:[%s5579 + $0x5c] sm:$0xf]
  %v5604 = vld [vmem:[%s5579 + $0x60] sm:$0xf]
  %v5605 = vld [vmem:[%s5579 + $0x64] sm:$0xf]
  %v5606 = vld [vmem:[%s5579 + $0x68] sm:$0xf]
  %v5607 = vld [vmem:[%s5579 + $0x6c] sm:$0xf]
  %v5608 = vld [vmem:[%s5579 + $0x70] sm:$0xf]
  %v5609 = vld [vmem:[%s5579 + $0x74] sm:$0xf]
  %v5610 = vld [vmem:[%s5579 + $0x78] sm:$0xf]
  %v5611 = vld [vmem:[%s5579 + $0x7c] sm:$0xf]
  %v5621 = vunpack.c.l.b16 %v5570
  %v5622 = vunpack.c.h.b16 %v5570
  %v5623 = vunpack.c.l.b16 %v5571
  %v5624 = vunpack.c.h.b16 %v5571
  %v5625 = vunpack.c.l.b16 %v5572
  %v5626 = vunpack.c.h.b16 %v5572
  %v5627 = vunpack.c.l.b16 %v5573
  %v5628 = vunpack.c.h.b16 %v5573
  %v5629 = vunpack.c.l.b16 %v5574
  %v5630 = vunpack.c.h.b16 %v5574
  %v5631 = vunpack.c.l.b16 %v5575
  %v5632 = vunpack.c.h.b16 %v5575
  %v5633 = vunpack.c.l.b16 %v5576
  %v5634 = vunpack.c.h.b16 %v5576
  %v5635 = vunpack.c.l.b16 %v5577
  %v5636 = vunpack.c.h.b16 %v5577
  %v5637 = vunpack.c.l.b16 %v5578
  %v5638 = vunpack.c.h.b16 %v5578
  %v5639 = vpack.c.b16 %v5623, %v5621
  %v5640 = vpack.c.b16 %v5624, %v5622
  %v5641 = vpack.c.b16 %v5627, %v5625
  %v5642 = vpack.c.b16 %v5628, %v5626
  %v5643 = vpack.c.b16 %v5631, %v5629
  %v5644 = vpack.c.b16 %v5632, %v5630
  %v5645 = vpack.c.b16 %v5635, %v5633
  %v5646 = vpack.c.b16 %v5636, %v5634
  %v5647 = vpack.c.b16 %v5637, %v5637
  %v5648 = vpack.c.b16 %v5638, %v5638
  %v5691 = vunpack.c.l.b16 %v5580
  %v5692 = vunpack.c.l.b16 %v5581
  %v5693 = vunpack.c.l.b16 %v5582
  %v5694 = vunpack.c.l.b16 %v5583
  %v5695 = vunpack.c.l.b16 %v5584
  %v5696 = vunpack.c.l.b16 %v5585
  %v5697 = vunpack.c.l.b16 %v5586
  %v5698 = vunpack.c.l.b16 %v5587
  %v5699 = vunpack.c.l.b16 %v5588
  %v5700 = vunpack.c.l.b16 %v5589
  %v5701 = vunpack.c.l.b16 %v5590
  %v5702 = vunpack.c.l.b16 %v5591
  %v5703 = vunpack.c.l.b16 %v5592
  %v5704 = vunpack.c.l.b16 %v5593
  %v5705 = vunpack.c.l.b16 %v5594
  %v5706 = vunpack.c.l.b16 %v5595
  %v5707 = vunpack.c.l.b16 %v5596
  %v5708 = vunpack.c.l.b16 %v5597
  %v5709 = vunpack.c.l.b16 %v5598
  %v5710 = vunpack.c.l.b16 %v5599
  %v5711 = vunpack.c.l.b16 %v5600
  %v5712 = vunpack.c.l.b16 %v5601
  %v5713 = vunpack.c.l.b16 %v5602
  %v5714 = vunpack.c.l.b16 %v5603
  %v5715 = vunpack.c.l.b16 %v5604
  %v5716 = vunpack.c.l.b16 %v5605
  %v5717 = vunpack.c.l.b16 %v5606
  %v5718 = vunpack.c.l.b16 %v5607
  %v5719 = vunpack.c.l.b16 %v5608
  %v5720 = vunpack.c.l.b16 %v5609
  %v5721 = vunpack.c.l.b16 %v5610
  %v5722 = vunpack.c.l.b16 %v5611
  %v5723 = vpack.c.b16 %v5692, %v5691
  %v5724 = vpack.c.b16 %v5694, %v5693
  %v5725 = vpack.c.b16 %v5696, %v5695
  %v5726 = vpack.c.b16 %v5698, %v5697
  %v5727 = vpack.c.b16 %v5700, %v5699
  %v5728 = vpack.c.b16 %v5702, %v5701
  %v5729 = vpack.c.b16 %v5704, %v5703
  %v5730 = vpack.c.b16 %v5706, %v5705
  %v5731 = vpack.c.b16 %v5708, %v5707
  %v5732 = vpack.c.b16 %v5710, %v5709
  %v5733 = vpack.c.b16 %v5712, %v5711
  %v5734 = vpack.c.b16 %v5714, %v5713
  %v5735 = vpack.c.b16 %v5716, %v5715
  %v5736 = vpack.c.b16 %v5718, %v5717
  %v5737 = vpack.c.b16 %v5720, %v5719
  %v5738 = vpack.c.b16 %v5722, %v5721
  %5755 = vmatprep.subr.bf16.mxu0 0
  %5756 = vmatpush1.bf16.msra.mxu0 %v5723
  %5757 = vmatprep.subr.bf16.mxu0 0
  %5758 = vmatpush1.bf16.msra.mxu0 %v5724
  %5759 = vmatprep.subr.bf16.mxu0 0
  %5760 = vmatpush1.bf16.msra.mxu0 %v5725
  %5761 = vmatprep.subr.bf16.mxu0 0
  %5762 = vmatpush1.bf16.msra.mxu0 %v5726
  %5763 = vmatprep.subr.bf16.mxu0 0
  %5764 = vmatpush1.bf16.msra.mxu0 %v5727
  %5765 = vmatprep.subr.bf16.mxu0 0
  %5766 = vmatpush1.bf16.msra.mxu0 %v5728
  %5767 = vmatprep.subr.bf16.mxu0 0
  %5768 = vmatpush1.bf16.msra.mxu0 %v5729
  %5769 = vmatprep.subr.bf16.mxu0 0
  %5770 = vmatpush1.bf16.msra.mxu0 %v5730
  %5771 = vmatprep.subr.bf16.mxu0 0
  %5772 = vmatpush1.bf16.msra.mxu0 %v5731
  %5773 = vmatprep.subr.bf16.mxu0 0
  %5774 = vmatpush1.bf16.msra.mxu0 %v5732
  %5775 = vmatprep.subr.bf16.mxu0 0
  %5776 = vmatpush1.bf16.msra.mxu0 %v5733
  %5777 = vmatprep.subr.bf16.mxu0 0
  %5778 = vmatpush1.bf16.msra.mxu0 %v5734
  %5779 = vmatprep.subr.bf16.mxu0 0
  %5780 = vmatpush1.bf16.msra.mxu0 %v5735
  %5781 = vmatprep.subr.bf16.mxu0 0
  %5782 = vmatpush1.bf16.msra.mxu0 %v5736
  %5783 = vmatprep.subr.bf16.mxu0 0
  %5784 = vmatpush1.bf16.msra.mxu0 %v5737
  %5785 = vmatprep.subr.bf16.mxu0 0
  %5786 = vmatpush1.bf16.msra.mxu0 %v5738
  %5787 = vmatprep.mubr.bf16.mxu0 %v5640
  %5788 = vmatmul.mubr.bf16.gmra.mrb[0].mxu0 %v5639
  %v5789 = vpop.f32.mrb[0].mxu0
  %v5790 = vadd.f32 0.0, %v5789
  %v5791 = vpop.f32.mrb[0].mxu0
  %v5792 = vpop.f32.mrb[0].mxu0
  %v5793 = vadd.f32 0.0, %v5792
  %v5794 = vpop.f32.mrb[0].mxu0
  %5795 = vmatprep.mubr.bf16.mxu0 %v5642
  %5796 = vmatmul.mubr.bf16.gmra.mrb[0].mxu0 %v5641
  %v5797 = vpop.f32.mrb[0].mxu0
  %v5798 = vadd.f32 0.0, %v5797
  %v5799 = vpop.f32.mrb[0].mxu0
  %v5800 = vpop.f32.mrb[0].mxu0
  %v5801 = vadd.f32 0.0, %v5800
  %v5802 = vpop.f32.mrb[0].mxu0
  %5803 = vmatprep.mubr.bf16.mxu0 %v5644
  %5804 = vmatmul.mubr.bf16.gmra.mrb[0].mxu0 %v5643
  %v5805 = vpop.f32.mrb[0].mxu0
  %v5806 = vadd.f32 0.0, %v5805
  %v5807 = vpop.f32.mrb[0].mxu0
  %v5808 = vpop.f32.mrb[0].mxu0
  %v5809 = vadd.f32 0.0, %v5808
  %v5810 = vpop.f32.mrb[0].mxu0
  %5811 = vmatprep.mubr.bf16.mxu0 %v5646
  %5812 = vmatmul.mubr.bf16.gmra.mrb[0].mxu0 %v5645
  %v5813 = vpop.f32.mrb[0].mxu0
  %v5814 = vadd.f32 0.0, %v5813
  %v5815 = vpop.f32.mrb[0].mxu0
  %v5816 = vpop.f32.mrb[0].mxu0
  %v5817 = vadd.f32 0.0, %v5816
  %v5818 = vpop.f32.mrb[0].mxu0
  %5819 = vmatprep.mubr.bf16.mxu0 %v5648
  %5820 = vmatmul.mubr.bf16.gmra.mrb[0].mxu0 %v5647
  %v5821 = vpop.f32.mrb[0].mxu0
  %v5822 = vadd.f32 0.0, %v5821
  %v5823 = vpop.f32.mrb[0].mxu0
  %v5824 = vpop.f32.mrb[0].mxu0
  %v5825 = vpop.f32.mrb[0].mxu0
  %5826 = vdwg.mxu0
  %v5827 = vadd.f32 %v5560, %v5790
  %v5828 = vadd.f32 %v5561, %v5793
  %v5829 = vadd.f32 %v5562, %v5798
  %v5830 = vadd.f32 %v5563, %v5801
  %v5831 = vadd.f32 %v5564, %v5806
  %v5832 = vadd.f32 %v5565, %v5809
  %v5833 = vadd.f32 %v5566, %v5814
  %v5834 = vadd.f32 %v5567, %v5817
  %v5835 = vadd.f32 %v5568, %v5822
  %s5836 = scalar_lea.vmem [#allocation2], 160
  %v5837 = vld [vmem:[%s5836] sm:$0xff]
  %v5838 = vld [vmem:[%s5836 + $0x8] sm:$0xff]
  %v5839 = vld [vmem:[%s5836 + $0x10] sm:$0xff]
  %v5840 = vld [vmem:[%s5836 + $0x20] sm:$0xff]
  %v5841 = vld [vmem:[%s5836 + $0x28] sm:$0xff]
  %v5842 = vld [vmem:[%s5836 + $0x30] sm:$0xff]
  %v5843 = vld [vmem:[%s5836 + $0x40] sm:$0xff]
  %v5844 = vld [vmem:[%s5836 + $0x48] sm:$0xff]
  %v5845 = vld [vmem:[%s5836 + $0x50] sm:$0xff]
  %s5846 = scalar_lea.vmem %s3, 768
  %v5847 = vld [vmem:[%s5846] sm:$0xf]
  %v5848 = vld [vmem:[%s5846 + $0x4] sm:$0xf]
  %v5849 = vld [vmem:[%s5846 + $0x8] sm:$0xf]
  %v5850 = vld [vmem:[%s5846 + $0xc] sm:$0xf]
  %v5851 = vld [vmem:[%s5846 + $0x10] sm:$0xf]
  %v5852 = vld [vmem:[%s5846 + $0x14] sm:$0xf]
  %v5853 = vld [vmem:[%s5846 + $0x18] sm:$0xf]
  %v5854 = vld [vmem:[%s5846 + $0x1c] sm:$0xf]
  %v5855 = vld [vmem:[%s5846 + $0x20] sm:$0xf]
  %v5856 = vld [vmem:[%s5846 + $0x24] sm:$0xf]
  %v5857 = vld [vmem:[%s5846 + $0x28] sm:$0xf]
  %v5858 = vld [vmem:[%s5846 + $0x2c] sm:$0xf]
  %v5859 = vld [vmem:[%s5846 + $0x30] sm:$0xf]
  %v5860 = vld [vmem:[%s5846 + $0x34] sm:$0xf]
  %v5861 = vld [vmem:[%s5846 + $0x38] sm:$0xf]
  %v5862 = vld [vmem:[%s5846 + $0x3c] sm:$0xf]
  %v5863 = vld [vmem:[%s5846 + $0x40] sm:$0xf]
  %v5864 = vld [vmem:[%s5846 + $0x44] sm:$0xf]
  %v5865 = vld [vmem:[%s5846 + $0x48] sm:$0xf]
  %v5866 = vld [vmem:[%s5846 + $0x4c] sm:$0xf]
  %v5867 = vld [vmem:[%s5846 + $0x50] sm:$0xf]
  %v5868 = vld [vmem:[%s5846 + $0x54] sm:$0xf]
  %v5869 = vld [vmem:[%s5846 + $0x58] sm:$0xf]
  %v5870 = vld [vmem:[%s5846 + $0x5c] sm:$0xf]
  %v5871 = vld [vmem:[%s5846 + $0x60] sm:$0xf]
  %v5872 = vld [vmem:[%s5846 + $0x64] sm:$0xf]
  %v5873 = vld [vmem:[%s5846 + $0x68] sm:$0xf]
  %v5874 = vld [vmem:[%s5846 + $0x6c] sm:$0xf]
  %v5875 = vld [vmem:[%s5846 + $0x70] sm:$0xf]
  %v5876 = vld [vmem:[%s5846 + $0x74] sm:$0xf]
  %v5877 = vld [vmem:[%s5846 + $0x78] sm:$0xf]
  %v5878 = vld [vmem:[%s5846 + $0x7c] sm:$0xf]
  %v5888 = vunpack.c.l.b16 %v5837
  %v5889 = vunpack.c.h.b16 %v5837
  %v5890 = vunpack.c.l.b16 %v5838
  %v5891 = vunpack.c.h.b16 %v5838
  %v5892 = vunpack.c.l.b16 %v5839
  %v5893 = vunpack.c.h.b16 %v5839
  %v5894 = vunpack.c.l.b16 %v5840
  %v5895 = vunpack.c.h.b16 %v5840
  %v5896 = vunpack.c.l.b16 %v5841
  %v5897 = vunpack.c.h.b16 %v5841
  %v5898 = vunpack.c.l.b16 %v5842
  %v5899 = vunpack.c.h.b16 %v5842
  %v5900 = vunpack.c.l.b16 %v5843
  %v5901 = vunpack.c.h.b16 %v5843
  %v5902 = vunpack.c.l.b16 %v5844
  %v5903 = vunpack.c.h.b16 %v5844
  %v5904 = vunpack.c.l.b16 %v5845
  %v5905 = vunpack.c.h.b16 %v5845
  %v5906 = vpack.c.b16 %v5890, %v5888
  %v5907 = vpack.c.b16 %v5891, %v5889
  %v5908 = vpack.c.b16 %v5894, %v5892
  %v5909 = vpack.c.b16 %v5895, %v5893
  %v5910 = vpack.c.b16 %v5898, %v5896
  %v5911 = vpack.c.b16 %v5899, %v5897
  %v5912 = vpack.c.b16 %v5902, %v5900
  %v5913 = vpack.c.b16 %v5903, %v5901
  %v5914 = vpack.c.b16 %v5904, %v5904
  %v5915 = vpack.c.b16 %v5905, %v5905
  %v5958 = vunpack.c.l.b16 %v5847
  %v5959 = vunpack.c.l.b16 %v5848
  %v5960 = vunpack.c.l.b16 %v5849
  %v5961 = vunpack.c.l.b16 %v5850
  %v5962 = vunpack.c.l.b16 %v5851
  %v5963 = vunpack.c.l.b16 %v5852
  %v5964 = vunpack.c.l.b16 %v5853
  %v5965 = vunpack.c.l.b16 %v5854
  %v5966 = vunpack.c.l.b16 %v5855
  %v5967 = vunpack.c.l.b16 %v5856
  %v5968 = vunpack.c.l.b16 %v5857
  %v5969 = vunpack.c.l.b16 %v5858
  %v5970 = vunpack.c.l.b16 %v5859
  %v5971 = vunpack.c.l.b16 %v5860
  %v5972 = vunpack.c.l.b16 %v5861
  %v5973 = vunpack.c.l.b16 %v5862
  %v5974 = vunpack.c.l.b16 %v5863
  %v5975 = vunpack.c.l.b16 %v5864
  %v5976 = vunpack.c.l.b16 %v5865
  %v5977 = vunpack.c.l.b16 %v5866
  %v5978 = vunpack.c.l.b16 %v5867
  %v5979 = vunpack.c.l.b16 %v5868
  %v5980 = vunpack.c.l.b16 %v5869
  %v5981 = vunpack.c.l.b16 %v5870
  %v5982 = vunpack.c.l.b16 %v5871
  %v5983 = vunpack.c.l.b16 %v5872
  %v5984 = vunpack.c.l.b16 %v5873
  %v5985 = vunpack.c.l.b16 %v5874
  %v5986 = vunpack.c.l.b16 %v5875
  %v5987 = vunpack.c.l.b16 %v5876
  %v5988 = vunpack.c.l.b16 %v5877
  %v5989 = vunpack.c.l.b16 %v5878
  %v5990 = vpack.c.b16 %v5959, %v5958
  %v5991 = vpack.c.b16 %v5961, %v5960
  %v5992 = vpack.c.b16 %v5963, %v5962
  %v5993 = vpack.c.b16 %v5965, %v5964
  %v5994 = vpack.c.b16 %v5967, %v5966
  %v5995 = vpack.c.b16 %v5969, %v5968
  %v5996 = vpack.c.b16 %v5971, %v5970
  %v5997 = vpack.c.b16 %v5973, %v5972
  %v5998 = vpack.c.b16 %v5975, %v5974
  %v5999 = vpack.c.b16 %v5977, %v5976
  %v6000 = vpack.c.b16 %v5979, %v5978
  %v6001 = vpack.c.b16 %v5981, %v5980
  %v6002 = vpack.c.b16 %v5983, %v5982
  %v6003 = vpack.c.b16 %v5985, %v5984
  %v6004 = vpack.c.b16 %v5987, %v5986
  %v6005 = vpack.c.b16 %v5989, %v5988
  %6022 = vmatprep.subr.bf16.mxu0 0
  %6023 = vmatpush1.bf16.msra.mxu0 %v5990
  %6024 = vmatprep.subr.bf16.mxu0 0
  %6025 = vmatpush1.bf16.msra.mxu0 %v5991
  %6026 = vmatprep.subr.bf16.mxu0 0
  %6027 = vmatpush1.bf16.msra.mxu0 %v5992
  %6028 = vmatprep.subr.bf16.mxu0 0
  %6029 = vmatpush1.bf16.msra.mxu0 %v5993
  %6030 = vmatprep.subr.bf16.mxu0 0
  %6031 = vmatpush1.bf16.msra.mxu0 %v5994
  %6032 = vmatprep.subr.bf16.mxu0 0
  %6033 = vmatpush1.bf16.msra.mxu0 %v5995
  %6034 = vmatprep.subr.bf16.mxu0 0
  %6035 = vmatpush1.bf16.msra.mxu0 %v5996
  %6036 = vmatprep.subr.bf16.mxu0 0
  %6037 = vmatpush1.bf16.msra.mxu0 %v5997
  %6038 = vmatprep.subr.bf16.mxu0 0
  %6039 = vmatpush1.bf16.msra.mxu0 %v5998
  %6040 = vmatprep.subr.bf16.mxu0 0
  %6041 = vmatpush1.bf16.msra.mxu0 %v5999
  %6042 = vmatprep.subr.bf16.mxu0 0
  %6043 = vmatpush1.bf16.msra.mxu0 %v6000
  %6044 = vmatprep.subr.bf16.mxu0 0
  %6045 = vmatpush1.bf16.msra.mxu0 %v6001
  %6046 = vmatprep.subr.bf16.mxu0 0
  %6047 = vmatpush1.bf16.msra.mxu0 %v6002
  %6048 = vmatprep.subr.bf16.mxu0 0
  %6049 = vmatpush1.bf16.msra.mxu0 %v6003
  %6050 = vmatprep.subr.bf16.mxu0 0
  %6051 = vmatpush1.bf16.msra.mxu0 %v6004
  %6052 = vmatprep.subr.bf16.mxu0 0
  %6053 = vmatpush1.bf16.msra.mxu0 %v6005
  %6054 = vmatprep.mubr.bf16.mxu0 %v5907
  %6055 = vmatmul.mubr.bf16.gmra.mrb[0].mxu0 %v5906
  %v6056 = vpop.f32.mrb[0].mxu0
  %v6057 = vadd.f32 0.0, %v6056
  %v6058 = vpop.f32.mrb[0].mxu0
  %v6059 = vpop.f32.mrb[0].mxu0
  %v6060 = vadd.f32 0.0, %v6059
  %v6061 = vpop.f32.mrb[0].mxu0
  %6062 = vmatprep.mubr.bf16.mxu0 %v5909
  %6063 = vmatmul.mubr.bf16.gmra.mrb[0].mxu0 %v5908
  %v6064 = vpop.f32.mrb[0].mxu0
  %v6065 = vadd.f32 0.0, %v6064
  %v6066 = vpop.f32.mrb[0].mxu0
  %v6067 = vpop.f32.mrb[0].mxu0
  %v6068 = vadd.f32 0.0, %v6067
  %v6069 = vpop.f32.mrb[0].mxu0
  %6070 = vmatprep.mubr.bf16.mxu0 %v5911
  %6071 = vmatmul.mubr.bf16.gmra.mrb[0].mxu0 %v5910
  %v6072 = vpop.f32.mrb[0].mxu0
  %v6073 = vadd.f32 0.0, %v6072
  %v6074 = vpop.f32.mrb[0].mxu0
  %v6075 = vpop.f32.mrb[0].mxu0
  %v6076 = vadd.f32 0.0, %v6075
  %v6077 = vpop.f32.mrb[0].mxu0
  %6078 = vmatprep.mubr.bf16.mxu0 %v5913
  %6079 = vmatmul.mubr.bf16.gmra.mrb[0].mxu0 %v5912
  %v6080 = vpop.f32.mrb[0].mxu0
  %v6081 = vadd.f32 0.0, %v6080
  %v6082 = vpop.f32.mrb[0].mxu0
  %v6083 = vpop.f32.mrb[0].mxu0
  %v6084 = vadd.f32 0.0, %v6083
  %v6085 = vpop.f32.mrb[0].mxu0
  %6086 = vmatprep.mubr.bf16.mxu0 %v5915
  %6087 = vmatmul.mubr.bf16.gmra.mrb[0].mxu0 %v5914
  %v6088 = vpop.f32.mrb[0].mxu0
  %v6089 = vadd.f32 0.0, %v6088
  %v6090 = vpop.f32.mrb[0].mxu0
  %v6091 = vpop.f32.mrb[0].mxu0
  %v6092 = vpop.f32.mrb[0].mxu0
  %6093 = vdwg.mxu0
  %v6094 = vadd.f32 %v5827, %v6057
  %v6095 = vadd.f32 %v5828, %v6060
  %v6096 = vadd.f32 %v5829, %v6065
  %v6097 = vadd.f32 %v5830, %v6068
  %v6098 = vadd.f32 %v5831, %v6073
  %v6099 = vadd.f32 %v5832, %v6076
  %v6100 = vadd.f32 %v5833, %v6081
  %v6101 = vadd.f32 %v5834, %v6084
  %v6102 = vadd.f32 %v5835, %v6089
  %s6103 = scalar_lea.vmem [#allocation2], 168
  %v6104 = vld [vmem:[%s6103] sm:$0xff]
  %v6105 = vld [vmem:[%s6103 + $0x8] sm:$0xff]
  %v6106 = vld [vmem:[%s6103 + $0x10] sm:$0xff]
  %v6107 = vld [vmem:[%s6103 + $0x20] sm:$0xff]
  %v6108 = vld [vmem:[%s6103 + $0x28] sm:$0xff]
  %v6109 = vld [vmem:[%s6103 + $0x30] sm:$0xff]
  %v6110 = vld [vmem:[%s6103 + $0x40] sm:$0xff]
  %v6111 = vld [vmem:[%s6103 + $0x48] sm:$0xff]
  %v6112 = vld [vmem:[%s6103 + $0x50] sm:$0xff]
  %s6113 = scalar_lea.vmem %s3, 896
  %v6114 = vld [vmem:[%s6113] sm:$0xf]
  %v6115 = vld [vmem:[%s6113 + $0x4] sm:$0xf]
  %v6116 = vld [vmem:[%s6113 + $0x8] sm:$0xf]
  %v6117 = vld [vmem:[%s6113 + $0xc] sm:$0xf]
  %v6118 = vld [vmem:[%s6113 + $0x10] sm:$0xf]
  %v6119 = vld [vmem:[%s6113 + $0x14] sm:$0xf]
  %v6120 = vld [vmem:[%s6113 + $0x18] sm:$0xf]
  %v6121 = vld [vmem:[%s6113 + $0x1c] sm:$0xf]
  %v6122 = vld [vmem:[%s6113 + $0x20] sm:$0xf]
  %v6123 = vld [vmem:[%s6113 + $0x24] sm:$0xf]
  %v6124 = vld [vmem:[%s6113 + $0x28] sm:$0xf]
  %v6125 = vld [vmem:[%s6113 + $0x2c] sm:$0xf]
  %v6126 = vld [vmem:[%s6113 + $0x30] sm:$0xf]
  %v6127 = vld [vmem:[%s6113 + $0x34] sm:$0xf]
  %v6128 = vld [vmem:[%s6113 + $0x38] sm:$0xf]
  %v6129 = vld [vmem:[%s6113 + $0x3c] sm:$0xf]
  %v6130 = vld [vmem:[%s6113 + $0x40] sm:$0xf]
  %v6131 = vld [vmem:[%s6113 + $0x44] sm:$0xf]
  %v6132 = vld [vmem:[%s6113 + $0x48] sm:$0xf]
  %v6133 = vld [vmem:[%s6113 + $0x4c] sm:$0xf]
  %v6134 = vld [vmem:[%s6113 + $0x50] sm:$0xf]
  %v6135 = vld [vmem:[%s6113 + $0x54] sm:$0xf]
  %v6136 = vld [vmem:[%s6113 + $0x58] sm:$0xf]
  %v6137 = vld [vmem:[%s6113 + $0x5c] sm:$0xf]
  %v6138 = vld [vmem:[%s6113 + $0x60] sm:$0xf]
  %v6139 = vld [vmem:[%s6113 + $0x64] sm:$0xf]
  %v6140 = vld [vmem:[%s6113 + $0x68] sm:$0xf]
  %v6141 = vld [vmem:[%s6113 + $0x6c] sm:$0xf]
  %v6142 = vld [vmem:[%s6113 + $0x70] sm:$0xf]
  %v6143 = vld [vmem:[%s6113 + $0x74] sm:$0xf]
  %v6144 = vld [vmem:[%s6113 + $0x78] sm:$0xf]
  %v6145 = vld [vmem:[%s6113 + $0x7c] sm:$0xf]
  %v6155 = vunpack.c.l.b16 %v6104
  %v6156 = vunpack.c.h.b16 %v6104
  %v6157 = vunpack.c.l.b16 %v6105
  %v6158 = vunpack.c.h.b16 %v6105
  %v6159 = vunpack.c.l.b16 %v6106
  %v6160 = vunpack.c.h.b16 %v6106
  %v6161 = vunpack.c.l.b16 %v6107
  %v6162 = vunpack.c.h.b16 %v6107
  %v6163 = vunpack.c.l.b16 %v6108
  %v6164 = vunpack.c.h.b16 %v6108
  %v6165 = vunpack.c.l.b16 %v6109
  %v6166 = vunpack.c.h.b16 %v6109
  %v6167 = vunpack.c.l.b16 %v6110
  %v6168 = vunpack.c.h.b16 %v6110
  %v6169 = vunpack.c.l.b16 %v6111
  %v6170 = vunpack.c.h.b16 %v6111
  %v6171 = vunpack.c.l.b16 %v6112
  %v6172 = vunpack.c.h.b16 %v6112
  %v6173 = vpack.c.b16 %v6157, %v6155
  %v6174 = vpack.c.b16 %v6158, %v6156
  %v6175 = vpack.c.b16 %v6161, %v6159
  %v6176 = vpack.c.b16 %v6162, %v6160
  %v6177 = vpack.c.b16 %v6165, %v6163
  %v6178 = vpack.c.b16 %v6166, %v6164
  %v6179 = vpack.c.b16 %v6169, %v6167
  %v6180 = vpack.c.b16 %v6170, %v6168
  %v6181 = vpack.c.b16 %v6171, %v6171
  %v6182 = vpack.c.b16 %v6172, %v6172
  %v6225 = vunpack.c.l.b16 %v6114
  %v6226 = vunpack.c.l.b16 %v6115
  %v6227 = vunpack.c.l.b16 %v6116
  %v6228 = vunpack.c.l.b16 %v6117
  %v6229 = vunpack.c.l.b16 %v6118
  %v6230 = vunpack.c.l.b16 %v6119
  %v6231 = vunpack.c.l.b16 %v6120
  %v6232 = vunpack.c.l.b16 %v6121
  %v6233 = vunpack.c.l.b16 %v6122
  %v6234 = vunpack.c.l.b16 %v6123
  %v6235 = vunpack.c.l.b16 %v6124
  %v6236 = vunpack.c.l.b16 %v6125
  %v6237 = vunpack.c.l.b16 %v6126
  %v6238 = vunpack.c.l.b16 %v6127
  %v6239 = vunpack.c.l.b16 %v6128
  %v6240 = vunpack.c.l.b16 %v6129
  %v6241 = vunpack.c.l.b16 %v6130
  %v6242 = vunpack.c.l.b16 %v6131
  %v6243 = vunpack.c.l.b16 %v6132
  %v6244 = vunpack.c.l.b16 %v6133
  %v6245 = vunpack.c.l.b16 %v6134
  %v6246 = vunpack.c.l.b16 %v6135
  %v6247 = vunpack.c.l.b16 %v6136
  %v6248 = vunpack.c.l.b16 %v6137
  %v6249 = vunpack.c.l.b16 %v6138
  %v6250 = vunpack.c.l.b16 %v6139
  %v6251 = vunpack.c.l.b16 %v6140
  %v6252 = vunpack.c.l.b16 %v6141
  %v6253 = vunpack.c.l.b16 %v6142
  %v6254 = vunpack.c.l.b16 %v6143
  %v6255 = vunpack.c.l.b16 %v6144
  %v6256 = vunpack.c.l.b16 %v6145
  %v6257 = vpack.c.b16 %v6226, %v6225
  %v6258 = vpack.c.b16 %v6228, %v6227
  %v6259 = vpack.c.b16 %v6230, %v6229
  %v6260 = vpack.c.b16 %v6232, %v6231
  %v6261 = vpack.c.b16 %v6234, %v6233
  %v6262 = vpack.c.b16 %v6236, %v6235
  %v6263 = vpack.c.b16 %v6238, %v6237
  %v6264 = vpack.c.b16 %v6240, %v6239
  %v6265 = vpack.c.b16 %v6242, %v6241
  %v6266 = vpack.c.b16 %v6244, %v6243
  %v6267 = vpack.c.b16 %v6246, %v6245
  %v6268 = vpack.c.b16 %v6248, %v6247
  %v6269 = vpack.c.b16 %v6250, %v6249
  %v6270 = vpack.c.b16 %v6252, %v6251
  %v6271 = vpack.c.b16 %v6254, %v6253
  %v6272 = vpack.c.b16 %v6256, %v6255
  %6289 = vmatprep.subr.bf16.mxu0 0
  %6290 = vmatpush1.bf16.msra.mxu0 %v6257
  %6291 = vmatprep.subr.bf16.mxu0 0
  %6292 = vmatpush1.bf16.msra.mxu0 %v6258
  %6293 = vmatprep.subr.bf16.mxu0 0
  %6294 = vmatpush1.bf16.msra.mxu0 %v6259
  %6295 = vmatprep.subr.bf16.mxu0 0
  %6296 = vmatpush1.bf16.msra.mxu0 %v6260
  %6297 = vmatprep.subr.bf16.mxu0 0
  %6298 = vmatpush1.bf16.msra.mxu0 %v6261
  %6299 = vmatprep.subr.bf16.mxu0 0
  %6300 = vmatpush1.bf16.msra.mxu0 %v6262
  %6301 = vmatprep.subr.bf16.mxu0 0
  %6302 = vmatpush1.bf16.msra.mxu0 %v6263
  %6303 = vmatprep.subr.bf16.mxu0 0
  %6304 = vmatpush1.bf16.msra.mxu0 %v6264
  %6305 = vmatprep.subr.bf16.mxu0 0
  %6306 = vmatpush1.bf16.msra.mxu0 %v6265
  %6307 = vmatprep.subr.bf16.mxu0 0
  %6308 = vmatpush1.bf16.msra.mxu0 %v6266
  %6309 = vmatprep.subr.bf16.mxu0 0
  %6310 = vmatpush1.bf16.msra.mxu0 %v6267
  %6311 = vmatprep.subr.bf16.mxu0 0
  %6312 = vmatpush1.bf16.msra.mxu0 %v6268
  %6313 = vmatprep.subr.bf16.mxu0 0
  %6314 = vmatpush1.bf16.msra.mxu0 %v6269
  %6315 = vmatprep.subr.bf16.mxu0 0
  %6316 = vmatpush1.bf16.msra.mxu0 %v6270
  %6317 = vmatprep.subr.bf16.mxu0 0
  %6318 = vmatpush1.bf16.msra.mxu0 %v6271
  %6319 = vmatprep.subr.bf16.mxu0 0
  %6320 = vmatpush1.bf16.msra.mxu0 %v6272
  %6321 = vmatprep.mubr.bf16.mxu0 %v6174
  %6322 = vmatmul.mubr.bf16.gmra.mrb[0].mxu0 %v6173
  %v6323 = vpop.f32.mrb[0].mxu0
  %v6324 = vadd.f32 0.0, %v6323
  %v6325 = vpop.f32.mrb[0].mxu0
  %v6326 = vpop.f32.mrb[0].mxu0
  %v6327 = vadd.f32 0.0, %v6326
  %v6328 = vpop.f32.mrb[0].mxu0
  %6329 = vmatprep.mubr.bf16.mxu0 %v6176
  %6330 = vmatmul.mubr.bf16.gmra.mrb[0].mxu0 %v6175
  %v6331 = vpop.f32.mrb[0].mxu0
  %v6332 = vadd.f32 0.0, %v6331
  %v6333 = vpop.f32.mrb[0].mxu0
  %v6334 = vpop.f32.mrb[0].mxu0
  %v6335 = vadd.f32 0.0, %v6334
  %v6336 = vpop.f32.mrb[0].mxu0
  %6337 = vmatprep.mubr.bf16.mxu0 %v6178
  %6338 = vmatmul.mubr.bf16.gmra.mrb[0].mxu0 %v6177
  %v6339 = vpop.f32.mrb[0].mxu0
  %v6340 = vadd.f32 0.0, %v6339
  %v6341 = vpop.f32.mrb[0].mxu0
  %v6342 = vpop.f32.mrb[0].mxu0
  %v6343 = vadd.f32 0.0, %v6342
  %v6344 = vpop.f32.mrb[0].mxu0
  %6345 = vmatprep.mubr.bf16.mxu0 %v6180
  %6346 = vmatmul.mubr.bf16.gmra.mrb[0].mxu0 %v6179
  %v6347 = vpop.f32.mrb[0].mxu0
  %v6348 = vadd.f32 0.0, %v6347
  %v6349 = vpop.f32.mrb[0].mxu0
  %v6350 = vpop.f32.mrb[0].mxu0
  %v6351 = vadd.f32 0.0, %v6350
  %v6352 = vpop.f32.mrb[0].mxu0
  %6353 = vmatprep.mubr.bf16.mxu0 %v6182
  %6354 = vmatmul.mubr.bf16.gmra.mrb[0].mxu0 %v6181
  %v6355 = vpop.f32.mrb[0].mxu0
  %v6356 = vadd.f32 0.0, %v6355
  %v6357 = vpop.f32.mrb[0].mxu0
  %v6358 = vpop.f32.mrb[0].mxu0
  %v6359 = vpop.f32.mrb[0].mxu0
  %6360 = vdwg.mxu0
  %v6361 = vadd.f32 %v6094, %v6324
  %v6362 = vadd.f32 %v6095, %v6327
  %v6363 = vadd.f32 %v6096, %v6332
  %v6364 = vadd.f32 %v6097, %v6335
  %v6365 = vadd.f32 %v6098, %v6340
  %v6366 = vadd.f32 %v6099, %v6343
  %v6367 = vadd.f32 %v6100, %v6348
  %v6368 = vadd.f32 %v6101, %v6351
  %v6369 = vadd.f32 %v6102, %v6356
  %v6370 = vld [vmem:[%s4] sm:$0x1]
  %v6372 = vlaneseq
  %v6373 = vshrl.u32 %v6372, 7
  %v6374 = vsub.s32 0, %v6373
  %v6375 = vrot.slane %v6370, %v6374
  %v6377 = vadd.f32 %v6361, %v6375
  %v6378 = vadd.f32 %v6362, %v6375
  %v6379 = vadd.f32 %v6363, %v6375
  %v6380 = vadd.f32 %v6364, %v6375
  %v6381 = vadd.f32 %v6365, %v6375
  %v6382 = vadd.f32 %v6366, %v6375
  %v6383 = vadd.f32 %v6367, %v6375
  %v6384 = vadd.f32 %v6368, %v6375
  %v6385 = vadd.f32 %v6369, %v6375
  %v6386 = vmax.f32 %v6377, 0.0
  %v6387 = vmax.f32 %v6378, 0.0
  %v6388 = vmax.f32 %v6379, 0.0
  %v6389 = vmax.f32 %v6380, 0.0
  %v6390 = vmax.f32 %v6381, 0.0
  %v6391 = vmax.f32 %v6382, 0.0
  %v6392 = vmax.f32 %v6383, 0.0
  %v6393 = vmax.f32 %v6384, 0.0
  %v6394 = vmax.f32 %v6385, 0.0
  %v6395 = vpack.c.bf16 %v6387, %v6386
  %v6396 = vpack.c.bf16 %v6389, %v6388
  %v6397 = vpack.c.bf16 %v6391, %v6390
  %v6398 = vpack.c.bf16 %v6393, %v6392
  %v6399 = vpack.c.bf16 %v6394, %v6394
  %v6405 = vunpack.c.l.b16 %v6395
  %v6406 = vunpack.c.h.b16 %v6395
  %v6407 = vunpack.c.l.b16 %v6396
  %v6408 = vunpack.c.h.b16 %v6396
  %v6409 = vunpack.c.l.b16 %v6397
  %v6410 = vunpack.c.h.b16 %v6397
  %v6411 = vunpack.c.l.b16 %v6398
  %v6412 = vunpack.c.h.b16 %v6398
  %v6413 = vunpack.c.l.b16 %v6399
  %v6414 = vpack.c.b16 %v6405, %v6405
  %v6415 = vpack.c.b16 %v6406, %v6406
  %v6416 = vpack.c.b16 %v6407, %v6407
  %v6417 = vpack.c.b16 %v6408, %v6408
  %v6418 = vpack.c.b16 %v6409, %v6409
  %v6419 = vpack.c.b16 %v6410, %v6410
  %v6420 = vpack.c.b16 %v6411, %v6411
  %v6421 = vpack.c.b16 %v6412, %v6412
  %v6422 = vpack.c.b16 %v6413, %v6413
  %6432 = vst [vmem:[#allocation3] sm:$0xf] %v6414
  %6433 = vst [vmem:[#allocation3 + $0x4] sm:$0xf] %v6415
  %6434 = vst [vmem:[#allocation3 + $0x8] sm:$0xf] %v6416
  %6435 = vst [vmem:[#allocation3 + $0xc] sm:$0xf] %v6417
  %6436 = vst [vmem:[#allocation3 + $0x10] sm:$0xf] %v6418
  %6437 = vst [vmem:[#allocation3 + $0x14] sm:$0xf] %v6419
  %6438 = vst [vmem:[#allocation3 + $0x18] sm:$0xf] %v6420
  %6439 = vst [vmem:[#allocation3 + $0x1c] sm:$0xf] %v6421
  %6440 = vst [vmem:[#allocation3 + $0x20] sm:$0xf] %v6422
  %v6441 = vld [vmem:[#allocation3] sm:$0xf]
  %v6442 = vld [vmem:[%s5] sm:$0xf]
  %v6443 = vld [vmem:[%s5 + $0x4] sm:$0xf]
  %v6444 = vld [vmem:[%s5 + $0x8] sm:$0xf]
  %v6445 = vld [vmem:[%s5 + $0xc] sm:$0xf]
  %v6446 = vld [vmem:[%s5 + $0x10] sm:$0xf]
  %v6447 = vld [vmem:[%s5 + $0x14] sm:$0xf]
  %v6448 = vld [vmem:[%s5 + $0x18] sm:$0xf]
  %v6449 = vld [vmem:[%s5 + $0x1c] sm:$0xf]
  %v6450 = vld [vmem:[%s5 + $0x20] sm:$0xf]
  %v6451 = vld [vmem:[%s5 + $0x24] sm:$0xf]
  %v6452 = vld [vmem:[%s5 + $0x28] sm:$0xf]
  %v6453 = vld [vmem:[%s5 + $0x2c] sm:$0xf]
  %v6454 = vld [vmem:[%s5 + $0x30] sm:$0xf]
  %v6455 = vld [vmem:[%s5 + $0x34] sm:$0xf]
  %v6456 = vld [vmem:[%s5 + $0x38] sm:$0xf]
  %v6457 = vld [vmem:[%s5 + $0x3c] sm:$0xf]
  %s6458 = scalar_lea.vmem [#allocation3], 4
  %v6459 = vld [vmem:[%s6458] sm:$0xf]
  %s6460 = scalar_lea.vmem %s5, 64
  %v6461 = vld [vmem:[%s6460] sm:$0xf]
  %v6462 = vld [vmem:[%s6460 + $0x4] sm:$0xf]
  %v6463 = vld [vmem:[%s6460 + $0x8] sm:$0xf]
  %v6464 = vld [vmem:[%s6460 + $0xc] sm:$0xf]
  %v6465 = vld [vmem:[%s6460 + $0x10] sm:$0xf]
  %v6466 = vld [vmem:[%s6460 + $0x14] sm:$0xf]
  %v6467 = vld [vmem:[%s6460 + $0x18] sm:$0xf]
  %v6468 = vld [vmem:[%s6460 + $0x1c] sm:$0xf]
  %v6469 = vld [vmem:[%s6460 + $0x20] sm:$0xf]
  %v6470 = vld [vmem:[%s6460 + $0x24] sm:$0xf]
  %v6471 = vld [vmem:[%s6460 + $0x28] sm:$0xf]
  %v6472 = vld [vmem:[%s6460 + $0x2c] sm:$0xf]
  %v6473 = vld [vmem:[%s6460 + $0x30] sm:$0xf]
  %v6474 = vld [vmem:[%s6460 + $0x34] sm:$0xf]
  %v6475 = vld [vmem:[%s6460 + $0x38] sm:$0xf]
  %v6476 = vld [vmem:[%s6460 + $0x3c] sm:$0xf]
  %v6493 = vunpack.c.l.b16 %v6461
  %v6494 = vunpack.c.l.b16 %v6462
  %v6495 = vunpack.c.l.b16 %v6463
  %v6496 = vunpack.c.l.b16 %v6464
  %v6497 = vunpack.c.l.b16 %v6465
  %v6498 = vunpack.c.l.b16 %v6466
  %v6499 = vunpack.c.l.b16 %v6467
  %v6500 = vunpack.c.l.b16 %v6468
  %v6501 = vunpack.c.l.b16 %v6469
  %v6502 = vunpack.c.l.b16 %v6470
  %v6503 = vunpack.c.l.b16 %v6471
  %v6504 = vunpack.c.l.b16 %v6472
  %v6505 = vunpack.c.l.b16 %v6473
  %v6506 = vunpack.c.l.b16 %v6474
  %v6507 = vunpack.c.l.b16 %v6475
  %v6508 = vunpack.c.l.b16 %v6476
  %v6509 = vpack.c.b16 %v6494, %v6493
  %v6510 = vpack.c.b16 %v6496, %v6495
  %v6511 = vpack.c.b16 %v6498, %v6497
  %v6512 = vpack.c.b16 %v6500, %v6499
  %v6513 = vpack.c.b16 %v6502, %v6501
  %v6514 = vpack.c.b16 %v6504, %v6503
  %v6515 = vpack.c.b16 %v6506, %v6505
  %v6516 = vpack.c.b16 %v6508, %v6507
  %6525 = vmatprep.subr.bf16.mxu0 0
  %6526 = vmatpush1.bf16.msra.mxu0 %v6509
  %6527 = vmatprep.subr.bf16.mxu0 0
  %6528 = vmatpush1.bf16.msra.mxu0 %v6510
  %6529 = vmatprep.subr.bf16.mxu0 0
  %6530 = vmatpush1.bf16.msra.mxu0 %v6511
  %6531 = vmatprep.subr.bf16.mxu0 0
  %6532 = vmatpush1.bf16.msra.mxu0 %v6512
  %6533 = vmatprep.subr.bf16.mxu0 0
  %6534 = vmatpush1.bf16.msra.mxu0 %v6513
  %6535 = vmatprep.subr.bf16.mxu0 0
  %6536 = vmatpush1.bf16.msra.mxu0 %v6514
  %6537 = vmatprep.subr.bf16.mxu0 0
  %6538 = vmatpush1.bf16.msra.mxu0 %v6515
  %6539 = vmatprep.subr.bf16.mxu0 0
  %6540 = vmatpush1.bf16.msra.mxu0 %v6516
  %6541 = vmatprep.subr.bf16.mxu0 0
  %6542 = vmatpush1.bf16.msra.mxu0 0
  %6543 = vmatprep.subr.bf16.mxu0 0
  %6544 = vmatpush1.bf16.msra.mxu0 0
  %6545 = vmatprep.subr.bf16.mxu0 0
  %6546 = vmatpush1.bf16.msra.mxu0 0
  %6547 = vmatprep.subr.bf16.mxu0 0
  %6548 = vmatpush1.bf16.msra.mxu0 0
  %6549 = vmatprep.subr.bf16.mxu0 0
  %6550 = vmatpush1.bf16.msra.mxu0 0
  %6551 = vmatprep.subr.bf16.mxu0 0
  %6552 = vmatpush1.bf16.msra.mxu0 0
  %6553 = vmatprep.subr.bf16.mxu0 0
  %6554 = vmatpush1.bf16.msra.mxu0 0
  %6555 = vmatprep.subr.bf16.mxu0 0
  %6556 = vmatpush1.bf16.msra.mxu0 0
  %6557 = vmatprep.mubr.bf16.mxu0 0
  %6558 = vmatmul.mubr.bf16.gmra.mrb[0].mxu0 %v6459
  %v6559 = vpop.f32.mrb[0].mxu0
  %v6560 = vadd.f32 0.0, %v6559
  %v6561 = vpop.f32.mrb[0].mxu0
  %v6562 = vpop.f32.mrb[0].mxu0
  %v6563 = vpop.f32.mrb[0].mxu0
  %6564 = vdwg.mxu0
  %v6581 = vunpack.c.l.b16 %v6442
  %v6582 = vunpack.c.l.b16 %v6443
  %v6583 = vunpack.c.l.b16 %v6444
  %v6584 = vunpack.c.l.b16 %v6445
  %v6585 = vunpack.c.l.b16 %v6446
  %v6586 = vunpack.c.l.b16 %v6447
  %v6587 = vunpack.c.l.b16 %v6448
  %v6588 = vunpack.c.l.b16 %v6449
  %v6589 = vunpack.c.l.b16 %v6450
  %v6590 = vunpack.c.l.b16 %v6451
  %v6591 = vunpack.c.l.b16 %v6452
  %v6592 = vunpack.c.l.b16 %v6453
  %v6593 = vunpack.c.l.b16 %v6454
  %v6594 = vunpack.c.l.b16 %v6455
  %v6595 = vunpack.c.l.b16 %v6456
  %v6596 = vunpack.c.l.b16 %v6457
  %v6597 = vpack.c.b16 %v6582, %v6581
  %v6598 = vpack.c.b16 %v6584, %v6583
  %v6599 = vpack.c.b16 %v6586, %v6585
  %v6600 = vpack.c.b16 %v6588, %v6587
  %v6601 = vpack.c.b16 %v6590, %v6589
  %v6602 = vpack.c.b16 %v6592, %v6591
  %v6603 = vpack.c.b16 %v6594, %v6593
  %v6604 = vpack.c.b16 %v6596, %v6595
  %6613 = vmatprep.subr.bf16.mxu0 0
  %6614 = vmatpush1.bf16.msra.mxu0 %v6597
  %6615 = vmatprep.subr.bf16.mxu0 0
  %6616 = vmatpush1.bf16.msra.mxu0 %v6598
  %6617 = vmatprep.subr.bf16.mxu0 0
  %6618 = vmatpush1.bf16.msra.mxu0 %v6599
  %6619 = vmatprep.subr.bf16.mxu0 0
  %6620 = vmatpush1.bf16.msra.mxu0 %v6600
  %6621 = vmatprep.subr.bf16.mxu0 0
  %6622 = vmatpush1.bf16.msra.mxu0 %v6601
  %6623 = vmatprep.subr.bf16.mxu0 0
  %6624 = vmatpush1.bf16.msra.mxu0 %v6602
  %6625 = vmatprep.subr.bf16.mxu0 0
  %6626 = vmatpush1.bf16.msra.mxu0 %v6603
  %6627 = vmatprep.subr.bf16.mxu0 0
  %6628 = vmatpush1.bf16.msra.mxu0 %v6604
  %6629 = vmatprep.subr.bf16.mxu0 0
  %6630 = vmatpush1.bf16.msra.mxu0 0
  %6631 = vmatprep.subr.bf16.mxu0 0
  %6632 = vmatpush1.bf16.msra.mxu0 0
  %6633 = vmatprep.subr.bf16.mxu0 0
  %6634 = vmatpush1.bf16.msra.mxu0 0
  %6635 = vmatprep.subr.bf16.mxu0 0
  %6636 = vmatpush1.bf16.msra.mxu0 0
  %6637 = vmatprep.subr.bf16.mxu0 0
  %6638 = vmatpush1.bf16.msra.mxu0 0
  %6639 = vmatprep.subr.bf16.mxu0 0
  %6640 = vmatpush1.bf16.msra.mxu0 0
  %6641 = vmatprep.subr.bf16.mxu0 0
  %6642 = vmatpush1.bf16.msra.mxu0 0
  %6643 = vmatprep.subr.bf16.mxu0 0
  %6644 = vmatpush1.bf16.msra.mxu0 0
  %6645 = vmatprep.mubr.bf16.mxu0 0
  %6646 = vmatmul.mubr.bf16.gmra.mrb[0].mxu0 %v6441
  %v6647 = vpop.f32.mrb[0].mxu0
  %v6648 = vadd.f32 %v6560, %v6647
  %v6649 = vpop.f32.mrb[0].mxu0
  %v6650 = vpop.f32.mrb[0].mxu0
  %v6651 = vpop.f32.mrb[0].mxu0
  %6652 = vdwg.mxu0
  %s6653 = scalar_lea.vmem [#allocation3], 8
  %v6654 = vld [vmem:[%s6653] sm:$0xf]
  %s6655 = scalar_lea.vmem %s5, 128
  %v6656 = vld [vmem:[%s6655] sm:$0xf]
  %v6657 = vld [vmem:[%s6655 + $0x4] sm:$0xf]
  %v6658 = vld [vmem:[%s6655 + $0x8] sm:$0xf]
  %v6659 = vld [vmem:[%s6655 + $0xc] sm:$0xf]
  %v6660 = vld [vmem:[%s6655 + $0x10] sm:$0xf]
  %v6661 = vld [vmem:[%s6655 + $0x14] sm:$0xf]
  %v6662 = vld [vmem:[%s6655 + $0x18] sm:$0xf]
  %v6663 = vld [vmem:[%s6655 + $0x1c] sm:$0xf]
  %v6664 = vld [vmem:[%s6655 + $0x20] sm:$0xf]
  %v6665 = vld [vmem:[%s6655 + $0x24] sm:$0xf]
  %v6666 = vld [vmem:[%s6655 + $0x28] sm:$0xf]
  %v6667 = vld [vmem:[%s6655 + $0x2c] sm:$0xf]
  %v6668 = vld [vmem:[%s6655 + $0x30] sm:$0xf]
  %v6669 = vld [vmem:[%s6655 + $0x34] sm:$0xf]
  %v6670 = vld [vmem:[%s6655 + $0x38] sm:$0xf]
  %v6671 = vld [vmem:[%s6655 + $0x3c] sm:$0xf]
  %v6688 = vunpack.c.l.b16 %v6656
  %v6689 = vunpack.c.l.b16 %v6657
  %v6690 = vunpack.c.l.b16 %v6658
  %v6691 = vunpack.c.l.b16 %v6659
  %v6692 = vunpack.c.l.b16 %v6660
  %v6693 = vunpack.c.l.b16 %v6661
  %v6694 = vunpack.c.l.b16 %v6662
  %v6695 = vunpack.c.l.b16 %v6663
  %v6696 = vunpack.c.l.b16 %v6664
  %v6697 = vunpack.c.l.b16 %v6665
  %v6698 = vunpack.c.l.b16 %v6666
  %v6699 = vunpack.c.l.b16 %v6667
  %v6700 = vunpack.c.l.b16 %v6668
  %v6701 = vunpack.c.l.b16 %v6669
  %v6702 = vunpack.c.l.b16 %v6670
  %v6703 = vunpack.c.l.b16 %v6671
  %v6704 = vpack.c.b16 %v6689, %v6688
  %v6705 = vpack.c.b16 %v6691, %v6690
  %v6706 = vpack.c.b16 %v6693, %v6692
  %v6707 = vpack.c.b16 %v6695, %v6694
  %v6708 = vpack.c.b16 %v6697, %v6696
  %v6709 = vpack.c.b16 %v6699, %v6698
  %v6710 = vpack.c.b16 %v6701, %v6700
  %v6711 = vpack.c.b16 %v6703, %v6702
  %6720 = vmatprep.subr.bf16.mxu0 0
  %6721 = vmatpush1.bf16.msra.mxu0 %v6704
  %6722 = vmatprep.subr.bf16.mxu0 0
  %6723 = vmatpush1.bf16.msra.mxu0 %v6705
  %6724 = vmatprep.subr.bf16.mxu0 0
  %6725 = vmatpush1.bf16.msra.mxu0 %v6706
  %6726 = vmatprep.subr.bf16.mxu0 0
  %6727 = vmatpush1.bf16.msra.mxu0 %v6707
  %6728 = vmatprep.subr.bf16.mxu0 0
  %6729 = vmatpush1.bf16.msra.mxu0 %v6708
  %6730 = vmatprep.subr.bf16.mxu0 0
  %6731 = vmatpush1.bf16.msra.mxu0 %v6709
  %6732 = vmatprep.subr.bf16.mxu0 0
  %6733 = vmatpush1.bf16.msra.mxu0 %v6710
  %6734 = vmatprep.subr.bf16.mxu0 0
  %6735 = vmatpush1.bf16.msra.mxu0 %v6711
  %6736 = vmatprep.subr.bf16.mxu0 0
  %6737 = vmatpush1.bf16.msra.mxu0 0
  %6738 = vmatprep.subr.bf16.mxu0 0
  %6739 = vmatpush1.bf16.msra.mxu0 0
  %6740 = vmatprep.subr.bf16.mxu0 0
  %6741 = vmatpush1.bf16.msra.mxu0 0
  %6742 = vmatprep.subr.bf16.mxu0 0
  %6743 = vmatpush1.bf16.msra.mxu0 0
  %6744 = vmatprep.subr.bf16.mxu0 0
  %6745 = vmatpush1.bf16.msra.mxu0 0
  %6746 = vmatprep.subr.bf16.mxu0 0
  %6747 = vmatpush1.bf16.msra.mxu0 0
  %6748 = vmatprep.subr.bf16.mxu0 0
  %6749 = vmatpush1.bf16.msra.mxu0 0
  %6750 = vmatprep.subr.bf16.mxu0 0
  %6751 = vmatpush1.bf16.msra.mxu0 0
  %6752 = vmatprep.mubr.bf16.mxu0 0
  %6753 = vmatmul.mubr.bf16.gmra.mrb[0].mxu0 %v6654
  %v6754 = vpop.f32.mrb[0].mxu0
  %v6755 = vadd.f32 0.0, %v6754
  %v6756 = vpop.f32.mrb[0].mxu0
  %v6757 = vpop.f32.mrb[0].mxu0
  %v6758 = vpop.f32.mrb[0].mxu0
  %6759 = vdwg.mxu0
  %v6760 = vadd.f32 %v6648, %v6755
  %s6761 = scalar_lea.vmem [#allocation3], 12
  %v6762 = vld [vmem:[%s6761] sm:$0xf]
  %s6763 = scalar_lea.vmem %s5, 192
  %v6764 = vld [vmem:[%s6763] sm:$0xf]
  %v6765 = vld [vmem:[%s6763 + $0x4] sm:$0xf]
  %v6766 = vld [vmem:[%s6763 + $0x8] sm:$0xf]
  %v6767 = vld [vmem:[%s6763 + $0xc] sm:$0xf]
  %v6768 = vld [vmem:[%s6763 + $0x10] sm:$0xf]
  %v6769 = vld [vmem:[%s6763 + $0x14] sm:$0xf]
  %v6770 = vld [vmem:[%s6763 + $0x18] sm:$0xf]
  %v6771 = vld [vmem:[%s6763 + $0x1c] sm:$0xf]
  %v6772 = vld [vmem:[%s6763 + $0x20] sm:$0xf]
  %v6773 = vld [vmem:[%s6763 + $0x24] sm:$0xf]
  %v6774 = vld [vmem:[%s6763 + $0x28] sm:$0xf]
  %v6775 = vld [vmem:[%s6763 + $0x2c] sm:$0xf]
  %v6776 = vld [vmem:[%s6763 + $0x30] sm:$0xf]
  %v6777 = vld [vmem:[%s6763 + $0x34] sm:$0xf]
  %v6778 = vld [vmem:[%s6763 + $0x38] sm:$0xf]
  %v6779 = vld [vmem:[%s6763 + $0x3c] sm:$0xf]
  %v6796 = vunpack.c.l.b16 %v6764
  %v6797 = vunpack.c.l.b16 %v6765
  %v6798 = vunpack.c.l.b16 %v6766
  %v6799 = vunpack.c.l.b16 %v6767
  %v6800 = vunpack.c.l.b16 %v6768
  %v6801 = vunpack.c.l.b16 %v6769
  %v6802 = vunpack.c.l.b16 %v6770
  %v6803 = vunpack.c.l.b16 %v6771
  %v6804 = vunpack.c.l.b16 %v6772
  %v6805 = vunpack.c.l.b16 %v6773
  %v6806 = vunpack.c.l.b16 %v6774
  %v6807 = vunpack.c.l.b16 %v6775
  %v6808 = vunpack.c.l.b16 %v6776
  %v6809 = vunpack.c.l.b16 %v6777
  %v6810 = vunpack.c.l.b16 %v6778
  %v6811 = vunpack.c.l.b16 %v6779
  %v6812 = vpack.c.b16 %v6797, %v6796
  %v6813 = vpack.c.b16 %v6799, %v6798
  %v6814 = vpack.c.b16 %v6801, %v6800
  %v6815 = vpack.c.b16 %v6803, %v6802
  %v6816 = vpack.c.b16 %v6805, %v6804
  %v6817 = vpack.c.b16 %v6807, %v6806
  %v6818 = vpack.c.b16 %v6809, %v6808
  %v6819 = vpack.c.b16 %v6811, %v6810
  %6828 = vmatprep.subr.bf16.mxu0 0
  %6829 = vmatpush1.bf16.msra.mxu0 %v6812
  %6830 = vmatprep.subr.bf16.mxu0 0
  %6831 = vmatpush1.bf16.msra.mxu0 %v6813
  %6832 = vmatprep.subr.bf16.mxu0 0
  %6833 = vmatpush1.bf16.msra.mxu0 %v6814
  %6834 = vmatprep.subr.bf16.mxu0 0
  %6835 = vmatpush1.bf16.msra.mxu0 %v6815
  %6836 = vmatprep.subr.bf16.mxu0 0
  %6837 = vmatpush1.bf16.msra.mxu0 %v6816
  %6838 = vmatprep.subr.bf16.mxu0 0
  %6839 = vmatpush1.bf16.msra.mxu0 %v6817
  %6840 = vmatprep.subr.bf16.mxu0 0
  %6841 = vmatpush1.bf16.msra.mxu0 %v6818
  %6842 = vmatprep.subr.bf16.mxu0 0
  %6843 = vmatpush1.bf16.msra.mxu0 %v6819
  %6844 = vmatprep.subr.bf16.mxu0 0
  %6845 = vmatpush1.bf16.msra.mxu0 0
  %6846 = vmatprep.subr.bf16.mxu0 0
  %6847 = vmatpush1.bf16.msra.mxu0 0
  %6848 = vmatprep.subr.bf16.mxu0 0
  %6849 = vmatpush1.bf16.msra.mxu0 0
  %6850 = vmatprep.subr.bf16.mxu0 0
  %6851 = vmatpush1.bf16.msra.mxu0 0
  %6852 = vmatprep.subr.bf16.mxu0 0
  %6853 = vmatpush1.bf16.msra.mxu0 0
  %6854 = vmatprep.subr.bf16.mxu0 0
  %6855 = vmatpush1.bf16.msra.mxu0 0
  %6856 = vmatprep.subr.bf16.mxu0 0
  %6857 = vmatpush1.bf16.msra.mxu0 0
  %6858 = vmatprep.subr.bf16.mxu0 0
  %6859 = vmatpush1.bf16.msra.mxu0 0
  %6860 = vmatprep.mubr.bf16.mxu0 0
  %6861 = vmatmul.mubr.bf16.gmra.mrb[0].mxu0 %v6762
  %v6862 = vpop.f32.mrb[0].mxu0
  %v6863 = vadd.f32 0.0, %v6862
  %v6864 = vpop.f32.mrb[0].mxu0
  %v6865 = vpop.f32.mrb[0].mxu0
  %v6866 = vpop.f32.mrb[0].mxu0
  %6867 = vdwg.mxu0
  %v6868 = vadd.f32 %v6760, %v6863
  %s6869 = scalar_lea.vmem [#allocation3], 16
  %v6870 = vld [vmem:[%s6869] sm:$0xf]
  %s6871 = scalar_lea.vmem %s5, 256
  %v6872 = vld [vmem:[%s6871] sm:$0xf]
  %v6873 = vld [vmem:[%s6871 + $0x4] sm:$0xf]
  %v6874 = vld [vmem:[%s6871 + $0x8] sm:$0xf]
  %v6875 = vld [vmem:[%s6871 + $0xc] sm:$0xf]
  %v6876 = vld [vmem:[%s6871 + $0x10] sm:$0xf]
  %v6877 = vld [vmem:[%s6871 + $0x14] sm:$0xf]
  %v6878 = vld [vmem:[%s6871 + $0x18] sm:$0xf]
  %v6879 = vld [vmem:[%s6871 + $0x1c] sm:$0xf]
  %v6880 = vld [vmem:[%s6871 + $0x20] sm:$0xf]
  %v6881 = vld [vmem:[%s6871 + $0x24] sm:$0xf]
  %v6882 = vld [vmem:[%s6871 + $0x28] sm:$0xf]
  %v6883 = vld [vmem:[%s6871 + $0x2c] sm:$0xf]
  %v6884 = vld [vmem:[%s6871 + $0x30] sm:$0xf]
  %v6885 = vld [vmem:[%s6871 + $0x34] sm:$0xf]
  %v6886 = vld [vmem:[%s6871 + $0x38] sm:$0xf]
  %v6887 = vld [vmem:[%s6871 + $0x3c] sm:$0xf]
  %v6904 = vunpack.c.l.b16 %v6872
  %v6905 = vunpack.c.l.b16 %v6873
  %v6906 = vunpack.c.l.b16 %v6874
  %v6907 = vunpack.c.l.b16 %v6875
  %v6908 = vunpack.c.l.b16 %v6876
  %v6909 = vunpack.c.l.b16 %v6877
  %v6910 = vunpack.c.l.b16 %v6878
  %v6911 = vunpack.c.l.b16 %v6879
  %v6912 = vunpack.c.l.b16 %v6880
  %v6913 = vunpack.c.l.b16 %v6881
  %v6914 = vunpack.c.l.b16 %v6882
  %v6915 = vunpack.c.l.b16 %v6883
  %v6916 = vunpack.c.l.b16 %v6884
  %v6917 = vunpack.c.l.b16 %v6885
  %v6918 = vunpack.c.l.b16 %v6886
  %v6919 = vunpack.c.l.b16 %v6887
  %v6920 = vpack.c.b16 %v6905, %v6904
  %v6921 = vpack.c.b16 %v6907, %v6906
  %v6922 = vpack.c.b16 %v6909, %v6908
  %v6923 = vpack.c.b16 %v6911, %v6910
  %v6924 = vpack.c.b16 %v6913, %v6912
  %v6925 = vpack.c.b16 %v6915, %v6914
  %v6926 = vpack.c.b16 %v6917, %v6916
  %v6927 = vpack.c.b16 %v6919, %v6918
  %6936 = vmatprep.subr.bf16.mxu0 0
  %6937 = vmatpush1.bf16.msra.mxu0 %v6920
  %6938 = vmatprep.subr.bf16.mxu0 0
  %6939 = vmatpush1.bf16.msra.mxu0 %v6921
  %6940 = vmatprep.subr.bf16.mxu0 0
  %6941 = vmatpush1.bf16.msra.mxu0 %v6922
  %6942 = vmatprep.subr.bf16.mxu0 0
  %6943 = vmatpush1.bf16.msra.mxu0 %v6923
  %6944 = vmatprep.subr.bf16.mxu0 0
  %6945 = vmatpush1.bf16.msra.mxu0 %v6924
  %6946 = vmatprep.subr.bf16.mxu0 0
  %6947 = vmatpush1.bf16.msra.mxu0 %v6925
  %6948 = vmatprep.subr.bf16.mxu0 0
  %6949 = vmatpush1.bf16.msra.mxu0 %v6926
  %6950 = vmatprep.subr.bf16.mxu0 0
  %6951 = vmatpush1.bf16.msra.mxu0 %v6927
  %6952 = vmatprep.subr.bf16.mxu0 0
  %6953 = vmatpush1.bf16.msra.mxu0 0
  %6954 = vmatprep.subr.bf16.mxu0 0
  %6955 = vmatpush1.bf16.msra.mxu0 0
  %6956 = vmatprep.subr.bf16.mxu0 0
  %6957 = vmatpush1.bf16.msra.mxu0 0
  %6958 = vmatprep.subr.bf16.mxu0 0
  %6959 = vmatpush1.bf16.msra.mxu0 0
  %6960 = vmatprep.subr.bf16.mxu0 0
  %6961 = vmatpush1.bf16.msra.mxu0 0
  %6962 = vmatprep.subr.bf16.mxu0 0
  %6963 = vmatpush1.bf16.msra.mxu0 0
  %6964 = vmatprep.subr.bf16.mxu0 0
  %6965 = vmatpush1.bf16.msra.mxu0 0
  %6966 = vmatprep.subr.bf16.mxu0 0
  %6967 = vmatpush1.bf16.msra.mxu0 0
  %6968 = vmatprep.mubr.bf16.mxu0 0
  %6969 = vmatmul.mubr.bf16.gmra.mrb[0].mxu0 %v6870
  %v6970 = vpop.f32.mrb[0].mxu0
  %v6971 = vadd.f32 0.0, %v6970
  %v6972 = vpop.f32.mrb[0].mxu0
  %v6973 = vpop.f32.mrb[0].mxu0
  %v6974 = vpop.f32.mrb[0].mxu0
  %6975 = vdwg.mxu0
  %v6976 = vadd.f32 %v6868, %v6971
  %s6977 = scalar_lea.vmem [#allocation3], 20
  %v6978 = vld [vmem:[%s6977] sm:$0xf]
  %s6979 = scalar_lea.vmem %s5, 320
  %v6980 = vld [vmem:[%s6979] sm:$0xf]
  %v6981 = vld [vmem:[%s6979 + $0x4] sm:$0xf]
  %v6982 = vld [vmem:[%s6979 + $0x8] sm:$0xf]
  %v6983 = vld [vmem:[%s6979 + $0xc] sm:$0xf]
  %v6984 = vld [vmem:[%s6979 + $0x10] sm:$0xf]
  %v6985 = vld [vmem:[%s6979 + $0x14] sm:$0xf]
  %v6986 = vld [vmem:[%s6979 + $0x18] sm:$0xf]
  %v6987 = vld [vmem:[%s6979 + $0x1c] sm:$0xf]
  %v6988 = vld [vmem:[%s6979 + $0x20] sm:$0xf]
  %v6989 = vld [vmem:[%s6979 + $0x24] sm:$0xf]
  %v6990 = vld [vmem:[%s6979 + $0x28] sm:$0xf]
  %v6991 = vld [vmem:[%s6979 + $0x2c] sm:$0xf]
  %v6992 = vld [vmem:[%s6979 + $0x30] sm:$0xf]
  %v6993 = vld [vmem:[%s6979 + $0x34] sm:$0xf]
  %v6994 = vld [vmem:[%s6979 + $0x38] sm:$0xf]
  %v6995 = vld [vmem:[%s6979 + $0x3c] sm:$0xf]
  %v7012 = vunpack.c.l.b16 %v6980
  %v7013 = vunpack.c.l.b16 %v6981
  %v7014 = vunpack.c.l.b16 %v6982
  %v7015 = vunpack.c.l.b16 %v6983
  %v7016 = vunpack.c.l.b16 %v6984
  %v7017 = vunpack.c.l.b16 %v6985
  %v7018 = vunpack.c.l.b16 %v6986
  %v7019 = vunpack.c.l.b16 %v6987
  %v7020 = vunpack.c.l.b16 %v6988
  %v7021 = vunpack.c.l.b16 %v6989
  %v7022 = vunpack.c.l.b16 %v6990
  %v7023 = vunpack.c.l.b16 %v6991
  %v7024 = vunpack.c.l.b16 %v6992
  %v7025 = vunpack.c.l.b16 %v6993
  %v7026 = vunpack.c.l.b16 %v6994
  %v7027 = vunpack.c.l.b16 %v6995
  %v7028 = vpack.c.b16 %v7013, %v7012
  %v7029 = vpack.c.b16 %v7015, %v7014
  %v7030 = vpack.c.b16 %v7017, %v7016
  %v7031 = vpack.c.b16 %v7019, %v7018
  %v7032 = vpack.c.b16 %v7021, %v7020
  %v7033 = vpack.c.b16 %v7023, %v7022
  %v7034 = vpack.c.b16 %v7025, %v7024
  %v7035 = vpack.c.b16 %v7027, %v7026
  %7044 = vmatprep.subr.bf16.mxu0 0
  %7045 = vmatpush1.bf16.msra.mxu0 %v7028
  %7046 = vmatprep.subr.bf16.mxu0 0
  %7047 = vmatpush1.bf16.msra.mxu0 %v7029
  %7048 = vmatprep.subr.bf16.mxu0 0
  %7049 = vmatpush1.bf16.msra.mxu0 %v7030
  %7050 = vmatprep.subr.bf16.mxu0 0
  %7051 = vmatpush1.bf16.msra.mxu0 %v7031
  %7052 = vmatprep.subr.bf16.mxu0 0
  %7053 = vmatpush1.bf16.msra.mxu0 %v7032
  %7054 = vmatprep.subr.bf16.mxu0 0
  %7055 = vmatpush1.bf16.msra.mxu0 %v7033
  %7056 = vmatprep.subr.bf16.mxu0 0
  %7057 = vmatpush1.bf16.msra.mxu0 %v7034
  %7058 = vmatprep.subr.bf16.mxu0 0
  %7059 = vmatpush1.bf16.msra.mxu0 %v7035
  %7060 = vmatprep.subr.bf16.mxu0 0
  %7061 = vmatpush1.bf16.msra.mxu0 0
  %7062 = vmatprep.subr.bf16.mxu0 0
  %7063 = vmatpush1.bf16.msra.mxu0 0
  %7064 = vmatprep.subr.bf16.mxu0 0
  %7065 = vmatpush1.bf16.msra.mxu0 0
  %7066 = vmatprep.subr.bf16.mxu0 0
  %7067 = vmatpush1.bf16.msra.mxu0 0
  %7068 = vmatprep.subr.bf16.mxu0 0
  %7069 = vmatpush1.bf16.msra.mxu0 0
  %7070 = vmatprep.subr.bf16.mxu0 0
  %7071 = vmatpush1.bf16.msra.mxu0 0
  %7072 = vmatprep.subr.bf16.mxu0 0
  %7073 = vmatpush1.bf16.msra.mxu0 0
  %7074 = vmatprep.subr.bf16.mxu0 0
  %7075 = vmatpush1.bf16.msra.mxu0 0
  %7076 = vmatprep.mubr.bf16.mxu0 0
  %7077 = vmatmul.mubr.bf16.gmra.mrb[0].mxu0 %v6978
  %v7078 = vpop.f32.mrb[0].mxu0
  %v7079 = vadd.f32 0.0, %v7078
  %v7080 = vpop.f32.mrb[0].mxu0
  %v7081 = vpop.f32.mrb[0].mxu0
  %v7082 = vpop.f32.mrb[0].mxu0
  %7083 = vdwg.mxu0
  %v7084 = vadd.f32 %v6976, %v7079
  %s7085 = scalar_lea.vmem [#allocation3], 24
  %v7086 = vld [vmem:[%s7085] sm:$0xf]
  %s7087 = scalar_lea.vmem %s5, 384
  %v7088 = vld [vmem:[%s7087] sm:$0xf]
  %v7089 = vld [vmem:[%s7087 + $0x4] sm:$0xf]
  %v7090 = vld [vmem:[%s7087 + $0x8] sm:$0xf]
  %v7091 = vld [vmem:[%s7087 + $0xc] sm:$0xf]
  %v7092 = vld [vmem:[%s7087 + $0x10] sm:$0xf]
  %v7093 = vld [vmem:[%s7087 + $0x14] sm:$0xf]
  %v7094 = vld [vmem:[%s7087 + $0x18] sm:$0xf]
  %v7095 = vld [vmem:[%s7087 + $0x1c] sm:$0xf]
  %v7096 = vld [vmem:[%s7087 + $0x20] sm:$0xf]
  %v7097 = vld [vmem:[%s7087 + $0x24] sm:$0xf]
  %v7098 = vld [vmem:[%s7087 + $0x28] sm:$0xf]
  %v7099 = vld [vmem:[%s7087 + $0x2c] sm:$0xf]
  %v7100 = vld [vmem:[%s7087 + $0x30] sm:$0xf]
  %v7101 = vld [vmem:[%s7087 + $0x34] sm:$0xf]
  %v7102 = vld [vmem:[%s7087 + $0x38] sm:$0xf]
  %v7103 = vld [vmem:[%s7087 + $0x3c] sm:$0xf]
  %v7120 = vunpack.c.l.b16 %v7088
  %v7121 = vunpack.c.l.b16 %v7089
  %v7122 = vunpack.c.l.b16 %v7090
  %v7123 = vunpack.c.l.b16 %v7091
  %v7124 = vunpack.c.l.b16 %v7092
  %v7125 = vunpack.c.l.b16 %v7093
  %v7126 = vunpack.c.l.b16 %v7094
  %v7127 = vunpack.c.l.b16 %v7095
  %v7128 = vunpack.c.l.b16 %v7096
  %v7129 = vunpack.c.l.b16 %v7097
  %v7130 = vunpack.c.l.b16 %v7098
  %v7131 = vunpack.c.l.b16 %v7099
  %v7132 = vunpack.c.l.b16 %v7100
  %v7133 = vunpack.c.l.b16 %v7101
  %v7134 = vunpack.c.l.b16 %v7102
  %v7135 = vunpack.c.l.b16 %v7103
  %v7136 = vpack.c.b16 %v7121, %v7120
  %v7137 = vpack.c.b16 %v7123, %v7122
  %v7138 = vpack.c.b16 %v7125, %v7124
  %v7139 = vpack.c.b16 %v7127, %v7126
  %v7140 = vpack.c.b16 %v7129, %v7128
  %v7141 = vpack.c.b16 %v7131, %v7130
  %v7142 = vpack.c.b16 %v7133, %v7132
  %v7143 = vpack.c.b16 %v7135, %v7134
  %7152 = vmatprep.subr.bf16.mxu0 0
  %7153 = vmatpush1.bf16.msra.mxu0 %v7136
  %7154 = vmatprep.subr.bf16.mxu0 0
  %7155 = vmatpush1.bf16.msra.mxu0 %v7137
  %7156 = vmatprep.subr.bf16.mxu0 0
  %7157 = vmatpush1.bf16.msra.mxu0 %v7138
  %7158 = vmatprep.subr.bf16.mxu0 0
  %7159 = vmatpush1.bf16.msra.mxu0 %v7139
  %7160 = vmatprep.subr.bf16.mxu0 0
  %7161 = vmatpush1.bf16.msra.mxu0 %v7140
  %7162 = vmatprep.subr.bf16.mxu0 0
  %7163 = vmatpush1.bf16.msra.mxu0 %v7141
  %7164 = vmatprep.subr.bf16.mxu0 0
  %7165 = vmatpush1.bf16.msra.mxu0 %v7142
  %7166 = vmatprep.subr.bf16.mxu0 0
  %7167 = vmatpush1.bf16.msra.mxu0 %v7143
  %7168 = vmatprep.subr.bf16.mxu0 0
  %7169 = vmatpush1.bf16.msra.mxu0 0
  %7170 = vmatprep.subr.bf16.mxu0 0
  %7171 = vmatpush1.bf16.msra.mxu0 0
  %7172 = vmatprep.subr.bf16.mxu0 0
  %7173 = vmatpush1.bf16.msra.mxu0 0
  %7174 = vmatprep.subr.bf16.mxu0 0
  %7175 = vmatpush1.bf16.msra.mxu0 0
  %7176 = vmatprep.subr.bf16.mxu0 0
  %7177 = vmatpush1.bf16.msra.mxu0 0
  %7178 = vmatprep.subr.bf16.mxu0 0
  %7179 = vmatpush1.bf16.msra.mxu0 0
  %7180 = vmatprep.subr.bf16.mxu0 0
  %7181 = vmatpush1.bf16.msra.mxu0 0
  %7182 = vmatprep.subr.bf16.mxu0 0
  %7183 = vmatpush1.bf16.msra.mxu0 0
  %7184 = vmatprep.mubr.bf16.mxu0 0
  %7185 = vmatmul.mubr.bf16.gmra.mrb[0].mxu0 %v7086
  %v7186 = vpop.f32.mrb[0].mxu0
  %v7187 = vadd.f32 0.0, %v7186
  %v7188 = vpop.f32.mrb[0].mxu0
  %v7189 = vpop.f32.mrb[0].mxu0
  %v7190 = vpop.f32.mrb[0].mxu0
  %7191 = vdwg.mxu0
  %v7192 = vadd.f32 %v7084, %v7187
  %s7193 = scalar_lea.vmem [#allocation3], 28
  %v7194 = vld [vmem:[%s7193] sm:$0xf]
  %s7195 = scalar_lea.vmem %s5, 448
  %v7196 = vld [vmem:[%s7195] sm:$0xf]
  %v7197 = vld [vmem:[%s7195 + $0x4] sm:$0xf]
  %v7198 = vld [vmem:[%s7195 + $0x8] sm:$0xf]
  %v7199 = vld [vmem:[%s7195 + $0xc] sm:$0xf]
  %v7200 = vld [vmem:[%s7195 + $0x10] sm:$0xf]
  %v7201 = vld [vmem:[%s7195 + $0x14] sm:$0xf]
  %v7202 = vld [vmem:[%s7195 + $0x18] sm:$0xf]
  %v7203 = vld [vmem:[%s7195 + $0x1c] sm:$0xf]
  %v7204 = vld [vmem:[%s7195 + $0x20] sm:$0xf]
  %v7205 = vld [vmem:[%s7195 + $0x24] sm:$0xf]
  %v7206 = vld [vmem:[%s7195 + $0x28] sm:$0xf]
  %v7207 = vld [vmem:[%s7195 + $0x2c] sm:$0xf]
  %v7208 = vld [vmem:[%s7195 + $0x30] sm:$0xf]
  %v7209 = vld [vmem:[%s7195 + $0x34] sm:$0xf]
  %v7210 = vld [vmem:[%s7195 + $0x38] sm:$0xf]
  %v7211 = vld [vmem:[%s7195 + $0x3c] sm:$0xf]
  %v7228 = vunpack.c.l.b16 %v7196
  %v7229 = vunpack.c.l.b16 %v7197
  %v7230 = vunpack.c.l.b16 %v7198
  %v7231 = vunpack.c.l.b16 %v7199
  %v7232 = vunpack.c.l.b16 %v7200
  %v7233 = vunpack.c.l.b16 %v7201
  %v7234 = vunpack.c.l.b16 %v7202
  %v7235 = vunpack.c.l.b16 %v7203
  %v7236 = vunpack.c.l.b16 %v7204
  %v7237 = vunpack.c.l.b16 %v7205
  %v7238 = vunpack.c.l.b16 %v7206
  %v7239 = vunpack.c.l.b16 %v7207
  %v7240 = vunpack.c.l.b16 %v7208
  %v7241 = vunpack.c.l.b16 %v7209
  %v7242 = vunpack.c.l.b16 %v7210
  %v7243 = vunpack.c.l.b16 %v7211
  %v7244 = vpack.c.b16 %v7229, %v7228
  %v7245 = vpack.c.b16 %v7231, %v7230
  %v7246 = vpack.c.b16 %v7233, %v7232
  %v7247 = vpack.c.b16 %v7235, %v7234
  %v7248 = vpack.c.b16 %v7237, %v7236
  %v7249 = vpack.c.b16 %v7239, %v7238
  %v7250 = vpack.c.b16 %v7241, %v7240
  %v7251 = vpack.c.b16 %v7243, %v7242
  %7260 = vmatprep.subr.bf16.mxu0 0
  %7261 = vmatpush1.bf16.msra.mxu0 %v7244
  %7262 = vmatprep.subr.bf16.mxu0 0
  %7263 = vmatpush1.bf16.msra.mxu0 %v7245
  %7264 = vmatprep.subr.bf16.mxu0 0
  %7265 = vmatpush1.bf16.msra.mxu0 %v7246
  %7266 = vmatprep.subr.bf16.mxu0 0
  %7267 = vmatpush1.bf16.msra.mxu0 %v7247
  %7268 = vmatprep.subr.bf16.mxu0 0
  %7269 = vmatpush1.bf16.msra.mxu0 %v7248
  %7270 = vmatprep.subr.bf16.mxu0 0
  %7271 = vmatpush1.bf16.msra.mxu0 %v7249
  %7272 = vmatprep.subr.bf16.mxu0 0
  %7273 = vmatpush1.bf16.msra.mxu0 %v7250
  %7274 = vmatprep.subr.bf16.mxu0 0
  %7275 = vmatpush1.bf16.msra.mxu0 %v7251
  %7276 = vmatprep.subr.bf16.mxu0 0
  %7277 = vmatpush1.bf16.msra.mxu0 0
  %7278 = vmatprep.subr.bf16.mxu0 0
  %7279 = vmatpush1.bf16.msra.mxu0 0
  %7280 = vmatprep.subr.bf16.mxu0 0
  %7281 = vmatpush1.bf16.msra.mxu0 0
  %7282 = vmatprep.subr.bf16.mxu0 0
  %7283 = vmatpush1.bf16.msra.mxu0 0
  %7284 = vmatprep.subr.bf16.mxu0 0
  %7285 = vmatpush1.bf16.msra.mxu0 0
  %7286 = vmatprep.subr.bf16.mxu0 0
  %7287 = vmatpush1.bf16.msra.mxu0 0
  %7288 = vmatprep.subr.bf16.mxu0 0
  %7289 = vmatpush1.bf16.msra.mxu0 0
  %7290 = vmatprep.subr.bf16.mxu0 0
  %7291 = vmatpush1.bf16.msra.mxu0 0
  %7292 = vmatprep.mubr.bf16.mxu0 0
  %7293 = vmatmul.mubr.bf16.gmra.mrb[0].mxu0 %v7194
  %v7294 = vpop.f32.mrb[0].mxu0
  %v7295 = vadd.f32 0.0, %v7294
  %v7296 = vpop.f32.mrb[0].mxu0
  %v7297 = vpop.f32.mrb[0].mxu0
  %v7298 = vpop.f32.mrb[0].mxu0
  %7299 = vdwg.mxu0
  %v7300 = vadd.f32 %v7192, %v7295
  %s7301 = scalar_lea.vmem [#allocation3], 32
  %v7302 = vld [vmem:[%s7301] sm:$0xf]
  %s7303 = scalar_lea.vmem %s5, 512
  %v7304 = vld [vmem:[%s7303] sm:$0xf]
  %v7305 = vld [vmem:[%s7303 + $0x4] sm:$0xf]
  %v7306 = vld [vmem:[%s7303 + $0x8] sm:$0xf]
  %v7307 = vld [vmem:[%s7303 + $0xc] sm:$0xf]
  %v7308 = vld [vmem:[%s7303 + $0x10] sm:$0xf]
  %v7309 = vld [vmem:[%s7303 + $0x14] sm:$0xf]
  %v7310 = vld [vmem:[%s7303 + $0x18] sm:$0xf]
  %v7311 = vld [vmem:[%s7303 + $0x1c] sm:$0xf]
  %v7312 = vld [vmem:[%s7303 + $0x20] sm:$0xf]
  %v7313 = vld [vmem:[%s7303 + $0x24] sm:$0xf]
  %v7314 = vld [vmem:[%s7303 + $0x28] sm:$0xf]
  %v7315 = vld [vmem:[%s7303 + $0x2c] sm:$0xf]
  %v7316 = vld [vmem:[%s7303 + $0x30] sm:$0xf]
  %v7317 = vld [vmem:[%s7303 + $0x34] sm:$0xf]
  %v7318 = vld [vmem:[%s7303 + $0x38] sm:$0xf]
  %v7319 = vld [vmem:[%s7303 + $0x3c] sm:$0xf]
  %v7336 = vunpack.c.l.b16 %v7304
  %v7337 = vunpack.c.l.b16 %v7305
  %v7338 = vunpack.c.l.b16 %v7306
  %v7339 = vunpack.c.l.b16 %v7307
  %v7340 = vunpack.c.l.b16 %v7308
  %v7341 = vunpack.c.l.b16 %v7309
  %v7342 = vunpack.c.l.b16 %v7310
  %v7343 = vunpack.c.l.b16 %v7311
  %v7344 = vunpack.c.l.b16 %v7312
  %v7345 = vunpack.c.l.b16 %v7313
  %v7346 = vunpack.c.l.b16 %v7314
  %v7347 = vunpack.c.l.b16 %v7315
  %v7348 = vunpack.c.l.b16 %v7316
  %v7349 = vunpack.c.l.b16 %v7317
  %v7350 = vunpack.c.l.b16 %v7318
  %v7351 = vunpack.c.l.b16 %v7319
  %v7352 = vpack.c.b16 %v7337, %v7336
  %v7353 = vpack.c.b16 %v7339, %v7338
  %v7354 = vpack.c.b16 %v7341, %v7340
  %v7355 = vpack.c.b16 %v7343, %v7342
  %v7356 = vpack.c.b16 %v7345, %v7344
  %v7357 = vpack.c.b16 %v7347, %v7346
  %v7358 = vpack.c.b16 %v7349, %v7348
  %v7359 = vpack.c.b16 %v7351, %v7350
  %7368 = vmatprep.subr.bf16.mxu0 0
  %7369 = vmatpush1.bf16.msra.mxu0 %v7352
  %7370 = vmatprep.subr.bf16.mxu0 0
  %7371 = vmatpush1.bf16.msra.mxu0 %v7353
  %7372 = vmatprep.subr.bf16.mxu0 0
  %7373 = vmatpush1.bf16.msra.mxu0 %v7354
  %7374 = vmatprep.subr.bf16.mxu0 0
  %7375 = vmatpush1.bf16.msra.mxu0 %v7355
  %7376 = vmatprep.subr.bf16.mxu0 0
  %7377 = vmatpush1.bf16.msra.mxu0 %v7356
  %7378 = vmatprep.subr.bf16.mxu0 0
  %7379 = vmatpush1.bf16.msra.mxu0 %v7357
  %7380 = vmatprep.subr.bf16.mxu0 0
  %7381 = vmatpush1.bf16.msra.mxu0 %v7358
  %7382 = vmatprep.subr.bf16.mxu0 0
  %7383 = vmatpush1.bf16.msra.mxu0 %v7359
  %7384 = vmatprep.subr.bf16.mxu0 0
  %7385 = vmatpush1.bf16.msra.mxu0 0
  %7386 = vmatprep.subr.bf16.mxu0 0
  %7387 = vmatpush1.bf16.msra.mxu0 0
  %7388 = vmatprep.subr.bf16.mxu0 0
  %7389 = vmatpush1.bf16.msra.mxu0 0
  %7390 = vmatprep.subr.bf16.mxu0 0
  %7391 = vmatpush1.bf16.msra.mxu0 0
  %7392 = vmatprep.subr.bf16.mxu0 0
  %7393 = vmatpush1.bf16.msra.mxu0 0
  %7394 = vmatprep.subr.bf16.mxu0 0
  %7395 = vmatpush1.bf16.msra.mxu0 0
  %7396 = vmatprep.subr.bf16.mxu0 0
  %7397 = vmatpush1.bf16.msra.mxu0 0
  %7398 = vmatprep.subr.bf16.mxu0 0
  %7399 = vmatpush1.bf16.msra.mxu0 0
  %7400 = vmatprep.mubr.bf16.mxu0 0
  %7401 = vmatmul.mubr.bf16.gmra.mrb[0].mxu0 %v7302
  %v7402 = vpop.f32.mrb[0].mxu0
  %v7403 = vadd.f32 0.0, %v7402
  %v7404 = vpop.f32.mrb[0].mxu0
  %v7405 = vpop.f32.mrb[0].mxu0
  %v7406 = vpop.f32.mrb[0].mxu0
  %7407 = vdwg.mxu0
  %v7408 = vadd.f32 %v7300, %v7403
  %v7409 = vld [vmem:[%s6] sm:$0x1]
  %v7411 = vlaneseq
  %v7412 = vshrl.u32 %v7411, 7
  %v7413 = vsub.s32 0, %v7412
  %v7414 = vrot.slane %v7409, %v7413
  %v7416 = vadd.f32 %v7408, %v7414
  %v7417 = vmax.f32 %v7416, 0.0
  %v7418 = vpack.c.bf16 %v7417, %v7417
  %7419 = vst [vmem:[#allocation4] sm:$0xf] %v7418
  %v7420 = vld [vmem:[#allocation4] sm:$0xf]
  %v7421 = vld [vmem:[%s7] sm:$0xff]
  %v7422 = vld [vmem:[%s7 + $0x8] sm:$0xff]
  %v7423 = vld [vmem:[%s7 + $0x10] sm:$0xff]
  %v7424 = vld [vmem:[%s7 + $0x18] sm:$0xff]
  %v7425 = vld [vmem:[%s7 + $0x20] sm:$0xff]
  %v7426 = vld [vmem:[%s7 + $0x28] sm:$0xff]
  %v7427 = vld [vmem:[%s7 + $0x30] sm:$0xff]
  %v7428 = vld [vmem:[%s7 + $0x38] sm:$0xff]
  %v7429 = vld [vmem:[%s7 + $0x40] sm:$0xff]
  %v7430 = vld [vmem:[%s7 + $0x48] sm:$0xff]
  %v7431 = vld [vmem:[%s7 + $0x50] sm:$0xff]
  %v7432 = vld [vmem:[%s7 + $0x58] sm:$0xff]
  %v7433 = vld [vmem:[%s7 + $0x60] sm:$0xff]
  %v7434 = vld [vmem:[%s7 + $0x68] sm:$0xff]
  %v7435 = vld [vmem:[%s7 + $0x70] sm:$0xff]
  %v7436 = vld [vmem:[%s7 + $0x78] sm:$0xff]
  %v7437 = vld [vmem:[%s7 + $0x80] sm:$0xff]
  %v7438 = vld [vmem:[%s7 + $0x88] sm:$0xff]
  %v7439 = vld [vmem:[%s7 + $0x90] sm:$0xff]
  %v7440 = vld [vmem:[%s7 + $0x98] sm:$0xff]
  %v7441 = vld [vmem:[%s7 + $0xa0] sm:$0xff]
  %v7442 = vld [vmem:[%s7 + $0xa8] sm:$0xff]
  %v7443 = vld [vmem:[%s7 + $0xb0] sm:$0xff]
  %v7444 = vld [vmem:[%s7 + $0xb8] sm:$0xff]
  %v7445 = vld [vmem:[%s7 + $0xc0] sm:$0xff]
  %v7446 = vld [vmem:[%s7 + $0xc8] sm:$0xff]
  %v7447 = vld [vmem:[%s7 + $0xd0] sm:$0xff]
  %v7448 = vld [vmem:[%s7 + $0xd8] sm:$0xff]
  %v7449 = vld [vmem:[%s7 + $0xe0] sm:$0xff]
  %v7450 = vld [vmem:[%s7 + $0xe8] sm:$0xff]
  %v7451 = vld [vmem:[%s7 + $0xf0] sm:$0xff]
  %v7452 = vld [vmem:[%s7 + $0xf8] sm:$0xff]
  %v7453 = vld [vmem:[%s8] sm:$0xf]
  %v7455 = vlaneseq
  %v7456 = vshrl.u32 %v7455, 7
  %v7457 = vsub.s32 0, %v7456
  %v7458 = vrot.slane %v7453, %v7457
  %v7459 = vlaneseq
  %v7460 = vshrl.u32 %v7459, 7
  %v7461 = vsub.s32 1, %v7460
  %v7462 = vrot.slane %v7453, %v7461
  %v7463 = vlaneseq
  %v7464 = vshrl.u32 %v7463, 7
  %v7465 = vsub.s32 2, %v7464
  %v7466 = vrot.slane %v7453, %v7465
  %v7467 = vlaneseq
  %v7468 = vshrl.u32 %v7467, 7
  %v7469 = vsub.s32 3, %v7468
  %v7470 = vrot.slane %v7453, %v7469
  %v7507 = vunpack.c.l.b16 %v7421
  %v7508 = vunpack.c.h.b16 %v7421
  %v7509 = vunpack.c.l.b16 %v7422
  %v7510 = vunpack.c.h.b16 %v7422
  %v7511 = vunpack.c.l.b16 %v7423
  %v7512 = vunpack.c.h.b16 %v7423
  %v7513 = vunpack.c.l.b16 %v7424
  %v7514 = vunpack.c.h.b16 %v7424
  %v7515 = vunpack.c.l.b16 %v7425
  %v7516 = vunpack.c.h.b16 %v7425
  %v7517 = vunpack.c.l.b16 %v7426
  %v7518 = vunpack.c.h.b16 %v7426
  %v7519 = vunpack.c.l.b16 %v7427
  %v7520 = vunpack.c.h.b16 %v7427
  %v7521 = vunpack.c.l.b16 %v7428
  %v7522 = vunpack.c.h.b16 %v7428
  %v7523 = vunpack.c.l.b16 %v7429
  %v7524 = vunpack.c.h.b16 %v7429
  %v7525 = vunpack.c.l.b16 %v7430
  %v7526 = vunpack.c.h.b16 %v7430
  %v7527 = vunpack.c.l.b16 %v7431
  %v7528 = vunpack.c.h.b16 %v7431
  %v7529 = vunpack.c.l.b16 %v7432
  %v7530 = vunpack.c.h.b16 %v7432
  %v7531 = vunpack.c.l.b16 %v7433
  %v7532 = vunpack.c.h.b16 %v7433
  %v7533 = vunpack.c.l.b16 %v7434
  %v7534 = vunpack.c.h.b16 %v7434
  %v7535 = vunpack.c.l.b16 %v7435
  %v7536 = vunpack.c.h.b16 %v7435
  %v7537 = vunpack.c.l.b16 %v7436
  %v7538 = vunpack.c.h.b16 %v7436
  %v7539 = vunpack.c.l.b16 %v7437
  %v7540 = vunpack.c.h.b16 %v7437
  %v7541 = vunpack.c.l.b16 %v7438
  %v7542 = vunpack.c.h.b16 %v7438
  %v7543 = vunpack.c.l.b16 %v7439
  %v7544 = vunpack.c.h.b16 %v7439
  %v7545 = vunpack.c.l.b16 %v7440
  %v7546 = vunpack.c.h.b16 %v7440
  %v7547 = vunpack.c.l.b16 %v7441
  %v7548 = vunpack.c.h.b16 %v7441
  %v7549 = vunpack.c.l.b16 %v7442
  %v7550 = vunpack.c.h.b16 %v7442
  %v7551 = vunpack.c.l.b16 %v7443
  %v7552 = vunpack.c.h.b16 %v7443
  %v7553 = vunpack.c.l.b16 %v7444
  %v7554 = vunpack.c.h.b16 %v7444
  %v7555 = vunpack.c.l.b16 %v7445
  %v7556 = vunpack.c.h.b16 %v7445
  %v7557 = vunpack.c.l.b16 %v7446
  %v7558 = vunpack.c.h.b16 %v7446
  %v7559 = vunpack.c.l.b16 %v7447
  %v7560 = vunpack.c.h.b16 %v7447
  %v7561 = vunpack.c.l.b16 %v7448
  %v7562 = vunpack.c.h.b16 %v7448
  %v7563 = vunpack.c.l.b16 %v7449
  %v7564 = vunpack.c.h.b16 %v7449
  %v7565 = vunpack.c.l.b16 %v7450
  %v7566 = vunpack.c.h.b16 %v7450
  %v7567 = vunpack.c.l.b16 %v7451
  %v7568 = vunpack.c.h.b16 %v7451
  %v7569 = vunpack.c.l.b16 %v7452
  %v7570 = vunpack.c.h.b16 %v7452
  %v7571 = vpack.c.b16 %v7511, %v7507
  %v7572 = vpack.c.b16 %v7512, %v7508
  %v7573 = vpack.c.b16 %v7513, %v7509
  %v7574 = vpack.c.b16 %v7514, %v7510
  %v7575 = vpack.c.b16 %v7519, %v7515
  %v7576 = vpack.c.b16 %v7520, %v7516
  %v7577 = vpack.c.b16 %v7521, %v7517
  %v7578 = vpack.c.b16 %v7522, %v7518
  %v7579 = vpack.c.b16 %v7527, %v7523
  %v7580 = vpack.c.b16 %v7528, %v7524
  %v7581 = vpack.c.b16 %v7529, %v7525
  %v7582 = vpack.c.b16 %v7530, %v7526
  %v7583 = vpack.c.b16 %v7535, %v7531
  %v7584 = vpack.c.b16 %v7536, %v7532
  %v7585 = vpack.c.b16 %v7537, %v7533
  %v7586 = vpack.c.b16 %v7538, %v7534
  %v7587 = vpack.c.b16 %v7543, %v7539
  %v7588 = vpack.c.b16 %v7544, %v7540
  %v7589 = vpack.c.b16 %v7545, %v7541
  %v7590 = vpack.c.b16 %v7546, %v7542
  %v7591 = vpack.c.b16 %v7551, %v7547
  %v7592 = vpack.c.b16 %v7552, %v7548
  %v7593 = vpack.c.b16 %v7553, %v7549
  %v7594 = vpack.c.b16 %v7554, %v7550
  %v7595 = vpack.c.b16 %v7559, %v7555
  %v7596 = vpack.c.b16 %v7560, %v7556
  %v7597 = vpack.c.b16 %v7561, %v7557
  %v7598 = vpack.c.b16 %v7562, %v7558
  %v7599 = vpack.c.b16 %v7567, %v7563
  %v7600 = vpack.c.b16 %v7568, %v7564
  %v7601 = vpack.c.b16 %v7569, %v7565
  %v7602 = vpack.c.b16 %v7570, %v7566
  %7635 = vmatprep.subr.bf16.mxu0 %v7572
  %7636 = vmatpush1.bf16.msra.mxu0 %v7571
  %7637 = vmatprep.subr.bf16.mxu0 %v7576
  %7638 = vmatpush1.bf16.msra.mxu0 %v7575
  %7639 = vmatprep.subr.bf16.mxu0 %v7580
  %7640 = vmatpush1.bf16.msra.mxu0 %v7579
  %7641 = vmatprep.subr.bf16.mxu0 %v7584
  %7642 = vmatpush1.bf16.msra.mxu0 %v7583
  %7643 = vmatprep.subr.bf16.mxu0 %v7588
  %7644 = vmatpush1.bf16.msra.mxu0 %v7587
  %7645 = vmatprep.subr.bf16.mxu0 %v7592
  %7646 = vmatpush1.bf16.msra.mxu0 %v7591
  %7647 = vmatprep.subr.bf16.mxu0 %v7596
  %7648 = vmatpush1.bf16.msra.mxu0 %v7595
  %7649 = vmatprep.subr.bf16.mxu0 %v7600
  %7650 = vmatpush1.bf16.msra.mxu0 %v7599
  %7651 = vmatprep.subr.bf16.mxu0 0
  %7652 = vmatpush1.bf16.msra.mxu0 0
  %7653 = vmatprep.subr.bf16.mxu0 0
  %7654 = vmatpush1.bf16.msra.mxu0 0
  %7655 = vmatprep.subr.bf16.mxu0 0
  %7656 = vmatpush1.bf16.msra.mxu0 0
  %7657 = vmatprep.subr.bf16.mxu0 0
  %7658 = vmatpush1.bf16.msra.mxu0 0
  %7659 = vmatprep.subr.bf16.mxu0 0
  %7660 = vmatpush1.bf16.msra.mxu0 0
  %7661 = vmatprep.subr.bf16.mxu0 0
  %7662 = vmatpush1.bf16.msra.mxu0 0
  %7663 = vmatprep.subr.bf16.mxu0 0
  %7664 = vmatpush1.bf16.msra.mxu0 0
  %7665 = vmatprep.subr.bf16.mxu0 0
  %7666 = vmatpush1.bf16.msra.mxu0 0
  %7667 = vmatprep.mubr.bf16.mxu0 0
  %7668 = vmatmul.mubr.bf16.gmra.mrb[0].mxu0 %v7420
  %v7669 = vpop.f32.mrb[0].mxu0
  %v7670 = vadd.f32 %v7458, %v7669
  %v7671 = vpop.f32.mrb[0].mxu0
  %v7672 = vadd.f32 %v7462, %v7671
  %v7673 = vpop.f32.mrb[0].mxu0
  %v7674 = vpop.f32.mrb[0].mxu0
  %7675 = vdwg.mxu0
  %7676 = vmatprep.subr.bf16.mxu0 %v7574
  %7677 = vmatpush1.bf16.msra.mxu0 %v7573
  %7678 = vmatprep.subr.bf16.mxu0 %v7578
  %7679 = vmatpush1.bf16.msra.mxu0 %v7577
  %7680 = vmatprep.subr.bf16.mxu0 %v7582
  %7681 = vmatpush1.bf16.msra.mxu0 %v7581
  %7682 = vmatprep.subr.bf16.mxu0 %v7586
  %7683 = vmatpush1.bf16.msra.mxu0 %v7585
  %7684 = vmatprep.subr.bf16.mxu0 %v7590
  %7685 = vmatpush1.bf16.msra.mxu0 %v7589
  %7686 = vmatprep.subr.bf16.mxu0 %v7594
  %7687 = vmatpush1.bf16.msra.mxu0 %v7593
  %7688 = vmatprep.subr.bf16.mxu0 %v7598
  %7689 = vmatpush1.bf16.msra.mxu0 %v7597
  %7690 = vmatprep.subr.bf16.mxu0 %v7602
  %7691 = vmatpush1.bf16.msra.mxu0 %v7601
  %7692 = vmatprep.subr.bf16.mxu0 0
  %7693 = vmatpush1.bf16.msra.mxu0 0
  %7694 = vmatprep.subr.bf16.mxu0 0
  %7695 = vmatpush1.bf16.msra.mxu0 0
  %7696 = vmatprep.subr.bf16.mxu0 0
  %7697 = vmatpush1.bf16.msra.mxu0 0
  %7698 = vmatprep.subr.bf16.mxu0 0
  %7699 = vmatpush1.bf16.msra.mxu0 0
  %7700 = vmatprep.subr.bf16.mxu0 0
  %7701 = vmatpush1.bf16.msra.mxu0 0
  %7702 = vmatprep.subr.bf16.mxu0 0
  %7703 = vmatpush1.bf16.msra.mxu0 0
  %7704 = vmatprep.subr.bf16.mxu0 0
  %7705 = vmatpush1.bf16.msra.mxu0 0
  %7706 = vmatprep.subr.bf16.mxu0 0
  %7707 = vmatpush1.bf16.msra.mxu0 0
  %7708 = vmatprep.mubr.bf16.mxu0 0
  %7709 = vmatmul.mubr.bf16.gmra.mrb[0].mxu0 %v7420
  %v7710 = vpop.f32.mrb[0].mxu0
  %v7711 = vadd.f32 %v7466, %v7710
  %v7712 = vpop.f32.mrb[0].mxu0
  %v7713 = vadd.f32 %v7470, %v7712
  %v7714 = vpop.f32.mrb[0].mxu0
  %v7715 = vpop.f32.mrb[0].mxu0
  %7716 = vdwg.mxu0
  %v7717 = vmax.f32 %v7670, 0.0
  %v7718 = vmax.f32 %v7672, 0.0
  %v7719 = vmax.f32 %v7711, 0.0
  %v7720 = vmax.f32 %v7713, 0.0
  %v7721 = vpack.c.bf16 %v7717, %v7717
  %v7722 = vpack.c.bf16 %v7718, %v7718
  %v7723 = vpack.c.bf16 %v7719, %v7719
  %v7724 = vpack.c.bf16 %v7720, %v7720
  %v7725 = vld [vmem:[%s9] sm:$0xf]
  %v7726 = vld [vmem:[%s9 + $0x4] sm:$0xf]
  %v7727 = vld [vmem:[%s9 + $0x8] sm:$0xf]
  %v7728 = vld [vmem:[%s9 + $0xc] sm:$0xf]
  %v7729 = vld [vmem:[%s9 + $0x10] sm:$0xf]
  %v7730 = vld [vmem:[%s9 + $0x14] sm:$0xf]
  %v7731 = vld [vmem:[%s9 + $0x18] sm:$0xf]
  %v7732 = vld [vmem:[%s9 + $0x1c] sm:$0xf]
  %v7733 = vld [vmem:[%s9 + $0x20] sm:$0xf]
  %v7734 = vld [vmem:[%s9 + $0x24] sm:$0xf]
  %v7735 = vld [vmem:[%s9 + $0x28] sm:$0xf]
  %v7736 = vld [vmem:[%s9 + $0x2c] sm:$0xf]
  %v7737 = vld [vmem:[%s9 + $0x30] sm:$0xf]
  %v7738 = vld [vmem:[%s9 + $0x34] sm:$0xf]
  %v7739 = vld [vmem:[%s9 + $0x38] sm:$0xf]
  %v7740 = vld [vmem:[%s9 + $0x3c] sm:$0xf]
  %v7741 = vld [vmem:[%s9 + $0x40] sm:$0xf]
  %v7742 = vld [vmem:[%s9 + $0x44] sm:$0xf]
  %v7743 = vld [vmem:[%s9 + $0x48] sm:$0xf]
  %v7744 = vld [vmem:[%s9 + $0x4c] sm:$0xf]
  %v7745 = vld [vmem:[%s9 + $0x50] sm:$0xf]
  %v7746 = vld [vmem:[%s9 + $0x54] sm:$0xf]
  %v7747 = vld [vmem:[%s9 + $0x58] sm:$0xf]
  %v7748 = vld [vmem:[%s9 + $0x5c] sm:$0xf]
  %v7749 = vld [vmem:[%s9 + $0x60] sm:$0xf]
  %v7750 = vld [vmem:[%s9 + $0x64] sm:$0xf]
  %v7751 = vld [vmem:[%s9 + $0x68] sm:$0xf]
  %v7752 = vld [vmem:[%s9 + $0x6c] sm:$0xf]
  %v7753 = vld [vmem:[%s9 + $0x70] sm:$0xf]
  %v7754 = vld [vmem:[%s9 + $0x74] sm:$0xf]
  %v7755 = vld [vmem:[%s9 + $0x78] sm:$0xf]
  %v7756 = vld [vmem:[%s9 + $0x7c] sm:$0xf]
  %v7757 = vld [vmem:[%s9 + $0x80] sm:$0xf]
  %v7758 = vld [vmem:[%s9 + $0x84] sm:$0xf]
  %v7759 = vld [vmem:[%s9 + $0x88] sm:$0xf]
  %v7760 = vld [vmem:[%s9 + $0x8c] sm:$0xf]
  %v7761 = vld [vmem:[%s9 + $0x90] sm:$0xf]
  %v7762 = vld [vmem:[%s9 + $0x94] sm:$0xf]
  %v7763 = vld [vmem:[%s9 + $0x98] sm:$0xf]
  %v7764 = vld [vmem:[%s9 + $0x9c] sm:$0xf]
  %v7765 = vld [vmem:[%s9 + $0xa0] sm:$0xf]
  %v7766 = vld [vmem:[%s9 + $0xa4] sm:$0xf]
  %v7767 = vld [vmem:[%s9 + $0xa8] sm:$0xf]
  %v7768 = vld [vmem:[%s9 + $0xac] sm:$0xf]
  %v7769 = vld [vmem:[%s9 + $0xb0] sm:$0xf]
  %v7770 = vld [vmem:[%s9 + $0xb4] sm:$0xf]
  %v7771 = vld [vmem:[%s9 + $0xb8] sm:$0xf]
  %v7772 = vld [vmem:[%s9 + $0xbc] sm:$0xf]
  %v7773 = vld [vmem:[%s9 + $0xc0] sm:$0xf]
  %v7774 = vld [vmem:[%s9 + $0xc4] sm:$0xf]
  %v7775 = vld [vmem:[%s9 + $0xc8] sm:$0xf]
  %v7776 = vld [vmem:[%s9 + $0xcc] sm:$0xf]
  %v7777 = vld [vmem:[%s9 + $0xd0] sm:$0xf]
  %v7778 = vld [vmem:[%s9 + $0xd4] sm:$0xf]
  %v7779 = vld [vmem:[%s9 + $0xd8] sm:$0xf]
  %v7780 = vld [vmem:[%s9 + $0xdc] sm:$0xf]
  %v7781 = vld [vmem:[%s9 + $0xe0] sm:$0xf]
  %v7782 = vld [vmem:[%s9 + $0xe4] sm:$0xf]
  %v7783 = vld [vmem:[%s9 + $0xe8] sm:$0xf]
  %v7784 = vld [vmem:[%s9 + $0xec] sm:$0xf]
  %v7785 = vld [vmem:[%s9 + $0xf0] sm:$0xf]
  %v7786 = vld [vmem:[%s9 + $0xf4] sm:$0xf]
  %v7787 = vld [vmem:[%s9 + $0xf8] sm:$0xf]
  %v7788 = vld [vmem:[%s9 + $0xfc] sm:$0xf]
  %v7789 = vld [vmem:[%s10] sm:$0x1]
  %v7791 = vlaneseq
  %v7792 = vshrl.u32 %v7791, 7
  %v7793 = vsub.s32 0, %v7792
  %v7794 = vrot.slane %v7789, %v7793
  %v7860 = vunpack.c.l.b16 %v7725
  %v7861 = vunpack.c.l.b16 %v7726
  %v7862 = vunpack.c.l.b16 %v7727
  %v7863 = vunpack.c.l.b16 %v7728
  %v7864 = vunpack.c.l.b16 %v7729
  %v7865 = vunpack.c.l.b16 %v7730
  %v7866 = vunpack.c.l.b16 %v7731
  %v7867 = vunpack.c.l.b16 %v7732
  %v7868 = vunpack.c.l.b16 %v7733
  %v7869 = vunpack.c.l.b16 %v7734
  %v7870 = vunpack.c.l.b16 %v7735
  %v7871 = vunpack.c.l.b16 %v7736
  %v7872 = vunpack.c.l.b16 %v7737
  %v7873 = vunpack.c.l.b16 %v7738
  %v7874 = vunpack.c.l.b16 %v7739
  %v7875 = vunpack.c.l.b16 %v7740
  %v7876 = vunpack.c.l.b16 %v7741
  %v7877 = vunpack.c.l.b16 %v7742
  %v7878 = vunpack.c.l.b16 %v7743
  %v7879 = vunpack.c.l.b16 %v7744
  %v7880 = vunpack.c.l.b16 %v7745
  %v7881 = vunpack.c.l.b16 %v7746
  %v7882 = vunpack.c.l.b16 %v7747
  %v7883 = vunpack.c.l.b16 %v7748
  %v7884 = vunpack.c.l.b16 %v7749
  %v7885 = vunpack.c.l.b16 %v7750
  %v7886 = vunpack.c.l.b16 %v7751
  %v7887 = vunpack.c.l.b16 %v7752
  %v7888 = vunpack.c.l.b16 %v7753
  %v7889 = vunpack.c.l.b16 %v7754
  %v7890 = vunpack.c.l.b16 %v7755
  %v7891 = vunpack.c.l.b16 %v7756
  %v7892 = vunpack.c.l.b16 %v7757
  %v7893 = vunpack.c.l.b16 %v7758
  %v7894 = vunpack.c.l.b16 %v7759
  %v7895 = vunpack.c.l.b16 %v7760
  %v7896 = vunpack.c.l.b16 %v7761
  %v7897 = vunpack.c.l.b16 %v7762
  %v7898 = vunpack.c.l.b16 %v7763
  %v7899 = vunpack.c.l.b16 %v7764
  %v7900 = vunpack.c.l.b16 %v7765
  %v7901 = vunpack.c.l.b16 %v7766
  %v7902 = vunpack.c.l.b16 %v7767
  %v7903 = vunpack.c.l.b16 %v7768
  %v7904 = vunpack.c.l.b16 %v7769
  %v7905 = vunpack.c.l.b16 %v7770
  %v7906 = vunpack.c.l.b16 %v7771
  %v7907 = vunpack.c.l.b16 %v7772
  %v7908 = vunpack.c.l.b16 %v7773
  %v7909 = vunpack.c.l.b16 %v7774
  %v7910 = vunpack.c.l.b16 %v7775
  %v7911 = vunpack.c.l.b16 %v7776
  %v7912 = vunpack.c.l.b16 %v7777
  %v7913 = vunpack.c.l.b16 %v7778
  %v7914 = vunpack.c.l.b16 %v7779
  %v7915 = vunpack.c.l.b16 %v7780
  %v7916 = vunpack.c.l.b16 %v7781
  %v7917 = vunpack.c.l.b16 %v7782
  %v7918 = vunpack.c.l.b16 %v7783
  %v7919 = vunpack.c.l.b16 %v7784
  %v7920 = vunpack.c.l.b16 %v7785
  %v7921 = vunpack.c.l.b16 %v7786
  %v7922 = vunpack.c.l.b16 %v7787
  %v7923 = vunpack.c.l.b16 %v7788
  %v7924 = vpack.c.b16 %v7861, %v7860
  %v7925 = vpack.c.b16 %v7863, %v7862
  %v7926 = vpack.c.b16 %v7865, %v7864
  %v7927 = vpack.c.b16 %v7867, %v7866
  %v7928 = vpack.c.b16 %v7869, %v7868
  %v7929 = vpack.c.b16 %v7871, %v7870
  %v7930 = vpack.c.b16 %v7873, %v7872
  %v7931 = vpack.c.b16 %v7875, %v7874
  %v7932 = vpack.c.b16 %v7877, %v7876
  %v7933 = vpack.c.b16 %v7879, %v7878
  %v7934 = vpack.c.b16 %v7881, %v7880
  %v7935 = vpack.c.b16 %v7883, %v7882
  %v7936 = vpack.c.b16 %v7885, %v7884
  %v7937 = vpack.c.b16 %v7887, %v7886
  %v7938 = vpack.c.b16 %v7889, %v7888
  %v7939 = vpack.c.b16 %v7891, %v7890
  %v7940 = vpack.c.b16 %v7893, %v7892
  %v7941 = vpack.c.b16 %v7895, %v7894
  %v7942 = vpack.c.b16 %v7897, %v7896
  %v7943 = vpack.c.b16 %v7899, %v7898
  %v7944 = vpack.c.b16 %v7901, %v7900
  %v7945 = vpack.c.b16 %v7903, %v7902
  %v7946 = vpack.c.b16 %v7905, %v7904
  %v7947 = vpack.c.b16 %v7907, %v7906
  %v7948 = vpack.c.b16 %v7909, %v7908
  %v7949 = vpack.c.b16 %v7911, %v7910
  %v7950 = vpack.c.b16 %v7913, %v7912
  %v7951 = vpack.c.b16 %v7915, %v7914
  %v7952 = vpack.c.b16 %v7917, %v7916
  %v7953 = vpack.c.b16 %v7919, %v7918
  %v7954 = vpack.c.b16 %v7921, %v7920
  %v7955 = vpack.c.b16 %v7923, %v7922
  %7988 = vmatprep.subr.bf16.mxu0 0
  %7989 = vmatpush1.bf16.msra.mxu0 %v7924
  %7990 = vmatprep.subr.bf16.mxu0 0
  %7991 = vmatpush1.bf16.msra.mxu0 %v7925
  %7992 = vmatprep.subr.bf16.mxu0 0
  %7993 = vmatpush1.bf16.msra.mxu0 %v7926
  %7994 = vmatprep.subr.bf16.mxu0 0
  %7995 = vmatpush1.bf16.msra.mxu0 %v7927
  %7996 = vmatprep.subr.bf16.mxu0 0
  %7997 = vmatpush1.bf16.msra.mxu0 %v7928
  %7998 = vmatprep.subr.bf16.mxu0 0
  %7999 = vmatpush1.bf16.msra.mxu0 %v7929
  %8000 = vmatprep.subr.bf16.mxu0 0
  %8001 = vmatpush1.bf16.msra.mxu0 %v7930
  %8002 = vmatprep.subr.bf16.mxu0 0
  %8003 = vmatpush1.bf16.msra.mxu0 %v7931
  %8004 = vmatprep.subr.bf16.mxu0 0
  %8005 = vmatpush1.bf16.msra.mxu0 %v7932
  %8006 = vmatprep.subr.bf16.mxu0 0
  %8007 = vmatpush1.bf16.msra.mxu0 %v7933
  %8008 = vmatprep.subr.bf16.mxu0 0
  %8009 = vmatpush1.bf16.msra.mxu0 %v7934
  %8010 = vmatprep.subr.bf16.mxu0 0
  %8011 = vmatpush1.bf16.msra.mxu0 %v7935
  %8012 = vmatprep.subr.bf16.mxu0 0
  %8013 = vmatpush1.bf16.msra.mxu0 %v7936
  %8014 = vmatprep.subr.bf16.mxu0 0
  %8015 = vmatpush1.bf16.msra.mxu0 %v7937
  %8016 = vmatprep.subr.bf16.mxu0 0
  %8017 = vmatpush1.bf16.msra.mxu0 %v7938
  %8018 = vmatprep.subr.bf16.mxu0 0
  %8019 = vmatpush1.bf16.msra.mxu0 %v7939
  %8020 = vmatprep.mubr.bf16.mxu0 %v7722
  %8021 = vmatmul.mubr.bf16.gmra.mrb[0].mxu0 %v7721
  %v8022 = vpop.f32.mrb[0].mxu0
  %v8023 = vadd.f32 %v7794, %v8022
  %v8024 = vpop.f32.mrb[0].mxu0
  %v8025 = vpop.f32.mrb[0].mxu0
  %v8026 = vpop.f32.mrb[0].mxu0
  %8027 = vdwg.mxu0
  %8028 = vmatprep.subr.bf16.mxu0 0
  %8029 = vmatpush1.bf16.msra.mxu0 %v7940
  %8030 = vmatprep.subr.bf16.mxu0 0
  %8031 = vmatpush1.bf16.msra.mxu0 %v7941
  %8032 = vmatprep.subr.bf16.mxu0 0
  %8033 = vmatpush1.bf16.msra.mxu0 %v7942
  %8034 = vmatprep.subr.bf16.mxu0 0
  %8035 = vmatpush1.bf16.msra.mxu0 %v7943
  %8036 = vmatprep.subr.bf16.mxu0 0
  %8037 = vmatpush1.bf16.msra.mxu0 %v7944
  %8038 = vmatprep.subr.bf16.mxu0 0
  %8039 = vmatpush1.bf16.msra.mxu0 %v7945
  %8040 = vmatprep.subr.bf16.mxu0 0
  %8041 = vmatpush1.bf16.msra.mxu0 %v7946
  %8042 = vmatprep.subr.bf16.mxu0 0
  %8043 = vmatpush1.bf16.msra.mxu0 %v7947
  %8044 = vmatprep.subr.bf16.mxu0 0
  %8045 = vmatpush1.bf16.msra.mxu0 %v7948
  %8046 = vmatprep.subr.bf16.mxu0 0
  %8047 = vmatpush1.bf16.msra.mxu0 %v7949
  %8048 = vmatprep.subr.bf16.mxu0 0
  %8049 = vmatpush1.bf16.msra.mxu0 %v7950
  %8050 = vmatprep.subr.bf16.mxu0 0
  %8051 = vmatpush1.bf16.msra.mxu0 %v7951
  %8052 = vmatprep.subr.bf16.mxu0 0
  %8053 = vmatpush1.bf16.msra.mxu0 %v7952
  %8054 = vmatprep.subr.bf16.mxu0 0
  %8055 = vmatpush1.bf16.msra.mxu0 %v7953
  %8056 = vmatprep.subr.bf16.mxu0 0
  %8057 = vmatpush1.bf16.msra.mxu0 %v7954
  %8058 = vmatprep.subr.bf16.mxu0 0
  %8059 = vmatpush1.bf16.msra.mxu0 %v7955
  %8060 = vmatprep.mubr.bf16.mxu0 %v7724
  %8061 = vmatmul.mubr.bf16.gmra.mrb[0].mxu0 %v7723
  %v8062 = vpop.f32.mrb[0].mxu0
  %v8063 = vadd.f32 %v8023, %v8062
  %v8064 = vpop.f32.mrb[0].mxu0
  %v8065 = vpop.f32.mrb[0].mxu0
  %v8066 = vpop.f32.mrb[0].mxu0
  %8067 = vdwg.mxu0
  %8068 = vst [vmem:[%s11] sm:$0xff] %v8063
  // Predicated region
  $region46: #{dqn_forward_pallas.1} parent=0 // pred_check
    _
  $region47: #{dqn_forward_pallas.1} parent=0 // pred_check_branch
    %8070 = sbr.rel (0) target = $region49
  $region48: #{dqn_forward_pallas.1} parent=0 // pred_region
    _
  $region49: #{dqn_forward_pallas.1} parent=0 // pred_fallthru
    _
  // Predicated region
  $region50: #{dqn_forward_pallas.1} parent=0 // pred_check
    _
  $region51: #{dqn_forward_pallas.1} parent=0 // pred_check_branch
    %8072 = sbr.rel (0) target = $region53
  $region52: #{dqn_forward_pallas.1} parent=0 // pred_region
    _
  $region53: #{dqn_forward_pallas.1} parent=0 // pred_fallthru
    _

</llo_original>
